<compile_context>
chip_gen: v5e
topology: v5e:2x2
jax: 0.10.0
libtpu: 0.0.40
codegen_flags: <defaults>
</compile_context>

<pallas_src>
import functools

import jax
import jax.numpy as jnp
from jax import lax
from jax.experimental import pallas as pl
from jax.experimental.pallas import tpu as pltpu

HEADS = 4      # GATv2 heads (static)
LANE = 128     # TPU lane width


# ----------------------------------------------------------------------------
# In-kernel building blocks
# ----------------------------------------------------------------------------
def _gat_layer(x, adj_bias, w_all, b_lr, att_rows, att_col,
               agg_scale, shift_f, prelu_a, pair_dtype):
    """GATv2Conv(heads=HEADS, concat=False, residual=True) + folded BN + PReLU."""
    N = x.shape[0]
    C = agg_scale.shape[1]
    HC = HEADS * C

    # (3) one lane-dense matmul for all heads' lin_l / lin_r AND the residual
    proj = jnp.dot(x, w_all, preferred_element_type=jnp.float32)       # (N, 2*H*C + C)
    xlr = proj[:, :2 * HC] + b_lr                                       # (N, 2*H*C)
    res = proj[:, 2 * HC:]                                              # (N, C), BN-folded residual
    xl_all_t = xlr[:, :HC].T                                            # (H*C, N): N in lanes

    acc = jnp.zeros((N, C), jnp.float32)
    for h in range(HEADS):                                              # static unroll
        xl = xlr[:, h * C:(h + 1) * C]                   # (N, C)  source-transformed
        xr = xlr[:, HC + h * C:HC + (h + 1) * C]         # (N, C)  target-transformed
        xl_t = xl_all_t[h * C:(h + 1) * C, :]            # (C, N)
        a_row = att_rows[h:h + 1, :]                     # (1, C)
        a_col = att_col[h * C:(h + 1) * C, :]            # (C, 1)

        # att . leaky_relu(xr_i + xl_j, 0.2)  with  leaky(z) = 0.6 z + 0.4 |z|
        ar = jnp.sum(xr * a_row, axis=-1, keepdims=True)         # (N, 1)  rank-1 i-part
        al = jnp.sum(xl_t * a_col, axis=0, keepdims=True)        # (1, N)  rank-1 j-part

        # (1) channel-wise accumulation of the |.| part: only an (N, N)
        #     accumulator is ever live (no (C, N, N) temporary).
        # (4) bf16 operands on v6e/v7x (f32 accumulate).
        xr_p = xr.astype(pair_dtype)                              # (N, C)
        xl_tp = xl_t.astype(pair_dtype)                           # (C, N)
        ac4 = 0.4 * a_col                                         # fold the 0.4 once
        abs_term = jnp.zeros((N, N), jnp.float32)
        for c in range(C):                                        # static unroll (C small)
            pc = jnp.abs(xr_p[:, c:c + 1] + xl_tp[c:c + 1, :])    # (N, N), N in lanes
            abs_term = abs_term + ac4[c:c + 1, 0:1] * pc          # promotes to f32

        logits = 0.6 * (ar + al) + abs_term + adj_bias            # additive mask

        # masked softmax over in-neighbours j of target i (self-loop => finite max)
        m = jnp.max(logits, axis=-1, keepdims=True)
        p = jnp.exp(logits - m)                                   # (N, N), unnormalized
        # (2) normalize after aggregation: N*C multiplies instead of N*N divides
        unorm = jnp.dot(p, xl, preferred_element_type=jnp.float32)          # (N, C)
        inv = pl.reciprocal(jnp.sum(p, axis=-1, keepdims=True), approx=True)  # (N, 1)
        acc = acc + unorm * inv

    # folded epilogue: head mean + residual + GAT bias + BatchNorm, then PReLU
    out = acc * agg_scale + res + shift_f
    return jnp.where(out > 0, out, prelu_a * out)


def fused_model_kernel(
        # graph inputs
        x_ref, adjb_ref, esrc_ref, edst_ref, eattr_ref,
        # GATv2 layer 1 (folded)
        wa1_ref, blr1_ref, arow1_ref, acol1_ref, asc1_ref, sh1_ref, pr1_ref,
        # GATv2 layer 2 (folded)
        wa2_ref, blr2_ref, arow2_ref, acol2_ref, asc2_ref, sh2_ref, pr2_ref,
        # lane-placement matrices for the edge-feature slab
        ps1_ref, ps2_ref, pd1_ref, pd2_ref,
        # MLP (BatchNorms folded, fc1 rows / fc3 cols zero-padded to 128)
        w1_ref, b1_ref, w2_ref, b2_ref, w3_ref, b3_ref,
        # outputs
        feat_ref, logits_ref,
        *, pair_dtype):
    x = x_ref[...]
    adjb = adjb_ref[...].astype(jnp.float32)    # (5) mask shipped as bf16, one cast

    # GNN([128, 16, 16]) — both GATv2(+BN+PReLU) layers, VMEM-resident
    x1 = _gat_layer(x, adjb, wa1_ref[...], blr1_ref[...], arow1_ref[...], acol1_ref[...],
                    asc1_ref[...], sh1_ref[...], pr1_ref[...], pair_dtype)
    x2 = _gat_layer(x1, adjb, wa2_ref[...], blr2_ref[...], arow2_ref[...], acol2_ref[...],
                    asc2_ref[...], sh2_ref[...], pr2_ref[...], pair_dtype)

    # labelled-edge gather done in-kernel via exact 0/1 one-hot matmuls
    N = x.shape[0]
    E = esrc_ref.shape[0]
    col = lax.broadcasted_iota(jnp.int32, (E, N), 1)
    sel_src = (col == esrc_ref[...]).astype(jnp.float32)         # (E, N)
    sel_dst = (col == edst_ref[...]).astype(jnp.float32)         # (E, N)

    # place [x1 | x2] into a lane-dense 128-wide slab:
    #   src features -> cols 0:32, dst features -> cols 32:64, attrs -> 64:86
    xs = (jnp.dot(x1, ps1_ref[...], preferred_element_type=jnp.float32)
          + jnp.dot(x2, ps2_ref[...], preferred_element_type=jnp.float32))   # (N, 128)
    xd = (jnp.dot(x1, pd1_ref[...], preferred_element_type=jnp.float32)
          + jnp.dot(x2, pd2_ref[...], preferred_element_type=jnp.float32))   # (N, 128)
    feat = (jnp.dot(sel_src, xs, preferred_element_type=jnp.float32)
            + jnp.dot(sel_dst, xd, preferred_element_type=jnp.float32)
            + eattr_ref[...])                                    # attrs pre-placed at cols 64:86
    feat_ref[...] = feat                                         # (E, 128) lane-dense store

    # MLP: BN->fc1->BN->LeakyReLU->fc2->BN->LeakyReLU->fc3 (all BNs folded)
    z = jnp.dot(feat, w1_ref[...], preferred_element_type=jnp.float32) + b1_ref[...]
    z = jnp.where(z > 0, z, 0.01 * z)
    z = jnp.dot(z, w2_ref[...], preferred_element_type=jnp.float32) + b2_ref[...]
    z = jnp.where(z > 0, z, 0.01 * z)
    logits_ref[...] = jnp.dot(z, w3_ref[...], preferred_element_type=jnp.float32) + b3_ref[...]


# ----------------------------------------------------------------------------
# Wrapper-side parameter folding / packing (trace-time only, tiny XLA ops)
# ----------------------------------------------------------------------------
_VMEM_SPEC = pl.BlockSpec(memory_space=pltpu.MemorySpace.VMEM)


def _pairwise_dtype():
    """bf16 pairwise pass only on chips with a bf16 VALU (v6e / v7x)."""
    try:
        kind = jax.devices()[0].device_kind.lower()
    except Exception:
        return jnp.float32
    return jnp.bfloat16 if any(t in kind for t in ("v6", "v7", "7x")) else jnp.float32


def _placement(rows, offset, width=LANE):
    """(rows, width) 0/1 matrix placing an identity block at column `offset`."""
    return jnp.pad(jnp.eye(rows, dtype=jnp.float32),
                   ((0, 0), (offset, width - offset - rows)))


def _fold_bn(gamma, beta, running_mean, running_var, eps=1e-5):
    scale = gamma / jnp.sqrt(running_var + eps)
    shift = beta - running_mean * scale
    return scale[None, :], shift[None, :]


def _prep_gat(g):
    """Fold heads / residual / bias / BatchNorm into the fused-kernel layout."""
    H, fin, C = g["wl"].shape
    wl = jnp.transpose(g["wl"], (1, 0, 2)).reshape(fin, H * C)
    wr = jnp.transpose(g["wr"], (1, 0, 2)).reshape(fin, H * C)
    s, sh = g["bn_scale"], g["bn_shift"]                         # (1, C) each
    # projection + residual in ONE matmul:  (fin, 2*H*C + C)
    w_all = jnp.concatenate([wl, wr, g["wres"] * s], axis=1)
    bl = jnp.transpose(g["bl"], (1, 0, 2)).reshape(1, H * C)
    br = jnp.transpose(g["br"], (1, 0, 2)).reshape(1, H * C)
    b_lr = jnp.concatenate([bl, br], axis=1)                     # (1, 2*H*C)
    att_rows = g["att"].reshape(H, C)                            # (H, C)
    att_col = g["att"].reshape(H * C, 1)                         # (H*C, 1)
    return (w_all, b_lr, att_rows, att_col,
            s / H,                  # head-mean (1/H) + BN scale
            g["bias"] * s + sh,     # GAT bias + BN shift
            g["prelu"])


def _prep_mlp(m):
    """Fold the 3 BatchNorm1d's into fc1/fc2 and pad fc1 rows / fc3 cols to 128."""
    s0, h0, s1, h1, s2, h2 = m["s0"], m["h0"], m["s1"], m["h1"], m["s2"], m["h2"]
    w1f = (jnp.transpose(s0) * m["w1"]) * s1
    b1f = (jnp.dot(h0, m["w1"]) + m["b1"]) * s1 + h1
    w2f = m["w2"] * s2
    b2f = m["b2"] * s2 + h2
    in_dim, hid1 = w1f.shape
    hid2, out_dim = m["w3"].shape
    w1_pad = jnp.zeros((LANE, hid1), jnp.float32).at[:in_dim, :].set(w1f)
    w3_pad = jnp.zeros((hid2, LANE), jnp.float32).at[:, :out_dim].set(m["w3"])
    b3_pad = jnp.zeros((1, LANE), jnp.float32).at[:, :out_dim].set(m["b3"])
    return w1_pad, b1f, w2f, b2f, w3_pad, b3_pad


# ----------------------------------------------------------------------------
# Model_CN forward (one fused pallas_call)
# ----------------------------------------------------------------------------
@jax.jit
def model_cn_forward(params, x_all_year, label_edge_index,
                     edge_index_all_year, label_edge_attr_all_year):
    N, fin = x_all_year.shape
    E = label_edge_index.shape[1]
    attr_dim = label_edge_attr_all_year.shape[1]
    C1 = params["gnn1"]["wres"].shape[1]
    C2 = params["gnn2"]["wres"].shape[1]
    feat_dim = 2 * (C1 + C2) + attr_dim
    out_dim = params["mlp"]["w3"].shape[1]

    # Additive softmax mask: 0 where edge j->i exists (+ self loops), -1e30 elsewhere.
    # NOTE: dense mask dedups repeated edges (PyG's scatter-softmax counts them).
    # Shipped as bf16 (halved DMA/VMEM), cast to f32 once inside the kernel.
    adj_bias = jnp.full((N, N), -1e30, jnp.float32)
    adj_bias = adj_bias.at[edge_index_all_year[1], edge_index_all_year[0]].set(0.0)
    diag = jnp.arange(N)
    adj_bias = adj_bias.at[diag, diag].set(0.0).astype(jnp.bfloat16)

    esrc = label_edge_index[0].astype(jnp.int32).reshape(E, 1)
    edst = label_edge_index[1].astype(jnp.int32).reshape(E, 1)
    # edge attrs pre-placed into the lane-dense (E,128) slab at cols 64:86
    eattr_slab = jnp.zeros((E, LANE), jnp.float32).at[
        :, 2 * (C1 + C2):2 * (C1 + C2) + attr_dim].set(label_edge_attr_all_year)

    g1 = _prep_gat(params["gnn1"])
    g2 = _prep_gat(params["gnn2"])
    mlp = _prep_mlp(params["mlp"])
    placements = (_placement(C1, 0),                 # x1[src] -> cols 0:C1
                  _placement(C2, C1),                # x2[src] -> cols C1:C1+C2
                  _placement(C1, C1 + C2),           # x1[dst]
                  _placement(C2, 2 * C1 + C2))       # x2[dst]

    inputs = (x_all_year, adj_bias, esrc, edst, eattr_slab,
              *g1, *g2, *placements, *mlp)

    # ---- generation-aware VMEM limit sized from actual resident footprint ----
    in_bytes = sum(a.size * a.dtype.itemsize for a in inputs)
    out_bytes = 2 * E * LANE * 4
    cmax = max(C1, C2)
    itm_bytes = 4 * (6 * N * N                                  # adj f32 + per-head (N,N) live set
                     + 8 * N * (2 * HEADS * cmax + cmax)        # proj / xlr / x1 / x2 / slabs
                     + 2 * E * (N + LANE))                      # one-hot selectors + feat
    resident = in_bytes + out_bytes + itm_bytes
    try:
        vmem_cap = int(pltpu.get_tpu_info().vmem_capacity_bytes)
    except Exception:
        vmem_cap = 64 * 1024 * 1024                             # v7x floor
    vmem_limit = int(max(4 * 1024 * 1024,
                         min(vmem_cap - 4 * 1024 * 1024, 4 * resident)))

    flops = int(
        2 * N * fin * (2 * HEADS * C1 + C1)                     # layer-1 fused projection
        + 2 * N * C1 * (2 * HEADS * C2 + C2)                    # layer-2 fused projection
        + HEADS * N * N * (7 * C1 + 8)                          # layer-1 pairwise + softmax + agg
        + HEADS * N * N * (7 * C2 + 8)                          # layer-2
        + 4 * N * LANE * (C1 + C2) + 4 * E * N * LANE           # placement + gather
        + 2 * E * LANE * 32 + 2 * E * 32 * 8 + 2 * E * 8 * LANE)  # MLP
    cost = pl.CostEstimate(flops=flops,
                           transcendentals=int(2 * HEADS * N * (N + 1)),
                           bytes_accessed=int(in_bytes + out_bytes))

    kernel = functools.partial(fused_model_kernel, pair_dtype=_pairwise_dtype())
    feat_pad, logits_pad = pl.pallas_call(
        kernel,
        out_shape=(jax.ShapeDtypeStruct((E, LANE), jnp.float32),
                   jax.ShapeDtypeStruct((E, LANE), jnp.float32)),
        in_specs=[_VMEM_SPEC] * len(inputs),
        out_specs=(_VMEM_SPEC, _VMEM_SPEC),
        compiler_params=pltpu.CompilerParams(vmem_limit_bytes=vmem_limit),
        cost_estimate=cost,
    )(*inputs)

    # lane-dense kernel outputs, sliced back to the module's shapes
    label_edge_feature_all = feat_pad[:, :feat_dim]     # (E, 86)
    logits = logits_pad[:, :out_dim]                    # (E, 2)
    return label_edge_feature_all, logits


# ----------------------------------------------------------------------------
# Deterministic synthetic parameters
# ----------------------------------------------------------------------------
def make_gat_params(key, fin, cout, heads=HEADS):
    ks = jax.random.split(key, 10)
    s = 0.1
    gamma = 1.0 + 0.05 * jax.random.normal(ks[7], (cout,), jnp.float32)
    beta = 0.05 * jax.random.normal(ks[8], (cout,), jnp.float32)
    bn_scale, bn_shift = _fold_bn(gamma, beta,
                                  jnp.zeros((cout,), jnp.float32),
                                  jnp.ones((cout,), jnp.float32))
    return {
        "wl": s * jax.random.normal(ks[0], (heads, fin, cout), jnp.float32),
        "bl": s * jax.random.normal(ks[1], (heads, 1, cout), jnp.float32),
        "wr": s * jax.random.normal(ks[2], (heads, fin, cout), jnp.float32),
        "br": s * jax.random.normal(ks[3], (heads, 1, cout), jnp.float32),
        "att": s * jax.random.normal(ks[4], (heads, 1, cout), jnp.float32),
        "wres": s * jax.random.normal(ks[5], (fin, cout), jnp.float32),
        "bias": s * jax.random.normal(ks[6], (1, cout), jnp.float32),
        "bn_scale": bn_scale, "bn_shift": bn_shift,
        "prelu": 0.25 * jnp.ones((1, cout), jnp.float32),   # nn.PReLU(cout) init
    }


def make_mlp_params(key, in_dim, hid1, hid2, out_dim):
    ks = jax.random.split(key, 12)
    s = 0.1

    def bn(kg, kb, d):
        gamma = 1.0 + 0.05 * jax.random.normal(kg, (d,), jnp.float32)
        beta = 0.05 * jax.random.normal(kb, (d,), jnp.float32)
        return _fold_bn(gamma, beta, jnp.zeros((d,), jnp.float32),
                        jnp.ones((d,), jnp.float32))

    s0, h0 = bn(ks[0], ks[1], in_dim)
    s1, h1 = bn(ks[2], ks[3], hid1)
    s2, h2 = bn(ks[4], ks[5], hid2)
    return {
        "s0": s0, "h0": h0,
        "w1": s * jax.random.normal(ks[6], (in_dim, hid1), jnp.float32),
        "b1": s * jax.random.normal(ks[7], (1, hid1), jnp.float32),
        "s1": s1, "h1": h1,
        "w2": s * jax.random.normal(ks[8], (hid1, hid2), jnp.float32),
        "b2": s * jax.random.normal(ks[9], (1, hid2), jnp.float32),
        "s2": s2, "h2": h2,
        "w3": s * jax.random.normal(ks[10], (hid2, out_dim), jnp.float32),
        "b3": s * jax.random.normal(ks[11], (1, out_dim), jnp.float32),
    }


def make_model_params(key):
    k1, k2, k3 = jax.random.split(key, 3)
    return {
        "gnn1": make_gat_params(k1, 128, 16),
        "gnn2": make_gat_params(k2, 16, 16),
        "mlp": make_mlp_params(k3, 86, 32, 8, 2),
    }


# ----------------------------------------------------------------------------
if __name__ == "__main__":
    key = jax.random.PRNGKey(0)
    k_par, k_x, k_e1, k_e2, k_attr = jax.random.split(key, 5)

    N, F_IN = 16, 128        # nodes, input feature dim (GNN expects 128)
    E_ALL = 40               # graph edges
    E_LAB = 8                # labelled edges
    ATTR_DIM = 86 - 2 * 32   # = 22, so src(32)+dst(32)+attr(22) = the MLP's 86-dim input

    params = make_model_params(k_par)

    x_all_year = jax.random.normal(k_x, (N, F_IN), jnp.float32)
    edge_index_all_year = jax.random.randint(k_e1, (2, E_ALL), 0, N, jnp.int32)
    label_edge_index = jax.random.randint(k_e2, (2, E_LAB), 0, N, jnp.int32)
    label_edge_attr_all_year = jax.random.normal(k_attr, (E_LAB, ATTR_DIM), jnp.float32)

    feats, logits = model_cn_forward(params, x_all_year, label_edge_index,
                                     edge_index_all_year, label_edge_attr_all_year)
    jax.block_until_ready((feats, logits))

    assert feats.shape == (E_LAB, 86) and logits.shape == (E_LAB, 2)
    assert bool(jnp.all(jnp.isfinite(feats))) and bool(jnp.all(jnp.isfinite(logits)))
    print("KERNEL_OK")
</pallas_src>

<mosaic_0001>
module attributes {stable_mosaic.version = 11 : i64} {
  func.func @fused_model_kernel(%arg0: memref<16x128xf32, #tpu.memory_space<vmem>>, %arg1: memref<16x16xbf16, #tpu.memory_space<vmem>>, %arg2: memref<8x1xi32, #tpu.memory_space<vmem>>, %arg3: memref<8x1xi32, #tpu.memory_space<vmem>>, %arg4: memref<8x128xf32, #tpu.memory_space<vmem>>, %arg5: memref<128x144xf32, #tpu.memory_space<vmem>>, %arg6: memref<1x128xf32, #tpu.memory_space<vmem>>, %arg7: memref<4x16xf32, #tpu.memory_space<vmem>>, %arg8: memref<64x1xf32, #tpu.memory_space<vmem>>, %arg9: memref<1x16xf32, #tpu.memory_space<vmem>>, %arg10: memref<1x16xf32, #tpu.memory_space<vmem>>, %arg11: memref<1x16xf32, #tpu.memory_space<vmem>>, %arg12: memref<16x144xf32, #tpu.memory_space<vmem>>, %arg13: memref<1x128xf32, #tpu.memory_space<vmem>>, %arg14: memref<4x16xf32, #tpu.memory_space<vmem>>, %arg15: memref<64x1xf32, #tpu.memory_space<vmem>>, %arg16: memref<1x16xf32, #tpu.memory_space<vmem>>, %arg17: memref<1x16xf32, #tpu.memory_space<vmem>>, %arg18: memref<1x16xf32, #tpu.memory_space<vmem>>, %arg19: memref<16x128xf32, #tpu.memory_space<vmem>>, %arg20: memref<16x128xf32, #tpu.memory_space<vmem>>, %arg21: memref<16x128xf32, #tpu.memory_space<vmem>>, %arg22: memref<16x128xf32, #tpu.memory_space<vmem>>, %arg23: memref<128x32xf32, #tpu.memory_space<vmem>>, %arg24: memref<1x32xf32, #tpu.memory_space<vmem>>, %arg25: memref<32x8xf32, #tpu.memory_space<vmem>>, %arg26: memref<1x8xf32, #tpu.memory_space<vmem>>, %arg27: memref<8x128xf32, #tpu.memory_space<vmem>>, %arg28: memref<1x128xf32, #tpu.memory_space<vmem>>, %arg29: memref<8x128xf32, #tpu.memory_space<vmem>>, %arg30: memref<8x128xf32, #tpu.memory_space<vmem>>) attributes {dimension_semantics = [], scalar_prefetch = 0 : i64, scratch_operands = 0 : i64, tpu.core_type = #tpu.core_type<tc>} {
    %c0 = arith.constant 0 : index
    %c0_0 = arith.constant 0 : index
    %0 = vector.load %arg0[%c0, %c0_0] : memref<16x128xf32, #tpu.memory_space<vmem>>, vector<16x128xf32>
    %c0_1 = arith.constant 0 : index
    %c0_2 = arith.constant 0 : index
    %1 = vector.load %arg1[%c0_1, %c0_2] : memref<16x16xbf16, #tpu.memory_space<vmem>>, vector<16x16xbf16>
    %2 = arith.extf %1 : vector<16x16xbf16> to vector<16x16xf32>
    %c0_3 = arith.constant 0 : index
    %c0_4 = arith.constant 0 : index
    %3 = vector.load %arg5[%c0_3, %c0_4] : memref<128x144xf32, #tpu.memory_space<vmem>>, vector<128x144xf32>
    %c0_5 = arith.constant 0 : index
    %c0_6 = arith.constant 0 : index
    %4 = vector.load %arg6[%c0_5, %c0_6] : memref<1x128xf32, #tpu.memory_space<vmem>>, vector<1x128xf32>
    %c0_7 = arith.constant 0 : index
    %c0_8 = arith.constant 0 : index
    %5 = vector.load %arg7[%c0_7, %c0_8] : memref<4x16xf32, #tpu.memory_space<vmem>>, vector<4x16xf32>
    %c0_9 = arith.constant 0 : index
    %c0_10 = arith.constant 0 : index
    %6 = vector.load %arg8[%c0_9, %c0_10] : memref<64x1xf32, #tpu.memory_space<vmem>>, vector<64x1xf32>
    %c0_11 = arith.constant 0 : index
    %c0_12 = arith.constant 0 : index
    %7 = vector.load %arg9[%c0_11, %c0_12] : memref<1x16xf32, #tpu.memory_space<vmem>>, vector<1x16xf32>
    %c0_13 = arith.constant 0 : index
    %c0_14 = arith.constant 0 : index
    %8 = vector.load %arg10[%c0_13, %c0_14] : memref<1x16xf32, #tpu.memory_space<vmem>>, vector<1x16xf32>
    %c0_15 = arith.constant 0 : index
    %c0_16 = arith.constant 0 : index
    %9 = vector.load %arg11[%c0_15, %c0_16] : memref<1x16xf32, #tpu.memory_space<vmem>>, vector<1x16xf32>
    %cst = arith.constant dense<0.000000e+00> : vector<16x144xf32>
    %10 = tpu.matmul %0, %3, %cst {dimension_numbers = #tpu.dot_dimension_numbers<[1], [0], [0], [1], [0, 0, 1, 1], [], []>} : vector<16x128xf32>, vector<128x144xf32>, vector<16x144xf32> -> vector<16x144xf32>
    %11 = vector.extract_strided_slice %10 {offsets = [0, 0], sizes = [16, 128], strides = [1, 1]} : vector<16x144xf32> to vector<16x128xf32>
    %12 = vector.broadcast %4 : vector<1x128xf32> to vector<16x128xf32>
    %13 = arith.addf %11, %12 : vector<16x128xf32>
    %14 = vector.extract_strided_slice %10 {offsets = [0, 128], sizes = [16, 16], strides = [1, 1]} : vector<16x144xf32> to vector<16x16xf32>
    %15 = vector.extract_strided_slice %13 {offsets = [0, 0], sizes = [16, 64], strides = [1, 1]} : vector<16x128xf32> to vector<16x64xf32>
    %16 = tpu.transpose %15, [1, 0] : vector<16x64xf32> -> vector<64x16xf32>
    %cst_17 = arith.constant 0.000000e+00 : f32
    %17 = vector.broadcast %cst_17 : f32 to vector<16x16xf32>
    %18 = vector.extract_strided_slice %13 {offsets = [0, 0], sizes = [16, 16], strides = [1, 1]} : vector<16x128xf32> to vector<16x16xf32>
    %19 = vector.extract_strided_slice %13 {offsets = [0, 64], sizes = [16, 16], strides = [1, 1]} : vector<16x128xf32> to vector<16x16xf32>
    %20 = vector.extract_strided_slice %16 {offsets = [0, 0], sizes = [16, 16], strides = [1, 1]} : vector<64x16xf32> to vector<16x16xf32>
    %21 = vector.extract_strided_slice %5 {offsets = [0, 0], sizes = [1, 16], strides = [1, 1]} : vector<4x16xf32> to vector<1x16xf32>
    %22 = vector.extract_strided_slice %6 {offsets = [0, 0], sizes = [16, 1], strides = [1, 1]} : vector<64x1xf32> to vector<16x1xf32>
    %23 = vector.broadcast %21 : vector<1x16xf32> to vector<16x16xf32>
    %24 = arith.mulf %19, %23 : vector<16x16xf32>
    %cst_18 = arith.constant dense<0.000000e+00> : vector<16xf32>
    %25 = vector.multi_reduction <add>, %24, %cst_18 [1] : vector<16x16xf32> to vector<16xf32>
    %26 = vector.shape_cast %25 : vector<16xf32> to vector<16x1xf32>
    %27 = vector.broadcast %22 : vector<16x1xf32> to vector<16x16xf32>
    %28 = arith.mulf %20, %27 : vector<16x16xf32>
    %cst_19 = arith.constant dense<0.000000e+00> : vector<16xf32>
    %29 = vector.multi_reduction <add>, %28, %cst_19 [0] : vector<16x16xf32> to vector<16xf32>
    %30 = vector.shape_cast %29 : vector<16xf32> to vector<1x16xf32>
    %cst_20 = arith.constant 4.000000e-01 : f32
    %31 = vector.broadcast %cst_20 : f32 to vector<16x1xf32>
    %32 = arith.mulf %31, %22 : vector<16x1xf32>
    %cst_21 = arith.constant 0.000000e+00 : f32
    %33 = vector.broadcast %cst_21 : f32 to vector<16x16xf32>
    %34 = vector.extract_strided_slice %19 {offsets = [0, 0], sizes = [16, 1], strides = [1, 1]} : vector<16x16xf32> to vector<16x1xf32>
    %35 = vector.extract_strided_slice %20 {offsets = [0, 0], sizes = [1, 16], strides = [1, 1]} : vector<16x16xf32> to vector<1x16xf32>
    %36 = vector.broadcast %34 : vector<16x1xf32> to vector<16x16xf32>
    %37 = vector.broadcast %35 : vector<1x16xf32> to vector<16x16xf32>
    %38 = arith.addf %36, %37 : vector<16x16xf32>
    %39 = math.absf %38 : vector<16x16xf32>
    %40 = vector.extract_strided_slice %32 {offsets = [0, 0], sizes = [1, 1], strides = [1, 1]} : vector<16x1xf32> to vector<1x1xf32>
    %41 = vector.broadcast %40 : vector<1x1xf32> to vector<16x16xf32>
    %42 = arith.mulf %41, %39 : vector<16x16xf32>
    %43 = arith.addf %33, %42 : vector<16x16xf32>
    %44 = vector.extract_strided_slice %19 {offsets = [0, 1], sizes = [16, 1], strides = [1, 1]} : vector<16x16xf32> to vector<16x1xf32>
    %45 = vector.extract_strided_slice %20 {offsets = [1, 0], sizes = [1, 16], strides = [1, 1]} : vector<16x16xf32> to vector<1x16xf32>
    %46 = vector.broadcast %44 : vector<16x1xf32> to vector<16x16xf32>
    %47 = vector.broadcast %45 : vector<1x16xf32> to vector<16x16xf32>
    %48 = arith.addf %46, %47 : vector<16x16xf32>
    %49 = math.absf %48 : vector<16x16xf32>
    %50 = vector.extract_strided_slice %32 {offsets = [1, 0], sizes = [1, 1], strides = [1, 1]} : vector<16x1xf32> to vector<1x1xf32>
    %51 = vector.broadcast %50 : vector<1x1xf32> to vector<16x16xf32>
    %52 = arith.mulf %51, %49 : vector<16x16xf32>
    %53 = arith.addf %43, %52 : vector<16x16xf32>
    %54 = vector.extract_strided_slice %19 {offsets = [0, 2], sizes = [16, 1], strides = [1, 1]} : vector<16x16xf32> to vector<16x1xf32>
    %55 = vector.extract_strided_slice %20 {offsets = [2, 0], sizes = [1, 16], strides = [1, 1]} : vector<16x16xf32> to vector<1x16xf32>
    %56 = vector.broadcast %54 : vector<16x1xf32> to vector<16x16xf32>
    %57 = vector.broadcast %55 : vector<1x16xf32> to vector<16x16xf32>
    %58 = arith.addf %56, %57 : vector<16x16xf32>
    %59 = math.absf %58 : vector<16x16xf32>
    %60 = vector.extract_strided_slice %32 {offsets = [2, 0], sizes = [1, 1], strides = [1, 1]} : vector<16x1xf32> to vector<1x1xf32>
    %61 = vector.broadcast %60 : vector<1x1xf32> to vector<16x16xf32>
    %62 = arith.mulf %61, %59 : vector<16x16xf32>
    %63 = arith.addf %53, %62 : vector<16x16xf32>
    %64 = vector.extract_strided_slice %19 {offsets = [0, 3], sizes = [16, 1], strides = [1, 1]} : vector<16x16xf32> to vector<16x1xf32>
    %65 = vector.extract_strided_slice %20 {offsets = [3, 0], sizes = [1, 16], strides = [1, 1]} : vector<16x16xf32> to vector<1x16xf32>
    %66 = vector.broadcast %64 : vector<16x1xf32> to vector<16x16xf32>
    %67 = vector.broadcast %65 : vector<1x16xf32> to vector<16x16xf32>
    %68 = arith.addf %66, %67 : vector<16x16xf32>
    %69 = math.absf %68 : vector<16x16xf32>
    %70 = vector.extract_strided_slice %32 {offsets = [3, 0], sizes = [1, 1], strides = [1, 1]} : vector<16x1xf32> to vector<1x1xf32>
    %71 = vector.broadcast %70 : vector<1x1xf32> to vector<16x16xf32>
    %72 = arith.mulf %71, %69 : vector<16x16xf32>
    %73 = arith.addf %63, %72 : vector<16x16xf32>
    %74 = vector.extract_strided_slice %19 {offsets = [0, 4], sizes = [16, 1], strides = [1, 1]} : vector<16x16xf32> to vector<16x1xf32>
    %75 = vector.extract_strided_slice %20 {offsets = [4, 0], sizes = [1, 16], strides = [1, 1]} : vector<16x16xf32> to vector<1x16xf32>
    %76 = vector.broadcast %74 : vector<16x1xf32> to vector<16x16xf32>
    %77 = vector.broadcast %75 : vector<1x16xf32> to vector<16x16xf32>
    %78 = arith.addf %76, %77 : vector<16x16xf32>
    %79 = math.absf %78 : vector<16x16xf32>
    %80 = vector.extract_strided_slice %32 {offsets = [4, 0], sizes = [1, 1], strides = [1, 1]} : vector<16x1xf32> to vector<1x1xf32>
    %81 = vector.broadcast %80 : vector<1x1xf32> to vector<16x16xf32>
    %82 = arith.mulf %81, %79 : vector<16x16xf32>
    %83 = arith.addf %73, %82 : vector<16x16xf32>
    %84 = vector.extract_strided_slice %19 {offsets = [0, 5], sizes = [16, 1], strides = [1, 1]} : vector<16x16xf32> to vector<16x1xf32>
    %85 = vector.extract_strided_slice %20 {offsets = [5, 0], sizes = [1, 16], strides = [1, 1]} : vector<16x16xf32> to vector<1x16xf32>
    %86 = vector.broadcast %84 : vector<16x1xf32> to vector<16x16xf32>
    %87 = vector.broadcast %85 : vector<1x16xf32> to vector<16x16xf32>
    %88 = arith.addf %86, %87 : vector<16x16xf32>
    %89 = math.absf %88 : vector<16x16xf32>
    %90 = vector.extract_strided_slice %32 {offsets = [5, 0], sizes = [1, 1], strides = [1, 1]} : vector<16x1xf32> to vector<1x1xf32>
    %91 = vector.broadcast %90 : vector<1x1xf32> to vector<16x16xf32>
    %92 = arith.mulf %91, %89 : vector<16x16xf32>
    %93 = arith.addf %83, %92 : vector<16x16xf32>
    %94 = vector.extract_strided_slice %19 {offsets = [0, 6], sizes = [16, 1], strides = [1, 1]} : vector<16x16xf32> to vector<16x1xf32>
    %95 = vector.extract_strided_slice %20 {offsets = [6, 0], sizes = [1, 16], strides = [1, 1]} : vector<16x16xf32> to vector<1x16xf32>
    %96 = vector.broadcast %94 : vector<16x1xf32> to vector<16x16xf32>
    %97 = vector.broadcast %95 : vector<1x16xf32> to vector<16x16xf32>
    %98 = arith.addf %96, %97 : vector<16x16xf32>
    %99 = math.absf %98 : vector<16x16xf32>
    %100 = vector.extract_strided_slice %32 {offsets = [6, 0], sizes = [1, 1], strides = [1, 1]} : vector<16x1xf32> to vector<1x1xf32>
    %101 = vector.broadcast %100 : vector<1x1xf32> to vector<16x16xf32>
    %102 = arith.mulf %101, %99 : vector<16x16xf32>
    %103 = arith.addf %93, %102 : vector<16x16xf32>
    %104 = vector.extract_strided_slice %19 {offsets = [0, 7], sizes = [16, 1], strides = [1, 1]} : vector<16x16xf32> to vector<16x1xf32>
    %105 = vector.extract_strided_slice %20 {offsets = [7, 0], sizes = [1, 16], strides = [1, 1]} : vector<16x16xf32> to vector<1x16xf32>
    %106 = vector.broadcast %104 : vector<16x1xf32> to vector<16x16xf32>
    %107 = vector.broadcast %105 : vector<1x16xf32> to vector<16x16xf32>
    %108 = arith.addf %106, %107 : vector<16x16xf32>
    %109 = math.absf %108 : vector<16x16xf32>
    %110 = vector.extract_strided_slice %32 {offsets = [7, 0], sizes = [1, 1], strides = [1, 1]} : vector<16x1xf32> to vector<1x1xf32>
    %111 = vector.broadcast %110 : vector<1x1xf32> to vector<16x16xf32>
    %112 = arith.mulf %111, %109 : vector<16x16xf32>
    %113 = arith.addf %103, %112 : vector<16x16xf32>
    %114 = vector.extract_strided_slice %19 {offsets = [0, 8], sizes = [16, 1], strides = [1, 1]} : vector<16x16xf32> to vector<16x1xf32>
    %115 = vector.extract_strided_slice %20 {offsets = [8, 0], sizes = [1, 16], strides = [1, 1]} : vector<16x16xf32> to vector<1x16xf32>
    %116 = vector.broadcast %114 : vector<16x1xf32> to vector<16x16xf32>
    %117 = vector.broadcast %115 : vector<1x16xf32> to vector<16x16xf32>
    %118 = arith.addf %116, %117 : vector<16x16xf32>
    %119 = math.absf %118 : vector<16x16xf32>
    %120 = vector.extract_strided_slice %32 {offsets = [8, 0], sizes = [1, 1], strides = [1, 1]} : vector<16x1xf32> to vector<1x1xf32>
    %121 = vector.broadcast %120 : vector<1x1xf32> to vector<16x16xf32>
    %122 = arith.mulf %121, %119 : vector<16x16xf32>
    %123 = arith.addf %113, %122 : vector<16x16xf32>
    %124 = vector.extract_strided_slice %19 {offsets = [0, 9], sizes = [16, 1], strides = [1, 1]} : vector<16x16xf32> to vector<16x1xf32>
    %125 = vector.extract_strided_slice %20 {offsets = [9, 0], sizes = [1, 16], strides = [1, 1]} : vector<16x16xf32> to vector<1x16xf32>
    %126 = vector.broadcast %124 : vector<16x1xf32> to vector<16x16xf32>
    %127 = vector.broadcast %125 : vector<1x16xf32> to vector<16x16xf32>
    %128 = arith.addf %126, %127 : vector<16x16xf32>
    %129 = math.absf %128 : vector<16x16xf32>
    %130 = vector.extract_strided_slice %32 {offsets = [9, 0], sizes = [1, 1], strides = [1, 1]} : vector<16x1xf32> to vector<1x1xf32>
    %131 = vector.broadcast %130 : vector<1x1xf32> to vector<16x16xf32>
    %132 = arith.mulf %131, %129 : vector<16x16xf32>
    %133 = arith.addf %123, %132 : vector<16x16xf32>
    %134 = vector.extract_strided_slice %19 {offsets = [0, 10], sizes = [16, 1], strides = [1, 1]} : vector<16x16xf32> to vector<16x1xf32>
    %135 = vector.extract_strided_slice %20 {offsets = [10, 0], sizes = [1, 16], strides = [1, 1]} : vector<16x16xf32> to vector<1x16xf32>
    %136 = vector.broadcast %134 : vector<16x1xf32> to vector<16x16xf32>
    %137 = vector.broadcast %135 : vector<1x16xf32> to vector<16x16xf32>
    %138 = arith.addf %136, %137 : vector<16x16xf32>
    %139 = math.absf %138 : vector<16x16xf32>
    %140 = vector.extract_strided_slice %32 {offsets = [10, 0], sizes = [1, 1], strides = [1, 1]} : vector<16x1xf32> to vector<1x1xf32>
    %141 = vector.broadcast %140 : vector<1x1xf32> to vector<16x16xf32>
    %142 = arith.mulf %141, %139 : vector<16x16xf32>
    %143 = arith.addf %133, %142 : vector<16x16xf32>
    %144 = vector.extract_strided_slice %19 {offsets = [0, 11], sizes = [16, 1], strides = [1, 1]} : vector<16x16xf32> to vector<16x1xf32>
    %145 = vector.extract_strided_slice %20 {offsets = [11, 0], sizes = [1, 16], strides = [1, 1]} : vector<16x16xf32> to vector<1x16xf32>
    %146 = vector.broadcast %144 : vector<16x1xf32> to vector<16x16xf32>
    %147 = vector.broadcast %145 : vector<1x16xf32> to vector<16x16xf32>
    %148 = arith.addf %146, %147 : vector<16x16xf32>
    %149 = math.absf %148 : vector<16x16xf32>
    %150 = vector.extract_strided_slice %32 {offsets = [11, 0], sizes = [1, 1], strides = [1, 1]} : vector<16x1xf32> to vector<1x1xf32>
    %151 = vector.broadcast %150 : vector<1x1xf32> to vector<16x16xf32>
    %152 = arith.mulf %151, %149 : vector<16x16xf32>
    %153 = arith.addf %143, %152 : vector<16x16xf32>
    %154 = vector.extract_strided_slice %19 {offsets = [0, 12], sizes = [16, 1], strides = [1, 1]} : vector<16x16xf32> to vector<16x1xf32>
    %155 = vector.extract_strided_slice %20 {offsets = [12, 0], sizes = [1, 16], strides = [1, 1]} : vector<16x16xf32> to vector<1x16xf32>
    %156 = vector.broadcast %154 : vector<16x1xf32> to vector<16x16xf32>
    %157 = vector.broadcast %155 : vector<1x16xf32> to vector<16x16xf32>
    %158 = arith.addf %156, %157 : vector<16x16xf32>
    %159 = math.absf %158 : vector<16x16xf32>
    %160 = vector.extract_strided_slice %32 {offsets = [12, 0], sizes = [1, 1], strides = [1, 1]} : vector<16x1xf32> to vector<1x1xf32>
    %161 = vector.broadcast %160 : vector<1x1xf32> to vector<16x16xf32>
    %162 = arith.mulf %161, %159 : vector<16x16xf32>
    %163 = arith.addf %153, %162 : vector<16x16xf32>
    %164 = vector.extract_strided_slice %19 {offsets = [0, 13], sizes = [16, 1], strides = [1, 1]} : vector<16x16xf32> to vector<16x1xf32>
    %165 = vector.extract_strided_slice %20 {offsets = [13, 0], sizes = [1, 16], strides = [1, 1]} : vector<16x16xf32> to vector<1x16xf32>
    %166 = vector.broadcast %164 : vector<16x1xf32> to vector<16x16xf32>
    %167 = vector.broadcast %165 : vector<1x16xf32> to vector<16x16xf32>
    %168 = arith.addf %166, %167 : vector<16x16xf32>
    %169 = math.absf %168 : vector<16x16xf32>
    %170 = vector.extract_strided_slice %32 {offsets = [13, 0], sizes = [1, 1], strides = [1, 1]} : vector<16x1xf32> to vector<1x1xf32>
    %171 = vector.broadcast %170 : vector<1x1xf32> to vector<16x16xf32>
    %172 = arith.mulf %171, %169 : vector<16x16xf32>
    %173 = arith.addf %163, %172 : vector<16x16xf32>
    %174 = vector.extract_strided_slice %19 {offsets = [0, 14], sizes = [16, 1], strides = [1, 1]} : vector<16x16xf32> to vector<16x1xf32>
    %175 = vector.extract_strided_slice %20 {offsets = [14, 0], sizes = [1, 16], strides = [1, 1]} : vector<16x16xf32> to vector<1x16xf32>
    %176 = vector.broadcast %174 : vector<16x1xf32> to vector<16x16xf32>
    %177 = vector.broadcast %175 : vector<1x16xf32> to vector<16x16xf32>
    %178 = arith.addf %176, %177 : vector<16x16xf32>
    %179 = math.absf %178 : vector<16x16xf32>
    %180 = vector.extract_strided_slice %32 {offsets = [14, 0], sizes = [1, 1], strides = [1, 1]} : vector<16x1xf32> to vector<1x1xf32>
    %181 = vector.broadcast %180 : vector<1x1xf32> to vector<16x16xf32>
    %182 = arith.mulf %181, %179 : vector<16x16xf32>
    %183 = arith.addf %173, %182 : vector<16x16xf32>
    %184 = vector.extract_strided_slice %19 {offsets = [0, 15], sizes = [16, 1], strides = [1, 1]} : vector<16x16xf32> to vector<16x1xf32>
    %185 = vector.extract_strided_slice %20 {offsets = [15, 0], sizes = [1, 16], strides = [1, 1]} : vector<16x16xf32> to vector<1x16xf32>
    %186 = vector.broadcast %184 : vector<16x1xf32> to vector<16x16xf32>
    %187 = vector.broadcast %185 : vector<1x16xf32> to vector<16x16xf32>
    %188 = arith.addf %186, %187 : vector<16x16xf32>
    %189 = math.absf %188 : vector<16x16xf32>
    %190 = vector.extract_strided_slice %32 {offsets = [15, 0], sizes = [1, 1], strides = [1, 1]} : vector<16x1xf32> to vector<1x1xf32>
    %191 = vector.broadcast %190 : vector<1x1xf32> to vector<16x16xf32>
    %192 = arith.mulf %191, %189 : vector<16x16xf32>
    %193 = arith.addf %183, %192 : vector<16x16xf32>
    %194 = vector.broadcast %26 : vector<16x1xf32> to vector<16x16xf32>
    %195 = vector.broadcast %30 : vector<1x16xf32> to vector<16x16xf32>
    %196 = arith.addf %194, %195 : vector<16x16xf32>
    %cst_22 = arith.constant 6.000000e-01 : f32
    %197 = vector.broadcast %cst_22 : f32 to vector<16x16xf32>
    %198 = arith.mulf %197, %196 : vector<16x16xf32>
    %199 = arith.addf %198, %193 : vector<16x16xf32>
    %200 = arith.addf %199, %2 : vector<16x16xf32>
    %cst_23 = arith.constant dense<0xFF800000> : vector<16xf32>
    %201 = vector.multi_reduction <maximumf>, %200, %cst_23 [1] : vector<16x16xf32> to vector<16xf32>
    %202 = vector.shape_cast %201 : vector<16xf32> to vector<16x1xf32>
    %203 = vector.broadcast %202 : vector<16x1xf32> to vector<16x16xf32>
    %204 = arith.subf %200, %203 : vector<16x16xf32>
    %205 = math.exp %204 : vector<16x16xf32>
    %cst_24 = arith.constant dense<0.000000e+00> : vector<16x16xf32>
    %206 = tpu.matmul %205, %18, %cst_24 {dimension_numbers = #tpu.dot_dimension_numbers<[1], [0], [0], [1], [0, 0, 1, 1], [], []>} : vector<16x16xf32>, vector<16x16xf32>, vector<16x16xf32> -> vector<16x16xf32>
    %cst_25 = arith.constant dense<0.000000e+00> : vector<16xf32>
    %207 = vector.multi_reduction <add>, %205, %cst_25 [1] : vector<16x16xf32> to vector<16xf32>
    %208 = vector.shape_cast %207 : vector<16xf32> to vector<16x1xf32>
    %209 = tpu.reciprocal %208 {approx = true} : vector<16x1xf32> -> vector<16x1xf32>
    %210 = vector.broadcast %209 : vector<16x1xf32> to vector<16x16xf32>
    %211 = arith.mulf %206, %210 : vector<16x16xf32>
    %212 = arith.addf %17, %211 : vector<16x16xf32>
    %213 = vector.extract_strided_slice %13 {offsets = [0, 16], sizes = [16, 16], strides = [1, 1]} : vector<16x128xf32> to vector<16x16xf32>
    %214 = vector.extract_strided_slice %13 {offsets = [0, 80], sizes = [16, 16], strides = [1, 1]} : vector<16x128xf32> to vector<16x16xf32>
    %215 = vector.extract_strided_slice %16 {offsets = [16, 0], sizes = [16, 16], strides = [1, 1]} : vector<64x16xf32> to vector<16x16xf32>
    %216 = vector.extract_strided_slice %5 {offsets = [1, 0], sizes = [1, 16], strides = [1, 1]} : vector<4x16xf32> to vector<1x16xf32>
    %217 = vector.extract_strided_slice %6 {offsets = [16, 0], sizes = [16, 1], strides = [1, 1]} : vector<64x1xf32> to vector<16x1xf32>
    %218 = vector.broadcast %216 : vector<1x16xf32> to vector<16x16xf32>
    %219 = arith.mulf %214, %218 : vector<16x16xf32>
    %cst_26 = arith.constant dense<0.000000e+00> : vector<16xf32>
    %220 = vector.multi_reduction <add>, %219, %cst_26 [1] : vector<16x16xf32> to vector<16xf32>
    %221 = vector.shape_cast %220 : vector<16xf32> to vector<16x1xf32>
    %222 = vector.broadcast %217 : vector<16x1xf32> to vector<16x16xf32>
    %223 = arith.mulf %215, %222 : vector<16x16xf32>
    %cst_27 = arith.constant dense<0.000000e+00> : vector<16xf32>
    %224 = vector.multi_reduction <add>, %223, %cst_27 [0] : vector<16x16xf32> to vector<16xf32>
    %225 = vector.shape_cast %224 : vector<16xf32> to vector<1x16xf32>
    %cst_28 = arith.constant 4.000000e-01 : f32
    %226 = vector.broadcast %cst_28 : f32 to vector<16x1xf32>
    %227 = arith.mulf %226, %217 : vector<16x1xf32>
    %cst_29 = arith.constant 0.000000e+00 : f32
    %228 = vector.broadcast %cst_29 : f32 to vector<16x16xf32>
    %229 = vector.extract_strided_slice %214 {offsets = [0, 0], sizes = [16, 1], strides = [1, 1]} : vector<16x16xf32> to vector<16x1xf32>
    %230 = vector.extract_strided_slice %215 {offsets = [0, 0], sizes = [1, 16], strides = [1, 1]} : vector<16x16xf32> to vector<1x16xf32>
    %231 = vector.broadcast %229 : vector<16x1xf32> to vector<16x16xf32>
    %232 = vector.broadcast %230 : vector<1x16xf32> to vector<16x16xf32>
    %233 = arith.addf %231, %232 : vector<16x16xf32>
    %234 = math.absf %233 : vector<16x16xf32>
    %235 = vector.extract_strided_slice %227 {offsets = [0, 0], sizes = [1, 1], strides = [1, 1]} : vector<16x1xf32> to vector<1x1xf32>
    %236 = vector.broadcast %235 : vector<1x1xf32> to vector<16x16xf32>
    %237 = arith.mulf %236, %234 : vector<16x16xf32>
    %238 = arith.addf %228, %237 : vector<16x16xf32>
    %239 = vector.extract_strided_slice %214 {offsets = [0, 1], sizes = [16, 1], strides = [1, 1]} : vector<16x16xf32> to vector<16x1xf32>
    %240 = vector.extract_strided_slice %215 {offsets = [1, 0], sizes = [1, 16], strides = [1, 1]} : vector<16x16xf32> to vector<1x16xf32>
    %241 = vector.broadcast %239 : vector<16x1xf32> to vector<16x16xf32>
    %242 = vector.broadcast %240 : vector<1x16xf32> to vector<16x16xf32>
    %243 = arith.addf %241, %242 : vector<16x16xf32>
    %244 = math.absf %243 : vector<16x16xf32>
    %245 = vector.extract_strided_slice %227 {offsets = [1, 0], sizes = [1, 1], strides = [1, 1]} : vector<16x1xf32> to vector<1x1xf32>
    %246 = vector.broadcast %245 : vector<1x1xf32> to vector<16x16xf32>
    %247 = arith.mulf %246, %244 : vector<16x16xf32>
    %248 = arith.addf %238, %247 : vector<16x16xf32>
    %249 = vector.extract_strided_slice %214 {offsets = [0, 2], sizes = [16, 1], strides = [1, 1]} : vector<16x16xf32> to vector<16x1xf32>
    %250 = vector.extract_strided_slice %215 {offsets = [2, 0], sizes = [1, 16], strides = [1, 1]} : vector<16x16xf32> to vector<1x16xf32>
    %251 = vector.broadcast %249 : vector<16x1xf32> to vector<16x16xf32>
    %252 = vector.broadcast %250 : vector<1x16xf32> to vector<16x16xf32>
    %253 = arith.addf %251, %252 : vector<16x16xf32>
    %254 = math.absf %253 : vector<16x16xf32>
    %255 = vector.extract_strided_slice %227 {offsets = [2, 0], sizes = [1, 1], strides = [1, 1]} : vector<16x1xf32> to vector<1x1xf32>
    %256 = vector.broadcast %255 : vector<1x1xf32> to vector<16x16xf32>
    %257 = arith.mulf %256, %254 : vector<16x16xf32>
    %258 = arith.addf %248, %257 : vector<16x16xf32>
    %259 = vector.extract_strided_slice %214 {offsets = [0, 3], sizes = [16, 1], strides = [1, 1]} : vector<16x16xf32> to vector<16x1xf32>
    %260 = vector.extract_strided_slice %215 {offsets = [3, 0], sizes = [1, 16], strides = [1, 1]} : vector<16x16xf32> to vector<1x16xf32>
    %261 = vector.broadcast %259 : vector<16x1xf32> to vector<16x16xf32>
    %262 = vector.broadcast %260 : vector<1x16xf32> to vector<16x16xf32>
    %263 = arith.addf %261, %262 : vector<16x16xf32>
    %264 = math.absf %263 : vector<16x16xf32>
    %265 = vector.extract_strided_slice %227 {offsets = [3, 0], sizes = [1, 1], strides = [1, 1]} : vector<16x1xf32> to vector<1x1xf32>
    %266 = vector.broadcast %265 : vector<1x1xf32> to vector<16x16xf32>
    %267 = arith.mulf %266, %264 : vector<16x16xf32>
    %268 = arith.addf %258, %267 : vector<16x16xf32>
    %269 = vector.extract_strided_slice %214 {offsets = [0, 4], sizes = [16, 1], strides = [1, 1]} : vector<16x16xf32> to vector<16x1xf32>
    %270 = vector.extract_strided_slice %215 {offsets = [4, 0], sizes = [1, 16], strides = [1, 1]} : vector<16x16xf32> to vector<1x16xf32>
    %271 = vector.broadcast %269 : vector<16x1xf32> to vector<16x16xf32>
    %272 = vector.broadcast %270 : vector<1x16xf32> to vector<16x16xf32>
    %273 = arith.addf %271, %272 : vector<16x16xf32>
    %274 = math.absf %273 : vector<16x16xf32>
    %275 = vector.extract_strided_slice %227 {offsets = [4, 0], sizes = [1, 1], strides = [1, 1]} : vector<16x1xf32> to vector<1x1xf32>
    %276 = vector.broadcast %275 : vector<1x1xf32> to vector<16x16xf32>
    %277 = arith.mulf %276, %274 : vector<16x16xf32>
    %278 = arith.addf %268, %277 : vector<16x16xf32>
    %279 = vector.extract_strided_slice %214 {offsets = [0, 5], sizes = [16, 1], strides = [1, 1]} : vector<16x16xf32> to vector<16x1xf32>
    %280 = vector.extract_strided_slice %215 {offsets = [5, 0], sizes = [1, 16], strides = [1, 1]} : vector<16x16xf32> to vector<1x16xf32>
    %281 = vector.broadcast %279 : vector<16x1xf32> to vector<16x16xf32>
    %282 = vector.broadcast %280 : vector<1x16xf32> to vector<16x16xf32>
    %283 = arith.addf %281, %282 : vector<16x16xf32>
    %284 = math.absf %283 : vector<16x16xf32>
    %285 = vector.extract_strided_slice %227 {offsets = [5, 0], sizes = [1, 1], strides = [1, 1]} : vector<16x1xf32> to vector<1x1xf32>
    %286 = vector.broadcast %285 : vector<1x1xf32> to vector<16x16xf32>
    %287 = arith.mulf %286, %284 : vector<16x16xf32>
    %288 = arith.addf %278, %287 : vector<16x16xf32>
    %289 = vector.extract_strided_slice %214 {offsets = [0, 6], sizes = [16, 1], strides = [1, 1]} : vector<16x16xf32> to vector<16x1xf32>
    %290 = vector.extract_strided_slice %215 {offsets = [6, 0], sizes = [1, 16], strides = [1, 1]} : vector<16x16xf32> to vector<1x16xf32>
    %291 = vector.broadcast %289 : vector<16x1xf32> to vector<16x16xf32>
    %292 = vector.broadcast %290 : vector<1x16xf32> to vector<16x16xf32>
    %293 = arith.addf %291, %292 : vector<16x16xf32>
    %294 = math.absf %293 : vector<16x16xf32>
    %295 = vector.extract_strided_slice %227 {offsets = [6, 0], sizes = [1, 1], strides = [1, 1]} : vector<16x1xf32> to vector<1x1xf32>
    %296 = vector.broadcast %295 : vector<1x1xf32> to vector<16x16xf32>
    %297 = arith.mulf %296, %294 : vector<16x16xf32>
    %298 = arith.addf %288, %297 : vector<16x16xf32>
    %299 = vector.extract_strided_slice %214 {offsets = [0, 7], sizes = [16, 1], strides = [1, 1]} : vector<16x16xf32> to vector<16x1xf32>
    %300 = vector.extract_strided_slice %215 {offsets = [7, 0], sizes = [1, 16], strides = [1, 1]} : vector<16x16xf32> to vector<1x16xf32>
    %301 = vector.broadcast %299 : vector<16x1xf32> to vector<16x16xf32>
    %302 = vector.broadcast %300 : vector<1x16xf32> to vector<16x16xf32>
    %303 = arith.addf %301, %302 : vector<16x16xf32>
    %304 = math.absf %303 : vector<16x16xf32>
    %305 = vector.extract_strided_slice %227 {offsets = [7, 0], sizes = [1, 1], strides = [1, 1]} : vector<16x1xf32> to vector<1x1xf32>
    %306 = vector.broadcast %305 : vector<1x1xf32> to vector<16x16xf32>
    %307 = arith.mulf %306, %304 : vector<16x16xf32>
    %308 = arith.addf %298, %307 : vector<16x16xf32>
    %309 = vector.extract_strided_slice %214 {offsets = [0, 8], sizes = [16, 1], strides = [1, 1]} : vector<16x16xf32> to vector<16x1xf32>
    %310 = vector.extract_strided_slice %215 {offsets = [8, 0], sizes = [1, 16], strides = [1, 1]} : vector<16x16xf32> to vector<1x16xf32>
    %311 = vector.broadcast %309 : vector<16x1xf32> to vector<16x16xf32>
    %312 = vector.broadcast %310 : vector<1x16xf32> to vector<16x16xf32>
    %313 = arith.addf %311, %312 : vector<16x16xf32>
    %314 = math.absf %313 : vector<16x16xf32>
    %315 = vector.extract_strided_slice %227 {offsets = [8, 0], sizes = [1, 1], strides = [1, 1]} : vector<16x1xf32> to vector<1x1xf32>
    %316 = vector.broadcast %315 : vector<1x1xf32> to vector<16x16xf32>
    %317 = arith.mulf %316, %314 : vector<16x16xf32>
    %318 = arith.addf %308, %317 : vector<16x16xf32>
    %319 = vector.extract_strided_slice %214 {offsets = [0, 9], sizes = [16, 1], strides = [1, 1]} : vector<16x16xf32> to vector<16x1xf32>
    %320 = vector.extract_strided_slice %215 {offsets = [9, 0], sizes = [1, 16], strides = [1, 1]} : vector<16x16xf32> to vector<1x16xf32>
    %321 = vector.broadcast %319 : vector<16x1xf32> to vector<16x16xf32>
    %322 = vector.broadcast %320 : vector<1x16xf32> to vector<16x16xf32>
    %323 = arith.addf %321, %322 : vector<16x16xf32>
    %324 = math.absf %323 : vector<16x16xf32>
    %325 = vector.extract_strided_slice %227 {offsets = [9, 0], sizes = [1, 1], strides = [1, 1]} : vector<16x1xf32> to vector<1x1xf32>
    %326 = vector.broadcast %325 : vector<1x1xf32> to vector<16x16xf32>
    %327 = arith.mulf %326, %324 : vector<16x16xf32>
    %328 = arith.addf %318, %327 : vector<16x16xf32>
    %329 = vector.extract_strided_slice %214 {offsets = [0, 10], sizes = [16, 1], strides = [1, 1]} : vector<16x16xf32> to vector<16x1xf32>
    %330 = vector.extract_strided_slice %215 {offsets = [10, 0], sizes = [1, 16], strides = [1, 1]} : vector<16x16xf32> to vector<1x16xf32>
    %331 = vector.broadcast %329 : vector<16x1xf32> to vector<16x16xf32>
    %332 = vector.broadcast %330 : vector<1x16xf32> to vector<16x16xf32>
    %333 = arith.addf %331, %332 : vector<16x16xf32>
    %334 = math.absf %333 : vector<16x16xf32>
    %335 = vector.extract_strided_slice %227 {offsets = [10, 0], sizes = [1, 1], strides = [1, 1]} : vector<16x1xf32> to vector<1x1xf32>
    %336 = vector.broadcast %335 : vector<1x1xf32> to vector<16x16xf32>
    %337 = arith.mulf %336, %334 : vector<16x16xf32>
    %338 = arith.addf %328, %337 : vector<16x16xf32>
    %339 = vector.extract_strided_slice %214 {offsets = [0, 11], sizes = [16, 1], strides = [1, 1]} : vector<16x16xf32> to vector<16x1xf32>
    %340 = vector.extract_strided_slice %215 {offsets = [11, 0], sizes = [1, 16], strides = [1, 1]} : vector<16x16xf32> to vector<1x16xf32>
    %341 = vector.broadcast %339 : vector<16x1xf32> to vector<16x16xf32>
    %342 = vector.broadcast %340 : vector<1x16xf32> to vector<16x16xf32>
    %343 = arith.addf %341, %342 : vector<16x16xf32>
    %344 = math.absf %343 : vector<16x16xf32>
    %345 = vector.extract_strided_slice %227 {offsets = [11, 0], sizes = [1, 1], strides = [1, 1]} : vector<16x1xf32> to vector<1x1xf32>
    %346 = vector.broadcast %345 : vector<1x1xf32> to vector<16x16xf32>
    %347 = arith.mulf %346, %344 : vector<16x16xf32>
    %348 = arith.addf %338, %347 : vector<16x16xf32>
    %349 = vector.extract_strided_slice %214 {offsets = [0, 12], sizes = [16, 1], strides = [1, 1]} : vector<16x16xf32> to vector<16x1xf32>
    %350 = vector.extract_strided_slice %215 {offsets = [12, 0], sizes = [1, 16], strides = [1, 1]} : vector<16x16xf32> to vector<1x16xf32>
    %351 = vector.broadcast %349 : vector<16x1xf32> to vector<16x16xf32>
    %352 = vector.broadcast %350 : vector<1x16xf32> to vector<16x16xf32>
    %353 = arith.addf %351, %352 : vector<16x16xf32>
    %354 = math.absf %353 : vector<16x16xf32>
    %355 = vector.extract_strided_slice %227 {offsets = [12, 0], sizes = [1, 1], strides = [1, 1]} : vector<16x1xf32> to vector<1x1xf32>
    %356 = vector.broadcast %355 : vector<1x1xf32> to vector<16x16xf32>
    %357 = arith.mulf %356, %354 : vector<16x16xf32>
    %358 = arith.addf %348, %357 : vector<16x16xf32>
    %359 = vector.extract_strided_slice %214 {offsets = [0, 13], sizes = [16, 1], strides = [1, 1]} : vector<16x16xf32> to vector<16x1xf32>
    %360 = vector.extract_strided_slice %215 {offsets = [13, 0], sizes = [1, 16], strides = [1, 1]} : vector<16x16xf32> to vector<1x16xf32>
    %361 = vector.broadcast %359 : vector<16x1xf32> to vector<16x16xf32>
    %362 = vector.broadcast %360 : vector<1x16xf32> to vector<16x16xf32>
    %363 = arith.addf %361, %362 : vector<16x16xf32>
    %364 = math.absf %363 : vector<16x16xf32>
    %365 = vector.extract_strided_slice %227 {offsets = [13, 0], sizes = [1, 1], strides = [1, 1]} : vector<16x1xf32> to vector<1x1xf32>
    %366 = vector.broadcast %365 : vector<1x1xf32> to vector<16x16xf32>
    %367 = arith.mulf %366, %364 : vector<16x16xf32>
    %368 = arith.addf %358, %367 : vector<16x16xf32>
    %369 = vector.extract_strided_slice %214 {offsets = [0, 14], sizes = [16, 1], strides = [1, 1]} : vector<16x16xf32> to vector<16x1xf32>
    %370 = vector.extract_strided_slice %215 {offsets = [14, 0], sizes = [1, 16], strides = [1, 1]} : vector<16x16xf32> to vector<1x16xf32>
    %371 = vector.broadcast %369 : vector<16x1xf32> to vector<16x16xf32>
    %372 = vector.broadcast %370 : vector<1x16xf32> to vector<16x16xf32>
    %373 = arith.addf %371, %372 : vector<16x16xf32>
    %374 = math.absf %373 : vector<16x16xf32>
    %375 = vector.extract_strided_slice %227 {offsets = [14, 0], sizes = [1, 1], strides = [1, 1]} : vector<16x1xf32> to vector<1x1xf32>
    %376 = vector.broadcast %375 : vector<1x1xf32> to vector<16x16xf32>
    %377 = arith.mulf %376, %374 : vector<16x16xf32>
    %378 = arith.addf %368, %377 : vector<16x16xf32>
    %379 = vector.extract_strided_slice %214 {offsets = [0, 15], sizes = [16, 1], strides = [1, 1]} : vector<16x16xf32> to vector<16x1xf32>
    %380 = vector.extract_strided_slice %215 {offsets = [15, 0], sizes = [1, 16], strides = [1, 1]} : vector<16x16xf32> to vector<1x16xf32>
    %381 = vector.broadcast %379 : vector<16x1xf32> to vector<16x16xf32>
    %382 = vector.broadcast %380 : vector<1x16xf32> to vector<16x16xf32>
    %383 = arith.addf %381, %382 : vector<16x16xf32>
    %384 = math.absf %383 : vector<16x16xf32>
    %385 = vector.extract_strided_slice %227 {offsets = [15, 0], sizes = [1, 1], strides = [1, 1]} : vector<16x1xf32> to vector<1x1xf32>
    %386 = vector.broadcast %385 : vector<1x1xf32> to vector<16x16xf32>
    %387 = arith.mulf %386, %384 : vector<16x16xf32>
    %388 = arith.addf %378, %387 : vector<16x16xf32>
    %389 = vector.broadcast %221 : vector<16x1xf32> to vector<16x16xf32>
    %390 = vector.broadcast %225 : vector<1x16xf32> to vector<16x16xf32>
    %391 = arith.addf %389, %390 : vector<16x16xf32>
    %cst_30 = arith.constant 6.000000e-01 : f32
    %392 = vector.broadcast %cst_30 : f32 to vector<16x16xf32>
    %393 = arith.mulf %392, %391 : vector<16x16xf32>
    %394 = arith.addf %393, %388 : vector<16x16xf32>
    %395 = arith.addf %394, %2 : vector<16x16xf32>
    %cst_31 = arith.constant dense<0xFF800000> : vector<16xf32>
    %396 = vector.multi_reduction <maximumf>, %395, %cst_31 [1] : vector<16x16xf32> to vector<16xf32>
    %397 = vector.shape_cast %396 : vector<16xf32> to vector<16x1xf32>
    %398 = vector.broadcast %397 : vector<16x1xf32> to vector<16x16xf32>
    %399 = arith.subf %395, %398 : vector<16x16xf32>
    %400 = math.exp %399 : vector<16x16xf32>
    %cst_32 = arith.constant dense<0.000000e+00> : vector<16x16xf32>
    %401 = tpu.matmul %400, %213, %cst_32 {dimension_numbers = #tpu.dot_dimension_numbers<[1], [0], [0], [1], [0, 0, 1, 1], [], []>} : vector<16x16xf32>, vector<16x16xf32>, vector<16x16xf32> -> vector<16x16xf32>
    %cst_33 = arith.constant dense<0.000000e+00> : vector<16xf32>
    %402 = vector.multi_reduction <add>, %400, %cst_33 [1] : vector<16x16xf32> to vector<16xf32>
    %403 = vector.shape_cast %402 : vector<16xf32> to vector<16x1xf32>
    %404 = tpu.reciprocal %403 {approx = true} : vector<16x1xf32> -> vector<16x1xf32>
    %405 = vector.broadcast %404 : vector<16x1xf32> to vector<16x16xf32>
    %406 = arith.mulf %401, %405 : vector<16x16xf32>
    %407 = arith.addf %212, %406 : vector<16x16xf32>
    %408 = vector.extract_strided_slice %13 {offsets = [0, 32], sizes = [16, 16], strides = [1, 1]} : vector<16x128xf32> to vector<16x16xf32>
    %409 = vector.extract_strided_slice %13 {offsets = [0, 96], sizes = [16, 16], strides = [1, 1]} : vector<16x128xf32> to vector<16x16xf32>
    %410 = vector.extract_strided_slice %16 {offsets = [32, 0], sizes = [16, 16], strides = [1, 1]} : vector<64x16xf32> to vector<16x16xf32>
    %411 = vector.extract_strided_slice %5 {offsets = [2, 0], sizes = [1, 16], strides = [1, 1]} : vector<4x16xf32> to vector<1x16xf32>
    %412 = vector.extract_strided_slice %6 {offsets = [32, 0], sizes = [16, 1], strides = [1, 1]} : vector<64x1xf32> to vector<16x1xf32>
    %413 = vector.broadcast %411 : vector<1x16xf32> to vector<16x16xf32>
    %414 = arith.mulf %409, %413 : vector<16x16xf32>
    %cst_34 = arith.constant dense<0.000000e+00> : vector<16xf32>
    %415 = vector.multi_reduction <add>, %414, %cst_34 [1] : vector<16x16xf32> to vector<16xf32>
    %416 = vector.shape_cast %415 : vector<16xf32> to vector<16x1xf32>
    %417 = vector.broadcast %412 : vector<16x1xf32> to vector<16x16xf32>
    %418 = arith.mulf %410, %417 : vector<16x16xf32>
    %cst_35 = arith.constant dense<0.000000e+00> : vector<16xf32>
    %419 = vector.multi_reduction <add>, %418, %cst_35 [0] : vector<16x16xf32> to vector<16xf32>
    %420 = vector.shape_cast %419 : vector<16xf32> to vector<1x16xf32>
    %cst_36 = arith.constant 4.000000e-01 : f32
    %421 = vector.broadcast %cst_36 : f32 to vector<16x1xf32>
    %422 = arith.mulf %421, %412 : vector<16x1xf32>
    %cst_37 = arith.constant 0.000000e+00 : f32
    %423 = vector.broadcast %cst_37 : f32 to vector<16x16xf32>
    %424 = vector.extract_strided_slice %409 {offsets = [0, 0], sizes = [16, 1], strides = [1, 1]} : vector<16x16xf32> to vector<16x1xf32>
    %425 = vector.extract_strided_slice %410 {offsets = [0, 0], sizes = [1, 16], strides = [1, 1]} : vector<16x16xf32> to vector<1x16xf32>
    %426 = vector.broadcast %424 : vector<16x1xf32> to vector<16x16xf32>
    %427 = vector.broadcast %425 : vector<1x16xf32> to vector<16x16xf32>
    %428 = arith.addf %426, %427 : vector<16x16xf32>
    %429 = math.absf %428 : vector<16x16xf32>
    %430 = vector.extract_strided_slice %422 {offsets = [0, 0], sizes = [1, 1], strides = [1, 1]} : vector<16x1xf32> to vector<1x1xf32>
    %431 = vector.broadcast %430 : vector<1x1xf32> to vector<16x16xf32>
    %432 = arith.mulf %431, %429 : vector<16x16xf32>
    %433 = arith.addf %423, %432 : vector<16x16xf32>
    %434 = vector.extract_strided_slice %409 {offsets = [0, 1], sizes = [16, 1], strides = [1, 1]} : vector<16x16xf32> to vector<16x1xf32>
    %435 = vector.extract_strided_slice %410 {offsets = [1, 0], sizes = [1, 16], strides = [1, 1]} : vector<16x16xf32> to vector<1x16xf32>
    %436 = vector.broadcast %434 : vector<16x1xf32> to vector<16x16xf32>
    %437 = vector.broadcast %435 : vector<1x16xf32> to vector<16x16xf32>
    %438 = arith.addf %436, %437 : vector<16x16xf32>
    %439 = math.absf %438 : vector<16x16xf32>
    %440 = vector.extract_strided_slice %422 {offsets = [1, 0], sizes = [1, 1], strides = [1, 1]} : vector<16x1xf32> to vector<1x1xf32>
    %441 = vector.broadcast %440 : vector<1x1xf32> to vector<16x16xf32>
    %442 = arith.mulf %441, %439 : vector<16x16xf32>
    %443 = arith.addf %433, %442 : vector<16x16xf32>
    %444 = vector.extract_strided_slice %409 {offsets = [0, 2], sizes = [16, 1], strides = [1, 1]} : vector<16x16xf32> to vector<16x1xf32>
    %445 = vector.extract_strided_slice %410 {offsets = [2, 0], sizes = [1, 16], strides = [1, 1]} : vector<16x16xf32> to vector<1x16xf32>
    %446 = vector.broadcast %444 : vector<16x1xf32> to vector<16x16xf32>
    %447 = vector.broadcast %445 : vector<1x16xf32> to vector<16x16xf32>
    %448 = arith.addf %446, %447 : vector<16x16xf32>
    %449 = math.absf %448 : vector<16x16xf32>
    %450 = vector.extract_strided_slice %422 {offsets = [2, 0], sizes = [1, 1], strides = [1, 1]} : vector<16x1xf32> to vector<1x1xf32>
    %451 = vector.broadcast %450 : vector<1x1xf32> to vector<16x16xf32>
    %452 = arith.mulf %451, %449 : vector<16x16xf32>
    %453 = arith.addf %443, %452 : vector<16x16xf32>
    %454 = vector.extract_strided_slice %409 {offsets = [0, 3], sizes = [16, 1], strides = [1, 1]} : vector<16x16xf32> to vector<16x1xf32>
    %455 = vector.extract_strided_slice %410 {offsets = [3, 0], sizes = [1, 16], strides = [1, 1]} : vector<16x16xf32> to vector<1x16xf32>
    %456 = vector.broadcast %454 : vector<16x1xf32> to vector<16x16xf32>
    %457 = vector.broadcast %455 : vector<1x16xf32> to vector<16x16xf32>
    %458 = arith.addf %456, %457 : vector<16x16xf32>
    %459 = math.absf %458 : vector<16x16xf32>
    %460 = vector.extract_strided_slice %422 {offsets = [3, 0], sizes = [1, 1], strides = [1, 1]} : vector<16x1xf32> to vector<1x1xf32>
    %461 = vector.broadcast %460 : vector<1x1xf32> to vector<16x16xf32>
    %462 = arith.mulf %461, %459 : vector<16x16xf32>
    %463 = arith.addf %453, %462 : vector<16x16xf32>
    %464 = vector.extract_strided_slice %409 {offsets = [0, 4], sizes = [16, 1], strides = [1, 1]} : vector<16x16xf32> to vector<16x1xf32>
    %465 = vector.extract_strided_slice %410 {offsets = [4, 0], sizes = [1, 16], strides = [1, 1]} : vector<16x16xf32> to vector<1x16xf32>
    %466 = vector.broadcast %464 : vector<16x1xf32> to vector<16x16xf32>
    %467 = vector.broadcast %465 : vector<1x16xf32> to vector<16x16xf32>
    %468 = arith.addf %466, %467 : vector<16x16xf32>
    %469 = math.absf %468 : vector<16x16xf32>
    %470 = vector.extract_strided_slice %422 {offsets = [4, 0], sizes = [1, 1], strides = [1, 1]} : vector<16x1xf32> to vector<1x1xf32>
    %471 = vector.broadcast %470 : vector<1x1xf32> to vector<16x16xf32>
    %472 = arith.mulf %471, %469 : vector<16x16xf32>
    %473 = arith.addf %463, %472 : vector<16x16xf32>
    %474 = vector.extract_strided_slice %409 {offsets = [0, 5], sizes = [16, 1], strides = [1, 1]} : vector<16x16xf32> to vector<16x1xf32>
    %475 = vector.extract_strided_slice %410 {offsets = [5, 0], sizes = [1, 16], strides = [1, 1]} : vector<16x16xf32> to vector<1x16xf32>
    %476 = vector.broadcast %474 : vector<16x1xf32> to vector<16x16xf32>
    %477 = vector.broadcast %475 : vector<1x16xf32> to vector<16x16xf32>
    %478 = arith.addf %476, %477 : vector<16x16xf32>
    %479 = math.absf %478 : vector<16x16xf32>
    %480 = vector.extract_strided_slice %422 {offsets = [5, 0], sizes = [1, 1], strides = [1, 1]} : vector<16x1xf32> to vector<1x1xf32>
    %481 = vector.broadcast %480 : vector<1x1xf32> to vector<16x16xf32>
    %482 = arith.mulf %481, %479 : vector<16x16xf32>
    %483 = arith.addf %473, %482 : vector<16x16xf32>
    %484 = vector.extract_strided_slice %409 {offsets = [0, 6], sizes = [16, 1], strides = [1, 1]} : vector<16x16xf32> to vector<16x1xf32>
    %485 = vector.extract_strided_slice %410 {offsets = [6, 0], sizes = [1, 16], strides = [1, 1]} : vector<16x16xf32> to vector<1x16xf32>
    %486 = vector.broadcast %484 : vector<16x1xf32> to vector<16x16xf32>
    %487 = vector.broadcast %485 : vector<1x16xf32> to vector<16x16xf32>
    %488 = arith.addf %486, %487 : vector<16x16xf32>
    %489 = math.absf %488 : vector<16x16xf32>
    %490 = vector.extract_strided_slice %422 {offsets = [6, 0], sizes = [1, 1], strides = [1, 1]} : vector<16x1xf32> to vector<1x1xf32>
    %491 = vector.broadcast %490 : vector<1x1xf32> to vector<16x16xf32>
    %492 = arith.mulf %491, %489 : vector<16x16xf32>
    %493 = arith.addf %483, %492 : vector<16x16xf32>
    %494 = vector.extract_strided_slice %409 {offsets = [0, 7], sizes = [16, 1], strides = [1, 1]} : vector<16x16xf32> to vector<16x1xf32>
    %495 = vector.extract_strided_slice %410 {offsets = [7, 0], sizes = [1, 16], strides = [1, 1]} : vector<16x16xf32> to vector<1x16xf32>
    %496 = vector.broadcast %494 : vector<16x1xf32> to vector<16x16xf32>
    %497 = vector.broadcast %495 : vector<1x16xf32> to vector<16x16xf32>
    %498 = arith.addf %496, %497 : vector<16x16xf32>
    %499 = math.absf %498 : vector<16x16xf32>
    %500 = vector.extract_strided_slice %422 {offsets = [7, 0], sizes = [1, 1], strides = [1, 1]} : vector<16x1xf32> to vector<1x1xf32>
    %501 = vector.broadcast %500 : vector<1x1xf32> to vector<16x16xf32>
    %502 = arith.mulf %501, %499 : vector<16x16xf32>
    %503 = arith.addf %493, %502 : vector<16x16xf32>
    %504 = vector.extract_strided_slice %409 {offsets = [0, 8], sizes = [16, 1], strides = [1, 1]} : vector<16x16xf32> to vector<16x1xf32>
    %505 = vector.extract_strided_slice %410 {offsets = [8, 0], sizes = [1, 16], strides = [1, 1]} : vector<16x16xf32> to vector<1x16xf32>
    %506 = vector.broadcast %504 : vector<16x1xf32> to vector<16x16xf32>
    %507 = vector.broadcast %505 : vector<1x16xf32> to vector<16x16xf32>
    %508 = arith.addf %506, %507 : vector<16x16xf32>
    %509 = math.absf %508 : vector<16x16xf32>
    %510 = vector.extract_strided_slice %422 {offsets = [8, 0], sizes = [1, 1], strides = [1, 1]} : vector<16x1xf32> to vector<1x1xf32>
    %511 = vector.broadcast %510 : vector<1x1xf32> to vector<16x16xf32>
    %512 = arith.mulf %511, %509 : vector<16x16xf32>
    %513 = arith.addf %503, %512 : vector<16x16xf32>
    %514 = vector.extract_strided_slice %409 {offsets = [0, 9], sizes = [16, 1], strides = [1, 1]} : vector<16x16xf32> to vector<16x1xf32>
    %515 = vector.extract_strided_slice %410 {offsets = [9, 0], sizes = [1, 16], strides = [1, 1]} : vector<16x16xf32> to vector<1x16xf32>
    %516 = vector.broadcast %514 : vector<16x1xf32> to vector<16x16xf32>
    %517 = vector.broadcast %515 : vector<1x16xf32> to vector<16x16xf32>
    %518 = arith.addf %516, %517 : vector<16x16xf32>
    %519 = math.absf %518 : vector<16x16xf32>
    %520 = vector.extract_strided_slice %422 {offsets = [9, 0], sizes = [1, 1], strides = [1, 1]} : vector<16x1xf32> to vector<1x1xf32>
    %521 = vector.broadcast %520 : vector<1x1xf32> to vector<16x16xf32>
    %522 = arith.mulf %521, %519 : vector<16x16xf32>
    %523 = arith.addf %513, %522 : vector<16x16xf32>
    %524 = vector.extract_strided_slice %409 {offsets = [0, 10], sizes = [16, 1], strides = [1, 1]} : vector<16x16xf32> to vector<16x1xf32>
    %525 = vector.extract_strided_slice %410 {offsets = [10, 0], sizes = [1, 16], strides = [1, 1]} : vector<16x16xf32> to vector<1x16xf32>
    %526 = vector.broadcast %524 : vector<16x1xf32> to vector<16x16xf32>
    %527 = vector.broadcast %525 : vector<1x16xf32> to vector<16x16xf32>
    %528 = arith.addf %526, %527 : vector<16x16xf32>
    %529 = math.absf %528 : vector<16x16xf32>
    %530 = vector.extract_strided_slice %422 {offsets = [10, 0], sizes = [1, 1], strides = [1, 1]} : vector<16x1xf32> to vector<1x1xf32>
    %531 = vector.broadcast %530 : vector<1x1xf32> to vector<16x16xf32>
    %532 = arith.mulf %531, %529 : vector<16x16xf32>
    %533 = arith.addf %523, %532 : vector<16x16xf32>
    %534 = vector.extract_strided_slice %409 {offsets = [0, 11], sizes = [16, 1], strides = [1, 1]} : vector<16x16xf32> to vector<16x1xf32>
    %535 = vector.extract_strided_slice %410 {offsets = [11, 0], sizes = [1, 16], strides = [1, 1]} : vector<16x16xf32> to vector<1x16xf32>
    %536 = vector.broadcast %534 : vector<16x1xf32> to vector<16x16xf32>
    %537 = vector.broadcast %535 : vector<1x16xf32> to vector<16x16xf32>
    %538 = arith.addf %536, %537 : vector<16x16xf32>
    %539 = math.absf %538 : vector<16x16xf32>
    %540 = vector.extract_strided_slice %422 {offsets = [11, 0], sizes = [1, 1], strides = [1, 1]} : vector<16x1xf32> to vector<1x1xf32>
    %541 = vector.broadcast %540 : vector<1x1xf32> to vector<16x16xf32>
    %542 = arith.mulf %541, %539 : vector<16x16xf32>
    %543 = arith.addf %533, %542 : vector<16x16xf32>
    %544 = vector.extract_strided_slice %409 {offsets = [0, 12], sizes = [16, 1], strides = [1, 1]} : vector<16x16xf32> to vector<16x1xf32>
    %545 = vector.extract_strided_slice %410 {offsets = [12, 0], sizes = [1, 16], strides = [1, 1]} : vector<16x16xf32> to vector<1x16xf32>
    %546 = vector.broadcast %544 : vector<16x1xf32> to vector<16x16xf32>
    %547 = vector.broadcast %545 : vector<1x16xf32> to vector<16x16xf32>
    %548 = arith.addf %546, %547 : vector<16x16xf32>
    %549 = math.absf %548 : vector<16x16xf32>
    %550 = vector.extract_strided_slice %422 {offsets = [12, 0], sizes = [1, 1], strides = [1, 1]} : vector<16x1xf32> to vector<1x1xf32>
    %551 = vector.broadcast %550 : vector<1x1xf32> to vector<16x16xf32>
    %552 = arith.mulf %551, %549 : vector<16x16xf32>
    %553 = arith.addf %543, %552 : vector<16x16xf32>
    %554 = vector.extract_strided_slice %409 {offsets = [0, 13], sizes = [16, 1], strides = [1, 1]} : vector<16x16xf32> to vector<16x1xf32>
    %555 = vector.extract_strided_slice %410 {offsets = [13, 0], sizes = [1, 16], strides = [1, 1]} : vector<16x16xf32> to vector<1x16xf32>
    %556 = vector.broadcast %554 : vector<16x1xf32> to vector<16x16xf32>
    %557 = vector.broadcast %555 : vector<1x16xf32> to vector<16x16xf32>
    %558 = arith.addf %556, %557 : vector<16x16xf32>
    %559 = math.absf %558 : vector<16x16xf32>
    %560 = vector.extract_strided_slice %422 {offsets = [13, 0], sizes = [1, 1], strides = [1, 1]} : vector<16x1xf32> to vector<1x1xf32>
    %561 = vector.broadcast %560 : vector<1x1xf32> to vector<16x16xf32>
    %562 = arith.mulf %561, %559 : vector<16x16xf32>
    %563 = arith.addf %553, %562 : vector<16x16xf32>
    %564 = vector.extract_strided_slice %409 {offsets = [0, 14], sizes = [16, 1], strides = [1, 1]} : vector<16x16xf32> to vector<16x1xf32>
    %565 = vector.extract_strided_slice %410 {offsets = [14, 0], sizes = [1, 16], strides = [1, 1]} : vector<16x16xf32> to vector<1x16xf32>
    %566 = vector.broadcast %564 : vector<16x1xf32> to vector<16x16xf32>
    %567 = vector.broadcast %565 : vector<1x16xf32> to vector<16x16xf32>
    %568 = arith.addf %566, %567 : vector<16x16xf32>
    %569 = math.absf %568 : vector<16x16xf32>
    %570 = vector.extract_strided_slice %422 {offsets = [14, 0], sizes = [1, 1], strides = [1, 1]} : vector<16x1xf32> to vector<1x1xf32>
    %571 = vector.broadcast %570 : vector<1x1xf32> to vector<16x16xf32>
    %572 = arith.mulf %571, %569 : vector<16x16xf32>
    %573 = arith.addf %563, %572 : vector<16x16xf32>
    %574 = vector.extract_strided_slice %409 {offsets = [0, 15], sizes = [16, 1], strides = [1, 1]} : vector<16x16xf32> to vector<16x1xf32>
    %575 = vector.extract_strided_slice %410 {offsets = [15, 0], sizes = [1, 16], strides = [1, 1]} : vector<16x16xf32> to vector<1x16xf32>
    %576 = vector.broadcast %574 : vector<16x1xf32> to vector<16x16xf32>
    %577 = vector.broadcast %575 : vector<1x16xf32> to vector<16x16xf32>
    %578 = arith.addf %576, %577 : vector<16x16xf32>
    %579 = math.absf %578 : vector<16x16xf32>
    %580 = vector.extract_strided_slice %422 {offsets = [15, 0], sizes = [1, 1], strides = [1, 1]} : vector<16x1xf32> to vector<1x1xf32>
    %581 = vector.broadcast %580 : vector<1x1xf32> to vector<16x16xf32>
    %582 = arith.mulf %581, %579 : vector<16x16xf32>
    %583 = arith.addf %573, %582 : vector<16x16xf32>
    %584 = vector.broadcast %416 : vector<16x1xf32> to vector<16x16xf32>
    %585 = vector.broadcast %420 : vector<1x16xf32> to vector<16x16xf32>
    %586 = arith.addf %584, %585 : vector<16x16xf32>
    %cst_38 = arith.constant 6.000000e-01 : f32
    %587 = vector.broadcast %cst_38 : f32 to vector<16x16xf32>
    %588 = arith.mulf %587, %586 : vector<16x16xf32>
    %589 = arith.addf %588, %583 : vector<16x16xf32>
    %590 = arith.addf %589, %2 : vector<16x16xf32>
    %cst_39 = arith.constant dense<0xFF800000> : vector<16xf32>
    %591 = vector.multi_reduction <maximumf>, %590, %cst_39 [1] : vector<16x16xf32> to vector<16xf32>
    %592 = vector.shape_cast %591 : vector<16xf32> to vector<16x1xf32>
    %593 = vector.broadcast %592 : vector<16x1xf32> to vector<16x16xf32>
    %594 = arith.subf %590, %593 : vector<16x16xf32>
    %595 = math.exp %594 : vector<16x16xf32>
    %cst_40 = arith.constant dense<0.000000e+00> : vector<16x16xf32>
    %596 = tpu.matmul %595, %408, %cst_40 {dimension_numbers = #tpu.dot_dimension_numbers<[1], [0], [0], [1], [0, 0, 1, 1], [], []>} : vector<16x16xf32>, vector<16x16xf32>, vector<16x16xf32> -> vector<16x16xf32>
    %cst_41 = arith.constant dense<0.000000e+00> : vector<16xf32>
    %597 = vector.multi_reduction <add>, %595, %cst_41 [1] : vector<16x16xf32> to vector<16xf32>
    %598 = vector.shape_cast %597 : vector<16xf32> to vector<16x1xf32>
    %599 = tpu.reciprocal %598 {approx = true} : vector<16x1xf32> -> vector<16x1xf32>
    %600 = vector.broadcast %599 : vector<16x1xf32> to vector<16x16xf32>
    %601 = arith.mulf %596, %600 : vector<16x16xf32>
    %602 = arith.addf %407, %601 : vector<16x16xf32>
    %603 = vector.extract_strided_slice %13 {offsets = [0, 48], sizes = [16, 16], strides = [1, 1]} : vector<16x128xf32> to vector<16x16xf32>
    %604 = vector.extract_strided_slice %13 {offsets = [0, 112], sizes = [16, 16], strides = [1, 1]} : vector<16x128xf32> to vector<16x16xf32>
    %605 = vector.extract_strided_slice %16 {offsets = [48, 0], sizes = [16, 16], strides = [1, 1]} : vector<64x16xf32> to vector<16x16xf32>
    %606 = vector.extract_strided_slice %5 {offsets = [3, 0], sizes = [1, 16], strides = [1, 1]} : vector<4x16xf32> to vector<1x16xf32>
    %607 = vector.extract_strided_slice %6 {offsets = [48, 0], sizes = [16, 1], strides = [1, 1]} : vector<64x1xf32> to vector<16x1xf32>
    %608 = vector.broadcast %606 : vector<1x16xf32> to vector<16x16xf32>
    %609 = arith.mulf %604, %608 : vector<16x16xf32>
    %cst_42 = arith.constant dense<0.000000e+00> : vector<16xf32>
    %610 = vector.multi_reduction <add>, %609, %cst_42 [1] : vector<16x16xf32> to vector<16xf32>
    %611 = vector.shape_cast %610 : vector<16xf32> to vector<16x1xf32>
    %612 = vector.broadcast %607 : vector<16x1xf32> to vector<16x16xf32>
    %613 = arith.mulf %605, %612 : vector<16x16xf32>
    %cst_43 = arith.constant dense<0.000000e+00> : vector<16xf32>
    %614 = vector.multi_reduction <add>, %613, %cst_43 [0] : vector<16x16xf32> to vector<16xf32>
    %615 = vector.shape_cast %614 : vector<16xf32> to vector<1x16xf32>
    %cst_44 = arith.constant 4.000000e-01 : f32
    %616 = vector.broadcast %cst_44 : f32 to vector<16x1xf32>
    %617 = arith.mulf %616, %607 : vector<16x1xf32>
    %cst_45 = arith.constant 0.000000e+00 : f32
    %618 = vector.broadcast %cst_45 : f32 to vector<16x16xf32>
    %619 = vector.extract_strided_slice %604 {offsets = [0, 0], sizes = [16, 1], strides = [1, 1]} : vector<16x16xf32> to vector<16x1xf32>
    %620 = vector.extract_strided_slice %605 {offsets = [0, 0], sizes = [1, 16], strides = [1, 1]} : vector<16x16xf32> to vector<1x16xf32>
    %621 = vector.broadcast %619 : vector<16x1xf32> to vector<16x16xf32>
    %622 = vector.broadcast %620 : vector<1x16xf32> to vector<16x16xf32>
    %623 = arith.addf %621, %622 : vector<16x16xf32>
    %624 = math.absf %623 : vector<16x16xf32>
    %625 = vector.extract_strided_slice %617 {offsets = [0, 0], sizes = [1, 1], strides = [1, 1]} : vector<16x1xf32> to vector<1x1xf32>
    %626 = vector.broadcast %625 : vector<1x1xf32> to vector<16x16xf32>
    %627 = arith.mulf %626, %624 : vector<16x16xf32>
    %628 = arith.addf %618, %627 : vector<16x16xf32>
    %629 = vector.extract_strided_slice %604 {offsets = [0, 1], sizes = [16, 1], strides = [1, 1]} : vector<16x16xf32> to vector<16x1xf32>
    %630 = vector.extract_strided_slice %605 {offsets = [1, 0], sizes = [1, 16], strides = [1, 1]} : vector<16x16xf32> to vector<1x16xf32>
    %631 = vector.broadcast %629 : vector<16x1xf32> to vector<16x16xf32>
    %632 = vector.broadcast %630 : vector<1x16xf32> to vector<16x16xf32>
    %633 = arith.addf %631, %632 : vector<16x16xf32>
    %634 = math.absf %633 : vector<16x16xf32>
    %635 = vector.extract_strided_slice %617 {offsets = [1, 0], sizes = [1, 1], strides = [1, 1]} : vector<16x1xf32> to vector<1x1xf32>
    %636 = vector.broadcast %635 : vector<1x1xf32> to vector<16x16xf32>
    %637 = arith.mulf %636, %634 : vector<16x16xf32>
    %638 = arith.addf %628, %637 : vector<16x16xf32>
    %639 = vector.extract_strided_slice %604 {offsets = [0, 2], sizes = [16, 1], strides = [1, 1]} : vector<16x16xf32> to vector<16x1xf32>
    %640 = vector.extract_strided_slice %605 {offsets = [2, 0], sizes = [1, 16], strides = [1, 1]} : vector<16x16xf32> to vector<1x16xf32>
    %641 = vector.broadcast %639 : vector<16x1xf32> to vector<16x16xf32>
    %642 = vector.broadcast %640 : vector<1x16xf32> to vector<16x16xf32>
    %643 = arith.addf %641, %642 : vector<16x16xf32>
    %644 = math.absf %643 : vector<16x16xf32>
    %645 = vector.extract_strided_slice %617 {offsets = [2, 0], sizes = [1, 1], strides = [1, 1]} : vector<16x1xf32> to vector<1x1xf32>
    %646 = vector.broadcast %645 : vector<1x1xf32> to vector<16x16xf32>
    %647 = arith.mulf %646, %644 : vector<16x16xf32>
    %648 = arith.addf %638, %647 : vector<16x16xf32>
    %649 = vector.extract_strided_slice %604 {offsets = [0, 3], sizes = [16, 1], strides = [1, 1]} : vector<16x16xf32> to vector<16x1xf32>
    %650 = vector.extract_strided_slice %605 {offsets = [3, 0], sizes = [1, 16], strides = [1, 1]} : vector<16x16xf32> to vector<1x16xf32>
    %651 = vector.broadcast %649 : vector<16x1xf32> to vector<16x16xf32>
    %652 = vector.broadcast %650 : vector<1x16xf32> to vector<16x16xf32>
    %653 = arith.addf %651, %652 : vector<16x16xf32>
    %654 = math.absf %653 : vector<16x16xf32>
    %655 = vector.extract_strided_slice %617 {offsets = [3, 0], sizes = [1, 1], strides = [1, 1]} : vector<16x1xf32> to vector<1x1xf32>
    %656 = vector.broadcast %655 : vector<1x1xf32> to vector<16x16xf32>
    %657 = arith.mulf %656, %654 : vector<16x16xf32>
    %658 = arith.addf %648, %657 : vector<16x16xf32>
    %659 = vector.extract_strided_slice %604 {offsets = [0, 4], sizes = [16, 1], strides = [1, 1]} : vector<16x16xf32> to vector<16x1xf32>
    %660 = vector.extract_strided_slice %605 {offsets = [4, 0], sizes = [1, 16], strides = [1, 1]} : vector<16x16xf32> to vector<1x16xf32>
    %661 = vector.broadcast %659 : vector<16x1xf32> to vector<16x16xf32>
    %662 = vector.broadcast %660 : vector<1x16xf32> to vector<16x16xf32>
    %663 = arith.addf %661, %662 : vector<16x16xf32>
    %664 = math.absf %663 : vector<16x16xf32>
    %665 = vector.extract_strided_slice %617 {offsets = [4, 0], sizes = [1, 1], strides = [1, 1]} : vector<16x1xf32> to vector<1x1xf32>
    %666 = vector.broadcast %665 : vector<1x1xf32> to vector<16x16xf32>
    %667 = arith.mulf %666, %664 : vector<16x16xf32>
    %668 = arith.addf %658, %667 : vector<16x16xf32>
    %669 = vector.extract_strided_slice %604 {offsets = [0, 5], sizes = [16, 1], strides = [1, 1]} : vector<16x16xf32> to vector<16x1xf32>
    %670 = vector.extract_strided_slice %605 {offsets = [5, 0], sizes = [1, 16], strides = [1, 1]} : vector<16x16xf32> to vector<1x16xf32>
    %671 = vector.broadcast %669 : vector<16x1xf32> to vector<16x16xf32>
    %672 = vector.broadcast %670 : vector<1x16xf32> to vector<16x16xf32>
    %673 = arith.addf %671, %672 : vector<16x16xf32>
    %674 = math.absf %673 : vector<16x16xf32>
    %675 = vector.extract_strided_slice %617 {offsets = [5, 0], sizes = [1, 1], strides = [1, 1]} : vector<16x1xf32> to vector<1x1xf32>
    %676 = vector.broadcast %675 : vector<1x1xf32> to vector<16x16xf32>
    %677 = arith.mulf %676, %674 : vector<16x16xf32>
    %678 = arith.addf %668, %677 : vector<16x16xf32>
    %679 = vector.extract_strided_slice %604 {offsets = [0, 6], sizes = [16, 1], strides = [1, 1]} : vector<16x16xf32> to vector<16x1xf32>
    %680 = vector.extract_strided_slice %605 {offsets = [6, 0], sizes = [1, 16], strides = [1, 1]} : vector<16x16xf32> to vector<1x16xf32>
    %681 = vector.broadcast %679 : vector<16x1xf32> to vector<16x16xf32>
    %682 = vector.broadcast %680 : vector<1x16xf32> to vector<16x16xf32>
    %683 = arith.addf %681, %682 : vector<16x16xf32>
    %684 = math.absf %683 : vector<16x16xf32>
    %685 = vector.extract_strided_slice %617 {offsets = [6, 0], sizes = [1, 1], strides = [1, 1]} : vector<16x1xf32> to vector<1x1xf32>
    %686 = vector.broadcast %685 : vector<1x1xf32> to vector<16x16xf32>
    %687 = arith.mulf %686, %684 : vector<16x16xf32>
    %688 = arith.addf %678, %687 : vector<16x16xf32>
    %689 = vector.extract_strided_slice %604 {offsets = [0, 7], sizes = [16, 1], strides = [1, 1]} : vector<16x16xf32> to vector<16x1xf32>
    %690 = vector.extract_strided_slice %605 {offsets = [7, 0], sizes = [1, 16], strides = [1, 1]} : vector<16x16xf32> to vector<1x16xf32>
    %691 = vector.broadcast %689 : vector<16x1xf32> to vector<16x16xf32>
    %692 = vector.broadcast %690 : vector<1x16xf32> to vector<16x16xf32>
    %693 = arith.addf %691, %692 : vector<16x16xf32>
    %694 = math.absf %693 : vector<16x16xf32>
    %695 = vector.extract_strided_slice %617 {offsets = [7, 0], sizes = [1, 1], strides = [1, 1]} : vector<16x1xf32> to vector<1x1xf32>
    %696 = vector.broadcast %695 : vector<1x1xf32> to vector<16x16xf32>
    %697 = arith.mulf %696, %694 : vector<16x16xf32>
    %698 = arith.addf %688, %697 : vector<16x16xf32>
    %699 = vector.extract_strided_slice %604 {offsets = [0, 8], sizes = [16, 1], strides = [1, 1]} : vector<16x16xf32> to vector<16x1xf32>
    %700 = vector.extract_strided_slice %605 {offsets = [8, 0], sizes = [1, 16], strides = [1, 1]} : vector<16x16xf32> to vector<1x16xf32>
    %701 = vector.broadcast %699 : vector<16x1xf32> to vector<16x16xf32>
    %702 = vector.broadcast %700 : vector<1x16xf32> to vector<16x16xf32>
    %703 = arith.addf %701, %702 : vector<16x16xf32>
    %704 = math.absf %703 : vector<16x16xf32>
    %705 = vector.extract_strided_slice %617 {offsets = [8, 0], sizes = [1, 1], strides = [1, 1]} : vector<16x1xf32> to vector<1x1xf32>
    %706 = vector.broadcast %705 : vector<1x1xf32> to vector<16x16xf32>
    %707 = arith.mulf %706, %704 : vector<16x16xf32>
    %708 = arith.addf %698, %707 : vector<16x16xf32>
    %709 = vector.extract_strided_slice %604 {offsets = [0, 9], sizes = [16, 1], strides = [1, 1]} : vector<16x16xf32> to vector<16x1xf32>
    %710 = vector.extract_strided_slice %605 {offsets = [9, 0], sizes = [1, 16], strides = [1, 1]} : vector<16x16xf32> to vector<1x16xf32>
    %711 = vector.broadcast %709 : vector<16x1xf32> to vector<16x16xf32>
    %712 = vector.broadcast %710 : vector<1x16xf32> to vector<16x16xf32>
    %713 = arith.addf %711, %712 : vector<16x16xf32>
    %714 = math.absf %713 : vector<16x16xf32>
    %715 = vector.extract_strided_slice %617 {offsets = [9, 0], sizes = [1, 1], strides = [1, 1]} : vector<16x1xf32> to vector<1x1xf32>
    %716 = vector.broadcast %715 : vector<1x1xf32> to vector<16x16xf32>
    %717 = arith.mulf %716, %714 : vector<16x16xf32>
    %718 = arith.addf %708, %717 : vector<16x16xf32>
    %719 = vector.extract_strided_slice %604 {offsets = [0, 10], sizes = [16, 1], strides = [1, 1]} : vector<16x16xf32> to vector<16x1xf32>
    %720 = vector.extract_strided_slice %605 {offsets = [10, 0], sizes = [1, 16], strides = [1, 1]} : vector<16x16xf32> to vector<1x16xf32>
    %721 = vector.broadcast %719 : vector<16x1xf32> to vector<16x16xf32>
    %722 = vector.broadcast %720 : vector<1x16xf32> to vector<16x16xf32>
    %723 = arith.addf %721, %722 : vector<16x16xf32>
    %724 = math.absf %723 : vector<16x16xf32>
    %725 = vector.extract_strided_slice %617 {offsets = [10, 0], sizes = [1, 1], strides = [1, 1]} : vector<16x1xf32> to vector<1x1xf32>
    %726 = vector.broadcast %725 : vector<1x1xf32> to vector<16x16xf32>
    %727 = arith.mulf %726, %724 : vector<16x16xf32>
    %728 = arith.addf %718, %727 : vector<16x16xf32>
    %729 = vector.extract_strided_slice %604 {offsets = [0, 11], sizes = [16, 1], strides = [1, 1]} : vector<16x16xf32> to vector<16x1xf32>
    %730 = vector.extract_strided_slice %605 {offsets = [11, 0], sizes = [1, 16], strides = [1, 1]} : vector<16x16xf32> to vector<1x16xf32>
    %731 = vector.broadcast %729 : vector<16x1xf32> to vector<16x16xf32>
    %732 = vector.broadcast %730 : vector<1x16xf32> to vector<16x16xf32>
    %733 = arith.addf %731, %732 : vector<16x16xf32>
    %734 = math.absf %733 : vector<16x16xf32>
    %735 = vector.extract_strided_slice %617 {offsets = [11, 0], sizes = [1, 1], strides = [1, 1]} : vector<16x1xf32> to vector<1x1xf32>
    %736 = vector.broadcast %735 : vector<1x1xf32> to vector<16x16xf32>
    %737 = arith.mulf %736, %734 : vector<16x16xf32>
    %738 = arith.addf %728, %737 : vector<16x16xf32>
    %739 = vector.extract_strided_slice %604 {offsets = [0, 12], sizes = [16, 1], strides = [1, 1]} : vector<16x16xf32> to vector<16x1xf32>
    %740 = vector.extract_strided_slice %605 {offsets = [12, 0], sizes = [1, 16], strides = [1, 1]} : vector<16x16xf32> to vector<1x16xf32>
    %741 = vector.broadcast %739 : vector<16x1xf32> to vector<16x16xf32>
    %742 = vector.broadcast %740 : vector<1x16xf32> to vector<16x16xf32>
    %743 = arith.addf %741, %742 : vector<16x16xf32>
    %744 = math.absf %743 : vector<16x16xf32>
    %745 = vector.extract_strided_slice %617 {offsets = [12, 0], sizes = [1, 1], strides = [1, 1]} : vector<16x1xf32> to vector<1x1xf32>
    %746 = vector.broadcast %745 : vector<1x1xf32> to vector<16x16xf32>
    %747 = arith.mulf %746, %744 : vector<16x16xf32>
    %748 = arith.addf %738, %747 : vector<16x16xf32>
    %749 = vector.extract_strided_slice %604 {offsets = [0, 13], sizes = [16, 1], strides = [1, 1]} : vector<16x16xf32> to vector<16x1xf32>
    %750 = vector.extract_strided_slice %605 {offsets = [13, 0], sizes = [1, 16], strides = [1, 1]} : vector<16x16xf32> to vector<1x16xf32>
    %751 = vector.broadcast %749 : vector<16x1xf32> to vector<16x16xf32>
    %752 = vector.broadcast %750 : vector<1x16xf32> to vector<16x16xf32>
    %753 = arith.addf %751, %752 : vector<16x16xf32>
    %754 = math.absf %753 : vector<16x16xf32>
    %755 = vector.extract_strided_slice %617 {offsets = [13, 0], sizes = [1, 1], strides = [1, 1]} : vector<16x1xf32> to vector<1x1xf32>
    %756 = vector.broadcast %755 : vector<1x1xf32> to vector<16x16xf32>
    %757 = arith.mulf %756, %754 : vector<16x16xf32>
    %758 = arith.addf %748, %757 : vector<16x16xf32>
    %759 = vector.extract_strided_slice %604 {offsets = [0, 14], sizes = [16, 1], strides = [1, 1]} : vector<16x16xf32> to vector<16x1xf32>
    %760 = vector.extract_strided_slice %605 {offsets = [14, 0], sizes = [1, 16], strides = [1, 1]} : vector<16x16xf32> to vector<1x16xf32>
    %761 = vector.broadcast %759 : vector<16x1xf32> to vector<16x16xf32>
    %762 = vector.broadcast %760 : vector<1x16xf32> to vector<16x16xf32>
    %763 = arith.addf %761, %762 : vector<16x16xf32>
    %764 = math.absf %763 : vector<16x16xf32>
    %765 = vector.extract_strided_slice %617 {offsets = [14, 0], sizes = [1, 1], strides = [1, 1]} : vector<16x1xf32> to vector<1x1xf32>
    %766 = vector.broadcast %765 : vector<1x1xf32> to vector<16x16xf32>
    %767 = arith.mulf %766, %764 : vector<16x16xf32>
    %768 = arith.addf %758, %767 : vector<16x16xf32>
    %769 = vector.extract_strided_slice %604 {offsets = [0, 15], sizes = [16, 1], strides = [1, 1]} : vector<16x16xf32> to vector<16x1xf32>
    %770 = vector.extract_strided_slice %605 {offsets = [15, 0], sizes = [1, 16], strides = [1, 1]} : vector<16x16xf32> to vector<1x16xf32>
    %771 = vector.broadcast %769 : vector<16x1xf32> to vector<16x16xf32>
    %772 = vector.broadcast %770 : vector<1x16xf32> to vector<16x16xf32>
    %773 = arith.addf %771, %772 : vector<16x16xf32>
    %774 = math.absf %773 : vector<16x16xf32>
    %775 = vector.extract_strided_slice %617 {offsets = [15, 0], sizes = [1, 1], strides = [1, 1]} : vector<16x1xf32> to vector<1x1xf32>
    %776 = vector.broadcast %775 : vector<1x1xf32> to vector<16x16xf32>
    %777 = arith.mulf %776, %774 : vector<16x16xf32>
    %778 = arith.addf %768, %777 : vector<16x16xf32>
    %779 = vector.broadcast %611 : vector<16x1xf32> to vector<16x16xf32>
    %780 = vector.broadcast %615 : vector<1x16xf32> to vector<16x16xf32>
    %781 = arith.addf %779, %780 : vector<16x16xf32>
    %cst_46 = arith.constant 6.000000e-01 : f32
    %782 = vector.broadcast %cst_46 : f32 to vector<16x16xf32>
    %783 = arith.mulf %782, %781 : vector<16x16xf32>
    %784 = arith.addf %783, %778 : vector<16x16xf32>
    %785 = arith.addf %784, %2 : vector<16x16xf32>
    %cst_47 = arith.constant dense<0xFF800000> : vector<16xf32>
    %786 = vector.multi_reduction <maximumf>, %785, %cst_47 [1] : vector<16x16xf32> to vector<16xf32>
    %787 = vector.shape_cast %786 : vector<16xf32> to vector<16x1xf32>
    %788 = vector.broadcast %787 : vector<16x1xf32> to vector<16x16xf32>
    %789 = arith.subf %785, %788 : vector<16x16xf32>
    %790 = math.exp %789 : vector<16x16xf32>
    %cst_48 = arith.constant dense<0.000000e+00> : vector<16x16xf32>
    %791 = tpu.matmul %790, %603, %cst_48 {dimension_numbers = #tpu.dot_dimension_numbers<[1], [0], [0], [1], [0, 0, 1, 1], [], []>} : vector<16x16xf32>, vector<16x16xf32>, vector<16x16xf32> -> vector<16x16xf32>
    %cst_49 = arith.constant dense<0.000000e+00> : vector<16xf32>
    %792 = vector.multi_reduction <add>, %790, %cst_49 [1] : vector<16x16xf32> to vector<16xf32>
    %793 = vector.shape_cast %792 : vector<16xf32> to vector<16x1xf32>
    %794 = tpu.reciprocal %793 {approx = true} : vector<16x1xf32> -> vector<16x1xf32>
    %795 = vector.broadcast %794 : vector<16x1xf32> to vector<16x16xf32>
    %796 = arith.mulf %791, %795 : vector<16x16xf32>
    %797 = arith.addf %602, %796 : vector<16x16xf32>
    %798 = vector.broadcast %7 : vector<1x16xf32> to vector<16x16xf32>
    %799 = arith.mulf %797, %798 : vector<16x16xf32>
    %800 = arith.addf %799, %14 : vector<16x16xf32>
    %801 = vector.broadcast %8 : vector<1x16xf32> to vector<16x16xf32>
    %802 = arith.addf %800, %801 : vector<16x16xf32>
    %cst_50 = arith.constant 0.000000e+00 : f32
    %803 = vector.broadcast %cst_50 : f32 to vector<16x16xf32>
    %804 = arith.cmpf ogt, %802, %803 : vector<16x16xf32>
    %805 = vector.broadcast %9 : vector<1x16xf32> to vector<16x16xf32>
    %806 = arith.mulf %805, %802 : vector<16x16xf32>
    %807 = arith.select %804, %802, %806 : vector<16x16xi1>, vector<16x16xf32>
    %c0_51 = arith.constant 0 : index
    %c0_52 = arith.constant 0 : index
    %808 = vector.load %arg12[%c0_51, %c0_52] : memref<16x144xf32, #tpu.memory_space<vmem>>, vector<16x144xf32>
    %c0_53 = arith.constant 0 : index
    %c0_54 = arith.constant 0 : index
    %809 = vector.load %arg13[%c0_53, %c0_54] : memref<1x128xf32, #tpu.memory_space<vmem>>, vector<1x128xf32>
    %c0_55 = arith.constant 0 : index
    %c0_56 = arith.constant 0 : index
    %810 = vector.load %arg14[%c0_55, %c0_56] : memref<4x16xf32, #tpu.memory_space<vmem>>, vector<4x16xf32>
    %c0_57 = arith.constant 0 : index
    %c0_58 = arith.constant 0 : index
    %811 = vector.load %arg15[%c0_57, %c0_58] : memref<64x1xf32, #tpu.memory_space<vmem>>, vector<64x1xf32>
    %c0_59 = arith.constant 0 : index
    %c0_60 = arith.constant 0 : index
    %812 = vector.load %arg16[%c0_59, %c0_60] : memref<1x16xf32, #tpu.memory_space<vmem>>, vector<1x16xf32>
    %c0_61 = arith.constant 0 : index
    %c0_62 = arith.constant 0 : index
    %813 = vector.load %arg17[%c0_61, %c0_62] : memref<1x16xf32, #tpu.memory_space<vmem>>, vector<1x16xf32>
    %c0_63 = arith.constant 0 : index
    %c0_64 = arith.constant 0 : index
    %814 = vector.load %arg18[%c0_63, %c0_64] : memref<1x16xf32, #tpu.memory_space<vmem>>, vector<1x16xf32>
    %cst_65 = arith.constant dense<0.000000e+00> : vector<16x144xf32>
    %815 = tpu.matmul %807, %808, %cst_65 {dimension_numbers = #tpu.dot_dimension_numbers<[1], [0], [0], [1], [0, 0, 1, 1], [], []>} : vector<16x16xf32>, vector<16x144xf32>, vector<16x144xf32> -> vector<16x144xf32>
    %816 = vector.extract_strided_slice %815 {offsets = [0, 0], sizes = [16, 128], strides = [1, 1]} : vector<16x144xf32> to vector<16x128xf32>
    %817 = vector.broadcast %809 : vector<1x128xf32> to vector<16x128xf32>
    %818 = arith.addf %816, %817 : vector<16x128xf32>
    %819 = vector.extract_strided_slice %815 {offsets = [0, 128], sizes = [16, 16], strides = [1, 1]} : vector<16x144xf32> to vector<16x16xf32>
    %820 = vector.extract_strided_slice %818 {offsets = [0, 0], sizes = [16, 64], strides = [1, 1]} : vector<16x128xf32> to vector<16x64xf32>
    %821 = tpu.transpose %820, [1, 0] : vector<16x64xf32> -> vector<64x16xf32>
    %cst_66 = arith.constant 0.000000e+00 : f32
    %822 = vector.broadcast %cst_66 : f32 to vector<16x16xf32>
    %823 = vector.extract_strided_slice %818 {offsets = [0, 0], sizes = [16, 16], strides = [1, 1]} : vector<16x128xf32> to vector<16x16xf32>
    %824 = vector.extract_strided_slice %818 {offsets = [0, 64], sizes = [16, 16], strides = [1, 1]} : vector<16x128xf32> to vector<16x16xf32>
    %825 = vector.extract_strided_slice %821 {offsets = [0, 0], sizes = [16, 16], strides = [1, 1]} : vector<64x16xf32> to vector<16x16xf32>
    %826 = vector.extract_strided_slice %810 {offsets = [0, 0], sizes = [1, 16], strides = [1, 1]} : vector<4x16xf32> to vector<1x16xf32>
    %827 = vector.extract_strided_slice %811 {offsets = [0, 0], sizes = [16, 1], strides = [1, 1]} : vector<64x1xf32> to vector<16x1xf32>
    %828 = vector.broadcast %826 : vector<1x16xf32> to vector<16x16xf32>
    %829 = arith.mulf %824, %828 : vector<16x16xf32>
    %cst_67 = arith.constant dense<0.000000e+00> : vector<16xf32>
    %830 = vector.multi_reduction <add>, %829, %cst_67 [1] : vector<16x16xf32> to vector<16xf32>
    %831 = vector.shape_cast %830 : vector<16xf32> to vector<16x1xf32>
    %832 = vector.broadcast %827 : vector<16x1xf32> to vector<16x16xf32>
    %833 = arith.mulf %825, %832 : vector<16x16xf32>
    %cst_68 = arith.constant dense<0.000000e+00> : vector<16xf32>
    %834 = vector.multi_reduction <add>, %833, %cst_68 [0] : vector<16x16xf32> to vector<16xf32>
    %835 = vector.shape_cast %834 : vector<16xf32> to vector<1x16xf32>
    %cst_69 = arith.constant 4.000000e-01 : f32
    %836 = vector.broadcast %cst_69 : f32 to vector<16x1xf32>
    %837 = arith.mulf %836, %827 : vector<16x1xf32>
    %cst_70 = arith.constant 0.000000e+00 : f32
    %838 = vector.broadcast %cst_70 : f32 to vector<16x16xf32>
    %839 = vector.extract_strided_slice %824 {offsets = [0, 0], sizes = [16, 1], strides = [1, 1]} : vector<16x16xf32> to vector<16x1xf32>
    %840 = vector.extract_strided_slice %825 {offsets = [0, 0], sizes = [1, 16], strides = [1, 1]} : vector<16x16xf32> to vector<1x16xf32>
    %841 = vector.broadcast %839 : vector<16x1xf32> to vector<16x16xf32>
    %842 = vector.broadcast %840 : vector<1x16xf32> to vector<16x16xf32>
    %843 = arith.addf %841, %842 : vector<16x16xf32>
    %844 = math.absf %843 : vector<16x16xf32>
    %845 = vector.extract_strided_slice %837 {offsets = [0, 0], sizes = [1, 1], strides = [1, 1]} : vector<16x1xf32> to vector<1x1xf32>
    %846 = vector.broadcast %845 : vector<1x1xf32> to vector<16x16xf32>
    %847 = arith.mulf %846, %844 : vector<16x16xf32>
    %848 = arith.addf %838, %847 : vector<16x16xf32>
    %849 = vector.extract_strided_slice %824 {offsets = [0, 1], sizes = [16, 1], strides = [1, 1]} : vector<16x16xf32> to vector<16x1xf32>
    %850 = vector.extract_strided_slice %825 {offsets = [1, 0], sizes = [1, 16], strides = [1, 1]} : vector<16x16xf32> to vector<1x16xf32>
    %851 = vector.broadcast %849 : vector<16x1xf32> to vector<16x16xf32>
    %852 = vector.broadcast %850 : vector<1x16xf32> to vector<16x16xf32>
    %853 = arith.addf %851, %852 : vector<16x16xf32>
    %854 = math.absf %853 : vector<16x16xf32>
    %855 = vector.extract_strided_slice %837 {offsets = [1, 0], sizes = [1, 1], strides = [1, 1]} : vector<16x1xf32> to vector<1x1xf32>
    %856 = vector.broadcast %855 : vector<1x1xf32> to vector<16x16xf32>
    %857 = arith.mulf %856, %854 : vector<16x16xf32>
    %858 = arith.addf %848, %857 : vector<16x16xf32>
    %859 = vector.extract_strided_slice %824 {offsets = [0, 2], sizes = [16, 1], strides = [1, 1]} : vector<16x16xf32> to vector<16x1xf32>
    %860 = vector.extract_strided_slice %825 {offsets = [2, 0], sizes = [1, 16], strides = [1, 1]} : vector<16x16xf32> to vector<1x16xf32>
    %861 = vector.broadcast %859 : vector<16x1xf32> to vector<16x16xf32>
    %862 = vector.broadcast %860 : vector<1x16xf32> to vector<16x16xf32>
    %863 = arith.addf %861, %862 : vector<16x16xf32>
    %864 = math.absf %863 : vector<16x16xf32>
    %865 = vector.extract_strided_slice %837 {offsets = [2, 0], sizes = [1, 1], strides = [1, 1]} : vector<16x1xf32> to vector<1x1xf32>
    %866 = vector.broadcast %865 : vector<1x1xf32> to vector<16x16xf32>
    %867 = arith.mulf %866, %864 : vector<16x16xf32>
    %868 = arith.addf %858, %867 : vector<16x16xf32>
    %869 = vector.extract_strided_slice %824 {offsets = [0, 3], sizes = [16, 1], strides = [1, 1]} : vector<16x16xf32> to vector<16x1xf32>
    %870 = vector.extract_strided_slice %825 {offsets = [3, 0], sizes = [1, 16], strides = [1, 1]} : vector<16x16xf32> to vector<1x16xf32>
    %871 = vector.broadcast %869 : vector<16x1xf32> to vector<16x16xf32>
    %872 = vector.broadcast %870 : vector<1x16xf32> to vector<16x16xf32>
    %873 = arith.addf %871, %872 : vector<16x16xf32>
    %874 = math.absf %873 : vector<16x16xf32>
    %875 = vector.extract_strided_slice %837 {offsets = [3, 0], sizes = [1, 1], strides = [1, 1]} : vector<16x1xf32> to vector<1x1xf32>
    %876 = vector.broadcast %875 : vector<1x1xf32> to vector<16x16xf32>
    %877 = arith.mulf %876, %874 : vector<16x16xf32>
    %878 = arith.addf %868, %877 : vector<16x16xf32>
    %879 = vector.extract_strided_slice %824 {offsets = [0, 4], sizes = [16, 1], strides = [1, 1]} : vector<16x16xf32> to vector<16x1xf32>
    %880 = vector.extract_strided_slice %825 {offsets = [4, 0], sizes = [1, 16], strides = [1, 1]} : vector<16x16xf32> to vector<1x16xf32>
    %881 = vector.broadcast %879 : vector<16x1xf32> to vector<16x16xf32>
    %882 = vector.broadcast %880 : vector<1x16xf32> to vector<16x16xf32>
    %883 = arith.addf %881, %882 : vector<16x16xf32>
    %884 = math.absf %883 : vector<16x16xf32>
    %885 = vector.extract_strided_slice %837 {offsets = [4, 0], sizes = [1, 1], strides = [1, 1]} : vector<16x1xf32> to vector<1x1xf32>
    %886 = vector.broadcast %885 : vector<1x1xf32> to vector<16x16xf32>
    %887 = arith.mulf %886, %884 : vector<16x16xf32>
    %888 = arith.addf %878, %887 : vector<16x16xf32>
    %889 = vector.extract_strided_slice %824 {offsets = [0, 5], sizes = [16, 1], strides = [1, 1]} : vector<16x16xf32> to vector<16x1xf32>
    %890 = vector.extract_strided_slice %825 {offsets = [5, 0], sizes = [1, 16], strides = [1, 1]} : vector<16x16xf32> to vector<1x16xf32>
    %891 = vector.broadcast %889 : vector<16x1xf32> to vector<16x16xf32>
    %892 = vector.broadcast %890 : vector<1x16xf32> to vector<16x16xf32>
    %893 = arith.addf %891, %892 : vector<16x16xf32>
    %894 = math.absf %893 : vector<16x16xf32>
    %895 = vector.extract_strided_slice %837 {offsets = [5, 0], sizes = [1, 1], strides = [1, 1]} : vector<16x1xf32> to vector<1x1xf32>
    %896 = vector.broadcast %895 : vector<1x1xf32> to vector<16x16xf32>
    %897 = arith.mulf %896, %894 : vector<16x16xf32>
    %898 = arith.addf %888, %897 : vector<16x16xf32>
    %899 = vector.extract_strided_slice %824 {offsets = [0, 6], sizes = [16, 1], strides = [1, 1]} : vector<16x16xf32> to vector<16x1xf32>
    %900 = vector.extract_strided_slice %825 {offsets = [6, 0], sizes = [1, 16], strides = [1, 1]} : vector<16x16xf32> to vector<1x16xf32>
    %901 = vector.broadcast %899 : vector<16x1xf32> to vector<16x16xf32>
    %902 = vector.broadcast %900 : vector<1x16xf32> to vector<16x16xf32>
    %903 = arith.addf %901, %902 : vector<16x16xf32>
    %904 = math.absf %903 : vector<16x16xf32>
    %905 = vector.extract_strided_slice %837 {offsets = [6, 0], sizes = [1, 1], strides = [1, 1]} : vector<16x1xf32> to vector<1x1xf32>
    %906 = vector.broadcast %905 : vector<1x1xf32> to vector<16x16xf32>
    %907 = arith.mulf %906, %904 : vector<16x16xf32>
    %908 = arith.addf %898, %907 : vector<16x16xf32>
    %909 = vector.extract_strided_slice %824 {offsets = [0, 7], sizes = [16, 1], strides = [1, 1]} : vector<16x16xf32> to vector<16x1xf32>
    %910 = vector.extract_strided_slice %825 {offsets = [7, 0], sizes = [1, 16], strides = [1, 1]} : vector<16x16xf32> to vector<1x16xf32>
    %911 = vector.broadcast %909 : vector<16x1xf32> to vector<16x16xf32>
    %912 = vector.broadcast %910 : vector<1x16xf32> to vector<16x16xf32>
    %913 = arith.addf %911, %912 : vector<16x16xf32>
    %914 = math.absf %913 : vector<16x16xf32>
    %915 = vector.extract_strided_slice %837 {offsets = [7, 0], sizes = [1, 1], strides = [1, 1]} : vector<16x1xf32> to vector<1x1xf32>
    %916 = vector.broadcast %915 : vector<1x1xf32> to vector<16x16xf32>
    %917 = arith.mulf %916, %914 : vector<16x16xf32>
    %918 = arith.addf %908, %917 : vector<16x16xf32>
    %919 = vector.extract_strided_slice %824 {offsets = [0, 8], sizes = [16, 1], strides = [1, 1]} : vector<16x16xf32> to vector<16x1xf32>
    %920 = vector.extract_strided_slice %825 {offsets = [8, 0], sizes = [1, 16], strides = [1, 1]} : vector<16x16xf32> to vector<1x16xf32>
    %921 = vector.broadcast %919 : vector<16x1xf32> to vector<16x16xf32>
    %922 = vector.broadcast %920 : vector<1x16xf32> to vector<16x16xf32>
    %923 = arith.addf %921, %922 : vector<16x16xf32>
    %924 = math.absf %923 : vector<16x16xf32>
    %925 = vector.extract_strided_slice %837 {offsets = [8, 0], sizes = [1, 1], strides = [1, 1]} : vector<16x1xf32> to vector<1x1xf32>
    %926 = vector.broadcast %925 : vector<1x1xf32> to vector<16x16xf32>
    %927 = arith.mulf %926, %924 : vector<16x16xf32>
    %928 = arith.addf %918, %927 : vector<16x16xf32>
    %929 = vector.extract_strided_slice %824 {offsets = [0, 9], sizes = [16, 1], strides = [1, 1]} : vector<16x16xf32> to vector<16x1xf32>
    %930 = vector.extract_strided_slice %825 {offsets = [9, 0], sizes = [1, 16], strides = [1, 1]} : vector<16x16xf32> to vector<1x16xf32>
    %931 = vector.broadcast %929 : vector<16x1xf32> to vector<16x16xf32>
    %932 = vector.broadcast %930 : vector<1x16xf32> to vector<16x16xf32>
    %933 = arith.addf %931, %932 : vector<16x16xf32>
    %934 = math.absf %933 : vector<16x16xf32>
    %935 = vector.extract_strided_slice %837 {offsets = [9, 0], sizes = [1, 1], strides = [1, 1]} : vector<16x1xf32> to vector<1x1xf32>
    %936 = vector.broadcast %935 : vector<1x1xf32> to vector<16x16xf32>
    %937 = arith.mulf %936, %934 : vector<16x16xf32>
    %938 = arith.addf %928, %937 : vector<16x16xf32>
    %939 = vector.extract_strided_slice %824 {offsets = [0, 10], sizes = [16, 1], strides = [1, 1]} : vector<16x16xf32> to vector<16x1xf32>
    %940 = vector.extract_strided_slice %825 {offsets = [10, 0], sizes = [1, 16], strides = [1, 1]} : vector<16x16xf32> to vector<1x16xf32>
    %941 = vector.broadcast %939 : vector<16x1xf32> to vector<16x16xf32>
    %942 = vector.broadcast %940 : vector<1x16xf32> to vector<16x16xf32>
    %943 = arith.addf %941, %942 : vector<16x16xf32>
    %944 = math.absf %943 : vector<16x16xf32>
    %945 = vector.extract_strided_slice %837 {offsets = [10, 0], sizes = [1, 1], strides = [1, 1]} : vector<16x1xf32> to vector<1x1xf32>
    %946 = vector.broadcast %945 : vector<1x1xf32> to vector<16x16xf32>
    %947 = arith.mulf %946, %944 : vector<16x16xf32>
    %948 = arith.addf %938, %947 : vector<16x16xf32>
    %949 = vector.extract_strided_slice %824 {offsets = [0, 11], sizes = [16, 1], strides = [1, 1]} : vector<16x16xf32> to vector<16x1xf32>
    %950 = vector.extract_strided_slice %825 {offsets = [11, 0], sizes = [1, 16], strides = [1, 1]} : vector<16x16xf32> to vector<1x16xf32>
    %951 = vector.broadcast %949 : vector<16x1xf32> to vector<16x16xf32>
    %952 = vector.broadcast %950 : vector<1x16xf32> to vector<16x16xf32>
    %953 = arith.addf %951, %952 : vector<16x16xf32>
    %954 = math.absf %953 : vector<16x16xf32>
    %955 = vector.extract_strided_slice %837 {offsets = [11, 0], sizes = [1, 1], strides = [1, 1]} : vector<16x1xf32> to vector<1x1xf32>
    %956 = vector.broadcast %955 : vector<1x1xf32> to vector<16x16xf32>
    %957 = arith.mulf %956, %954 : vector<16x16xf32>
    %958 = arith.addf %948, %957 : vector<16x16xf32>
    %959 = vector.extract_strided_slice %824 {offsets = [0, 12], sizes = [16, 1], strides = [1, 1]} : vector<16x16xf32> to vector<16x1xf32>
    %960 = vector.extract_strided_slice %825 {offsets = [12, 0], sizes = [1, 16], strides = [1, 1]} : vector<16x16xf32> to vector<1x16xf32>
    %961 = vector.broadcast %959 : vector<16x1xf32> to vector<16x16xf32>
    %962 = vector.broadcast %960 : vector<1x16xf32> to vector<16x16xf32>
    %963 = arith.addf %961, %962 : vector<16x16xf32>
    %964 = math.absf %963 : vector<16x16xf32>
    %965 = vector.extract_strided_slice %837 {offsets = [12, 0], sizes = [1, 1], strides = [1, 1]} : vector<16x1xf32> to vector<1x1xf32>
    %966 = vector.broadcast %965 : vector<1x1xf32> to vector<16x16xf32>
    %967 = arith.mulf %966, %964 : vector<16x16xf32>
    %968 = arith.addf %958, %967 : vector<16x16xf32>
    %969 = vector.extract_strided_slice %824 {offsets = [0, 13], sizes = [16, 1], strides = [1, 1]} : vector<16x16xf32> to vector<16x1xf32>
    %970 = vector.extract_strided_slice %825 {offsets = [13, 0], sizes = [1, 16], strides = [1, 1]} : vector<16x16xf32> to vector<1x16xf32>
    %971 = vector.broadcast %969 : vector<16x1xf32> to vector<16x16xf32>
    %972 = vector.broadcast %970 : vector<1x16xf32> to vector<16x16xf32>
    %973 = arith.addf %971, %972 : vector<16x16xf32>
    %974 = math.absf %973 : vector<16x16xf32>
    %975 = vector.extract_strided_slice %837 {offsets = [13, 0], sizes = [1, 1], strides = [1, 1]} : vector<16x1xf32> to vector<1x1xf32>
    %976 = vector.broadcast %975 : vector<1x1xf32> to vector<16x16xf32>
    %977 = arith.mulf %976, %974 : vector<16x16xf32>
    %978 = arith.addf %968, %977 : vector<16x16xf32>
    %979 = vector.extract_strided_slice %824 {offsets = [0, 14], sizes = [16, 1], strides = [1, 1]} : vector<16x16xf32> to vector<16x1xf32>
    %980 = vector.extract_strided_slice %825 {offsets = [14, 0], sizes = [1, 16], strides = [1, 1]} : vector<16x16xf32> to vector<1x16xf32>
    %981 = vector.broadcast %979 : vector<16x1xf32> to vector<16x16xf32>
    %982 = vector.broadcast %980 : vector<1x16xf32> to vector<16x16xf32>
    %983 = arith.addf %981, %982 : vector<16x16xf32>
    %984 = math.absf %983 : vector<16x16xf32>
    %985 = vector.extract_strided_slice %837 {offsets = [14, 0], sizes = [1, 1], strides = [1, 1]} : vector<16x1xf32> to vector<1x1xf32>
    %986 = vector.broadcast %985 : vector<1x1xf32> to vector<16x16xf32>
    %987 = arith.mulf %986, %984 : vector<16x16xf32>
    %988 = arith.addf %978, %987 : vector<16x16xf32>
    %989 = vector.extract_strided_slice %824 {offsets = [0, 15], sizes = [16, 1], strides = [1, 1]} : vector<16x16xf32> to vector<16x1xf32>
    %990 = vector.extract_strided_slice %825 {offsets = [15, 0], sizes = [1, 16], strides = [1, 1]} : vector<16x16xf32> to vector<1x16xf32>
    %991 = vector.broadcast %989 : vector<16x1xf32> to vector<16x16xf32>
    %992 = vector.broadcast %990 : vector<1x16xf32> to vector<16x16xf32>
    %993 = arith.addf %991, %992 : vector<16x16xf32>
    %994 = math.absf %993 : vector<16x16xf32>
    %995 = vector.extract_strided_slice %837 {offsets = [15, 0], sizes = [1, 1], strides = [1, 1]} : vector<16x1xf32> to vector<1x1xf32>
    %996 = vector.broadcast %995 : vector<1x1xf32> to vector<16x16xf32>
    %997 = arith.mulf %996, %994 : vector<16x16xf32>
    %998 = arith.addf %988, %997 : vector<16x16xf32>
    %999 = vector.broadcast %831 : vector<16x1xf32> to vector<16x16xf32>
    %1000 = vector.broadcast %835 : vector<1x16xf32> to vector<16x16xf32>
    %1001 = arith.addf %999, %1000 : vector<16x16xf32>
    %cst_71 = arith.constant 6.000000e-01 : f32
    %1002 = vector.broadcast %cst_71 : f32 to vector<16x16xf32>
    %1003 = arith.mulf %1002, %1001 : vector<16x16xf32>
    %1004 = arith.addf %1003, %998 : vector<16x16xf32>
    %1005 = arith.addf %1004, %2 : vector<16x16xf32>
    %cst_72 = arith.constant dense<0xFF800000> : vector<16xf32>
    %1006 = vector.multi_reduction <maximumf>, %1005, %cst_72 [1] : vector<16x16xf32> to vector<16xf32>
    %1007 = vector.shape_cast %1006 : vector<16xf32> to vector<16x1xf32>
    %1008 = vector.broadcast %1007 : vector<16x1xf32> to vector<16x16xf32>
    %1009 = arith.subf %1005, %1008 : vector<16x16xf32>
    %1010 = math.exp %1009 : vector<16x16xf32>
    %cst_73 = arith.constant dense<0.000000e+00> : vector<16x16xf32>
    %1011 = tpu.matmul %1010, %823, %cst_73 {dimension_numbers = #tpu.dot_dimension_numbers<[1], [0], [0], [1], [0, 0, 1, 1], [], []>} : vector<16x16xf32>, vector<16x16xf32>, vector<16x16xf32> -> vector<16x16xf32>
    %cst_74 = arith.constant dense<0.000000e+00> : vector<16xf32>
    %1012 = vector.multi_reduction <add>, %1010, %cst_74 [1] : vector<16x16xf32> to vector<16xf32>
    %1013 = vector.shape_cast %1012 : vector<16xf32> to vector<16x1xf32>
    %1014 = tpu.reciprocal %1013 {approx = true} : vector<16x1xf32> -> vector<16x1xf32>
    %1015 = vector.broadcast %1014 : vector<16x1xf32> to vector<16x16xf32>
    %1016 = arith.mulf %1011, %1015 : vector<16x16xf32>
    %1017 = arith.addf %822, %1016 : vector<16x16xf32>
    %1018 = vector.extract_strided_slice %818 {offsets = [0, 16], sizes = [16, 16], strides = [1, 1]} : vector<16x128xf32> to vector<16x16xf32>
    %1019 = vector.extract_strided_slice %818 {offsets = [0, 80], sizes = [16, 16], strides = [1, 1]} : vector<16x128xf32> to vector<16x16xf32>
    %1020 = vector.extract_strided_slice %821 {offsets = [16, 0], sizes = [16, 16], strides = [1, 1]} : vector<64x16xf32> to vector<16x16xf32>
    %1021 = vector.extract_strided_slice %810 {offsets = [1, 0], sizes = [1, 16], strides = [1, 1]} : vector<4x16xf32> to vector<1x16xf32>
    %1022 = vector.extract_strided_slice %811 {offsets = [16, 0], sizes = [16, 1], strides = [1, 1]} : vector<64x1xf32> to vector<16x1xf32>
    %1023 = vector.broadcast %1021 : vector<1x16xf32> to vector<16x16xf32>
    %1024 = arith.mulf %1019, %1023 : vector<16x16xf32>
    %cst_75 = arith.constant dense<0.000000e+00> : vector<16xf32>
    %1025 = vector.multi_reduction <add>, %1024, %cst_75 [1] : vector<16x16xf32> to vector<16xf32>
    %1026 = vector.shape_cast %1025 : vector<16xf32> to vector<16x1xf32>
    %1027 = vector.broadcast %1022 : vector<16x1xf32> to vector<16x16xf32>
    %1028 = arith.mulf %1020, %1027 : vector<16x16xf32>
    %cst_76 = arith.constant dense<0.000000e+00> : vector<16xf32>
    %1029 = vector.multi_reduction <add>, %1028, %cst_76 [0] : vector<16x16xf32> to vector<16xf32>
    %1030 = vector.shape_cast %1029 : vector<16xf32> to vector<1x16xf32>
    %cst_77 = arith.constant 4.000000e-01 : f32
    %1031 = vector.broadcast %cst_77 : f32 to vector<16x1xf32>
    %1032 = arith.mulf %1031, %1022 : vector<16x1xf32>
    %cst_78 = arith.constant 0.000000e+00 : f32
    %1033 = vector.broadcast %cst_78 : f32 to vector<16x16xf32>
    %1034 = vector.extract_strided_slice %1019 {offsets = [0, 0], sizes = [16, 1], strides = [1, 1]} : vector<16x16xf32> to vector<16x1xf32>
    %1035 = vector.extract_strided_slice %1020 {offsets = [0, 0], sizes = [1, 16], strides = [1, 1]} : vector<16x16xf32> to vector<1x16xf32>
    %1036 = vector.broadcast %1034 : vector<16x1xf32> to vector<16x16xf32>
    %1037 = vector.broadcast %1035 : vector<1x16xf32> to vector<16x16xf32>
    %1038 = arith.addf %1036, %1037 : vector<16x16xf32>
    %1039 = math.absf %1038 : vector<16x16xf32>
    %1040 = vector.extract_strided_slice %1032 {offsets = [0, 0], sizes = [1, 1], strides = [1, 1]} : vector<16x1xf32> to vector<1x1xf32>
    %1041 = vector.broadcast %1040 : vector<1x1xf32> to vector<16x16xf32>
    %1042 = arith.mulf %1041, %1039 : vector<16x16xf32>
    %1043 = arith.addf %1033, %1042 : vector<16x16xf32>
    %1044 = vector.extract_strided_slice %1019 {offsets = [0, 1], sizes = [16, 1], strides = [1, 1]} : vector<16x16xf32> to vector<16x1xf32>
    %1045 = vector.extract_strided_slice %1020 {offsets = [1, 0], sizes = [1, 16], strides = [1, 1]} : vector<16x16xf32> to vector<1x16xf32>
    %1046 = vector.broadcast %1044 : vector<16x1xf32> to vector<16x16xf32>
    %1047 = vector.broadcast %1045 : vector<1x16xf32> to vector<16x16xf32>
    %1048 = arith.addf %1046, %1047 : vector<16x16xf32>
    %1049 = math.absf %1048 : vector<16x16xf32>
    %1050 = vector.extract_strided_slice %1032 {offsets = [1, 0], sizes = [1, 1], strides = [1, 1]} : vector<16x1xf32> to vector<1x1xf32>
    %1051 = vector.broadcast %1050 : vector<1x1xf32> to vector<16x16xf32>
    %1052 = arith.mulf %1051, %1049 : vector<16x16xf32>
    %1053 = arith.addf %1043, %1052 : vector<16x16xf32>
    %1054 = vector.extract_strided_slice %1019 {offsets = [0, 2], sizes = [16, 1], strides = [1, 1]} : vector<16x16xf32> to vector<16x1xf32>
    %1055 = vector.extract_strided_slice %1020 {offsets = [2, 0], sizes = [1, 16], strides = [1, 1]} : vector<16x16xf32> to vector<1x16xf32>
    %1056 = vector.broadcast %1054 : vector<16x1xf32> to vector<16x16xf32>
    %1057 = vector.broadcast %1055 : vector<1x16xf32> to vector<16x16xf32>
    %1058 = arith.addf %1056, %1057 : vector<16x16xf32>
    %1059 = math.absf %1058 : vector<16x16xf32>
    %1060 = vector.extract_strided_slice %1032 {offsets = [2, 0], sizes = [1, 1], strides = [1, 1]} : vector<16x1xf32> to vector<1x1xf32>
    %1061 = vector.broadcast %1060 : vector<1x1xf32> to vector<16x16xf32>
    %1062 = arith.mulf %1061, %1059 : vector<16x16xf32>
    %1063 = arith.addf %1053, %1062 : vector<16x16xf32>
    %1064 = vector.extract_strided_slice %1019 {offsets = [0, 3], sizes = [16, 1], strides = [1, 1]} : vector<16x16xf32> to vector<16x1xf32>
    %1065 = vector.extract_strided_slice %1020 {offsets = [3, 0], sizes = [1, 16], strides = [1, 1]} : vector<16x16xf32> to vector<1x16xf32>
    %1066 = vector.broadcast %1064 : vector<16x1xf32> to vector<16x16xf32>
    %1067 = vector.broadcast %1065 : vector<1x16xf32> to vector<16x16xf32>
    %1068 = arith.addf %1066, %1067 : vector<16x16xf32>
    %1069 = math.absf %1068 : vector<16x16xf32>
    %1070 = vector.extract_strided_slice %1032 {offsets = [3, 0], sizes = [1, 1], strides = [1, 1]} : vector<16x1xf32> to vector<1x1xf32>
    %1071 = vector.broadcast %1070 : vector<1x1xf32> to vector<16x16xf32>
    %1072 = arith.mulf %1071, %1069 : vector<16x16xf32>
    %1073 = arith.addf %1063, %1072 : vector<16x16xf32>
    %1074 = vector.extract_strided_slice %1019 {offsets = [0, 4], sizes = [16, 1], strides = [1, 1]} : vector<16x16xf32> to vector<16x1xf32>
    %1075 = vector.extract_strided_slice %1020 {offsets = [4, 0], sizes = [1, 16], strides = [1, 1]} : vector<16x16xf32> to vector<1x16xf32>
    %1076 = vector.broadcast %1074 : vector<16x1xf32> to vector<16x16xf32>
    %1077 = vector.broadcast %1075 : vector<1x16xf32> to vector<16x16xf32>
    %1078 = arith.addf %1076, %1077 : vector<16x16xf32>
    %1079 = math.absf %1078 : vector<16x16xf32>
    %1080 = vector.extract_strided_slice %1032 {offsets = [4, 0], sizes = [1, 1], strides = [1, 1]} : vector<16x1xf32> to vector<1x1xf32>
    %1081 = vector.broadcast %1080 : vector<1x1xf32> to vector<16x16xf32>
    %1082 = arith.mulf %1081, %1079 : vector<16x16xf32>
    %1083 = arith.addf %1073, %1082 : vector<16x16xf32>
    %1084 = vector.extract_strided_slice %1019 {offsets = [0, 5], sizes = [16, 1], strides = [1, 1]} : vector<16x16xf32> to vector<16x1xf32>
    %1085 = vector.extract_strided_slice %1020 {offsets = [5, 0], sizes = [1, 16], strides = [1, 1]} : vector<16x16xf32> to vector<1x16xf32>
    %1086 = vector.broadcast %1084 : vector<16x1xf32> to vector<16x16xf32>
    %1087 = vector.broadcast %1085 : vector<1x16xf32> to vector<16x16xf32>
    %1088 = arith.addf %1086, %1087 : vector<16x16xf32>
    %1089 = math.absf %1088 : vector<16x16xf32>
    %1090 = vector.extract_strided_slice %1032 {offsets = [5, 0], sizes = [1, 1], strides = [1, 1]} : vector<16x1xf32> to vector<1x1xf32>
    %1091 = vector.broadcast %1090 : vector<1x1xf32> to vector<16x16xf32>
    %1092 = arith.mulf %1091, %1089 : vector<16x16xf32>
    %1093 = arith.addf %1083, %1092 : vector<16x16xf32>
    %1094 = vector.extract_strided_slice %1019 {offsets = [0, 6], sizes = [16, 1], strides = [1, 1]} : vector<16x16xf32> to vector<16x1xf32>
    %1095 = vector.extract_strided_slice %1020 {offsets = [6, 0], sizes = [1, 16], strides = [1, 1]} : vector<16x16xf32> to vector<1x16xf32>
    %1096 = vector.broadcast %1094 : vector<16x1xf32> to vector<16x16xf32>
    %1097 = vector.broadcast %1095 : vector<1x16xf32> to vector<16x16xf32>
    %1098 = arith.addf %1096, %1097 : vector<16x16xf32>
    %1099 = math.absf %1098 : vector<16x16xf32>
    %1100 = vector.extract_strided_slice %1032 {offsets = [6, 0], sizes = [1, 1], strides = [1, 1]} : vector<16x1xf32> to vector<1x1xf32>
    %1101 = vector.broadcast %1100 : vector<1x1xf32> to vector<16x16xf32>
    %1102 = arith.mulf %1101, %1099 : vector<16x16xf32>
    %1103 = arith.addf %1093, %1102 : vector<16x16xf32>
    %1104 = vector.extract_strided_slice %1019 {offsets = [0, 7], sizes = [16, 1], strides = [1, 1]} : vector<16x16xf32> to vector<16x1xf32>
    %1105 = vector.extract_strided_slice %1020 {offsets = [7, 0], sizes = [1, 16], strides = [1, 1]} : vector<16x16xf32> to vector<1x16xf32>
    %1106 = vector.broadcast %1104 : vector<16x1xf32> to vector<16x16xf32>
    %1107 = vector.broadcast %1105 : vector<1x16xf32> to vector<16x16xf32>
    %1108 = arith.addf %1106, %1107 : vector<16x16xf32>
    %1109 = math.absf %1108 : vector<16x16xf32>
    %1110 = vector.extract_strided_slice %1032 {offsets = [7, 0], sizes = [1, 1], strides = [1, 1]} : vector<16x1xf32> to vector<1x1xf32>
    %1111 = vector.broadcast %1110 : vector<1x1xf32> to vector<16x16xf32>
    %1112 = arith.mulf %1111, %1109 : vector<16x16xf32>
    %1113 = arith.addf %1103, %1112 : vector<16x16xf32>
    %1114 = vector.extract_strided_slice %1019 {offsets = [0, 8], sizes = [16, 1], strides = [1, 1]} : vector<16x16xf32> to vector<16x1xf32>
    %1115 = vector.extract_strided_slice %1020 {offsets = [8, 0], sizes = [1, 16], strides = [1, 1]} : vector<16x16xf32> to vector<1x16xf32>
    %1116 = vector.broadcast %1114 : vector<16x1xf32> to vector<16x16xf32>
    %1117 = vector.broadcast %1115 : vector<1x16xf32> to vector<16x16xf32>
    %1118 = arith.addf %1116, %1117 : vector<16x16xf32>
    %1119 = math.absf %1118 : vector<16x16xf32>
    %1120 = vector.extract_strided_slice %1032 {offsets = [8, 0], sizes = [1, 1], strides = [1, 1]} : vector<16x1xf32> to vector<1x1xf32>
    %1121 = vector.broadcast %1120 : vector<1x1xf32> to vector<16x16xf32>
    %1122 = arith.mulf %1121, %1119 : vector<16x16xf32>
    %1123 = arith.addf %1113, %1122 : vector<16x16xf32>
    %1124 = vector.extract_strided_slice %1019 {offsets = [0, 9], sizes = [16, 1], strides = [1, 1]} : vector<16x16xf32> to vector<16x1xf32>
    %1125 = vector.extract_strided_slice %1020 {offsets = [9, 0], sizes = [1, 16], strides = [1, 1]} : vector<16x16xf32> to vector<1x16xf32>
    %1126 = vector.broadcast %1124 : vector<16x1xf32> to vector<16x16xf32>
    %1127 = vector.broadcast %1125 : vector<1x16xf32> to vector<16x16xf32>
    %1128 = arith.addf %1126, %1127 : vector<16x16xf32>
    %1129 = math.absf %1128 : vector<16x16xf32>
    %1130 = vector.extract_strided_slice %1032 {offsets = [9, 0], sizes = [1, 1], strides = [1, 1]} : vector<16x1xf32> to vector<1x1xf32>
    %1131 = vector.broadcast %1130 : vector<1x1xf32> to vector<16x16xf32>
    %1132 = arith.mulf %1131, %1129 : vector<16x16xf32>
    %1133 = arith.addf %1123, %1132 : vector<16x16xf32>
    %1134 = vector.extract_strided_slice %1019 {offsets = [0, 10], sizes = [16, 1], strides = [1, 1]} : vector<16x16xf32> to vector<16x1xf32>
    %1135 = vector.extract_strided_slice %1020 {offsets = [10, 0], sizes = [1, 16], strides = [1, 1]} : vector<16x16xf32> to vector<1x16xf32>
    %1136 = vector.broadcast %1134 : vector<16x1xf32> to vector<16x16xf32>
    %1137 = vector.broadcast %1135 : vector<1x16xf32> to vector<16x16xf32>
    %1138 = arith.addf %1136, %1137 : vector<16x16xf32>
    %1139 = math.absf %1138 : vector<16x16xf32>
    %1140 = vector.extract_strided_slice %1032 {offsets = [10, 0], sizes = [1, 1], strides = [1, 1]} : vector<16x1xf32> to vector<1x1xf32>
    %1141 = vector.broadcast %1140 : vector<1x1xf32> to vector<16x16xf32>
    %1142 = arith.mulf %1141, %1139 : vector<16x16xf32>
    %1143 = arith.addf %1133, %1142 : vector<16x16xf32>
    %1144 = vector.extract_strided_slice %1019 {offsets = [0, 11], sizes = [16, 1], strides = [1, 1]} : vector<16x16xf32> to vector<16x1xf32>
    %1145 = vector.extract_strided_slice %1020 {offsets = [11, 0], sizes = [1, 16], strides = [1, 1]} : vector<16x16xf32> to vector<1x16xf32>
    %1146 = vector.broadcast %1144 : vector<16x1xf32> to vector<16x16xf32>
    %1147 = vector.broadcast %1145 : vector<1x16xf32> to vector<16x16xf32>
    %1148 = arith.addf %1146, %1147 : vector<16x16xf32>
    %1149 = math.absf %1148 : vector<16x16xf32>
    %1150 = vector.extract_strided_slice %1032 {offsets = [11, 0], sizes = [1, 1], strides = [1, 1]} : vector<16x1xf32> to vector<1x1xf32>
    %1151 = vector.broadcast %1150 : vector<1x1xf32> to vector<16x16xf32>
    %1152 = arith.mulf %1151, %1149 : vector<16x16xf32>
    %1153 = arith.addf %1143, %1152 : vector<16x16xf32>
    %1154 = vector.extract_strided_slice %1019 {offsets = [0, 12], sizes = [16, 1], strides = [1, 1]} : vector<16x16xf32> to vector<16x1xf32>
    %1155 = vector.extract_strided_slice %1020 {offsets = [12, 0], sizes = [1, 16], strides = [1, 1]} : vector<16x16xf32> to vector<1x16xf32>
    %1156 = vector.broadcast %1154 : vector<16x1xf32> to vector<16x16xf32>
    %1157 = vector.broadcast %1155 : vector<1x16xf32> to vector<16x16xf32>
    %1158 = arith.addf %1156, %1157 : vector<16x16xf32>
    %1159 = math.absf %1158 : vector<16x16xf32>
    %1160 = vector.extract_strided_slice %1032 {offsets = [12, 0], sizes = [1, 1], strides = [1, 1]} : vector<16x1xf32> to vector<1x1xf32>
    %1161 = vector.broadcast %1160 : vector<1x1xf32> to vector<16x16xf32>
    %1162 = arith.mulf %1161, %1159 : vector<16x16xf32>
    %1163 = arith.addf %1153, %1162 : vector<16x16xf32>
    %1164 = vector.extract_strided_slice %1019 {offsets = [0, 13], sizes = [16, 1], strides = [1, 1]} : vector<16x16xf32> to vector<16x1xf32>
    %1165 = vector.extract_strided_slice %1020 {offsets = [13, 0], sizes = [1, 16], strides = [1, 1]} : vector<16x16xf32> to vector<1x16xf32>
    %1166 = vector.broadcast %1164 : vector<16x1xf32> to vector<16x16xf32>
    %1167 = vector.broadcast %1165 : vector<1x16xf32> to vector<16x16xf32>
    %1168 = arith.addf %1166, %1167 : vector<16x16xf32>
    %1169 = math.absf %1168 : vector<16x16xf32>
    %1170 = vector.extract_strided_slice %1032 {offsets = [13, 0], sizes = [1, 1], strides = [1, 1]} : vector<16x1xf32> to vector<1x1xf32>
    %1171 = vector.broadcast %1170 : vector<1x1xf32> to vector<16x16xf32>
    %1172 = arith.mulf %1171, %1169 : vector<16x16xf32>
    %1173 = arith.addf %1163, %1172 : vector<16x16xf32>
    %1174 = vector.extract_strided_slice %1019 {offsets = [0, 14], sizes = [16, 1], strides = [1, 1]} : vector<16x16xf32> to vector<16x1xf32>
    %1175 = vector.extract_strided_slice %1020 {offsets = [14, 0], sizes = [1, 16], strides = [1, 1]} : vector<16x16xf32> to vector<1x16xf32>
    %1176 = vector.broadcast %1174 : vector<16x1xf32> to vector<16x16xf32>
    %1177 = vector.broadcast %1175 : vector<1x16xf32> to vector<16x16xf32>
    %1178 = arith.addf %1176, %1177 : vector<16x16xf32>
    %1179 = math.absf %1178 : vector<16x16xf32>
    %1180 = vector.extract_strided_slice %1032 {offsets = [14, 0], sizes = [1, 1], strides = [1, 1]} : vector<16x1xf32> to vector<1x1xf32>
    %1181 = vector.broadcast %1180 : vector<1x1xf32> to vector<16x16xf32>
    %1182 = arith.mulf %1181, %1179 : vector<16x16xf32>
    %1183 = arith.addf %1173, %1182 : vector<16x16xf32>
    %1184 = vector.extract_strided_slice %1019 {offsets = [0, 15], sizes = [16, 1], strides = [1, 1]} : vector<16x16xf32> to vector<16x1xf32>
    %1185 = vector.extract_strided_slice %1020 {offsets = [15, 0], sizes = [1, 16], strides = [1, 1]} : vector<16x16xf32> to vector<1x16xf32>
    %1186 = vector.broadcast %1184 : vector<16x1xf32> to vector<16x16xf32>
    %1187 = vector.broadcast %1185 : vector<1x16xf32> to vector<16x16xf32>
    %1188 = arith.addf %1186, %1187 : vector<16x16xf32>
    %1189 = math.absf %1188 : vector<16x16xf32>
    %1190 = vector.extract_strided_slice %1032 {offsets = [15, 0], sizes = [1, 1], strides = [1, 1]} : vector<16x1xf32> to vector<1x1xf32>
    %1191 = vector.broadcast %1190 : vector<1x1xf32> to vector<16x16xf32>
    %1192 = arith.mulf %1191, %1189 : vector<16x16xf32>
    %1193 = arith.addf %1183, %1192 : vector<16x16xf32>
    %1194 = vector.broadcast %1026 : vector<16x1xf32> to vector<16x16xf32>
    %1195 = vector.broadcast %1030 : vector<1x16xf32> to vector<16x16xf32>
    %1196 = arith.addf %1194, %1195 : vector<16x16xf32>
    %cst_79 = arith.constant 6.000000e-01 : f32
    %1197 = vector.broadcast %cst_79 : f32 to vector<16x16xf32>
    %1198 = arith.mulf %1197, %1196 : vector<16x16xf32>
    %1199 = arith.addf %1198, %1193 : vector<16x16xf32>
    %1200 = arith.addf %1199, %2 : vector<16x16xf32>
    %cst_80 = arith.constant dense<0xFF800000> : vector<16xf32>
    %1201 = vector.multi_reduction <maximumf>, %1200, %cst_80 [1] : vector<16x16xf32> to vector<16xf32>
    %1202 = vector.shape_cast %1201 : vector<16xf32> to vector<16x1xf32>
    %1203 = vector.broadcast %1202 : vector<16x1xf32> to vector<16x16xf32>
    %1204 = arith.subf %1200, %1203 : vector<16x16xf32>
    %1205 = math.exp %1204 : vector<16x16xf32>
    %cst_81 = arith.constant dense<0.000000e+00> : vector<16x16xf32>
    %1206 = tpu.matmul %1205, %1018, %cst_81 {dimension_numbers = #tpu.dot_dimension_numbers<[1], [0], [0], [1], [0, 0, 1, 1], [], []>} : vector<16x16xf32>, vector<16x16xf32>, vector<16x16xf32> -> vector<16x16xf32>
    %cst_82 = arith.constant dense<0.000000e+00> : vector<16xf32>
    %1207 = vector.multi_reduction <add>, %1205, %cst_82 [1] : vector<16x16xf32> to vector<16xf32>
    %1208 = vector.shape_cast %1207 : vector<16xf32> to vector<16x1xf32>
    %1209 = tpu.reciprocal %1208 {approx = true} : vector<16x1xf32> -> vector<16x1xf32>
    %1210 = vector.broadcast %1209 : vector<16x1xf32> to vector<16x16xf32>
    %1211 = arith.mulf %1206, %1210 : vector<16x16xf32>
    %1212 = arith.addf %1017, %1211 : vector<16x16xf32>
    %1213 = vector.extract_strided_slice %818 {offsets = [0, 32], sizes = [16, 16], strides = [1, 1]} : vector<16x128xf32> to vector<16x16xf32>
    %1214 = vector.extract_strided_slice %818 {offsets = [0, 96], sizes = [16, 16], strides = [1, 1]} : vector<16x128xf32> to vector<16x16xf32>
    %1215 = vector.extract_strided_slice %821 {offsets = [32, 0], sizes = [16, 16], strides = [1, 1]} : vector<64x16xf32> to vector<16x16xf32>
    %1216 = vector.extract_strided_slice %810 {offsets = [2, 0], sizes = [1, 16], strides = [1, 1]} : vector<4x16xf32> to vector<1x16xf32>
    %1217 = vector.extract_strided_slice %811 {offsets = [32, 0], sizes = [16, 1], strides = [1, 1]} : vector<64x1xf32> to vector<16x1xf32>
    %1218 = vector.broadcast %1216 : vector<1x16xf32> to vector<16x16xf32>
    %1219 = arith.mulf %1214, %1218 : vector<16x16xf32>
    %cst_83 = arith.constant dense<0.000000e+00> : vector<16xf32>
    %1220 = vector.multi_reduction <add>, %1219, %cst_83 [1] : vector<16x16xf32> to vector<16xf32>
    %1221 = vector.shape_cast %1220 : vector<16xf32> to vector<16x1xf32>
    %1222 = vector.broadcast %1217 : vector<16x1xf32> to vector<16x16xf32>
    %1223 = arith.mulf %1215, %1222 : vector<16x16xf32>
    %cst_84 = arith.constant dense<0.000000e+00> : vector<16xf32>
    %1224 = vector.multi_reduction <add>, %1223, %cst_84 [0] : vector<16x16xf32> to vector<16xf32>
    %1225 = vector.shape_cast %1224 : vector<16xf32> to vector<1x16xf32>
    %cst_85 = arith.constant 4.000000e-01 : f32
    %1226 = vector.broadcast %cst_85 : f32 to vector<16x1xf32>
    %1227 = arith.mulf %1226, %1217 : vector<16x1xf32>
    %cst_86 = arith.constant 0.000000e+00 : f32
    %1228 = vector.broadcast %cst_86 : f32 to vector<16x16xf32>
    %1229 = vector.extract_strided_slice %1214 {offsets = [0, 0], sizes = [16, 1], strides = [1, 1]} : vector<16x16xf32> to vector<16x1xf32>
    %1230 = vector.extract_strided_slice %1215 {offsets = [0, 0], sizes = [1, 16], strides = [1, 1]} : vector<16x16xf32> to vector<1x16xf32>
    %1231 = vector.broadcast %1229 : vector<16x1xf32> to vector<16x16xf32>
    %1232 = vector.broadcast %1230 : vector<1x16xf32> to vector<16x16xf32>
    %1233 = arith.addf %1231, %1232 : vector<16x16xf32>
    %1234 = math.absf %1233 : vector<16x16xf32>
    %1235 = vector.extract_strided_slice %1227 {offsets = [0, 0], sizes = [1, 1], strides = [1, 1]} : vector<16x1xf32> to vector<1x1xf32>
    %1236 = vector.broadcast %1235 : vector<1x1xf32> to vector<16x16xf32>
    %1237 = arith.mulf %1236, %1234 : vector<16x16xf32>
    %1238 = arith.addf %1228, %1237 : vector<16x16xf32>
    %1239 = vector.extract_strided_slice %1214 {offsets = [0, 1], sizes = [16, 1], strides = [1, 1]} : vector<16x16xf32> to vector<16x1xf32>
    %1240 = vector.extract_strided_slice %1215 {offsets = [1, 0], sizes = [1, 16], strides = [1, 1]} : vector<16x16xf32> to vector<1x16xf32>
    %1241 = vector.broadcast %1239 : vector<16x1xf32> to vector<16x16xf32>
    %1242 = vector.broadcast %1240 : vector<1x16xf32> to vector<16x16xf32>
    %1243 = arith.addf %1241, %1242 : vector<16x16xf32>
    %1244 = math.absf %1243 : vector<16x16xf32>
    %1245 = vector.extract_strided_slice %1227 {offsets = [1, 0], sizes = [1, 1], strides = [1, 1]} : vector<16x1xf32> to vector<1x1xf32>
    %1246 = vector.broadcast %1245 : vector<1x1xf32> to vector<16x16xf32>
    %1247 = arith.mulf %1246, %1244 : vector<16x16xf32>
    %1248 = arith.addf %1238, %1247 : vector<16x16xf32>
    %1249 = vector.extract_strided_slice %1214 {offsets = [0, 2], sizes = [16, 1], strides = [1, 1]} : vector<16x16xf32> to vector<16x1xf32>
    %1250 = vector.extract_strided_slice %1215 {offsets = [2, 0], sizes = [1, 16], strides = [1, 1]} : vector<16x16xf32> to vector<1x16xf32>
    %1251 = vector.broadcast %1249 : vector<16x1xf32> to vector<16x16xf32>
    %1252 = vector.broadcast %1250 : vector<1x16xf32> to vector<16x16xf32>
    %1253 = arith.addf %1251, %1252 : vector<16x16xf32>
    %1254 = math.absf %1253 : vector<16x16xf32>
    %1255 = vector.extract_strided_slice %1227 {offsets = [2, 0], sizes = [1, 1], strides = [1, 1]} : vector<16x1xf32> to vector<1x1xf32>
    %1256 = vector.broadcast %1255 : vector<1x1xf32> to vector<16x16xf32>
    %1257 = arith.mulf %1256, %1254 : vector<16x16xf32>
    %1258 = arith.addf %1248, %1257 : vector<16x16xf32>
    %1259 = vector.extract_strided_slice %1214 {offsets = [0, 3], sizes = [16, 1], strides = [1, 1]} : vector<16x16xf32> to vector<16x1xf32>
    %1260 = vector.extract_strided_slice %1215 {offsets = [3, 0], sizes = [1, 16], strides = [1, 1]} : vector<16x16xf32> to vector<1x16xf32>
    %1261 = vector.broadcast %1259 : vector<16x1xf32> to vector<16x16xf32>
    %1262 = vector.broadcast %1260 : vector<1x16xf32> to vector<16x16xf32>
    %1263 = arith.addf %1261, %1262 : vector<16x16xf32>
    %1264 = math.absf %1263 : vector<16x16xf32>
    %1265 = vector.extract_strided_slice %1227 {offsets = [3, 0], sizes = [1, 1], strides = [1, 1]} : vector<16x1xf32> to vector<1x1xf32>
    %1266 = vector.broadcast %1265 : vector<1x1xf32> to vector<16x16xf32>
    %1267 = arith.mulf %1266, %1264 : vector<16x16xf32>
    %1268 = arith.addf %1258, %1267 : vector<16x16xf32>
    %1269 = vector.extract_strided_slice %1214 {offsets = [0, 4], sizes = [16, 1], strides = [1, 1]} : vector<16x16xf32> to vector<16x1xf32>
    %1270 = vector.extract_strided_slice %1215 {offsets = [4, 0], sizes = [1, 16], strides = [1, 1]} : vector<16x16xf32> to vector<1x16xf32>
    %1271 = vector.broadcast %1269 : vector<16x1xf32> to vector<16x16xf32>
    %1272 = vector.broadcast %1270 : vector<1x16xf32> to vector<16x16xf32>
    %1273 = arith.addf %1271, %1272 : vector<16x16xf32>
    %1274 = math.absf %1273 : vector<16x16xf32>
    %1275 = vector.extract_strided_slice %1227 {offsets = [4, 0], sizes = [1, 1], strides = [1, 1]} : vector<16x1xf32> to vector<1x1xf32>
    %1276 = vector.broadcast %1275 : vector<1x1xf32> to vector<16x16xf32>
    %1277 = arith.mulf %1276, %1274 : vector<16x16xf32>
    %1278 = arith.addf %1268, %1277 : vector<16x16xf32>
    %1279 = vector.extract_strided_slice %1214 {offsets = [0, 5], sizes = [16, 1], strides = [1, 1]} : vector<16x16xf32> to vector<16x1xf32>
    %1280 = vector.extract_strided_slice %1215 {offsets = [5, 0], sizes = [1, 16], strides = [1, 1]} : vector<16x16xf32> to vector<1x16xf32>
    %1281 = vector.broadcast %1279 : vector<16x1xf32> to vector<16x16xf32>
    %1282 = vector.broadcast %1280 : vector<1x16xf32> to vector<16x16xf32>
    %1283 = arith.addf %1281, %1282 : vector<16x16xf32>
    %1284 = math.absf %1283 : vector<16x16xf32>
    %1285 = vector.extract_strided_slice %1227 {offsets = [5, 0], sizes = [1, 1], strides = [1, 1]} : vector<16x1xf32> to vector<1x1xf32>
    %1286 = vector.broadcast %1285 : vector<1x1xf32> to vector<16x16xf32>
    %1287 = arith.mulf %1286, %1284 : vector<16x16xf32>
    %1288 = arith.addf %1278, %1287 : vector<16x16xf32>
    %1289 = vector.extract_strided_slice %1214 {offsets = [0, 6], sizes = [16, 1], strides = [1, 1]} : vector<16x16xf32> to vector<16x1xf32>
    %1290 = vector.extract_strided_slice %1215 {offsets = [6, 0], sizes = [1, 16], strides = [1, 1]} : vector<16x16xf32> to vector<1x16xf32>
    %1291 = vector.broadcast %1289 : vector<16x1xf32> to vector<16x16xf32>
    %1292 = vector.broadcast %1290 : vector<1x16xf32> to vector<16x16xf32>
    %1293 = arith.addf %1291, %1292 : vector<16x16xf32>
    %1294 = math.absf %1293 : vector<16x16xf32>
    %1295 = vector.extract_strided_slice %1227 {offsets = [6, 0], sizes = [1, 1], strides = [1, 1]} : vector<16x1xf32> to vector<1x1xf32>
    %1296 = vector.broadcast %1295 : vector<1x1xf32> to vector<16x16xf32>
    %1297 = arith.mulf %1296, %1294 : vector<16x16xf32>
    %1298 = arith.addf %1288, %1297 : vector<16x16xf32>
    %1299 = vector.extract_strided_slice %1214 {offsets = [0, 7], sizes = [16, 1], strides = [1, 1]} : vector<16x16xf32> to vector<16x1xf32>
    %1300 = vector.extract_strided_slice %1215 {offsets = [7, 0], sizes = [1, 16], strides = [1, 1]} : vector<16x16xf32> to vector<1x16xf32>
    %1301 = vector.broadcast %1299 : vector<16x1xf32> to vector<16x16xf32>
    %1302 = vector.broadcast %1300 : vector<1x16xf32> to vector<16x16xf32>
    %1303 = arith.addf %1301, %1302 : vector<16x16xf32>
    %1304 = math.absf %1303 : vector<16x16xf32>
    %1305 = vector.extract_strided_slice %1227 {offsets = [7, 0], sizes = [1, 1], strides = [1, 1]} : vector<16x1xf32> to vector<1x1xf32>
    %1306 = vector.broadcast %1305 : vector<1x1xf32> to vector<16x16xf32>
    %1307 = arith.mulf %1306, %1304 : vector<16x16xf32>
    %1308 = arith.addf %1298, %1307 : vector<16x16xf32>
    %1309 = vector.extract_strided_slice %1214 {offsets = [0, 8], sizes = [16, 1], strides = [1, 1]} : vector<16x16xf32> to vector<16x1xf32>
    %1310 = vector.extract_strided_slice %1215 {offsets = [8, 0], sizes = [1, 16], strides = [1, 1]} : vector<16x16xf32> to vector<1x16xf32>
    %1311 = vector.broadcast %1309 : vector<16x1xf32> to vector<16x16xf32>
    %1312 = vector.broadcast %1310 : vector<1x16xf32> to vector<16x16xf32>
    %1313 = arith.addf %1311, %1312 : vector<16x16xf32>
    %1314 = math.absf %1313 : vector<16x16xf32>
    %1315 = vector.extract_strided_slice %1227 {offsets = [8, 0], sizes = [1, 1], strides = [1, 1]} : vector<16x1xf32> to vector<1x1xf32>
    %1316 = vector.broadcast %1315 : vector<1x1xf32> to vector<16x16xf32>
    %1317 = arith.mulf %1316, %1314 : vector<16x16xf32>
    %1318 = arith.addf %1308, %1317 : vector<16x16xf32>
    %1319 = vector.extract_strided_slice %1214 {offsets = [0, 9], sizes = [16, 1], strides = [1, 1]} : vector<16x16xf32> to vector<16x1xf32>
    %1320 = vector.extract_strided_slice %1215 {offsets = [9, 0], sizes = [1, 16], strides = [1, 1]} : vector<16x16xf32> to vector<1x16xf32>
    %1321 = vector.broadcast %1319 : vector<16x1xf32> to vector<16x16xf32>
    %1322 = vector.broadcast %1320 : vector<1x16xf32> to vector<16x16xf32>
    %1323 = arith.addf %1321, %1322 : vector<16x16xf32>
    %1324 = math.absf %1323 : vector<16x16xf32>
    %1325 = vector.extract_strided_slice %1227 {offsets = [9, 0], sizes = [1, 1], strides = [1, 1]} : vector<16x1xf32> to vector<1x1xf32>
    %1326 = vector.broadcast %1325 : vector<1x1xf32> to vector<16x16xf32>
    %1327 = arith.mulf %1326, %1324 : vector<16x16xf32>
    %1328 = arith.addf %1318, %1327 : vector<16x16xf32>
    %1329 = vector.extract_strided_slice %1214 {offsets = [0, 10], sizes = [16, 1], strides = [1, 1]} : vector<16x16xf32> to vector<16x1xf32>
    %1330 = vector.extract_strided_slice %1215 {offsets = [10, 0], sizes = [1, 16], strides = [1, 1]} : vector<16x16xf32> to vector<1x16xf32>
    %1331 = vector.broadcast %1329 : vector<16x1xf32> to vector<16x16xf32>
    %1332 = vector.broadcast %1330 : vector<1x16xf32> to vector<16x16xf32>
    %1333 = arith.addf %1331, %1332 : vector<16x16xf32>
    %1334 = math.absf %1333 : vector<16x16xf32>
    %1335 = vector.extract_strided_slice %1227 {offsets = [10, 0], sizes = [1, 1], strides = [1, 1]} : vector<16x1xf32> to vector<1x1xf32>
    %1336 = vector.broadcast %1335 : vector<1x1xf32> to vector<16x16xf32>
    %1337 = arith.mulf %1336, %1334 : vector<16x16xf32>
    %1338 = arith.addf %1328, %1337 : vector<16x16xf32>
    %1339 = vector.extract_strided_slice %1214 {offsets = [0, 11], sizes = [16, 1], strides = [1, 1]} : vector<16x16xf32> to vector<16x1xf32>
    %1340 = vector.extract_strided_slice %1215 {offsets = [11, 0], sizes = [1, 16], strides = [1, 1]} : vector<16x16xf32> to vector<1x16xf32>
    %1341 = vector.broadcast %1339 : vector<16x1xf32> to vector<16x16xf32>
    %1342 = vector.broadcast %1340 : vector<1x16xf32> to vector<16x16xf32>
    %1343 = arith.addf %1341, %1342 : vector<16x16xf32>
    %1344 = math.absf %1343 : vector<16x16xf32>
    %1345 = vector.extract_strided_slice %1227 {offsets = [11, 0], sizes = [1, 1], strides = [1, 1]} : vector<16x1xf32> to vector<1x1xf32>
    %1346 = vector.broadcast %1345 : vector<1x1xf32> to vector<16x16xf32>
    %1347 = arith.mulf %1346, %1344 : vector<16x16xf32>
    %1348 = arith.addf %1338, %1347 : vector<16x16xf32>
    %1349 = vector.extract_strided_slice %1214 {offsets = [0, 12], sizes = [16, 1], strides = [1, 1]} : vector<16x16xf32> to vector<16x1xf32>
    %1350 = vector.extract_strided_slice %1215 {offsets = [12, 0], sizes = [1, 16], strides = [1, 1]} : vector<16x16xf32> to vector<1x16xf32>
    %1351 = vector.broadcast %1349 : vector<16x1xf32> to vector<16x16xf32>
    %1352 = vector.broadcast %1350 : vector<1x16xf32> to vector<16x16xf32>
    %1353 = arith.addf %1351, %1352 : vector<16x16xf32>
    %1354 = math.absf %1353 : vector<16x16xf32>
    %1355 = vector.extract_strided_slice %1227 {offsets = [12, 0], sizes = [1, 1], strides = [1, 1]} : vector<16x1xf32> to vector<1x1xf32>
    %1356 = vector.broadcast %1355 : vector<1x1xf32> to vector<16x16xf32>
    %1357 = arith.mulf %1356, %1354 : vector<16x16xf32>
    %1358 = arith.addf %1348, %1357 : vector<16x16xf32>
    %1359 = vector.extract_strided_slice %1214 {offsets = [0, 13], sizes = [16, 1], strides = [1, 1]} : vector<16x16xf32> to vector<16x1xf32>
    %1360 = vector.extract_strided_slice %1215 {offsets = [13, 0], sizes = [1, 16], strides = [1, 1]} : vector<16x16xf32> to vector<1x16xf32>
    %1361 = vector.broadcast %1359 : vector<16x1xf32> to vector<16x16xf32>
    %1362 = vector.broadcast %1360 : vector<1x16xf32> to vector<16x16xf32>
    %1363 = arith.addf %1361, %1362 : vector<16x16xf32>
    %1364 = math.absf %1363 : vector<16x16xf32>
    %1365 = vector.extract_strided_slice %1227 {offsets = [13, 0], sizes = [1, 1], strides = [1, 1]} : vector<16x1xf32> to vector<1x1xf32>
    %1366 = vector.broadcast %1365 : vector<1x1xf32> to vector<16x16xf32>
    %1367 = arith.mulf %1366, %1364 : vector<16x16xf32>
    %1368 = arith.addf %1358, %1367 : vector<16x16xf32>
    %1369 = vector.extract_strided_slice %1214 {offsets = [0, 14], sizes = [16, 1], strides = [1, 1]} : vector<16x16xf32> to vector<16x1xf32>
    %1370 = vector.extract_strided_slice %1215 {offsets = [14, 0], sizes = [1, 16], strides = [1, 1]} : vector<16x16xf32> to vector<1x16xf32>
    %1371 = vector.broadcast %1369 : vector<16x1xf32> to vector<16x16xf32>
    %1372 = vector.broadcast %1370 : vector<1x16xf32> to vector<16x16xf32>
    %1373 = arith.addf %1371, %1372 : vector<16x16xf32>
    %1374 = math.absf %1373 : vector<16x16xf32>
    %1375 = vector.extract_strided_slice %1227 {offsets = [14, 0], sizes = [1, 1], strides = [1, 1]} : vector<16x1xf32> to vector<1x1xf32>
    %1376 = vector.broadcast %1375 : vector<1x1xf32> to vector<16x16xf32>
    %1377 = arith.mulf %1376, %1374 : vector<16x16xf32>
    %1378 = arith.addf %1368, %1377 : vector<16x16xf32>
    %1379 = vector.extract_strided_slice %1214 {offsets = [0, 15], sizes = [16, 1], strides = [1, 1]} : vector<16x16xf32> to vector<16x1xf32>
    %1380 = vector.extract_strided_slice %1215 {offsets = [15, 0], sizes = [1, 16], strides = [1, 1]} : vector<16x16xf32> to vector<1x16xf32>
    %1381 = vector.broadcast %1379 : vector<16x1xf32> to vector<16x16xf32>
    %1382 = vector.broadcast %1380 : vector<1x16xf32> to vector<16x16xf32>
    %1383 = arith.addf %1381, %1382 : vector<16x16xf32>
    %1384 = math.absf %1383 : vector<16x16xf32>
    %1385 = vector.extract_strided_slice %1227 {offsets = [15, 0], sizes = [1, 1], strides = [1, 1]} : vector<16x1xf32> to vector<1x1xf32>
    %1386 = vector.broadcast %1385 : vector<1x1xf32> to vector<16x16xf32>
    %1387 = arith.mulf %1386, %1384 : vector<16x16xf32>
    %1388 = arith.addf %1378, %1387 : vector<16x16xf32>
    %1389 = vector.broadcast %1221 : vector<16x1xf32> to vector<16x16xf32>
    %1390 = vector.broadcast %1225 : vector<1x16xf32> to vector<16x16xf32>
    %1391 = arith.addf %1389, %1390 : vector<16x16xf32>
    %cst_87 = arith.constant 6.000000e-01 : f32
    %1392 = vector.broadcast %cst_87 : f32 to vector<16x16xf32>
    %1393 = arith.mulf %1392, %1391 : vector<16x16xf32>
    %1394 = arith.addf %1393, %1388 : vector<16x16xf32>
    %1395 = arith.addf %1394, %2 : vector<16x16xf32>
    %cst_88 = arith.constant dense<0xFF800000> : vector<16xf32>
    %1396 = vector.multi_reduction <maximumf>, %1395, %cst_88 [1] : vector<16x16xf32> to vector<16xf32>
    %1397 = vector.shape_cast %1396 : vector<16xf32> to vector<16x1xf32>
    %1398 = vector.broadcast %1397 : vector<16x1xf32> to vector<16x16xf32>
    %1399 = arith.subf %1395, %1398 : vector<16x16xf32>
    %1400 = math.exp %1399 : vector<16x16xf32>
    %cst_89 = arith.constant dense<0.000000e+00> : vector<16x16xf32>
    %1401 = tpu.matmul %1400, %1213, %cst_89 {dimension_numbers = #tpu.dot_dimension_numbers<[1], [0], [0], [1], [0, 0, 1, 1], [], []>} : vector<16x16xf32>, vector<16x16xf32>, vector<16x16xf32> -> vector<16x16xf32>
    %cst_90 = arith.constant dense<0.000000e+00> : vector<16xf32>
    %1402 = vector.multi_reduction <add>, %1400, %cst_90 [1] : vector<16x16xf32> to vector<16xf32>
    %1403 = vector.shape_cast %1402 : vector<16xf32> to vector<16x1xf32>
    %1404 = tpu.reciprocal %1403 {approx = true} : vector<16x1xf32> -> vector<16x1xf32>
    %1405 = vector.broadcast %1404 : vector<16x1xf32> to vector<16x16xf32>
    %1406 = arith.mulf %1401, %1405 : vector<16x16xf32>
    %1407 = arith.addf %1212, %1406 : vector<16x16xf32>
    %1408 = vector.extract_strided_slice %818 {offsets = [0, 48], sizes = [16, 16], strides = [1, 1]} : vector<16x128xf32> to vector<16x16xf32>
    %1409 = vector.extract_strided_slice %818 {offsets = [0, 112], sizes = [16, 16], strides = [1, 1]} : vector<16x128xf32> to vector<16x16xf32>
    %1410 = vector.extract_strided_slice %821 {offsets = [48, 0], sizes = [16, 16], strides = [1, 1]} : vector<64x16xf32> to vector<16x16xf32>
    %1411 = vector.extract_strided_slice %810 {offsets = [3, 0], sizes = [1, 16], strides = [1, 1]} : vector<4x16xf32> to vector<1x16xf32>
    %1412 = vector.extract_strided_slice %811 {offsets = [48, 0], sizes = [16, 1], strides = [1, 1]} : vector<64x1xf32> to vector<16x1xf32>
    %1413 = vector.broadcast %1411 : vector<1x16xf32> to vector<16x16xf32>
    %1414 = arith.mulf %1409, %1413 : vector<16x16xf32>
    %cst_91 = arith.constant dense<0.000000e+00> : vector<16xf32>
    %1415 = vector.multi_reduction <add>, %1414, %cst_91 [1] : vector<16x16xf32> to vector<16xf32>
    %1416 = vector.shape_cast %1415 : vector<16xf32> to vector<16x1xf32>
    %1417 = vector.broadcast %1412 : vector<16x1xf32> to vector<16x16xf32>
    %1418 = arith.mulf %1410, %1417 : vector<16x16xf32>
    %cst_92 = arith.constant dense<0.000000e+00> : vector<16xf32>
    %1419 = vector.multi_reduction <add>, %1418, %cst_92 [0] : vector<16x16xf32> to vector<16xf32>
    %1420 = vector.shape_cast %1419 : vector<16xf32> to vector<1x16xf32>
    %cst_93 = arith.constant 4.000000e-01 : f32
    %1421 = vector.broadcast %cst_93 : f32 to vector<16x1xf32>
    %1422 = arith.mulf %1421, %1412 : vector<16x1xf32>
    %cst_94 = arith.constant 0.000000e+00 : f32
    %1423 = vector.broadcast %cst_94 : f32 to vector<16x16xf32>
    %1424 = vector.extract_strided_slice %1409 {offsets = [0, 0], sizes = [16, 1], strides = [1, 1]} : vector<16x16xf32> to vector<16x1xf32>
    %1425 = vector.extract_strided_slice %1410 {offsets = [0, 0], sizes = [1, 16], strides = [1, 1]} : vector<16x16xf32> to vector<1x16xf32>
    %1426 = vector.broadcast %1424 : vector<16x1xf32> to vector<16x16xf32>
    %1427 = vector.broadcast %1425 : vector<1x16xf32> to vector<16x16xf32>
    %1428 = arith.addf %1426, %1427 : vector<16x16xf32>
    %1429 = math.absf %1428 : vector<16x16xf32>
    %1430 = vector.extract_strided_slice %1422 {offsets = [0, 0], sizes = [1, 1], strides = [1, 1]} : vector<16x1xf32> to vector<1x1xf32>
    %1431 = vector.broadcast %1430 : vector<1x1xf32> to vector<16x16xf32>
    %1432 = arith.mulf %1431, %1429 : vector<16x16xf32>
    %1433 = arith.addf %1423, %1432 : vector<16x16xf32>
    %1434 = vector.extract_strided_slice %1409 {offsets = [0, 1], sizes = [16, 1], strides = [1, 1]} : vector<16x16xf32> to vector<16x1xf32>
    %1435 = vector.extract_strided_slice %1410 {offsets = [1, 0], sizes = [1, 16], strides = [1, 1]} : vector<16x16xf32> to vector<1x16xf32>
    %1436 = vector.broadcast %1434 : vector<16x1xf32> to vector<16x16xf32>
    %1437 = vector.broadcast %1435 : vector<1x16xf32> to vector<16x16xf32>
    %1438 = arith.addf %1436, %1437 : vector<16x16xf32>
    %1439 = math.absf %1438 : vector<16x16xf32>
    %1440 = vector.extract_strided_slice %1422 {offsets = [1, 0], sizes = [1, 1], strides = [1, 1]} : vector<16x1xf32> to vector<1x1xf32>
    %1441 = vector.broadcast %1440 : vector<1x1xf32> to vector<16x16xf32>
    %1442 = arith.mulf %1441, %1439 : vector<16x16xf32>
    %1443 = arith.addf %1433, %1442 : vector<16x16xf32>
    %1444 = vector.extract_strided_slice %1409 {offsets = [0, 2], sizes = [16, 1], strides = [1, 1]} : vector<16x16xf32> to vector<16x1xf32>
    %1445 = vector.extract_strided_slice %1410 {offsets = [2, 0], sizes = [1, 16], strides = [1, 1]} : vector<16x16xf32> to vector<1x16xf32>
    %1446 = vector.broadcast %1444 : vector<16x1xf32> to vector<16x16xf32>
    %1447 = vector.broadcast %1445 : vector<1x16xf32> to vector<16x16xf32>
    %1448 = arith.addf %1446, %1447 : vector<16x16xf32>
    %1449 = math.absf %1448 : vector<16x16xf32>
    %1450 = vector.extract_strided_slice %1422 {offsets = [2, 0], sizes = [1, 1], strides = [1, 1]} : vector<16x1xf32> to vector<1x1xf32>
    %1451 = vector.broadcast %1450 : vector<1x1xf32> to vector<16x16xf32>
    %1452 = arith.mulf %1451, %1449 : vector<16x16xf32>
    %1453 = arith.addf %1443, %1452 : vector<16x16xf32>
    %1454 = vector.extract_strided_slice %1409 {offsets = [0, 3], sizes = [16, 1], strides = [1, 1]} : vector<16x16xf32> to vector<16x1xf32>
    %1455 = vector.extract_strided_slice %1410 {offsets = [3, 0], sizes = [1, 16], strides = [1, 1]} : vector<16x16xf32> to vector<1x16xf32>
    %1456 = vector.broadcast %1454 : vector<16x1xf32> to vector<16x16xf32>
    %1457 = vector.broadcast %1455 : vector<1x16xf32> to vector<16x16xf32>
    %1458 = arith.addf %1456, %1457 : vector<16x16xf32>
    %1459 = math.absf %1458 : vector<16x16xf32>
    %1460 = vector.extract_strided_slice %1422 {offsets = [3, 0], sizes = [1, 1], strides = [1, 1]} : vector<16x1xf32> to vector<1x1xf32>
    %1461 = vector.broadcast %1460 : vector<1x1xf32> to vector<16x16xf32>
    %1462 = arith.mulf %1461, %1459 : vector<16x16xf32>
    %1463 = arith.addf %1453, %1462 : vector<16x16xf32>
    %1464 = vector.extract_strided_slice %1409 {offsets = [0, 4], sizes = [16, 1], strides = [1, 1]} : vector<16x16xf32> to vector<16x1xf32>
    %1465 = vector.extract_strided_slice %1410 {offsets = [4, 0], sizes = [1, 16], strides = [1, 1]} : vector<16x16xf32> to vector<1x16xf32>
    %1466 = vector.broadcast %1464 : vector<16x1xf32> to vector<16x16xf32>
    %1467 = vector.broadcast %1465 : vector<1x16xf32> to vector<16x16xf32>
    %1468 = arith.addf %1466, %1467 : vector<16x16xf32>
    %1469 = math.absf %1468 : vector<16x16xf32>
    %1470 = vector.extract_strided_slice %1422 {offsets = [4, 0], sizes = [1, 1], strides = [1, 1]} : vector<16x1xf32> to vector<1x1xf32>
    %1471 = vector.broadcast %1470 : vector<1x1xf32> to vector<16x16xf32>
    %1472 = arith.mulf %1471, %1469 : vector<16x16xf32>
    %1473 = arith.addf %1463, %1472 : vector<16x16xf32>
    %1474 = vector.extract_strided_slice %1409 {offsets = [0, 5], sizes = [16, 1], strides = [1, 1]} : vector<16x16xf32> to vector<16x1xf32>
    %1475 = vector.extract_strided_slice %1410 {offsets = [5, 0], sizes = [1, 16], strides = [1, 1]} : vector<16x16xf32> to vector<1x16xf32>
    %1476 = vector.broadcast %1474 : vector<16x1xf32> to vector<16x16xf32>
    %1477 = vector.broadcast %1475 : vector<1x16xf32> to vector<16x16xf32>
    %1478 = arith.addf %1476, %1477 : vector<16x16xf32>
    %1479 = math.absf %1478 : vector<16x16xf32>
    %1480 = vector.extract_strided_slice %1422 {offsets = [5, 0], sizes = [1, 1], strides = [1, 1]} : vector<16x1xf32> to vector<1x1xf32>
    %1481 = vector.broadcast %1480 : vector<1x1xf32> to vector<16x16xf32>
    %1482 = arith.mulf %1481, %1479 : vector<16x16xf32>
    %1483 = arith.addf %1473, %1482 : vector<16x16xf32>
    %1484 = vector.extract_strided_slice %1409 {offsets = [0, 6], sizes = [16, 1], strides = [1, 1]} : vector<16x16xf32> to vector<16x1xf32>
    %1485 = vector.extract_strided_slice %1410 {offsets = [6, 0], sizes = [1, 16], strides = [1, 1]} : vector<16x16xf32> to vector<1x16xf32>
    %1486 = vector.broadcast %1484 : vector<16x1xf32> to vector<16x16xf32>
    %1487 = vector.broadcast %1485 : vector<1x16xf32> to vector<16x16xf32>
    %1488 = arith.addf %1486, %1487 : vector<16x16xf32>
    %1489 = math.absf %1488 : vector<16x16xf32>
    %1490 = vector.extract_strided_slice %1422 {offsets = [6, 0], sizes = [1, 1], strides = [1, 1]} : vector<16x1xf32> to vector<1x1xf32>
    %1491 = vector.broadcast %1490 : vector<1x1xf32> to vector<16x16xf32>
    %1492 = arith.mulf %1491, %1489 : vector<16x16xf32>
    %1493 = arith.addf %1483, %1492 : vector<16x16xf32>
    %1494 = vector.extract_strided_slice %1409 {offsets = [0, 7], sizes = [16, 1], strides = [1, 1]} : vector<16x16xf32> to vector<16x1xf32>
    %1495 = vector.extract_strided_slice %1410 {offsets = [7, 0], sizes = [1, 16], strides = [1, 1]} : vector<16x16xf32> to vector<1x16xf32>
    %1496 = vector.broadcast %1494 : vector<16x1xf32> to vector<16x16xf32>
    %1497 = vector.broadcast %1495 : vector<1x16xf32> to vector<16x16xf32>
    %1498 = arith.addf %1496, %1497 : vector<16x16xf32>
    %1499 = math.absf %1498 : vector<16x16xf32>
    %1500 = vector.extract_strided_slice %1422 {offsets = [7, 0], sizes = [1, 1], strides = [1, 1]} : vector<16x1xf32> to vector<1x1xf32>
    %1501 = vector.broadcast %1500 : vector<1x1xf32> to vector<16x16xf32>
    %1502 = arith.mulf %1501, %1499 : vector<16x16xf32>
    %1503 = arith.addf %1493, %1502 : vector<16x16xf32>
    %1504 = vector.extract_strided_slice %1409 {offsets = [0, 8], sizes = [16, 1], strides = [1, 1]} : vector<16x16xf32> to vector<16x1xf32>
    %1505 = vector.extract_strided_slice %1410 {offsets = [8, 0], sizes = [1, 16], strides = [1, 1]} : vector<16x16xf32> to vector<1x16xf32>
    %1506 = vector.broadcast %1504 : vector<16x1xf32> to vector<16x16xf32>
    %1507 = vector.broadcast %1505 : vector<1x16xf32> to vector<16x16xf32>
    %1508 = arith.addf %1506, %1507 : vector<16x16xf32>
    %1509 = math.absf %1508 : vector<16x16xf32>
    %1510 = vector.extract_strided_slice %1422 {offsets = [8, 0], sizes = [1, 1], strides = [1, 1]} : vector<16x1xf32> to vector<1x1xf32>
    %1511 = vector.broadcast %1510 : vector<1x1xf32> to vector<16x16xf32>
    %1512 = arith.mulf %1511, %1509 : vector<16x16xf32>
    %1513 = arith.addf %1503, %1512 : vector<16x16xf32>
    %1514 = vector.extract_strided_slice %1409 {offsets = [0, 9], sizes = [16, 1], strides = [1, 1]} : vector<16x16xf32> to vector<16x1xf32>
    %1515 = vector.extract_strided_slice %1410 {offsets = [9, 0], sizes = [1, 16], strides = [1, 1]} : vector<16x16xf32> to vector<1x16xf32>
    %1516 = vector.broadcast %1514 : vector<16x1xf32> to vector<16x16xf32>
    %1517 = vector.broadcast %1515 : vector<1x16xf32> to vector<16x16xf32>
    %1518 = arith.addf %1516, %1517 : vector<16x16xf32>
    %1519 = math.absf %1518 : vector<16x16xf32>
    %1520 = vector.extract_strided_slice %1422 {offsets = [9, 0], sizes = [1, 1], strides = [1, 1]} : vector<16x1xf32> to vector<1x1xf32>
    %1521 = vector.broadcast %1520 : vector<1x1xf32> to vector<16x16xf32>
    %1522 = arith.mulf %1521, %1519 : vector<16x16xf32>
    %1523 = arith.addf %1513, %1522 : vector<16x16xf32>
    %1524 = vector.extract_strided_slice %1409 {offsets = [0, 10], sizes = [16, 1], strides = [1, 1]} : vector<16x16xf32> to vector<16x1xf32>
    %1525 = vector.extract_strided_slice %1410 {offsets = [10, 0], sizes = [1, 16], strides = [1, 1]} : vector<16x16xf32> to vector<1x16xf32>
    %1526 = vector.broadcast %1524 : vector<16x1xf32> to vector<16x16xf32>
    %1527 = vector.broadcast %1525 : vector<1x16xf32> to vector<16x16xf32>
    %1528 = arith.addf %1526, %1527 : vector<16x16xf32>
    %1529 = math.absf %1528 : vector<16x16xf32>
    %1530 = vector.extract_strided_slice %1422 {offsets = [10, 0], sizes = [1, 1], strides = [1, 1]} : vector<16x1xf32> to vector<1x1xf32>
    %1531 = vector.broadcast %1530 : vector<1x1xf32> to vector<16x16xf32>
    %1532 = arith.mulf %1531, %1529 : vector<16x16xf32>
    %1533 = arith.addf %1523, %1532 : vector<16x16xf32>
    %1534 = vector.extract_strided_slice %1409 {offsets = [0, 11], sizes = [16, 1], strides = [1, 1]} : vector<16x16xf32> to vector<16x1xf32>
    %1535 = vector.extract_strided_slice %1410 {offsets = [11, 0], sizes = [1, 16], strides = [1, 1]} : vector<16x16xf32> to vector<1x16xf32>
    %1536 = vector.broadcast %1534 : vector<16x1xf32> to vector<16x16xf32>
    %1537 = vector.broadcast %1535 : vector<1x16xf32> to vector<16x16xf32>
    %1538 = arith.addf %1536, %1537 : vector<16x16xf32>
    %1539 = math.absf %1538 : vector<16x16xf32>
    %1540 = vector.extract_strided_slice %1422 {offsets = [11, 0], sizes = [1, 1], strides = [1, 1]} : vector<16x1xf32> to vector<1x1xf32>
    %1541 = vector.broadcast %1540 : vector<1x1xf32> to vector<16x16xf32>
    %1542 = arith.mulf %1541, %1539 : vector<16x16xf32>
    %1543 = arith.addf %1533, %1542 : vector<16x16xf32>
    %1544 = vector.extract_strided_slice %1409 {offsets = [0, 12], sizes = [16, 1], strides = [1, 1]} : vector<16x16xf32> to vector<16x1xf32>
    %1545 = vector.extract_strided_slice %1410 {offsets = [12, 0], sizes = [1, 16], strides = [1, 1]} : vector<16x16xf32> to vector<1x16xf32>
    %1546 = vector.broadcast %1544 : vector<16x1xf32> to vector<16x16xf32>
    %1547 = vector.broadcast %1545 : vector<1x16xf32> to vector<16x16xf32>
    %1548 = arith.addf %1546, %1547 : vector<16x16xf32>
    %1549 = math.absf %1548 : vector<16x16xf32>
    %1550 = vector.extract_strided_slice %1422 {offsets = [12, 0], sizes = [1, 1], strides = [1, 1]} : vector<16x1xf32> to vector<1x1xf32>
    %1551 = vector.broadcast %1550 : vector<1x1xf32> to vector<16x16xf32>
    %1552 = arith.mulf %1551, %1549 : vector<16x16xf32>
    %1553 = arith.addf %1543, %1552 : vector<16x16xf32>
    %1554 = vector.extract_strided_slice %1409 {offsets = [0, 13], sizes = [16, 1], strides = [1, 1]} : vector<16x16xf32> to vector<16x1xf32>
    %1555 = vector.extract_strided_slice %1410 {offsets = [13, 0], sizes = [1, 16], strides = [1, 1]} : vector<16x16xf32> to vector<1x16xf32>
    %1556 = vector.broadcast %1554 : vector<16x1xf32> to vector<16x16xf32>
    %1557 = vector.broadcast %1555 : vector<1x16xf32> to vector<16x16xf32>
    %1558 = arith.addf %1556, %1557 : vector<16x16xf32>
    %1559 = math.absf %1558 : vector<16x16xf32>
    %1560 = vector.extract_strided_slice %1422 {offsets = [13, 0], sizes = [1, 1], strides = [1, 1]} : vector<16x1xf32> to vector<1x1xf32>
    %1561 = vector.broadcast %1560 : vector<1x1xf32> to vector<16x16xf32>
    %1562 = arith.mulf %1561, %1559 : vector<16x16xf32>
    %1563 = arith.addf %1553, %1562 : vector<16x16xf32>
    %1564 = vector.extract_strided_slice %1409 {offsets = [0, 14], sizes = [16, 1], strides = [1, 1]} : vector<16x16xf32> to vector<16x1xf32>
    %1565 = vector.extract_strided_slice %1410 {offsets = [14, 0], sizes = [1, 16], strides = [1, 1]} : vector<16x16xf32> to vector<1x16xf32>
    %1566 = vector.broadcast %1564 : vector<16x1xf32> to vector<16x16xf32>
    %1567 = vector.broadcast %1565 : vector<1x16xf32> to vector<16x16xf32>
    %1568 = arith.addf %1566, %1567 : vector<16x16xf32>
    %1569 = math.absf %1568 : vector<16x16xf32>
    %1570 = vector.extract_strided_slice %1422 {offsets = [14, 0], sizes = [1, 1], strides = [1, 1]} : vector<16x1xf32> to vector<1x1xf32>
    %1571 = vector.broadcast %1570 : vector<1x1xf32> to vector<16x16xf32>
    %1572 = arith.mulf %1571, %1569 : vector<16x16xf32>
    %1573 = arith.addf %1563, %1572 : vector<16x16xf32>
    %1574 = vector.extract_strided_slice %1409 {offsets = [0, 15], sizes = [16, 1], strides = [1, 1]} : vector<16x16xf32> to vector<16x1xf32>
    %1575 = vector.extract_strided_slice %1410 {offsets = [15, 0], sizes = [1, 16], strides = [1, 1]} : vector<16x16xf32> to vector<1x16xf32>
    %1576 = vector.broadcast %1574 : vector<16x1xf32> to vector<16x16xf32>
    %1577 = vector.broadcast %1575 : vector<1x16xf32> to vector<16x16xf32>
    %1578 = arith.addf %1576, %1577 : vector<16x16xf32>
    %1579 = math.absf %1578 : vector<16x16xf32>
    %1580 = vector.extract_strided_slice %1422 {offsets = [15, 0], sizes = [1, 1], strides = [1, 1]} : vector<16x1xf32> to vector<1x1xf32>
    %1581 = vector.broadcast %1580 : vector<1x1xf32> to vector<16x16xf32>
    %1582 = arith.mulf %1581, %1579 : vector<16x16xf32>
    %1583 = arith.addf %1573, %1582 : vector<16x16xf32>
    %1584 = vector.broadcast %1416 : vector<16x1xf32> to vector<16x16xf32>
    %1585 = vector.broadcast %1420 : vector<1x16xf32> to vector<16x16xf32>
    %1586 = arith.addf %1584, %1585 : vector<16x16xf32>
    %cst_95 = arith.constant 6.000000e-01 : f32
    %1587 = vector.broadcast %cst_95 : f32 to vector<16x16xf32>
    %1588 = arith.mulf %1587, %1586 : vector<16x16xf32>
    %1589 = arith.addf %1588, %1583 : vector<16x16xf32>
    %1590 = arith.addf %1589, %2 : vector<16x16xf32>
    %cst_96 = arith.constant dense<0xFF800000> : vector<16xf32>
    %1591 = vector.multi_reduction <maximumf>, %1590, %cst_96 [1] : vector<16x16xf32> to vector<16xf32>
    %1592 = vector.shape_cast %1591 : vector<16xf32> to vector<16x1xf32>
    %1593 = vector.broadcast %1592 : vector<16x1xf32> to vector<16x16xf32>
    %1594 = arith.subf %1590, %1593 : vector<16x16xf32>
    %1595 = math.exp %1594 : vector<16x16xf32>
    %cst_97 = arith.constant dense<0.000000e+00> : vector<16x16xf32>
    %1596 = tpu.matmul %1595, %1408, %cst_97 {dimension_numbers = #tpu.dot_dimension_numbers<[1], [0], [0], [1], [0, 0, 1, 1], [], []>} : vector<16x16xf32>, vector<16x16xf32>, vector<16x16xf32> -> vector<16x16xf32>
    %cst_98 = arith.constant dense<0.000000e+00> : vector<16xf32>
    %1597 = vector.multi_reduction <add>, %1595, %cst_98 [1] : vector<16x16xf32> to vector<16xf32>
    %1598 = vector.shape_cast %1597 : vector<16xf32> to vector<16x1xf32>
    %1599 = tpu.reciprocal %1598 {approx = true} : vector<16x1xf32> -> vector<16x1xf32>
    %1600 = vector.broadcast %1599 : vector<16x1xf32> to vector<16x16xf32>
    %1601 = arith.mulf %1596, %1600 : vector<16x16xf32>
    %1602 = arith.addf %1407, %1601 : vector<16x16xf32>
    %1603 = vector.broadcast %812 : vector<1x16xf32> to vector<16x16xf32>
    %1604 = arith.mulf %1602, %1603 : vector<16x16xf32>
    %1605 = arith.addf %1604, %819 : vector<16x16xf32>
    %1606 = vector.broadcast %813 : vector<1x16xf32> to vector<16x16xf32>
    %1607 = arith.addf %1605, %1606 : vector<16x16xf32>
    %cst_99 = arith.constant 0.000000e+00 : f32
    %1608 = vector.broadcast %cst_99 : f32 to vector<16x16xf32>
    %1609 = arith.cmpf ogt, %1607, %1608 : vector<16x16xf32>
    %1610 = vector.broadcast %814 : vector<1x16xf32> to vector<16x16xf32>
    %1611 = arith.mulf %1610, %1607 : vector<16x16xf32>
    %1612 = arith.select %1609, %1607, %1611 : vector<16x16xi1>, vector<16x16xf32>
    %1613 = tpu.iota {dimensions = array<i32: 1>} : vector<8x16xi32>
    %c0_100 = arith.constant 0 : index
    %c0_101 = arith.constant 0 : index
    %1614 = vector.load %arg2[%c0_100, %c0_101] : memref<8x1xi32, #tpu.memory_space<vmem>>, vector<8x1xi32>
    %1615 = vector.broadcast %1614 : vector<8x1xi32> to vector<8x16xi32>
    %1616 = arith.cmpi eq, %1613, %1615 : vector<8x16xi32>
    %1617 = arith.extui %1616 : vector<8x16xi1> to vector<8x16xi32>
    %1618 = arith.sitofp %1617 : vector<8x16xi32> to vector<8x16xf32>
    %c0_102 = arith.constant 0 : index
    %c0_103 = arith.constant 0 : index
    %1619 = vector.load %arg3[%c0_102, %c0_103] : memref<8x1xi32, #tpu.memory_space<vmem>>, vector<8x1xi32>
    %1620 = vector.broadcast %1619 : vector<8x1xi32> to vector<8x16xi32>
    %1621 = arith.cmpi eq, %1613, %1620 : vector<8x16xi32>
    %1622 = arith.extui %1621 : vector<8x16xi1> to vector<8x16xi32>
    %1623 = arith.sitofp %1622 : vector<8x16xi32> to vector<8x16xf32>
    %c0_104 = arith.constant 0 : index
    %c0_105 = arith.constant 0 : index
    %1624 = vector.load %arg19[%c0_104, %c0_105] : memref<16x128xf32, #tpu.memory_space<vmem>>, vector<16x128xf32>
    %cst_106 = arith.constant dense<0.000000e+00> : vector<16x128xf32>
    %1625 = tpu.matmul %807, %1624, %cst_106 {dimension_numbers = #tpu.dot_dimension_numbers<[1], [0], [0], [1], [0, 0, 1, 1], [], []>} : vector<16x16xf32>, vector<16x128xf32>, vector<16x128xf32> -> vector<16x128xf32>
    %c0_107 = arith.constant 0 : index
    %c0_108 = arith.constant 0 : index
    %1626 = vector.load %arg20[%c0_107, %c0_108] : memref<16x128xf32, #tpu.memory_space<vmem>>, vector<16x128xf32>
    %cst_109 = arith.constant dense<0.000000e+00> : vector<16x128xf32>
    %1627 = tpu.matmul %1612, %1626, %cst_109 {dimension_numbers = #tpu.dot_dimension_numbers<[1], [0], [0], [1], [0, 0, 1, 1], [], []>} : vector<16x16xf32>, vector<16x128xf32>, vector<16x128xf32> -> vector<16x128xf32>
    %1628 = arith.addf %1625, %1627 : vector<16x128xf32>
    %c0_110 = arith.constant 0 : index
    %c0_111 = arith.constant 0 : index
    %1629 = vector.load %arg21[%c0_110, %c0_111] : memref<16x128xf32, #tpu.memory_space<vmem>>, vector<16x128xf32>
    %cst_112 = arith.constant dense<0.000000e+00> : vector<16x128xf32>
    %1630 = tpu.matmul %807, %1629, %cst_112 {dimension_numbers = #tpu.dot_dimension_numbers<[1], [0], [0], [1], [0, 0, 1, 1], [], []>} : vector<16x16xf32>, vector<16x128xf32>, vector<16x128xf32> -> vector<16x128xf32>
    %c0_113 = arith.constant 0 : index
    %c0_114 = arith.constant 0 : index
    %1631 = vector.load %arg22[%c0_113, %c0_114] : memref<16x128xf32, #tpu.memory_space<vmem>>, vector<16x128xf32>
    %cst_115 = arith.constant dense<0.000000e+00> : vector<16x128xf32>
    %1632 = tpu.matmul %1612, %1631, %cst_115 {dimension_numbers = #tpu.dot_dimension_numbers<[1], [0], [0], [1], [0, 0, 1, 1], [], []>} : vector<16x16xf32>, vector<16x128xf32>, vector<16x128xf32> -> vector<16x128xf32>
    %1633 = arith.addf %1630, %1632 : vector<16x128xf32>
    %cst_116 = arith.constant dense<0.000000e+00> : vector<8x128xf32>
    %1634 = tpu.matmul %1618, %1628, %cst_116 {dimension_numbers = #tpu.dot_dimension_numbers<[1], [0], [0], [1], [0, 0, 1, 1], [], []>} : vector<8x16xf32>, vector<16x128xf32>, vector<8x128xf32> -> vector<8x128xf32>
    %cst_117 = arith.constant dense<0.000000e+00> : vector<8x128xf32>
    %1635 = tpu.matmul %1623, %1633, %cst_117 {dimension_numbers = #tpu.dot_dimension_numbers<[1], [0], [0], [1], [0, 0, 1, 1], [], []>} : vector<8x16xf32>, vector<16x128xf32>, vector<8x128xf32> -> vector<8x128xf32>
    %1636 = arith.addf %1634, %1635 : vector<8x128xf32>
    %c0_118 = arith.constant 0 : index
    %c0_119 = arith.constant 0 : index
    %1637 = vector.load %arg4[%c0_118, %c0_119] : memref<8x128xf32, #tpu.memory_space<vmem>>, vector<8x128xf32>
    %1638 = arith.addf %1636, %1637 : vector<8x128xf32>
    %c0_120 = arith.constant 0 : index
    %c0_121 = arith.constant 0 : index
    %1639 = vector.load %arg29[%c0_120, %c0_121] : memref<8x128xf32, #tpu.memory_space<vmem>>, vector<8x128xf32>
    tpu.vector_store %arg29[%c0_120, %c0_121], %1638 {strides = array<i32>} : memref<8x128xf32, #tpu.memory_space<vmem>>, vector<8x128xf32>,
    %c0_122 = arith.constant 0 : index
    %c0_123 = arith.constant 0 : index
    %1640 = vector.load %arg23[%c0_122, %c0_123] : memref<128x32xf32, #tpu.memory_space<vmem>>, vector<128x32xf32>
    %cst_124 = arith.constant dense<0.000000e+00> : vector<8x32xf32>
    %1641 = tpu.matmul %1638, %1640, %cst_124 {dimension_numbers = #tpu.dot_dimension_numbers<[1], [0], [0], [1], [0, 0, 1, 1], [], []>} : vector<8x128xf32>, vector<128x32xf32>, vector<8x32xf32> -> vector<8x32xf32>
    %c0_125 = arith.constant 0 : index
    %c0_126 = arith.constant 0 : index
    %1642 = vector.load %arg24[%c0_125, %c0_126] : memref<1x32xf32, #tpu.memory_space<vmem>>, vector<1x32xf32>
    %1643 = vector.broadcast %1642 : vector<1x32xf32> to vector<8x32xf32>
    %1644 = arith.addf %1641, %1643 : vector<8x32xf32>
    %cst_127 = arith.constant 0.000000e+00 : f32
    %1645 = vector.broadcast %cst_127 : f32 to vector<8x32xf32>
    %1646 = arith.cmpf ogt, %1644, %1645 : vector<8x32xf32>
    %cst_128 = arith.constant 0.00999999977 : f32
    %1647 = vector.broadcast %cst_128 : f32 to vector<8x32xf32>
    %1648 = arith.mulf %1647, %1644 : vector<8x32xf32>
    %1649 = arith.select %1646, %1644, %1648 : vector<8x32xi1>, vector<8x32xf32>
    %c0_129 = arith.constant 0 : index
    %c0_130 = arith.constant 0 : index
    %1650 = vector.load %arg25[%c0_129, %c0_130] : memref<32x8xf32, #tpu.memory_space<vmem>>, vector<32x8xf32>
    %cst_131 = arith.constant dense<0.000000e+00> : vector<8x8xf32>
    %1651 = tpu.matmul %1649, %1650, %cst_131 {dimension_numbers = #tpu.dot_dimension_numbers<[1], [0], [0], [1], [0, 0, 1, 1], [], []>} : vector<8x32xf32>, vector<32x8xf32>, vector<8x8xf32> -> vector<8x8xf32>
    %c0_132 = arith.constant 0 : index
    %c0_133 = arith.constant 0 : index
    %1652 = vector.load %arg26[%c0_132, %c0_133] : memref<1x8xf32, #tpu.memory_space<vmem>>, vector<1x8xf32>
    %1653 = vector.broadcast %1652 : vector<1x8xf32> to vector<8x8xf32>
    %1654 = arith.addf %1651, %1653 : vector<8x8xf32>
    %cst_134 = arith.constant 0.000000e+00 : f32
    %1655 = vector.broadcast %cst_134 : f32 to vector<8x8xf32>
    %1656 = arith.cmpf ogt, %1654, %1655 : vector<8x8xf32>
    %cst_135 = arith.constant 0.00999999977 : f32
    %1657 = vector.broadcast %cst_135 : f32 to vector<8x8xf32>
    %1658 = arith.mulf %1657, %1654 : vector<8x8xf32>
    %1659 = arith.select %1656, %1654, %1658 : vector<8x8xi1>, vector<8x8xf32>
    %c0_136 = arith.constant 0 : index
    %c0_137 = arith.constant 0 : index
    %1660 = vector.load %arg27[%c0_136, %c0_137] : memref<8x128xf32, #tpu.memory_space<vmem>>, vector<8x128xf32>
    %cst_138 = arith.constant dense<0.000000e+00> : vector<8x128xf32>
    %1661 = tpu.matmul %1659, %1660, %cst_138 {dimension_numbers = #tpu.dot_dimension_numbers<[1], [0], [0], [1], [0, 0, 1, 1], [], []>} : vector<8x8xf32>, vector<8x128xf32>, vector<8x128xf32> -> vector<8x128xf32>
    %c0_139 = arith.constant 0 : index
    %c0_140 = arith.constant 0 : index
    %1662 = vector.load %arg28[%c0_139, %c0_140] : memref<1x128xf32, #tpu.memory_space<vmem>>, vector<1x128xf32>
    %1663 = vector.broadcast %1662 : vector<1x128xf32> to vector<8x128xf32>
    %1664 = arith.addf %1661, %1663 : vector<8x128xf32>
    %c0_141 = arith.constant 0 : index
    %c0_142 = arith.constant 0 : index
    %1665 = vector.load %arg30[%c0_141, %c0_142] : memref<8x128xf32, #tpu.memory_space<vmem>>, vector<8x128xf32>
    tpu.vector_store %arg30[%c0_141, %c0_142], %1664 {strides = array<i32>} : memref<8x128xf32, #tpu.memory_space<vmem>>, vector<8x128xf32>,
    return
  }
}

</mosaic_0001>

<llo_original>
// kernel: model_cn_forward.1
$region0: #{model_cn_forward.1}
  #allocation0 [shape = 'u32[]', space=smem, size = 0x4, offset = 0x4, fixed_abs, tag = 'smem constant byte address 0x4 - core index']
  #allocation1 [shape = 'u32[72,128]{1,0:T(1,128)}', space=vmem, size = 0x9000, scoped, tag = 'internal scratch']
  %s0 = inlined_call_operand.smem [shape: u32[31], index: -1, kind: input, shape index: {}]
  %s1 = sld [smem:[%s0]]
  %s2 = scalar_lea.smem %s0, 1
  %s3 = sld [smem:[%s2]]
  %s4 = scalar_lea.smem %s0, 2
  %s5 = sld [smem:[%s4]]
  %s6 = scalar_lea.smem %s0, 3
  %s7 = sld [smem:[%s6]]
  %s8 = scalar_lea.smem %s0, 4
  %s9 = sld [smem:[%s8]]
  %s10 = scalar_lea.smem %s0, 5
  %s11 = sld [smem:[%s10]]
  %s12 = scalar_lea.smem %s0, 6
  %s13 = sld [smem:[%s12]]
  %s14 = scalar_lea.smem %s0, 7
  %s15 = sld [smem:[%s14]]
  %s16 = scalar_lea.smem %s0, 8
  %s17 = sld [smem:[%s16]]
  %s18 = scalar_lea.smem %s0, 9
  %s19 = sld [smem:[%s18]]
  %s20 = scalar_lea.smem %s0, 10
  %s21 = sld [smem:[%s20]]
  %s22 = scalar_lea.smem %s0, 11
  %s23 = sld [smem:[%s22]]
  %s24 = scalar_lea.smem %s0, 12
  %s25 = sld [smem:[%s24]]
  %s26 = scalar_lea.smem %s0, 13
  %s27 = sld [smem:[%s26]]
  %s28 = scalar_lea.smem %s0, 14
  %s29 = sld [smem:[%s28]]
  %s30 = scalar_lea.smem %s0, 15
  %s31 = sld [smem:[%s30]]
  %s32 = scalar_lea.smem %s0, 16
  %s33 = sld [smem:[%s32]]
  %s34 = scalar_lea.smem %s0, 17
  %s35 = sld [smem:[%s34]]
  %s36 = scalar_lea.smem %s0, 18
  %s37 = sld [smem:[%s36]]
  %s38 = scalar_lea.smem %s0, 19
  %s39 = sld [smem:[%s38]]
  %s40 = scalar_lea.smem %s0, 20
  %s41 = sld [smem:[%s40]]
  %s42 = scalar_lea.smem %s0, 21
  %s43 = sld [smem:[%s42]]
  %s44 = scalar_lea.smem %s0, 22
  %s45 = sld [smem:[%s44]]
  %s46 = scalar_lea.smem %s0, 23
  %s47 = sld [smem:[%s46]]
  %s48 = scalar_lea.smem %s0, 24
  %s49 = sld [smem:[%s48]]
  %s50 = scalar_lea.smem %s0, 25
  %s51 = sld [smem:[%s50]]
  %s52 = scalar_lea.smem %s0, 26
  %s53 = sld [smem:[%s52]]
  %s54 = scalar_lea.smem %s0, 27
  %s55 = sld [smem:[%s54]]
  %s56 = scalar_lea.smem %s0, 28
  %s57 = sld [smem:[%s56]]
  %s58 = scalar_lea.smem %s0, 29
  %s59 = sld [smem:[%s58]]
  %s60 = scalar_lea.smem %s0, 30
  %s61 = sld [smem:[%s60]]
  %62 = xla_tuple %s59, %s61
  %s63 = sld [smem:[#allocation0]]
  $region134: #{model_cn_forward.1} parent=0
    _
  %s65 = ssub.s32 1, %s63
  %s66 = scalar_select 0, %s65, %s63
  $region1: #{model_cn_forward.1} parent=0
    #allocation2 [shape = 'u8[4096]{0}', space=vmem, size = 0x1000, scoped, tag = 'output window, operand 0, single buffered']
    #allocation3 [shape = 's32[1]{0}', space=sflag, size = 0x4, scoped, tag = 'scoped memory for model_cn_forward.1']
    %67 = vsyncpa [#allocation3], 0
    // Predicated region
    $region2: #{model_cn_forward.1} parent=1 // pred_check
      _
    $region3: #{model_cn_forward.1} parent=1 // pred_check_branch
      %69 = sbr.rel (0) target = $region5
    $region4: #{model_cn_forward.1} parent=1 // pred_region
      _
    $region5: #{model_cn_forward.1} parent=1 // pred_fallthru
      _
    // Predicated region
    $region6: #{model_cn_forward.1} parent=1 // pred_check
      _
    $region7: #{model_cn_forward.1} parent=1 // pred_check_branch
      %71 = sbr.rel (0) target = $region9
    $region8: #{model_cn_forward.1} parent=1 // pred_region
      _
    $region9: #{model_cn_forward.1} parent=1 // pred_fallthru
      _
    // Predicated region
    $region10: #{model_cn_forward.1} parent=1 // pred_check
      _
    $region11: #{model_cn_forward.1} parent=1 // pred_check_branch
      %73 = sbr.rel (0) target = $region13
    $region12: #{model_cn_forward.1} parent=1 // pred_region
      _
    $region13: #{model_cn_forward.1} parent=1 // pred_fallthru
      _
    // Predicated region
    $region14: #{model_cn_forward.1} parent=1 // pred_check
      _
    $region15: #{model_cn_forward.1} parent=1 // pred_check_branch
      %75 = sbr.rel (0) target = $region17
    $region16: #{model_cn_forward.1} parent=1 // pred_region
      _
    $region17: #{model_cn_forward.1} parent=1 // pred_fallthru
      _
    // Predicated region
    $region18: #{model_cn_forward.1} parent=1 // pred_check
      _
    $region19: #{model_cn_forward.1} parent=1 // pred_check_branch
      %77 = sbr.rel (0) target = $region21
    $region20: #{model_cn_forward.1} parent=1 // pred_region
      _
    $region21: #{model_cn_forward.1} parent=1 // pred_fallthru
      _
    // Predicated region
    $region22: #{model_cn_forward.1} parent=1 // pred_check
      _
    $region23: #{model_cn_forward.1} parent=1 // pred_check_branch
      %79 = sbr.rel (0) target = $region25
    $region24: #{model_cn_forward.1} parent=1 // pred_region
      _
    $region25: #{model_cn_forward.1} parent=1 // pred_fallthru
      _
    // Predicated region
    $region26: #{model_cn_forward.1} parent=1 // pred_check
      _
    $region27: #{model_cn_forward.1} parent=1 // pred_check_branch
      %81 = sbr.rel (0) target = $region29
    $region28: #{model_cn_forward.1} parent=1 // pred_region
      _
    $region29: #{model_cn_forward.1} parent=1 // pred_fallthru
      _
    // Predicated region
    $region30: #{model_cn_forward.1} parent=1 // pred_check
      _
    $region31: #{model_cn_forward.1} parent=1 // pred_check_branch
      %83 = sbr.rel (0) target = $region33
    $region32: #{model_cn_forward.1} parent=1 // pred_region
      _
    $region33: #{model_cn_forward.1} parent=1 // pred_fallthru
      _
    // Predicated region
    $region34: #{model_cn_forward.1} parent=1 // pred_check
      _
    $region35: #{model_cn_forward.1} parent=1 // pred_check_branch
      %85 = sbr.rel (0) target = $region37
    $region36: #{model_cn_forward.1} parent=1 // pred_region
      _
    $region37: #{model_cn_forward.1} parent=1 // pred_fallthru
      _
    // Predicated region
    $region38: #{model_cn_forward.1} parent=1 // pred_check
      _
    $region39: #{model_cn_forward.1} parent=1 // pred_check_branch
      %87 = sbr.rel (0) target = $region41
    $region40: #{model_cn_forward.1} parent=1 // pred_region
      _
    $region41: #{model_cn_forward.1} parent=1 // pred_fallthru
      _
    // Predicated region
    $region42: #{model_cn_forward.1} parent=1 // pred_check
      _
    $region43: #{model_cn_forward.1} parent=1 // pred_check_branch
      %89 = sbr.rel (0) target = $region45
    $region44: #{model_cn_forward.1} parent=1 // pred_region
      _
    $region45: #{model_cn_forward.1} parent=1 // pred_fallthru
      _
    // Predicated region
    $region46: #{model_cn_forward.1} parent=1 // pred_check
      _
    $region47: #{model_cn_forward.1} parent=1 // pred_check_branch
      %91 = sbr.rel (0) target = $region49
    $region48: #{model_cn_forward.1} parent=1 // pred_region
      _
    $region49: #{model_cn_forward.1} parent=1 // pred_fallthru
      _
    // Predicated region
    $region50: #{model_cn_forward.1} parent=1 // pred_check
      _
    $region51: #{model_cn_forward.1} parent=1 // pred_check_branch
      %93 = sbr.rel (0) target = $region53
    $region52: #{model_cn_forward.1} parent=1 // pred_region
      _
    $region53: #{model_cn_forward.1} parent=1 // pred_fallthru
      _
    // Predicated region
    $region54: #{model_cn_forward.1} parent=1 // pred_check
      _
    $region55: #{model_cn_forward.1} parent=1 // pred_check_branch
      %95 = sbr.rel (0) target = $region57
    $region56: #{model_cn_forward.1} parent=1 // pred_region
      _
    $region57: #{model_cn_forward.1} parent=1 // pred_fallthru
      _
    // Predicated region
    $region58: #{model_cn_forward.1} parent=1 // pred_check
      _
    $region59: #{model_cn_forward.1} parent=1 // pred_check_branch
      %97 = sbr.rel (0) target = $region61
    $region60: #{model_cn_forward.1} parent=1 // pred_region
      _
    $region61: #{model_cn_forward.1} parent=1 // pred_fallthru
      _
    // Predicated region
    $region62: #{model_cn_forward.1} parent=1 // pred_check
      _
    $region63: #{model_cn_forward.1} parent=1 // pred_check_branch
      %99 = sbr.rel (0) target = $region65
    $region64: #{model_cn_forward.1} parent=1 // pred_region
      _
    $region65: #{model_cn_forward.1} parent=1 // pred_fallthru
      _
    // Predicated region
    $region66: #{model_cn_forward.1} parent=1 // pred_check
      _
    $region67: #{model_cn_forward.1} parent=1 // pred_check_branch
      %101 = sbr.rel (0) target = $region69
    $region68: #{model_cn_forward.1} parent=1 // pred_region
      _
    $region69: #{model_cn_forward.1} parent=1 // pred_fallthru
      _
    // Predicated region
    $region70: #{model_cn_forward.1} parent=1 // pred_check
      _
    $region71: #{model_cn_forward.1} parent=1 // pred_check_branch
      %103 = sbr.rel (0) target = $region73
    $region72: #{model_cn_forward.1} parent=1 // pred_region
      _
    $region73: #{model_cn_forward.1} parent=1 // pred_fallthru
      _
    // Predicated region
    $region74: #{model_cn_forward.1} parent=1 // pred_check
      _
    $region75: #{model_cn_forward.1} parent=1 // pred_check_branch
      %105 = sbr.rel (0) target = $region77
    $region76: #{model_cn_forward.1} parent=1 // pred_region
      _
    $region77: #{model_cn_forward.1} parent=1 // pred_fallthru
      _
    // Predicated region
    $region78: #{model_cn_forward.1} parent=1 // pred_check
      _
    $region79: #{model_cn_forward.1} parent=1 // pred_check_branch
      %107 = sbr.rel (0) target = $region81
    $region80: #{model_cn_forward.1} parent=1 // pred_region
      _
    $region81: #{model_cn_forward.1} parent=1 // pred_fallthru
      _
    // Predicated region
    $region82: #{model_cn_forward.1} parent=1 // pred_check
      _
    $region83: #{model_cn_forward.1} parent=1 // pred_check_branch
      %109 = sbr.rel (0) target = $region85
    $region84: #{model_cn_forward.1} parent=1 // pred_region
      _
    $region85: #{model_cn_forward.1} parent=1 // pred_fallthru
      _
    // Predicated region
    $region86: #{model_cn_forward.1} parent=1 // pred_check
      _
    $region87: #{model_cn_forward.1} parent=1 // pred_check_branch
      %111 = sbr.rel (0) target = $region89
    $region88: #{model_cn_forward.1} parent=1 // pred_region
      _
    $region89: #{model_cn_forward.1} parent=1 // pred_fallthru
      _
    // Predicated region
    $region90: #{model_cn_forward.1} parent=1 // pred_check
      _
    $region91: #{model_cn_forward.1} parent=1 // pred_check_branch
      %113 = sbr.rel (0) target = $region93
    $region92: #{model_cn_forward.1} parent=1 // pred_region
      _
    $region93: #{model_cn_forward.1} parent=1 // pred_fallthru
      _
    // Predicated region
    $region94: #{model_cn_forward.1} parent=1 // pred_check
      _
    $region95: #{model_cn_forward.1} parent=1 // pred_check_branch
      %115 = sbr.rel (0) target = $region97
    $region96: #{model_cn_forward.1} parent=1 // pred_region
      _
    $region97: #{model_cn_forward.1} parent=1 // pred_fallthru
      _
    // Predicated region
    $region98: #{model_cn_forward.1} parent=1 // pred_check
      _
    $region99: #{model_cn_forward.1} parent=1 // pred_check_branch
      %117 = sbr.rel (0) target = $region101
    $region100: #{model_cn_forward.1} parent=1 // pred_region
      _
    $region101: #{model_cn_forward.1} parent=1 // pred_fallthru
      _
    // Predicated region
    $region102: #{model_cn_forward.1} parent=1 // pred_check
      _
    $region103: #{model_cn_forward.1} parent=1 // pred_check_branch
      %119 = sbr.rel (0) target = $region105
    $region104: #{model_cn_forward.1} parent=1 // pred_region
      _
    $region105: #{model_cn_forward.1} parent=1 // pred_fallthru
      _
    // Predicated region
    $region106: #{model_cn_forward.1} parent=1 // pred_check
      _
    $region107: #{model_cn_forward.1} parent=1 // pred_check_branch
      %121 = sbr.rel (0) target = $region109
    $region108: #{model_cn_forward.1} parent=1 // pred_region
      _
    $region109: #{model_cn_forward.1} parent=1 // pred_fallthru
      _
    // Predicated region
    $region110: #{model_cn_forward.1} parent=1 // pred_check
      _
    $region111: #{model_cn_forward.1} parent=1 // pred_check_branch
      %123 = sbr.rel (0) target = $region113
    $region112: #{model_cn_forward.1} parent=1 // pred_region
      _
    $region113: #{model_cn_forward.1} parent=1 // pred_fallthru
      _
    // Predicated region
    $region114: #{model_cn_forward.1} parent=1 // pred_check
      _
    $region115: #{model_cn_forward.1} parent=1 // pred_check_branch
      %125 = sbr.rel (0) target = $region117
    $region116: #{model_cn_forward.1} parent=1 // pred_region
      _
    $region117: #{model_cn_forward.1} parent=1 // pred_fallthru
      _
    %v126 = vld [vmem:[%s1] sm:$0xff]
    %v127 = vld [vmem:[%s1 + $0x8] sm:$0xff]
    %v128 = vld [vmem:[%s3] sm:$0xf]
    %v129 = vld [vmem:[%s3 + $0x4] sm:$0xf]
    %v130 = vunpack.c.l.bf16 %v128
    %v131 = vunpack.c.l.bf16 %v129
    %v132 = vld [vmem:[%s11] sm:$0xff]
    %v133 = vld [vmem:[%s11 + $0x8] sm:$0xff]
    %v134 = vld [vmem:[%s11 + $0x10] sm:$0xff]
    %v135 = vld [vmem:[%s11 + $0x18] sm:$0xff]
    %v136 = vld [vmem:[%s11 + $0x20] sm:$0xff]
    %v137 = vld [vmem:[%s11 + $0x28] sm:$0xff]
    %v138 = vld [vmem:[%s11 + $0x30] sm:$0xff]
    %v139 = vld [vmem:[%s11 + $0x38] sm:$0xff]
    %v140 = vld [vmem:[%s11 + $0x40] sm:$0xff]
    %v141 = vld [vmem:[%s11 + $0x48] sm:$0xff]
    %v142 = vld [vmem:[%s11 + $0x50] sm:$0xff]
    %v143 = vld [vmem:[%s11 + $0x58] sm:$0xff]
    %v144 = vld [vmem:[%s11 + $0x60] sm:$0xff]
    %v145 = vld [vmem:[%s11 + $0x68] sm:$0xff]
    %v146 = vld [vmem:[%s11 + $0x70] sm:$0xff]
    %v147 = vld [vmem:[%s11 + $0x78] sm:$0xff]
    %v148 = vld [vmem:[%s11 + $0x80] sm:$0xff]
    %v149 = vld [vmem:[%s11 + $0x88] sm:$0xff]
    %v150 = vld [vmem:[%s11 + $0x90] sm:$0xff]
    %v151 = vld [vmem:[%s11 + $0x98] sm:$0xff]
    %v152 = vld [vmem:[%s11 + $0xa0] sm:$0xff]
    %v153 = vld [vmem:[%s11 + $0xa8] sm:$0xff]
    %v154 = vld [vmem:[%s11 + $0xb0] sm:$0xff]
    %v155 = vld [vmem:[%s11 + $0xb8] sm:$0xff]
    %v156 = vld [vmem:[%s11 + $0xc0] sm:$0xff]
    %v157 = vld [vmem:[%s11 + $0xc8] sm:$0xff]
    %v158 = vld [vmem:[%s11 + $0xd0] sm:$0xff]
    %v159 = vld [vmem:[%s11 + $0xd8] sm:$0xff]
    %v160 = vld [vmem:[%s11 + $0xe0] sm:$0xff]
    %v161 = vld [vmem:[%s11 + $0xe8] sm:$0xff]
    %v162 = vld [vmem:[%s11 + $0xf0] sm:$0xff]
    %v163 = vld [vmem:[%s11 + $0xf8] sm:$0xff]
    %v164 = vld [vmem:[%s13] sm:$0x1]
    %v165 = vld [vmem:[%s15] sm:$0xf]
    %v166 = vld [vmem:[%s17] sm:$0xff]
    %v167 = vld [vmem:[%s17 + $0x8] sm:$0xff]
    %v168 = vld [vmem:[%s17 + $0x10] sm:$0xff]
    %v169 = vld [vmem:[%s17 + $0x18] sm:$0xff]
    %v170 = vld [vmem:[%s17 + $0x20] sm:$0xff]
    %v171 = vld [vmem:[%s17 + $0x28] sm:$0xff]
    %v172 = vld [vmem:[%s17 + $0x30] sm:$0xff]
    %v173 = vld [vmem:[%s17 + $0x38] sm:$0xff]
    %v174 = vld [vmem:[%s19] sm:$0x1]
    %v175 = vld [vmem:[%s21] sm:$0x1]
    %v176 = vld [vmem:[%s23] sm:$0x1]
    %177 = vmatpush.msra.mxu0 %v162
    %178 = vmatpush.msra.mxu0 %v160
    %179 = vmatpush.msra.mxu0 %v158
    %180 = vmatpush.msra.mxu0 %v156
    %181 = vmatpush.msra.mxu0 %v154
    %182 = vmatpush.msra.mxu0 %v152
    %183 = vmatpush.msra.mxu0 %v150
    %184 = vmatpush.msra.mxu0 %v148
    %185 = vmatpush.msra.mxu0 %v146
    %186 = vmatpush.msra.mxu0 %v144
    %187 = vmatpush.msra.mxu0 %v142
    %188 = vmatpush.msra.mxu0 %v140
    %189 = vmatpush.msra.mxu0 %v138
    %190 = vmatpush.msra.mxu0 %v136
    %191 = vmatpush.msra.mxu0 %v134
    %192 = vmatpush.msra.mxu0 %v132
    %193 = vmatmul.f32.gmra.mxu0 %v126
    %v194 = vpop.f32.mrf.mxu0
    %v195 = vadd.f32 0.0, %v194
    %196 = vmatmul.f32.gmra.mxu0 %v127
    %v197 = vpop.f32.mrf.mxu0
    %v198 = vadd.f32 0.0, %v197
    %199 = vdwg.mxu0
    %200 = vmatpush.msra.mxu0 %v163
    %201 = vmatpush.msra.mxu0 %v161
    %202 = vmatpush.msra.mxu0 %v159
    %203 = vmatpush.msra.mxu0 %v157
    %204 = vmatpush.msra.mxu0 %v155
    %205 = vmatpush.msra.mxu0 %v153
    %206 = vmatpush.msra.mxu0 %v151
    %207 = vmatpush.msra.mxu0 %v149
    %208 = vmatpush.msra.mxu0 %v147
    %209 = vmatpush.msra.mxu0 %v145
    %210 = vmatpush.msra.mxu0 %v143
    %211 = vmatpush.msra.mxu0 %v141
    %212 = vmatpush.msra.mxu0 %v139
    %213 = vmatpush.msra.mxu0 %v137
    %214 = vmatpush.msra.mxu0 %v135
    %215 = vmatpush.msra.mxu0 %v133
    %216 = vmatmul.f32.gmra.mxu0 %v126
    %v217 = vpop.f32.mrf.mxu0
    %v218 = vadd.f32 0.0, %v217
    %219 = vmatmul.f32.gmra.mxu0 %v127
    %v220 = vpop.f32.mrf.mxu0
    %v221 = vadd.f32 0.0, %v220
    %222 = vdwg.mxu0
    %v224 = vperm.slane %v164, 0
    %v226 = vadd.f32 %v195, %v224
    %v227 = vadd.f32 %v198, %v224
    %228 = vxpose.xlu0.b32.start [1/16] %v226, 128
    %229 = vxpose.xlu0.b32.cont [2/16] %v227, 128
    %230 = vxpose.xlu0.b32.cont [3/16] 0.0, 128
    %231 = vxpose.xlu0.b32.cont [4/16] 0.0, 128
    %232 = vxpose.xlu0.b32.cont [5/16] 0.0, 128
    %233 = vxpose.xlu0.b32.cont [6/16] 0.0, 128
    %234 = vxpose.xlu0.b32.cont [7/16] 0.0, 128
    %235 = vxpose.xlu0.b32.cont [8/16] 0.0, 128
    %236 = vxpose.xlu0.b32.cont [9/16] 0.0, 128
    %237 = vxpose.xlu0.b32.cont [10/16] 0.0, 128
    %238 = vxpose.xlu0.b32.cont [11/16] 0.0, 128
    %239 = vxpose.xlu0.b32.cont [12/16] 0.0, 128
    %240 = vxpose.xlu0.b32.cont [13/16] 0.0, 128
    %241 = vxpose.xlu0.b32.cont [14/16] 0.0, 128
    %242 = vxpose.xlu0.b32.cont [15/16] 0.0, 128
    %243 = vxpose.xlu0.b32.end [16/16] 0.0, 128
    %v244 = vpop.trf.xlu0
    %v245 = vpop.trf.xlu0
    %v246 = vpop.trf.xlu0
    %v247 = vpop.trf.xlu0
    %v248 = vpop.trf.xlu0
    %v249 = vpop.trf.xlu0
    %v250 = vpop.trf.xlu0
    %v251 = vpop.trf.xlu0
    %v252 = vpop.trf.xlu0
    %v253 = vpop.trf.xlu0
    %v254 = vpop.trf.xlu0
    %v255 = vpop.trf.xlu0
    %v256 = vpop.trf.xlu0
    %v257 = vpop.trf.xlu0
    %v258 = vpop.trf.xlu0
    %v259 = vpop.trf.xlu0
    %v260 = vperm.slane %v165, 0
    %262 = vrot.lane.b32.xlu0 %v260, 64
    %v263 = vpop.permute.xlu0 %262
    %v265 = vmul.f32 %v226, %v263
    %v266 = vmul.f32 %v227, %v263
    %269 = vrot.lane.b32.xlu0 %v265, 64
    %v270 = vpop.permute.xlu0 %269
    %271 = vrot.lane.b32.xlu0 %v266, 64
    %v272 = vpop.permute.xlu0 %271
    %vm275 = vcmask 130048
    %v276 = vsel %vm275, %v270, 0.0
    %277 = vadd.xlane.f32.xlu0 %v276
    %v278 = vpop.xlane.xlu0 %277
    %v279 = vsel %vm275, %v272, 0.0
    %280 = vadd.xlane.f32.xlu0 %v279
    %v281 = vpop.xlane.xlu0 %280
    %283 = vset.pattern.permute.xlu0 0
    %284 = vperm.xlu0 %283, %v166
    %v285 = vpop.permute.xlu0 %284
    %288 = vset.pattern.permute.xlu0 0
    %289 = vperm.xlu0 %288, %v167
    %v290 = vpop.permute.xlu0 %289
    %v292 = vmul.f32 %v244, %v285
    %v293 = vmul.f32 %v245, %v290
    %v294 = vsel %vm275, %v292, 0.0
    %v295 = vsel %vm275, %v293, 0.0
    %v296 = vadd.f32 %v294, %v295
    %v297 = vrot.slane %v296, 4
    %v298 = vadd.f32 %v296, %v297
    %v299 = vrot.slane %v298, 2
    %v300 = vadd.f32 %v298, %v299
    %v301 = vrot.slane %v300, 1
    %v302 = vadd.f32 %v300, %v301
    %v303 = vmul.f32 %v166, 0.4
    %v304 = vmul.f32 %v167, 0.4
    %306 = vset.pattern.permute.xlu0 64
    %307 = vperm.xlu0 %306, %v226
    %v308 = vpop.permute.xlu0 %307
    %311 = vset.pattern.permute.xlu0 64
    %312 = vperm.xlu0 %311, %v227
    %v313 = vpop.permute.xlu0 %312
    %v315 = vperm.slane %v244, 0
    %v316 = vadd.f32 %v308, %v315
    %v317 = vadd.f32 %v313, %v315
    %v318 = vand.u32 2147483647, %v316
    %v319 = vand.u32 2147483647, %v317
    %s321 = vtos %v303
    %v322 = vstv %s321
    %v324 = vmul.f32 %v322, %v318
    %v325 = vmul.f32 %v322, %v319
    %v326 = vadd.f32 %v324, 0.0
    %v327 = vadd.f32 %v325, 0.0
    %328 = vset.pattern.permute.xlu0 65
    %329 = vperm.xlu0 %328, %v226
    %v330 = vpop.permute.xlu0 %329
    %332 = vset.pattern.permute.xlu0 65
    %333 = vperm.xlu0 %332, %v227
    %v334 = vpop.permute.xlu0 %333
    %v336 = vperm.slane %v244, 1
    %v337 = vadd.f32 %v330, %v336
    %v338 = vadd.f32 %v334, %v336
    %v339 = vand.u32 2147483647, %v337
    %v340 = vand.u32 2147483647, %v338
    %v341 = vrot.slane %v303, 1
    %s342 = vtos %v341
    %v343 = vstv %s342
    %v345 = vmul.f32 %v343, %v339
    %v346 = vmul.f32 %v343, %v340
    %v347 = vadd.f32 %v326, %v345
    %v348 = vadd.f32 %v327, %v346
    %349 = vset.pattern.permute.xlu0 66
    %350 = vperm.xlu0 %349, %v226
    %v351 = vpop.permute.xlu0 %350
    %353 = vset.pattern.permute.xlu0 66
    %354 = vperm.xlu0 %353, %v227
    %v355 = vpop.permute.xlu0 %354
    %v357 = vperm.slane %v244, 2
    %v358 = vadd.f32 %v351, %v357
    %v359 = vadd.f32 %v355, %v357
    %v360 = vand.u32 2147483647, %v358
    %v361 = vand.u32 2147483647, %v359
    %v362 = vrot.slane %v303, 2
    %s363 = vtos %v362
    %v364 = vstv %s363
    %v366 = vmul.f32 %v364, %v360
    %v367 = vmul.f32 %v364, %v361
    %v368 = vadd.f32 %v347, %v366
    %v369 = vadd.f32 %v348, %v367
    %370 = vset.pattern.permute.xlu0 67
    %371 = vperm.xlu0 %370, %v226
    %v372 = vpop.permute.xlu0 %371
    %374 = vset.pattern.permute.xlu0 67
    %375 = vperm.xlu0 %374, %v227
    %v376 = vpop.permute.xlu0 %375
    %v378 = vperm.slane %v244, 3
    %v379 = vadd.f32 %v372, %v378
    %v380 = vadd.f32 %v376, %v378
    %v381 = vand.u32 2147483647, %v379
    %v382 = vand.u32 2147483647, %v380
    %v383 = vrot.slane %v303, 3
    %s384 = vtos %v383
    %v385 = vstv %s384
    %v387 = vmul.f32 %v385, %v381
    %v388 = vmul.f32 %v385, %v382
    %v389 = vadd.f32 %v368, %v387
    %v390 = vadd.f32 %v369, %v388
    %391 = vset.pattern.permute.xlu0 68
    %392 = vperm.xlu0 %391, %v226
    %v393 = vpop.permute.xlu0 %392
    %395 = vset.pattern.permute.xlu0 68
    %396 = vperm.xlu0 %395, %v227
    %v397 = vpop.permute.xlu0 %396
    %v399 = vperm.slane %v244, 4
    %v400 = vadd.f32 %v393, %v399
    %v401 = vadd.f32 %v397, %v399
    %v402 = vand.u32 2147483647, %v400
    %v403 = vand.u32 2147483647, %v401
    %v404 = vrot.slane %v303, 4
    %s405 = vtos %v404
    %v406 = vstv %s405
    %v408 = vmul.f32 %v406, %v402
    %v409 = vmul.f32 %v406, %v403
    %v410 = vadd.f32 %v389, %v408
    %v411 = vadd.f32 %v390, %v409
    %412 = vset.pattern.permute.xlu0 69
    %413 = vperm.xlu0 %412, %v226
    %v414 = vpop.permute.xlu0 %413
    %416 = vset.pattern.permute.xlu0 69
    %417 = vperm.xlu0 %416, %v227
    %v418 = vpop.permute.xlu0 %417
    %v420 = vperm.slane %v244, 5
    %v421 = vadd.f32 %v414, %v420
    %v422 = vadd.f32 %v418, %v420
    %v423 = vand.u32 2147483647, %v421
    %v424 = vand.u32 2147483647, %v422
    %v425 = vrot.slane %v303, 5
    %s426 = vtos %v425
    %v427 = vstv %s426
    %v429 = vmul.f32 %v427, %v423
    %v430 = vmul.f32 %v427, %v424
    %v431 = vadd.f32 %v410, %v429
    %v432 = vadd.f32 %v411, %v430
    %433 = vset.pattern.permute.xlu0 70
    %434 = vperm.xlu0 %433, %v226
    %v435 = vpop.permute.xlu0 %434
    %437 = vset.pattern.permute.xlu0 70
    %438 = vperm.xlu0 %437, %v227
    %v439 = vpop.permute.xlu0 %438
    %v441 = vperm.slane %v244, 6
    %v442 = vadd.f32 %v435, %v441
    %v443 = vadd.f32 %v439, %v441
    %v444 = vand.u32 2147483647, %v442
    %v445 = vand.u32 2147483647, %v443
    %v446 = vrot.slane %v303, 6
    %s447 = vtos %v446
    %v448 = vstv %s447
    %v450 = vmul.f32 %v448, %v444
    %v451 = vmul.f32 %v448, %v445
    %v452 = vadd.f32 %v431, %v450
    %v453 = vadd.f32 %v432, %v451
    %454 = vset.pattern.permute.xlu0 71
    %455 = vperm.xlu0 %454, %v226
    %v456 = vpop.permute.xlu0 %455
    %458 = vset.pattern.permute.xlu0 71
    %459 = vperm.xlu0 %458, %v227
    %v460 = vpop.permute.xlu0 %459
    %v462 = vperm.slane %v244, 7
    %v463 = vadd.f32 %v456, %v462
    %v464 = vadd.f32 %v460, %v462
    %v465 = vand.u32 2147483647, %v463
    %v466 = vand.u32 2147483647, %v464
    %v467 = vrot.slane %v303, 7
    %s468 = vtos %v467
    %v469 = vstv %s468
    %v471 = vmul.f32 %v469, %v465
    %v472 = vmul.f32 %v469, %v466
    %v473 = vadd.f32 %v452, %v471
    %v474 = vadd.f32 %v453, %v472
    %475 = vset.pattern.permute.xlu0 72
    %476 = vperm.xlu0 %475, %v226
    %v477 = vpop.permute.xlu0 %476
    %479 = vset.pattern.permute.xlu0 72
    %480 = vperm.xlu0 %479, %v227
    %v481 = vpop.permute.xlu0 %480
    %v483 = vperm.slane %v245, 0
    %v484 = vadd.f32 %v477, %v483
    %v485 = vadd.f32 %v481, %v483
    %v486 = vand.u32 2147483647, %v484
    %v487 = vand.u32 2147483647, %v485
    %s489 = vtos %v304
    %v490 = vstv %s489
    %v492 = vmul.f32 %v490, %v486
    %v493 = vmul.f32 %v490, %v487
    %v494 = vadd.f32 %v473, %v492
    %v495 = vadd.f32 %v474, %v493
    %496 = vset.pattern.permute.xlu0 73
    %497 = vperm.xlu0 %496, %v226
    %v498 = vpop.permute.xlu0 %497
    %500 = vset.pattern.permute.xlu0 73
    %501 = vperm.xlu0 %500, %v227
    %v502 = vpop.permute.xlu0 %501
    %v504 = vperm.slane %v245, 1
    %v505 = vadd.f32 %v498, %v504
    %v506 = vadd.f32 %v502, %v504
    %v507 = vand.u32 2147483647, %v505
    %v508 = vand.u32 2147483647, %v506
    %v509 = vrot.slane %v304, 1
    %s510 = vtos %v509
    %v511 = vstv %s510
    %v513 = vmul.f32 %v511, %v507
    %v514 = vmul.f32 %v511, %v508
    %v515 = vadd.f32 %v494, %v513
    %v516 = vadd.f32 %v495, %v514
    %517 = vset.pattern.permute.xlu0 74
    %518 = vperm.xlu0 %517, %v226
    %v519 = vpop.permute.xlu0 %518
    %521 = vset.pattern.permute.xlu0 74
    %522 = vperm.xlu0 %521, %v227
    %v523 = vpop.permute.xlu0 %522
    %v525 = vperm.slane %v245, 2
    %v526 = vadd.f32 %v519, %v525
    %v527 = vadd.f32 %v523, %v525
    %v528 = vand.u32 2147483647, %v526
    %v529 = vand.u32 2147483647, %v527
    %v530 = vrot.slane %v304, 2
    %s531 = vtos %v530
    %v532 = vstv %s531
    %v534 = vmul.f32 %v532, %v528
    %v535 = vmul.f32 %v532, %v529
    %v536 = vadd.f32 %v515, %v534
    %v537 = vadd.f32 %v516, %v535
    %538 = vset.pattern.permute.xlu0 75
    %539 = vperm.xlu0 %538, %v226
    %v540 = vpop.permute.xlu0 %539
    %542 = vset.pattern.permute.xlu0 75
    %543 = vperm.xlu0 %542, %v227
    %v544 = vpop.permute.xlu0 %543
    %v546 = vperm.slane %v245, 3
    %v547 = vadd.f32 %v540, %v546
    %v548 = vadd.f32 %v544, %v546
    %v549 = vand.u32 2147483647, %v547
    %v550 = vand.u32 2147483647, %v548
    %v551 = vrot.slane %v304, 3
    %s552 = vtos %v551
    %v553 = vstv %s552
    %v555 = vmul.f32 %v553, %v549
    %v556 = vmul.f32 %v553, %v550
    %v557 = vadd.f32 %v536, %v555
    %v558 = vadd.f32 %v537, %v556
    %559 = vset.pattern.permute.xlu0 76
    %560 = vperm.xlu0 %559, %v226
    %v561 = vpop.permute.xlu0 %560
    %563 = vset.pattern.permute.xlu0 76
    %564 = vperm.xlu0 %563, %v227
    %v565 = vpop.permute.xlu0 %564
    %v567 = vperm.slane %v245, 4
    %v568 = vadd.f32 %v561, %v567
    %v569 = vadd.f32 %v565, %v567
    %v570 = vand.u32 2147483647, %v568
    %v571 = vand.u32 2147483647, %v569
    %v572 = vrot.slane %v304, 4
    %s573 = vtos %v572
    %v574 = vstv %s573
    %v576 = vmul.f32 %v574, %v570
    %v577 = vmul.f32 %v574, %v571
    %v578 = vadd.f32 %v557, %v576
    %v579 = vadd.f32 %v558, %v577
    %580 = vset.pattern.permute.xlu0 77
    %581 = vperm.xlu0 %580, %v226
    %v582 = vpop.permute.xlu0 %581
    %584 = vset.pattern.permute.xlu0 77
    %585 = vperm.xlu0 %584, %v227
    %v586 = vpop.permute.xlu0 %585
    %v588 = vperm.slane %v245, 5
    %v589 = vadd.f32 %v582, %v588
    %v590 = vadd.f32 %v586, %v588
    %v591 = vand.u32 2147483647, %v589
    %v592 = vand.u32 2147483647, %v590
    %v593 = vrot.slane %v304, 5
    %s594 = vtos %v593
    %v595 = vstv %s594
    %v597 = vmul.f32 %v595, %v591
    %v598 = vmul.f32 %v595, %v592
    %v599 = vadd.f32 %v578, %v597
    %v600 = vadd.f32 %v579, %v598
    %601 = vset.pattern.permute.xlu0 78
    %602 = vperm.xlu0 %601, %v226
    %v603 = vpop.permute.xlu0 %602
    %605 = vset.pattern.permute.xlu0 78
    %606 = vperm.xlu0 %605, %v227
    %v607 = vpop.permute.xlu0 %606
    %v609 = vperm.slane %v245, 6
    %v610 = vadd.f32 %v603, %v609
    %v611 = vadd.f32 %v607, %v609
    %v612 = vand.u32 2147483647, %v610
    %v613 = vand.u32 2147483647, %v611
    %v614 = vrot.slane %v304, 6
    %s615 = vtos %v614
    %v616 = vstv %s615
    %v618 = vmul.f32 %v616, %v612
    %v619 = vmul.f32 %v616, %v613
    %v620 = vadd.f32 %v599, %v618
    %v621 = vadd.f32 %v600, %v619
    %622 = vset.pattern.permute.xlu0 79
    %623 = vperm.xlu0 %622, %v226
    %v624 = vpop.permute.xlu0 %623
    %626 = vset.pattern.permute.xlu0 79
    %627 = vperm.xlu0 %626, %v227
    %v628 = vpop.permute.xlu0 %627
    %v630 = vperm.slane %v245, 7
    %v631 = vadd.f32 %v624, %v630
    %v632 = vadd.f32 %v628, %v630
    %v633 = vand.u32 2147483647, %v631
    %v634 = vand.u32 2147483647, %v632
    %v635 = vrot.slane %v304, 7
    %s636 = vtos %v635
    %v637 = vstv %s636
    %v639 = vmul.f32 %v637, %v633
    %v640 = vmul.f32 %v637, %v634
    %v641 = vadd.f32 %v620, %v639
    %v642 = vadd.f32 %v621, %v640
    %v643 = vadd.f32 %v278, %v302
    %v644 = vadd.f32 %v281, %v302
    %v645 = vmul.f32 %v643, 0.6
    %v646 = vmul.f32 %v644, 0.6
    %v647 = vadd.f32 %v645, %v641
    %v648 = vadd.f32 %v646, %v642
    %v649 = vadd.f32 %v647, %v130
    %v650 = vadd.f32 %v648, %v131
    %v651 = vsel %vm275, %v649, -inf
    %652 = vmax.xlane.f32.xlu0 %v651
    %v653 = vpop.xlane.xlu0 %652
    %v654 = vsel %vm275, %v650, -inf
    %655 = vmax.xlane.f32.xlu0 %v654
    %v656 = vpop.xlane.xlu0 %655
    %v657 = vsub.f32 %v649, %v653
    %v658 = vsub.f32 %v650, %v656
    %v659 = vmul.f32 %v657, 1.442695
    %v660 = vpow.pop %v659
    %v661 = vmul.f32 %v658, 1.442695
    %v662 = vpow.pop %v661
    %v664 = vsel %vm275, %v660, 0
    %v667 = vsel %vm275, %v662, 0
    %669 = vmatpush.msra.mxu0 0.0
    %670 = vmatpush.msra.mxu0 0.0
    %671 = vmatpush.msra.mxu0 0.0
    %672 = vmatpush.msra.mxu0 0.0
    %673 = vmatpush.msra.mxu0 0.0
    %674 = vmatpush.msra.mxu0 0.0
    %675 = vmatpush.msra.mxu0 0.0
    %676 = vmatpush.msra.mxu0 0.0
    %677 = vmatpush.msra.mxu0 0.0
    %678 = vmatpush.msra.mxu0 0.0
    %679 = vmatpush.msra.mxu0 0.0
    %680 = vmatpush.msra.mxu0 0.0
    %681 = vmatpush.msra.mxu0 0.0
    %682 = vmatpush.msra.mxu0 0.0
    %683 = vmatpush.msra.mxu0 %v227
    %684 = vmatpush.msra.mxu0 %v226
    %685 = vmatmul.f32.gmra.mxu0 %v664
    %v686 = vpop.f32.mrf.mxu0
    %v687 = vadd.f32 0.0, %v686
    %688 = vmatmul.f32.gmra.mxu0 %v667
    %v689 = vpop.f32.mrf.mxu0
    %v690 = vadd.f32 0.0, %v689
    %691 = vdwg.mxu0
    %v692 = vsel %vm275, %v660, 0.0
    %693 = vadd.xlane.f32.xlu0 %v692
    %v694 = vpop.xlane.xlu0 %693
    %v695 = vsel %vm275, %v662, 0.0
    %696 = vadd.xlane.f32.xlu0 %v695
    %v697 = vpop.xlane.xlu0 %696
    %v698 = vrcp.pop %v694
    %v699 = vrcp.pop %v697
    %v700 = vmul.f32 %v687, %v698
    %v701 = vmul.f32 %v690, %v699
    %v702 = vadd.f32 %v700, 0.0
    %v703 = vadd.f32 %v701, 0.0
    %v704 = vperm.slane %v165, 1
    %706 = vrot.lane.b32.xlu0 %v704, 80
    %v707 = vpop.permute.xlu0 %706
    %v709 = vmul.f32 %v226, %v707
    %v710 = vmul.f32 %v227, %v707
    %713 = vrot.lane.b32.xlu0 %v709, 48
    %v714 = vpop.permute.xlu0 %713
    %715 = vrot.lane.b32.xlu0 %v710, 48
    %v716 = vpop.permute.xlu0 %715
    %v719 = vsel %vm275, %v714, 0.0
    %720 = vadd.xlane.f32.xlu0 %v719
    %v721 = vpop.xlane.xlu0 %720
    %v722 = vsel %vm275, %v716, 0.0
    %723 = vadd.xlane.f32.xlu0 %v722
    %v724 = vpop.xlane.xlu0 %723
    %726 = vset.pattern.permute.xlu0 0
    %727 = vperm.xlu0 %726, %v168
    %v728 = vpop.permute.xlu0 %727
    %731 = vset.pattern.permute.xlu0 0
    %732 = vperm.xlu0 %731, %v169
    %v733 = vpop.permute.xlu0 %732
    %v735 = vmul.f32 %v246, %v728
    %v736 = vmul.f32 %v247, %v733
    %v737 = vsel %vm275, %v735, 0.0
    %v738 = vsel %vm275, %v736, 0.0
    %v739 = vadd.f32 %v737, %v738
    %v740 = vrot.slane %v739, 4
    %v741 = vadd.f32 %v739, %v740
    %v742 = vrot.slane %v741, 2
    %v743 = vadd.f32 %v741, %v742
    %v744 = vrot.slane %v743, 1
    %v745 = vadd.f32 %v743, %v744
    %v746 = vmul.f32 %v168, 0.4
    %v747 = vmul.f32 %v169, 0.4
    %748 = vset.pattern.permute.xlu0 80
    %749 = vperm.xlu0 %748, %v226
    %v750 = vpop.permute.xlu0 %749
    %752 = vset.pattern.permute.xlu0 80
    %753 = vperm.xlu0 %752, %v227
    %v754 = vpop.permute.xlu0 %753
    %v756 = vperm.slane %v246, 0
    %v757 = vadd.f32 %v750, %v756
    %v758 = vadd.f32 %v754, %v756
    %v759 = vand.u32 2147483647, %v757
    %v760 = vand.u32 2147483647, %v758
    %s762 = vtos %v746
    %v763 = vstv %s762
    %v765 = vmul.f32 %v763, %v759
    %v766 = vmul.f32 %v763, %v760
    %v767 = vadd.f32 %v765, 0.0
    %v768 = vadd.f32 %v766, 0.0
    %769 = vset.pattern.permute.xlu0 81
    %770 = vperm.xlu0 %769, %v226
    %v771 = vpop.permute.xlu0 %770
    %773 = vset.pattern.permute.xlu0 81
    %774 = vperm.xlu0 %773, %v227
    %v775 = vpop.permute.xlu0 %774
    %v777 = vperm.slane %v246, 1
    %v778 = vadd.f32 %v771, %v777
    %v779 = vadd.f32 %v775, %v777
    %v780 = vand.u32 2147483647, %v778
    %v781 = vand.u32 2147483647, %v779
    %v782 = vrot.slane %v746, 1
    %s783 = vtos %v782
    %v784 = vstv %s783
    %v786 = vmul.f32 %v784, %v780
    %v787 = vmul.f32 %v784, %v781
    %v788 = vadd.f32 %v767, %v786
    %v789 = vadd.f32 %v768, %v787
    %790 = vset.pattern.permute.xlu0 82
    %791 = vperm.xlu0 %790, %v226
    %v792 = vpop.permute.xlu0 %791
    %794 = vset.pattern.permute.xlu0 82
    %795 = vperm.xlu0 %794, %v227
    %v796 = vpop.permute.xlu0 %795
    %v798 = vperm.slane %v246, 2
    %v799 = vadd.f32 %v792, %v798
    %v800 = vadd.f32 %v796, %v798
    %v801 = vand.u32 2147483647, %v799
    %v802 = vand.u32 2147483647, %v800
    %v803 = vrot.slane %v746, 2
    %s804 = vtos %v803
    %v805 = vstv %s804
    %v807 = vmul.f32 %v805, %v801
    %v808 = vmul.f32 %v805, %v802
    %v809 = vadd.f32 %v788, %v807
    %v810 = vadd.f32 %v789, %v808
    %811 = vset.pattern.permute.xlu0 83
    %812 = vperm.xlu0 %811, %v226
    %v813 = vpop.permute.xlu0 %812
    %815 = vset.pattern.permute.xlu0 83
    %816 = vperm.xlu0 %815, %v227
    %v817 = vpop.permute.xlu0 %816
    %v819 = vperm.slane %v246, 3
    %v820 = vadd.f32 %v813, %v819
    %v821 = vadd.f32 %v817, %v819
    %v822 = vand.u32 2147483647, %v820
    %v823 = vand.u32 2147483647, %v821
    %v824 = vrot.slane %v746, 3
    %s825 = vtos %v824
    %v826 = vstv %s825
    %v828 = vmul.f32 %v826, %v822
    %v829 = vmul.f32 %v826, %v823
    %v830 = vadd.f32 %v809, %v828
    %v831 = vadd.f32 %v810, %v829
    %832 = vset.pattern.permute.xlu0 84
    %833 = vperm.xlu0 %832, %v226
    %v834 = vpop.permute.xlu0 %833
    %836 = vset.pattern.permute.xlu0 84
    %837 = vperm.xlu0 %836, %v227
    %v838 = vpop.permute.xlu0 %837
    %v840 = vperm.slane %v246, 4
    %v841 = vadd.f32 %v834, %v840
    %v842 = vadd.f32 %v838, %v840
    %v843 = vand.u32 2147483647, %v841
    %v844 = vand.u32 2147483647, %v842
    %v845 = vrot.slane %v746, 4
    %s846 = vtos %v845
    %v847 = vstv %s846
    %v849 = vmul.f32 %v847, %v843
    %v850 = vmul.f32 %v847, %v844
    %v851 = vadd.f32 %v830, %v849
    %v852 = vadd.f32 %v831, %v850
    %853 = vset.pattern.permute.xlu0 85
    %854 = vperm.xlu0 %853, %v226
    %v855 = vpop.permute.xlu0 %854
    %857 = vset.pattern.permute.xlu0 85
    %858 = vperm.xlu0 %857, %v227
    %v859 = vpop.permute.xlu0 %858
    %v861 = vperm.slane %v246, 5
    %v862 = vadd.f32 %v855, %v861
    %v863 = vadd.f32 %v859, %v861
    %v864 = vand.u32 2147483647, %v862
    %v865 = vand.u32 2147483647, %v863
    %v866 = vrot.slane %v746, 5
    %s867 = vtos %v866
    %v868 = vstv %s867
    %v870 = vmul.f32 %v868, %v864
    %v871 = vmul.f32 %v868, %v865
    %v872 = vadd.f32 %v851, %v870
    %v873 = vadd.f32 %v852, %v871
    %874 = vset.pattern.permute.xlu0 86
    %875 = vperm.xlu0 %874, %v226
    %v876 = vpop.permute.xlu0 %875
    %878 = vset.pattern.permute.xlu0 86
    %879 = vperm.xlu0 %878, %v227
    %v880 = vpop.permute.xlu0 %879
    %v882 = vperm.slane %v246, 6
    %v883 = vadd.f32 %v876, %v882
    %v884 = vadd.f32 %v880, %v882
    %v885 = vand.u32 2147483647, %v883
    %v886 = vand.u32 2147483647, %v884
    %v887 = vrot.slane %v746, 6
    %s888 = vtos %v887
    %v889 = vstv %s888
    %v891 = vmul.f32 %v889, %v885
    %v892 = vmul.f32 %v889, %v886
    %v893 = vadd.f32 %v872, %v891
    %v894 = vadd.f32 %v873, %v892
    %895 = vset.pattern.permute.xlu0 87
    %896 = vperm.xlu0 %895, %v226
    %v897 = vpop.permute.xlu0 %896
    %899 = vset.pattern.permute.xlu0 87
    %900 = vperm.xlu0 %899, %v227
    %v901 = vpop.permute.xlu0 %900
    %v903 = vperm.slane %v246, 7
    %v904 = vadd.f32 %v897, %v903
    %v905 = vadd.f32 %v901, %v903
    %v906 = vand.u32 2147483647, %v904
    %v907 = vand.u32 2147483647, %v905
    %v908 = vrot.slane %v746, 7
    %s909 = vtos %v908
    %v910 = vstv %s909
    %v912 = vmul.f32 %v910, %v906
    %v913 = vmul.f32 %v910, %v907
    %v914 = vadd.f32 %v893, %v912
    %v915 = vadd.f32 %v894, %v913
    %916 = vset.pattern.permute.xlu0 88
    %917 = vperm.xlu0 %916, %v226
    %v918 = vpop.permute.xlu0 %917
    %920 = vset.pattern.permute.xlu0 88
    %921 = vperm.xlu0 %920, %v227
    %v922 = vpop.permute.xlu0 %921
    %v924 = vperm.slane %v247, 0
    %v925 = vadd.f32 %v918, %v924
    %v926 = vadd.f32 %v922, %v924
    %v927 = vand.u32 2147483647, %v925
    %v928 = vand.u32 2147483647, %v926
    %s930 = vtos %v747
    %v931 = vstv %s930
    %v933 = vmul.f32 %v931, %v927
    %v934 = vmul.f32 %v931, %v928
    %v935 = vadd.f32 %v914, %v933
    %v936 = vadd.f32 %v915, %v934
    %937 = vset.pattern.permute.xlu0 89
    %938 = vperm.xlu0 %937, %v226
    %v939 = vpop.permute.xlu0 %938
    %941 = vset.pattern.permute.xlu0 89
    %942 = vperm.xlu0 %941, %v227
    %v943 = vpop.permute.xlu0 %942
    %v945 = vperm.slane %v247, 1
    %v946 = vadd.f32 %v939, %v945
    %v947 = vadd.f32 %v943, %v945
    %v948 = vand.u32 2147483647, %v946
    %v949 = vand.u32 2147483647, %v947
    %v950 = vrot.slane %v747, 1
    %s951 = vtos %v950
    %v952 = vstv %s951
    %v954 = vmul.f32 %v952, %v948
    %v955 = vmul.f32 %v952, %v949
    %v956 = vadd.f32 %v935, %v954
    %v957 = vadd.f32 %v936, %v955
    %958 = vset.pattern.permute.xlu0 90
    %959 = vperm.xlu0 %958, %v226
    %v960 = vpop.permute.xlu0 %959
    %962 = vset.pattern.permute.xlu0 90
    %963 = vperm.xlu0 %962, %v227
    %v964 = vpop.permute.xlu0 %963
    %v966 = vperm.slane %v247, 2
    %v967 = vadd.f32 %v960, %v966
    %v968 = vadd.f32 %v964, %v966
    %v969 = vand.u32 2147483647, %v967
    %v970 = vand.u32 2147483647, %v968
    %v971 = vrot.slane %v747, 2
    %s972 = vtos %v971
    %v973 = vstv %s972
    %v975 = vmul.f32 %v973, %v969
    %v976 = vmul.f32 %v973, %v970
    %v977 = vadd.f32 %v956, %v975
    %v978 = vadd.f32 %v957, %v976
    %979 = vset.pattern.permute.xlu0 91
    %980 = vperm.xlu0 %979, %v226
    %v981 = vpop.permute.xlu0 %980
    %983 = vset.pattern.permute.xlu0 91
    %984 = vperm.xlu0 %983, %v227
    %v985 = vpop.permute.xlu0 %984
    %v987 = vperm.slane %v247, 3
    %v988 = vadd.f32 %v981, %v987
    %v989 = vadd.f32 %v985, %v987
    %v990 = vand.u32 2147483647, %v988
    %v991 = vand.u32 2147483647, %v989
    %v992 = vrot.slane %v747, 3
    %s993 = vtos %v992
    %v994 = vstv %s993
    %v996 = vmul.f32 %v994, %v990
    %v997 = vmul.f32 %v994, %v991
    %v998 = vadd.f32 %v977, %v996
    %v999 = vadd.f32 %v978, %v997
    %1000 = vset.pattern.permute.xlu0 92
    %1001 = vperm.xlu0 %1000, %v226
    %v1002 = vpop.permute.xlu0 %1001
    %1004 = vset.pattern.permute.xlu0 92
    %1005 = vperm.xlu0 %1004, %v227
    %v1006 = vpop.permute.xlu0 %1005
    %v1008 = vperm.slane %v247, 4
    %v1009 = vadd.f32 %v1002, %v1008
    %v1010 = vadd.f32 %v1006, %v1008
    %v1011 = vand.u32 2147483647, %v1009
    %v1012 = vand.u32 2147483647, %v1010
    %v1013 = vrot.slane %v747, 4
    %s1014 = vtos %v1013
    %v1015 = vstv %s1014
    %v1017 = vmul.f32 %v1015, %v1011
    %v1018 = vmul.f32 %v1015, %v1012
    %v1019 = vadd.f32 %v998, %v1017
    %v1020 = vadd.f32 %v999, %v1018
    %1021 = vset.pattern.permute.xlu0 93
    %1022 = vperm.xlu0 %1021, %v226
    %v1023 = vpop.permute.xlu0 %1022
    %1025 = vset.pattern.permute.xlu0 93
    %1026 = vperm.xlu0 %1025, %v227
    %v1027 = vpop.permute.xlu0 %1026
    %v1029 = vperm.slane %v247, 5
    %v1030 = vadd.f32 %v1023, %v1029
    %v1031 = vadd.f32 %v1027, %v1029
    %v1032 = vand.u32 2147483647, %v1030
    %v1033 = vand.u32 2147483647, %v1031
    %v1034 = vrot.slane %v747, 5
    %s1035 = vtos %v1034
    %v1036 = vstv %s1035
    %v1038 = vmul.f32 %v1036, %v1032
    %v1039 = vmul.f32 %v1036, %v1033
    %v1040 = vadd.f32 %v1019, %v1038
    %v1041 = vadd.f32 %v1020, %v1039
    %1042 = vset.pattern.permute.xlu0 94
    %1043 = vperm.xlu0 %1042, %v226
    %v1044 = vpop.permute.xlu0 %1043
    %1046 = vset.pattern.permute.xlu0 94
    %1047 = vperm.xlu0 %1046, %v227
    %v1048 = vpop.permute.xlu0 %1047
    %v1050 = vperm.slane %v247, 6
    %v1051 = vadd.f32 %v1044, %v1050
    %v1052 = vadd.f32 %v1048, %v1050
    %v1053 = vand.u32 2147483647, %v1051
    %v1054 = vand.u32 2147483647, %v1052
    %v1055 = vrot.slane %v747, 6
    %s1056 = vtos %v1055
    %v1057 = vstv %s1056
    %v1059 = vmul.f32 %v1057, %v1053
    %v1060 = vmul.f32 %v1057, %v1054
    %v1061 = vadd.f32 %v1040, %v1059
    %v1062 = vadd.f32 %v1041, %v1060
    %1063 = vset.pattern.permute.xlu0 95
    %1064 = vperm.xlu0 %1063, %v226
    %v1065 = vpop.permute.xlu0 %1064
    %1067 = vset.pattern.permute.xlu0 95
    %1068 = vperm.xlu0 %1067, %v227
    %v1069 = vpop.permute.xlu0 %1068
    %v1071 = vperm.slane %v247, 7
    %v1072 = vadd.f32 %v1065, %v1071
    %v1073 = vadd.f32 %v1069, %v1071
    %v1074 = vand.u32 2147483647, %v1072
    %v1075 = vand.u32 2147483647, %v1073
    %v1076 = vrot.slane %v747, 7
    %s1077 = vtos %v1076
    %v1078 = vstv %s1077
    %v1080 = vmul.f32 %v1078, %v1074
    %v1081 = vmul.f32 %v1078, %v1075
    %v1082 = vadd.f32 %v1061, %v1080
    %v1083 = vadd.f32 %v1062, %v1081
    %v1084 = vadd.f32 %v721, %v745
    %v1085 = vadd.f32 %v724, %v745
    %v1086 = vmul.f32 %v1084, 0.6
    %v1087 = vmul.f32 %v1085, 0.6
    %v1088 = vadd.f32 %v1086, %v1082
    %v1089 = vadd.f32 %v1087, %v1083
    %v1090 = vadd.f32 %v1088, %v130
    %v1091 = vadd.f32 %v1089, %v131
    %v1092 = vsel %vm275, %v1090, -inf
    %1093 = vmax.xlane.f32.xlu0 %v1092
    %v1094 = vpop.xlane.xlu0 %1093
    %v1095 = vsel %vm275, %v1091, -inf
    %1096 = vmax.xlane.f32.xlu0 %v1095
    %v1097 = vpop.xlane.xlu0 %1096
    %v1098 = vsub.f32 %v1090, %v1094
    %v1099 = vsub.f32 %v1091, %v1097
    %v1100 = vmul.f32 %v1098, 1.442695
    %v1101 = vpow.pop %v1100
    %v1102 = vmul.f32 %v1099, 1.442695
    %v1103 = vpow.pop %v1102
    %1104 = vrot.lane.b32.xlu0 %v226, 112
    %v1105 = vpop.permute.xlu0 %1104
    %1106 = vrot.lane.b32.xlu0 %v227, 112
    %v1107 = vpop.permute.xlu0 %1106
    %v1111 = vsel %vm275, %v1101, 0
    %v1114 = vsel %vm275, %v1103, 0
    %1116 = vmatpush.msra.mxu0 0.0
    %1117 = vmatpush.msra.mxu0 0.0
    %1118 = vmatpush.msra.mxu0 0.0
    %1119 = vmatpush.msra.mxu0 0.0
    %1120 = vmatpush.msra.mxu0 0.0
    %1121 = vmatpush.msra.mxu0 0.0
    %1122 = vmatpush.msra.mxu0 0.0
    %1123 = vmatpush.msra.mxu0 0.0
    %1124 = vmatpush.msra.mxu0 0.0
    %1125 = vmatpush.msra.mxu0 0.0
    %1126 = vmatpush.msra.mxu0 0.0
    %1127 = vmatpush.msra.mxu0 0.0
    %1128 = vmatpush.msra.mxu0 0.0
    %1129 = vmatpush.msra.mxu0 0.0
    %1130 = vmatpush.msra.mxu0 %v1107
    %1131 = vmatpush.msra.mxu0 %v1105
    %1132 = vmatmul.f32.gmra.mxu0 %v1111
    %v1133 = vpop.f32.mrf.mxu0
    %v1134 = vadd.f32 0.0, %v1133
    %1135 = vmatmul.f32.gmra.mxu0 %v1114
    %v1136 = vpop.f32.mrf.mxu0
    %v1137 = vadd.f32 0.0, %v1136
    %1138 = vdwg.mxu0
    %v1139 = vsel %vm275, %v1101, 0.0
    %1140 = vadd.xlane.f32.xlu0 %v1139
    %v1141 = vpop.xlane.xlu0 %1140
    %v1142 = vsel %vm275, %v1103, 0.0
    %1143 = vadd.xlane.f32.xlu0 %v1142
    %v1144 = vpop.xlane.xlu0 %1143
    %v1145 = vrcp.pop %v1141
    %v1146 = vrcp.pop %v1144
    %v1147 = vmul.f32 %v1134, %v1145
    %v1148 = vmul.f32 %v1137, %v1146
    %v1149 = vadd.f32 %v702, %v1147
    %v1150 = vadd.f32 %v703, %v1148
    %v1151 = vperm.slane %v165, 2
    %1153 = vrot.lane.b32.xlu0 %v1151, 96
    %v1154 = vpop.permute.xlu0 %1153
    %v1156 = vmul.f32 %v226, %v1154
    %v1157 = vmul.f32 %v227, %v1154
    %1160 = vrot.lane.b32.xlu0 %v1156, 32
    %v1161 = vpop.permute.xlu0 %1160
    %1162 = vrot.lane.b32.xlu0 %v1157, 32
    %v1163 = vpop.permute.xlu0 %1162
    %v1166 = vsel %vm275, %v1161, 0.0
    %1167 = vadd.xlane.f32.xlu0 %v1166
    %v1168 = vpop.xlane.xlu0 %1167
    %v1169 = vsel %vm275, %v1163, 0.0
    %1170 = vadd.xlane.f32.xlu0 %v1169
    %v1171 = vpop.xlane.xlu0 %1170
    %1173 = vset.pattern.permute.xlu0 0
    %1174 = vperm.xlu0 %1173, %v170
    %v1175 = vpop.permute.xlu0 %1174
    %1178 = vset.pattern.permute.xlu0 0
    %1179 = vperm.xlu0 %1178, %v171
    %v1180 = vpop.permute.xlu0 %1179
    %v1182 = vmul.f32 %v248, %v1175
    %v1183 = vmul.f32 %v249, %v1180
    %v1184 = vsel %vm275, %v1182, 0.0
    %v1185 = vsel %vm275, %v1183, 0.0
    %v1186 = vadd.f32 %v1184, %v1185
    %v1187 = vrot.slane %v1186, 4
    %v1188 = vadd.f32 %v1186, %v1187
    %v1189 = vrot.slane %v1188, 2
    %v1190 = vadd.f32 %v1188, %v1189
    %v1191 = vrot.slane %v1190, 1
    %v1192 = vadd.f32 %v1190, %v1191
    %v1193 = vmul.f32 %v170, 0.4
    %v1194 = vmul.f32 %v171, 0.4
    %1195 = vset.pattern.permute.xlu0 96
    %1196 = vperm.xlu0 %1195, %v226
    %v1197 = vpop.permute.xlu0 %1196
    %1199 = vset.pattern.permute.xlu0 96
    %1200 = vperm.xlu0 %1199, %v227
    %v1201 = vpop.permute.xlu0 %1200
    %v1203 = vperm.slane %v248, 0
    %v1204 = vadd.f32 %v1197, %v1203
    %v1205 = vadd.f32 %v1201, %v1203
    %v1206 = vand.u32 2147483647, %v1204
    %v1207 = vand.u32 2147483647, %v1205
    %s1209 = vtos %v1193
    %v1210 = vstv %s1209
    %v1212 = vmul.f32 %v1210, %v1206
    %v1213 = vmul.f32 %v1210, %v1207
    %v1214 = vadd.f32 %v1212, 0.0
    %v1215 = vadd.f32 %v1213, 0.0
    %1216 = vset.pattern.permute.xlu0 97
    %1217 = vperm.xlu0 %1216, %v226
    %v1218 = vpop.permute.xlu0 %1217
    %1220 = vset.pattern.permute.xlu0 97
    %1221 = vperm.xlu0 %1220, %v227
    %v1222 = vpop.permute.xlu0 %1221
    %v1224 = vperm.slane %v248, 1
    %v1225 = vadd.f32 %v1218, %v1224
    %v1226 = vadd.f32 %v1222, %v1224
    %v1227 = vand.u32 2147483647, %v1225
    %v1228 = vand.u32 2147483647, %v1226
    %v1229 = vrot.slane %v1193, 1
    %s1230 = vtos %v1229
    %v1231 = vstv %s1230
    %v1233 = vmul.f32 %v1231, %v1227
    %v1234 = vmul.f32 %v1231, %v1228
    %v1235 = vadd.f32 %v1214, %v1233
    %v1236 = vadd.f32 %v1215, %v1234
    %1237 = vset.pattern.permute.xlu0 98
    %1238 = vperm.xlu0 %1237, %v226
    %v1239 = vpop.permute.xlu0 %1238
    %1241 = vset.pattern.permute.xlu0 98
    %1242 = vperm.xlu0 %1241, %v227
    %v1243 = vpop.permute.xlu0 %1242
    %v1245 = vperm.slane %v248, 2
    %v1246 = vadd.f32 %v1239, %v1245
    %v1247 = vadd.f32 %v1243, %v1245
    %v1248 = vand.u32 2147483647, %v1246
    %v1249 = vand.u32 2147483647, %v1247
    %v1250 = vrot.slane %v1193, 2
    %s1251 = vtos %v1250
    %v1252 = vstv %s1251
    %v1254 = vmul.f32 %v1252, %v1248
    %v1255 = vmul.f32 %v1252, %v1249
    %v1256 = vadd.f32 %v1235, %v1254
    %v1257 = vadd.f32 %v1236, %v1255
    %1258 = vset.pattern.permute.xlu0 99
    %1259 = vperm.xlu0 %1258, %v226
    %v1260 = vpop.permute.xlu0 %1259
    %1262 = vset.pattern.permute.xlu0 99
    %1263 = vperm.xlu0 %1262, %v227
    %v1264 = vpop.permute.xlu0 %1263
    %v1266 = vperm.slane %v248, 3
    %v1267 = vadd.f32 %v1260, %v1266
    %v1268 = vadd.f32 %v1264, %v1266
    %v1269 = vand.u32 2147483647, %v1267
    %v1270 = vand.u32 2147483647, %v1268
    %v1271 = vrot.slane %v1193, 3
    %s1272 = vtos %v1271
    %v1273 = vstv %s1272
    %v1275 = vmul.f32 %v1273, %v1269
    %v1276 = vmul.f32 %v1273, %v1270
    %v1277 = vadd.f32 %v1256, %v1275
    %v1278 = vadd.f32 %v1257, %v1276
    %1279 = vset.pattern.permute.xlu0 100
    %1280 = vperm.xlu0 %1279, %v226
    %v1281 = vpop.permute.xlu0 %1280
    %1283 = vset.pattern.permute.xlu0 100
    %1284 = vperm.xlu0 %1283, %v227
    %v1285 = vpop.permute.xlu0 %1284
    %v1287 = vperm.slane %v248, 4
    %v1288 = vadd.f32 %v1281, %v1287
    %v1289 = vadd.f32 %v1285, %v1287
    %v1290 = vand.u32 2147483647, %v1288
    %v1291 = vand.u32 2147483647, %v1289
    %v1292 = vrot.slane %v1193, 4
    %s1293 = vtos %v1292
    %v1294 = vstv %s1293
    %v1296 = vmul.f32 %v1294, %v1290
    %v1297 = vmul.f32 %v1294, %v1291
    %v1298 = vadd.f32 %v1277, %v1296
    %v1299 = vadd.f32 %v1278, %v1297
    %1300 = vset.pattern.permute.xlu0 101
    %1301 = vperm.xlu0 %1300, %v226
    %v1302 = vpop.permute.xlu0 %1301
    %1304 = vset.pattern.permute.xlu0 101
    %1305 = vperm.xlu0 %1304, %v227
    %v1306 = vpop.permute.xlu0 %1305
    %v1308 = vperm.slane %v248, 5
    %v1309 = vadd.f32 %v1302, %v1308
    %v1310 = vadd.f32 %v1306, %v1308
    %v1311 = vand.u32 2147483647, %v1309
    %v1312 = vand.u32 2147483647, %v1310
    %v1313 = vrot.slane %v1193, 5
    %s1314 = vtos %v1313
    %v1315 = vstv %s1314
    %v1317 = vmul.f32 %v1315, %v1311
    %v1318 = vmul.f32 %v1315, %v1312
    %v1319 = vadd.f32 %v1298, %v1317
    %v1320 = vadd.f32 %v1299, %v1318
    %1321 = vset.pattern.permute.xlu0 102
    %1322 = vperm.xlu0 %1321, %v226
    %v1323 = vpop.permute.xlu0 %1322
    %1325 = vset.pattern.permute.xlu0 102
    %1326 = vperm.xlu0 %1325, %v227
    %v1327 = vpop.permute.xlu0 %1326
    %v1329 = vperm.slane %v248, 6
    %v1330 = vadd.f32 %v1323, %v1329
    %v1331 = vadd.f32 %v1327, %v1329
    %v1332 = vand.u32 2147483647, %v1330
    %v1333 = vand.u32 2147483647, %v1331
    %v1334 = vrot.slane %v1193, 6
    %s1335 = vtos %v1334
    %v1336 = vstv %s1335
    %v1338 = vmul.f32 %v1336, %v1332
    %v1339 = vmul.f32 %v1336, %v1333
    %v1340 = vadd.f32 %v1319, %v1338
    %v1341 = vadd.f32 %v1320, %v1339
    %1342 = vset.pattern.permute.xlu0 103
    %1343 = vperm.xlu0 %1342, %v226
    %v1344 = vpop.permute.xlu0 %1343
    %1346 = vset.pattern.permute.xlu0 103
    %1347 = vperm.xlu0 %1346, %v227
    %v1348 = vpop.permute.xlu0 %1347
    %v1350 = vperm.slane %v248, 7
    %v1351 = vadd.f32 %v1344, %v1350
    %v1352 = vadd.f32 %v1348, %v1350
    %v1353 = vand.u32 2147483647, %v1351
    %v1354 = vand.u32 2147483647, %v1352
    %v1355 = vrot.slane %v1193, 7
    %s1356 = vtos %v1355
    %v1357 = vstv %s1356
    %v1359 = vmul.f32 %v1357, %v1353
    %v1360 = vmul.f32 %v1357, %v1354
    %v1361 = vadd.f32 %v1340, %v1359
    %v1362 = vadd.f32 %v1341, %v1360
    %1363 = vset.pattern.permute.xlu0 104
    %1364 = vperm.xlu0 %1363, %v226
    %v1365 = vpop.permute.xlu0 %1364
    %1367 = vset.pattern.permute.xlu0 104
    %1368 = vperm.xlu0 %1367, %v227
    %v1369 = vpop.permute.xlu0 %1368
    %v1371 = vperm.slane %v249, 0
    %v1372 = vadd.f32 %v1365, %v1371
    %v1373 = vadd.f32 %v1369, %v1371
    %v1374 = vand.u32 2147483647, %v1372
    %v1375 = vand.u32 2147483647, %v1373
    %s1377 = vtos %v1194
    %v1378 = vstv %s1377
    %v1380 = vmul.f32 %v1378, %v1374
    %v1381 = vmul.f32 %v1378, %v1375
    %v1382 = vadd.f32 %v1361, %v1380
    %v1383 = vadd.f32 %v1362, %v1381
    %1384 = vset.pattern.permute.xlu0 105
    %1385 = vperm.xlu0 %1384, %v226
    %v1386 = vpop.permute.xlu0 %1385
    %1388 = vset.pattern.permute.xlu0 105
    %1389 = vperm.xlu0 %1388, %v227
    %v1390 = vpop.permute.xlu0 %1389
    %v1392 = vperm.slane %v249, 1
    %v1393 = vadd.f32 %v1386, %v1392
    %v1394 = vadd.f32 %v1390, %v1392
    %v1395 = vand.u32 2147483647, %v1393
    %v1396 = vand.u32 2147483647, %v1394
    %v1397 = vrot.slane %v1194, 1
    %s1398 = vtos %v1397
    %v1399 = vstv %s1398
    %v1401 = vmul.f32 %v1399, %v1395
    %v1402 = vmul.f32 %v1399, %v1396
    %v1403 = vadd.f32 %v1382, %v1401
    %v1404 = vadd.f32 %v1383, %v1402
    %1405 = vset.pattern.permute.xlu0 106
    %1406 = vperm.xlu0 %1405, %v226
    %v1407 = vpop.permute.xlu0 %1406
    %1409 = vset.pattern.permute.xlu0 106
    %1410 = vperm.xlu0 %1409, %v227
    %v1411 = vpop.permute.xlu0 %1410
    %v1413 = vperm.slane %v249, 2
    %v1414 = vadd.f32 %v1407, %v1413
    %v1415 = vadd.f32 %v1411, %v1413
    %v1416 = vand.u32 2147483647, %v1414
    %v1417 = vand.u32 2147483647, %v1415
    %v1418 = vrot.slane %v1194, 2
    %s1419 = vtos %v1418
    %v1420 = vstv %s1419
    %v1422 = vmul.f32 %v1420, %v1416
    %v1423 = vmul.f32 %v1420, %v1417
    %v1424 = vadd.f32 %v1403, %v1422
    %v1425 = vadd.f32 %v1404, %v1423
    %1426 = vset.pattern.permute.xlu0 107
    %1427 = vperm.xlu0 %1426, %v226
    %v1428 = vpop.permute.xlu0 %1427
    %1430 = vset.pattern.permute.xlu0 107
    %1431 = vperm.xlu0 %1430, %v227
    %v1432 = vpop.permute.xlu0 %1431
    %v1434 = vperm.slane %v249, 3
    %v1435 = vadd.f32 %v1428, %v1434
    %v1436 = vadd.f32 %v1432, %v1434
    %v1437 = vand.u32 2147483647, %v1435
    %v1438 = vand.u32 2147483647, %v1436
    %v1439 = vrot.slane %v1194, 3
    %s1440 = vtos %v1439
    %v1441 = vstv %s1440
    %v1443 = vmul.f32 %v1441, %v1437
    %v1444 = vmul.f32 %v1441, %v1438
    %v1445 = vadd.f32 %v1424, %v1443
    %v1446 = vadd.f32 %v1425, %v1444
    %1447 = vset.pattern.permute.xlu0 108
    %1448 = vperm.xlu0 %1447, %v226
    %v1449 = vpop.permute.xlu0 %1448
    %1451 = vset.pattern.permute.xlu0 108
    %1452 = vperm.xlu0 %1451, %v227
    %v1453 = vpop.permute.xlu0 %1452
    %v1455 = vperm.slane %v249, 4
    %v1456 = vadd.f32 %v1449, %v1455
    %v1457 = vadd.f32 %v1453, %v1455
    %v1458 = vand.u32 2147483647, %v1456
    %v1459 = vand.u32 2147483647, %v1457
    %v1460 = vrot.slane %v1194, 4
    %s1461 = vtos %v1460
    %v1462 = vstv %s1461
    %v1464 = vmul.f32 %v1462, %v1458
    %v1465 = vmul.f32 %v1462, %v1459
    %v1466 = vadd.f32 %v1445, %v1464
    %v1467 = vadd.f32 %v1446, %v1465
    %1468 = vset.pattern.permute.xlu0 109
    %1469 = vperm.xlu0 %1468, %v226
    %v1470 = vpop.permute.xlu0 %1469
    %1472 = vset.pattern.permute.xlu0 109
    %1473 = vperm.xlu0 %1472, %v227
    %v1474 = vpop.permute.xlu0 %1473
    %v1476 = vperm.slane %v249, 5
    %v1477 = vadd.f32 %v1470, %v1476
    %v1478 = vadd.f32 %v1474, %v1476
    %v1479 = vand.u32 2147483647, %v1477
    %v1480 = vand.u32 2147483647, %v1478
    %v1481 = vrot.slane %v1194, 5
    %s1482 = vtos %v1481
    %v1483 = vstv %s1482
    %v1485 = vmul.f32 %v1483, %v1479
    %v1486 = vmul.f32 %v1483, %v1480
    %v1487 = vadd.f32 %v1466, %v1485
    %v1488 = vadd.f32 %v1467, %v1486
    %1489 = vset.pattern.permute.xlu0 110
    %1490 = vperm.xlu0 %1489, %v226
    %v1491 = vpop.permute.xlu0 %1490
    %1493 = vset.pattern.permute.xlu0 110
    %1494 = vperm.xlu0 %1493, %v227
    %v1495 = vpop.permute.xlu0 %1494
    %v1497 = vperm.slane %v249, 6
    %v1498 = vadd.f32 %v1491, %v1497
    %v1499 = vadd.f32 %v1495, %v1497
    %v1500 = vand.u32 2147483647, %v1498
    %v1501 = vand.u32 2147483647, %v1499
    %v1502 = vrot.slane %v1194, 6
    %s1503 = vtos %v1502
    %v1504 = vstv %s1503
    %v1506 = vmul.f32 %v1504, %v1500
    %v1507 = vmul.f32 %v1504, %v1501
    %v1508 = vadd.f32 %v1487, %v1506
    %v1509 = vadd.f32 %v1488, %v1507
    %1510 = vset.pattern.permute.xlu0 111
    %1511 = vperm.xlu0 %1510, %v226
    %v1512 = vpop.permute.xlu0 %1511
    %1514 = vset.pattern.permute.xlu0 111
    %1515 = vperm.xlu0 %1514, %v227
    %v1516 = vpop.permute.xlu0 %1515
    %v1518 = vperm.slane %v249, 7
    %v1519 = vadd.f32 %v1512, %v1518
    %v1520 = vadd.f32 %v1516, %v1518
    %v1521 = vand.u32 2147483647, %v1519
    %v1522 = vand.u32 2147483647, %v1520
    %v1523 = vrot.slane %v1194, 7
    %s1524 = vtos %v1523
    %v1525 = vstv %s1524
    %v1527 = vmul.f32 %v1525, %v1521
    %v1528 = vmul.f32 %v1525, %v1522
    %v1529 = vadd.f32 %v1508, %v1527
    %v1530 = vadd.f32 %v1509, %v1528
    %v1531 = vadd.f32 %v1168, %v1192
    %v1532 = vadd.f32 %v1171, %v1192
    %v1533 = vmul.f32 %v1531, 0.6
    %v1534 = vmul.f32 %v1532, 0.6
    %v1535 = vadd.f32 %v1533, %v1529
    %v1536 = vadd.f32 %v1534, %v1530
    %v1537 = vadd.f32 %v1535, %v130
    %v1538 = vadd.f32 %v1536, %v131
    %v1539 = vsel %vm275, %v1537, -inf
    %1540 = vmax.xlane.f32.xlu0 %v1539
    %v1541 = vpop.xlane.xlu0 %1540
    %v1542 = vsel %vm275, %v1538, -inf
    %1543 = vmax.xlane.f32.xlu0 %v1542
    %v1544 = vpop.xlane.xlu0 %1543
    %v1545 = vsub.f32 %v1537, %v1541
    %v1546 = vsub.f32 %v1538, %v1544
    %v1547 = vmul.f32 %v1545, 1.442695
    %v1548 = vpow.pop %v1547
    %v1549 = vmul.f32 %v1546, 1.442695
    %v1550 = vpow.pop %v1549
    %1551 = vrot.lane.b32.xlu0 %v226, 96
    %v1552 = vpop.permute.xlu0 %1551
    %1553 = vrot.lane.b32.xlu0 %v227, 96
    %v1554 = vpop.permute.xlu0 %1553
    %v1558 = vsel %vm275, %v1548, 0
    %v1561 = vsel %vm275, %v1550, 0
    %1563 = vmatpush.msra.mxu0 0.0
    %1564 = vmatpush.msra.mxu0 0.0
    %1565 = vmatpush.msra.mxu0 0.0
    %1566 = vmatpush.msra.mxu0 0.0
    %1567 = vmatpush.msra.mxu0 0.0
    %1568 = vmatpush.msra.mxu0 0.0
    %1569 = vmatpush.msra.mxu0 0.0
    %1570 = vmatpush.msra.mxu0 0.0
    %1571 = vmatpush.msra.mxu0 0.0
    %1572 = vmatpush.msra.mxu0 0.0
    %1573 = vmatpush.msra.mxu0 0.0
    %1574 = vmatpush.msra.mxu0 0.0
    %1575 = vmatpush.msra.mxu0 0.0
    %1576 = vmatpush.msra.mxu0 0.0
    %1577 = vmatpush.msra.mxu0 %v1554
    %1578 = vmatpush.msra.mxu0 %v1552
    %1579 = vmatmul.f32.gmra.mxu0 %v1558
    %v1580 = vpop.f32.mrf.mxu0
    %v1581 = vadd.f32 0.0, %v1580
    %1582 = vmatmul.f32.gmra.mxu0 %v1561
    %v1583 = vpop.f32.mrf.mxu0
    %v1584 = vadd.f32 0.0, %v1583
    %1585 = vdwg.mxu0
    %v1586 = vsel %vm275, %v1548, 0.0
    %1587 = vadd.xlane.f32.xlu0 %v1586
    %v1588 = vpop.xlane.xlu0 %1587
    %v1589 = vsel %vm275, %v1550, 0.0
    %1590 = vadd.xlane.f32.xlu0 %v1589
    %v1591 = vpop.xlane.xlu0 %1590
    %v1592 = vrcp.pop %v1588
    %v1593 = vrcp.pop %v1591
    %v1594 = vmul.f32 %v1581, %v1592
    %v1595 = vmul.f32 %v1584, %v1593
    %v1596 = vadd.f32 %v1149, %v1594
    %v1597 = vadd.f32 %v1150, %v1595
    %v1598 = vperm.slane %v165, 3
    %1600 = vrot.lane.b32.xlu0 %v1598, 112
    %v1601 = vpop.permute.xlu0 %1600
    %v1603 = vmul.f32 %v226, %v1601
    %v1604 = vmul.f32 %v227, %v1601
    %1607 = vrot.lane.b32.xlu0 %v1603, 16
    %v1608 = vpop.permute.xlu0 %1607
    %1609 = vrot.lane.b32.xlu0 %v1604, 16
    %v1610 = vpop.permute.xlu0 %1609
    %v1613 = vsel %vm275, %v1608, 0.0
    %1614 = vadd.xlane.f32.xlu0 %v1613
    %v1615 = vpop.xlane.xlu0 %1614
    %v1616 = vsel %vm275, %v1610, 0.0
    %1617 = vadd.xlane.f32.xlu0 %v1616
    %v1618 = vpop.xlane.xlu0 %1617
    %1620 = vset.pattern.permute.xlu0 0
    %1621 = vperm.xlu0 %1620, %v172
    %v1622 = vpop.permute.xlu0 %1621
    %1625 = vset.pattern.permute.xlu0 0
    %1626 = vperm.xlu0 %1625, %v173
    %v1627 = vpop.permute.xlu0 %1626
    %v1629 = vmul.f32 %v250, %v1622
    %v1630 = vmul.f32 %v251, %v1627
    %v1631 = vsel %vm275, %v1629, 0.0
    %v1632 = vsel %vm275, %v1630, 0.0
    %v1633 = vadd.f32 %v1631, %v1632
    %v1634 = vrot.slane %v1633, 4
    %v1635 = vadd.f32 %v1633, %v1634
    %v1636 = vrot.slane %v1635, 2
    %v1637 = vadd.f32 %v1635, %v1636
    %v1638 = vrot.slane %v1637, 1
    %v1639 = vadd.f32 %v1637, %v1638
    %v1640 = vmul.f32 %v172, 0.4
    %v1641 = vmul.f32 %v173, 0.4
    %1642 = vset.pattern.permute.xlu0 112
    %1643 = vperm.xlu0 %1642, %v226
    %v1644 = vpop.permute.xlu0 %1643
    %1646 = vset.pattern.permute.xlu0 112
    %1647 = vperm.xlu0 %1646, %v227
    %v1648 = vpop.permute.xlu0 %1647
    %v1650 = vperm.slane %v250, 0
    %v1651 = vadd.f32 %v1644, %v1650
    %v1652 = vadd.f32 %v1648, %v1650
    %v1653 = vand.u32 2147483647, %v1651
    %v1654 = vand.u32 2147483647, %v1652
    %s1656 = vtos %v1640
    %v1657 = vstv %s1656
    %v1659 = vmul.f32 %v1657, %v1653
    %v1660 = vmul.f32 %v1657, %v1654
    %v1661 = vadd.f32 %v1659, 0.0
    %v1662 = vadd.f32 %v1660, 0.0
    %1663 = vset.pattern.permute.xlu0 113
    %1664 = vperm.xlu0 %1663, %v226
    %v1665 = vpop.permute.xlu0 %1664
    %1667 = vset.pattern.permute.xlu0 113
    %1668 = vperm.xlu0 %1667, %v227
    %v1669 = vpop.permute.xlu0 %1668
    %v1671 = vperm.slane %v250, 1
    %v1672 = vadd.f32 %v1665, %v1671
    %v1673 = vadd.f32 %v1669, %v1671
    %v1674 = vand.u32 2147483647, %v1672
    %v1675 = vand.u32 2147483647, %v1673
    %v1676 = vrot.slane %v1640, 1
    %s1677 = vtos %v1676
    %v1678 = vstv %s1677
    %v1680 = vmul.f32 %v1678, %v1674
    %v1681 = vmul.f32 %v1678, %v1675
    %v1682 = vadd.f32 %v1661, %v1680
    %v1683 = vadd.f32 %v1662, %v1681
    %1684 = vset.pattern.permute.xlu0 114
    %1685 = vperm.xlu0 %1684, %v226
    %v1686 = vpop.permute.xlu0 %1685
    %1688 = vset.pattern.permute.xlu0 114
    %1689 = vperm.xlu0 %1688, %v227
    %v1690 = vpop.permute.xlu0 %1689
    %v1692 = vperm.slane %v250, 2
    %v1693 = vadd.f32 %v1686, %v1692
    %v1694 = vadd.f32 %v1690, %v1692
    %v1695 = vand.u32 2147483647, %v1693
    %v1696 = vand.u32 2147483647, %v1694
    %v1697 = vrot.slane %v1640, 2
    %s1698 = vtos %v1697
    %v1699 = vstv %s1698
    %v1701 = vmul.f32 %v1699, %v1695
    %v1702 = vmul.f32 %v1699, %v1696
    %v1703 = vadd.f32 %v1682, %v1701
    %v1704 = vadd.f32 %v1683, %v1702
    %1705 = vset.pattern.permute.xlu0 115
    %1706 = vperm.xlu0 %1705, %v226
    %v1707 = vpop.permute.xlu0 %1706
    %1709 = vset.pattern.permute.xlu0 115
    %1710 = vperm.xlu0 %1709, %v227
    %v1711 = vpop.permute.xlu0 %1710
    %v1713 = vperm.slane %v250, 3
    %v1714 = vadd.f32 %v1707, %v1713
    %v1715 = vadd.f32 %v1711, %v1713
    %v1716 = vand.u32 2147483647, %v1714
    %v1717 = vand.u32 2147483647, %v1715
    %v1718 = vrot.slane %v1640, 3
    %s1719 = vtos %v1718
    %v1720 = vstv %s1719
    %v1722 = vmul.f32 %v1720, %v1716
    %v1723 = vmul.f32 %v1720, %v1717
    %v1724 = vadd.f32 %v1703, %v1722
    %v1725 = vadd.f32 %v1704, %v1723
    %1726 = vset.pattern.permute.xlu0 116
    %1727 = vperm.xlu0 %1726, %v226
    %v1728 = vpop.permute.xlu0 %1727
    %1730 = vset.pattern.permute.xlu0 116
    %1731 = vperm.xlu0 %1730, %v227
    %v1732 = vpop.permute.xlu0 %1731
    %v1734 = vperm.slane %v250, 4
    %v1735 = vadd.f32 %v1728, %v1734
    %v1736 = vadd.f32 %v1732, %v1734
    %v1737 = vand.u32 2147483647, %v1735
    %v1738 = vand.u32 2147483647, %v1736
    %v1739 = vrot.slane %v1640, 4
    %s1740 = vtos %v1739
    %v1741 = vstv %s1740
    %v1743 = vmul.f32 %v1741, %v1737
    %v1744 = vmul.f32 %v1741, %v1738
    %v1745 = vadd.f32 %v1724, %v1743
    %v1746 = vadd.f32 %v1725, %v1744
    %1747 = vset.pattern.permute.xlu0 117
    %1748 = vperm.xlu0 %1747, %v226
    %v1749 = vpop.permute.xlu0 %1748
    %1751 = vset.pattern.permute.xlu0 117
    %1752 = vperm.xlu0 %1751, %v227
    %v1753 = vpop.permute.xlu0 %1752
    %v1755 = vperm.slane %v250, 5
    %v1756 = vadd.f32 %v1749, %v1755
    %v1757 = vadd.f32 %v1753, %v1755
    %v1758 = vand.u32 2147483647, %v1756
    %v1759 = vand.u32 2147483647, %v1757
    %v1760 = vrot.slane %v1640, 5
    %s1761 = vtos %v1760
    %v1762 = vstv %s1761
    %v1764 = vmul.f32 %v1762, %v1758
    %v1765 = vmul.f32 %v1762, %v1759
    %v1766 = vadd.f32 %v1745, %v1764
    %v1767 = vadd.f32 %v1746, %v1765
    %1768 = vset.pattern.permute.xlu0 118
    %1769 = vperm.xlu0 %1768, %v226
    %v1770 = vpop.permute.xlu0 %1769
    %1772 = vset.pattern.permute.xlu0 118
    %1773 = vperm.xlu0 %1772, %v227
    %v1774 = vpop.permute.xlu0 %1773
    %v1776 = vperm.slane %v250, 6
    %v1777 = vadd.f32 %v1770, %v1776
    %v1778 = vadd.f32 %v1774, %v1776
    %v1779 = vand.u32 2147483647, %v1777
    %v1780 = vand.u32 2147483647, %v1778
    %v1781 = vrot.slane %v1640, 6
    %s1782 = vtos %v1781
    %v1783 = vstv %s1782
    %v1785 = vmul.f32 %v1783, %v1779
    %v1786 = vmul.f32 %v1783, %v1780
    %v1787 = vadd.f32 %v1766, %v1785
    %v1788 = vadd.f32 %v1767, %v1786
    %1789 = vset.pattern.permute.xlu0 119
    %1790 = vperm.xlu0 %1789, %v226
    %v1791 = vpop.permute.xlu0 %1790
    %1793 = vset.pattern.permute.xlu0 119
    %1794 = vperm.xlu0 %1793, %v227
    %v1795 = vpop.permute.xlu0 %1794
    %v1797 = vperm.slane %v250, 7
    %v1798 = vadd.f32 %v1791, %v1797
    %v1799 = vadd.f32 %v1795, %v1797
    %v1800 = vand.u32 2147483647, %v1798
    %v1801 = vand.u32 2147483647, %v1799
    %v1802 = vrot.slane %v1640, 7
    %s1803 = vtos %v1802
    %v1804 = vstv %s1803
    %v1806 = vmul.f32 %v1804, %v1800
    %v1807 = vmul.f32 %v1804, %v1801
    %v1808 = vadd.f32 %v1787, %v1806
    %v1809 = vadd.f32 %v1788, %v1807
    %1810 = vset.pattern.permute.xlu0 120
    %1811 = vperm.xlu0 %1810, %v226
    %v1812 = vpop.permute.xlu0 %1811
    %1814 = vset.pattern.permute.xlu0 120
    %1815 = vperm.xlu0 %1814, %v227
    %v1816 = vpop.permute.xlu0 %1815
    %v1818 = vperm.slane %v251, 0
    %v1819 = vadd.f32 %v1812, %v1818
    %v1820 = vadd.f32 %v1816, %v1818
    %v1821 = vand.u32 2147483647, %v1819
    %v1822 = vand.u32 2147483647, %v1820
    %s1824 = vtos %v1641
    %v1825 = vstv %s1824
    %v1827 = vmul.f32 %v1825, %v1821
    %v1828 = vmul.f32 %v1825, %v1822
    %v1829 = vadd.f32 %v1808, %v1827
    %v1830 = vadd.f32 %v1809, %v1828
    %1831 = vset.pattern.permute.xlu0 121
    %1832 = vperm.xlu0 %1831, %v226
    %v1833 = vpop.permute.xlu0 %1832
    %1835 = vset.pattern.permute.xlu0 121
    %1836 = vperm.xlu0 %1835, %v227
    %v1837 = vpop.permute.xlu0 %1836
    %v1839 = vperm.slane %v251, 1
    %v1840 = vadd.f32 %v1833, %v1839
    %v1841 = vadd.f32 %v1837, %v1839
    %v1842 = vand.u32 2147483647, %v1840
    %v1843 = vand.u32 2147483647, %v1841
    %v1844 = vrot.slane %v1641, 1
    %s1845 = vtos %v1844
    %v1846 = vstv %s1845
    %v1848 = vmul.f32 %v1846, %v1842
    %v1849 = vmul.f32 %v1846, %v1843
    %v1850 = vadd.f32 %v1829, %v1848
    %v1851 = vadd.f32 %v1830, %v1849
    %1852 = vset.pattern.permute.xlu0 122
    %1853 = vperm.xlu0 %1852, %v226
    %v1854 = vpop.permute.xlu0 %1853
    %1856 = vset.pattern.permute.xlu0 122
    %1857 = vperm.xlu0 %1856, %v227
    %v1858 = vpop.permute.xlu0 %1857
    %v1860 = vperm.slane %v251, 2
    %v1861 = vadd.f32 %v1854, %v1860
    %v1862 = vadd.f32 %v1858, %v1860
    %v1863 = vand.u32 2147483647, %v1861
    %v1864 = vand.u32 2147483647, %v1862
    %v1865 = vrot.slane %v1641, 2
    %s1866 = vtos %v1865
    %v1867 = vstv %s1866
    %v1869 = vmul.f32 %v1867, %v1863
    %v1870 = vmul.f32 %v1867, %v1864
    %v1871 = vadd.f32 %v1850, %v1869
    %v1872 = vadd.f32 %v1851, %v1870
    %1873 = vset.pattern.permute.xlu0 123
    %1874 = vperm.xlu0 %1873, %v226
    %v1875 = vpop.permute.xlu0 %1874
    %1877 = vset.pattern.permute.xlu0 123
    %1878 = vperm.xlu0 %1877, %v227
    %v1879 = vpop.permute.xlu0 %1878
    %v1881 = vperm.slane %v251, 3
    %v1882 = vadd.f32 %v1875, %v1881
    %v1883 = vadd.f32 %v1879, %v1881
    %v1884 = vand.u32 2147483647, %v1882
    %v1885 = vand.u32 2147483647, %v1883
    %v1886 = vrot.slane %v1641, 3
    %s1887 = vtos %v1886
    %v1888 = vstv %s1887
    %v1890 = vmul.f32 %v1888, %v1884
    %v1891 = vmul.f32 %v1888, %v1885
    %v1892 = vadd.f32 %v1871, %v1890
    %v1893 = vadd.f32 %v1872, %v1891
    %1894 = vset.pattern.permute.xlu0 124
    %1895 = vperm.xlu0 %1894, %v226
    %v1896 = vpop.permute.xlu0 %1895
    %1898 = vset.pattern.permute.xlu0 124
    %1899 = vperm.xlu0 %1898, %v227
    %v1900 = vpop.permute.xlu0 %1899
    %v1902 = vperm.slane %v251, 4
    %v1903 = vadd.f32 %v1896, %v1902
    %v1904 = vadd.f32 %v1900, %v1902
    %v1905 = vand.u32 2147483647, %v1903
    %v1906 = vand.u32 2147483647, %v1904
    %v1907 = vrot.slane %v1641, 4
    %s1908 = vtos %v1907
    %v1909 = vstv %s1908
    %v1911 = vmul.f32 %v1909, %v1905
    %v1912 = vmul.f32 %v1909, %v1906
    %v1913 = vadd.f32 %v1892, %v1911
    %v1914 = vadd.f32 %v1893, %v1912
    %1915 = vset.pattern.permute.xlu0 125
    %1916 = vperm.xlu0 %1915, %v226
    %v1917 = vpop.permute.xlu0 %1916
    %1919 = vset.pattern.permute.xlu0 125
    %1920 = vperm.xlu0 %1919, %v227
    %v1921 = vpop.permute.xlu0 %1920
    %v1923 = vperm.slane %v251, 5
    %v1924 = vadd.f32 %v1917, %v1923
    %v1925 = vadd.f32 %v1921, %v1923
    %v1926 = vand.u32 2147483647, %v1924
    %v1927 = vand.u32 2147483647, %v1925
    %v1928 = vrot.slane %v1641, 5
    %s1929 = vtos %v1928
    %v1930 = vstv %s1929
    %v1932 = vmul.f32 %v1930, %v1926
    %v1933 = vmul.f32 %v1930, %v1927
    %v1934 = vadd.f32 %v1913, %v1932
    %v1935 = vadd.f32 %v1914, %v1933
    %1936 = vset.pattern.permute.xlu0 126
    %1937 = vperm.xlu0 %1936, %v226
    %v1938 = vpop.permute.xlu0 %1937
    %1940 = vset.pattern.permute.xlu0 126
    %1941 = vperm.xlu0 %1940, %v227
    %v1942 = vpop.permute.xlu0 %1941
    %v1944 = vperm.slane %v251, 6
    %v1945 = vadd.f32 %v1938, %v1944
    %v1946 = vadd.f32 %v1942, %v1944
    %v1947 = vand.u32 2147483647, %v1945
    %v1948 = vand.u32 2147483647, %v1946
    %v1949 = vrot.slane %v1641, 6
    %s1950 = vtos %v1949
    %v1951 = vstv %s1950
    %v1953 = vmul.f32 %v1951, %v1947
    %v1954 = vmul.f32 %v1951, %v1948
    %v1955 = vadd.f32 %v1934, %v1953
    %v1956 = vadd.f32 %v1935, %v1954
    %1957 = vset.pattern.permute.xlu0 127
    %1958 = vperm.xlu0 %1957, %v226
    %v1959 = vpop.permute.xlu0 %1958
    %1961 = vset.pattern.permute.xlu0 127
    %1962 = vperm.xlu0 %1961, %v227
    %v1963 = vpop.permute.xlu0 %1962
    %v1965 = vperm.slane %v251, 7
    %v1966 = vadd.f32 %v1959, %v1965
    %v1967 = vadd.f32 %v1963, %v1965
    %v1968 = vand.u32 2147483647, %v1966
    %v1969 = vand.u32 2147483647, %v1967
    %v1970 = vrot.slane %v1641, 7
    %s1971 = vtos %v1970
    %v1972 = vstv %s1971
    %v1974 = vmul.f32 %v1972, %v1968
    %v1975 = vmul.f32 %v1972, %v1969
    %v1976 = vadd.f32 %v1955, %v1974
    %v1977 = vadd.f32 %v1956, %v1975
    %v1978 = vadd.f32 %v1615, %v1639
    %v1979 = vadd.f32 %v1618, %v1639
    %v1980 = vmul.f32 %v1978, 0.6
    %v1981 = vmul.f32 %v1979, 0.6
    %v1982 = vadd.f32 %v1980, %v1976
    %v1983 = vadd.f32 %v1981, %v1977
    %v1984 = vadd.f32 %v1982, %v130
    %v1985 = vadd.f32 %v1983, %v131
    %v1986 = vsel %vm275, %v1984, -inf
    %1987 = vmax.xlane.f32.xlu0 %v1986
    %v1988 = vpop.xlane.xlu0 %1987
    %v1989 = vsel %vm275, %v1985, -inf
    %1990 = vmax.xlane.f32.xlu0 %v1989
    %v1991 = vpop.xlane.xlu0 %1990
    %v1992 = vsub.f32 %v1984, %v1988
    %v1993 = vsub.f32 %v1985, %v1991
    %v1994 = vmul.f32 %v1992, 1.442695
    %v1995 = vpow.pop %v1994
    %v1996 = vmul.f32 %v1993, 1.442695
    %v1997 = vpow.pop %v1996
    %1998 = vrot.lane.b32.xlu0 %v226, 80
    %v1999 = vpop.permute.xlu0 %1998
    %2000 = vrot.lane.b32.xlu0 %v227, 80
    %v2001 = vpop.permute.xlu0 %2000
    %v2005 = vsel %vm275, %v1995, 0
    %v2008 = vsel %vm275, %v1997, 0
    %2010 = vmatpush.msra.mxu0 0.0
    %2011 = vmatpush.msra.mxu0 0.0
    %2012 = vmatpush.msra.mxu0 0.0
    %2013 = vmatpush.msra.mxu0 0.0
    %2014 = vmatpush.msra.mxu0 0.0
    %2015 = vmatpush.msra.mxu0 0.0
    %2016 = vmatpush.msra.mxu0 0.0
    %2017 = vmatpush.msra.mxu0 0.0
    %2018 = vmatpush.msra.mxu0 0.0
    %2019 = vmatpush.msra.mxu0 0.0
    %2020 = vmatpush.msra.mxu0 0.0
    %2021 = vmatpush.msra.mxu0 0.0
    %2022 = vmatpush.msra.mxu0 0.0
    %2023 = vmatpush.msra.mxu0 0.0
    %2024 = vmatpush.msra.mxu0 %v2001
    %2025 = vmatpush.msra.mxu0 %v1999
    %2026 = vmatmul.f32.gmra.mxu0 %v2005
    %v2027 = vpop.f32.mrf.mxu0
    %v2028 = vadd.f32 0.0, %v2027
    %2029 = vmatmul.f32.gmra.mxu0 %v2008
    %v2030 = vpop.f32.mrf.mxu0
    %v2031 = vadd.f32 0.0, %v2030
    %2032 = vdwg.mxu0
    %v2033 = vsel %vm275, %v1995, 0.0
    %2034 = vadd.xlane.f32.xlu0 %v2033
    %v2035 = vpop.xlane.xlu0 %2034
    %v2036 = vsel %vm275, %v1997, 0.0
    %2037 = vadd.xlane.f32.xlu0 %v2036
    %v2038 = vpop.xlane.xlu0 %2037
    %v2039 = vrcp.pop %v2035
    %v2040 = vrcp.pop %v2038
    %v2041 = vmul.f32 %v2028, %v2039
    %v2042 = vmul.f32 %v2031, %v2040
    %v2043 = vadd.f32 %v1596, %v2041
    %v2044 = vadd.f32 %v1597, %v2042
    %v2046 = vperm.slane %v174, 0
    %v2048 = vmul.f32 %v2043, %v2046
    %v2049 = vmul.f32 %v2044, %v2046
    %v2050 = vadd.f32 %v2048, %v218
    %v2051 = vadd.f32 %v2049, %v221
    %v2053 = vperm.slane %v175, 0
    %v2055 = vadd.f32 %v2050, %v2053
    %v2056 = vadd.f32 %v2051, %v2053
    %vm2057 = vcmp.gt.f32.partialorder %v2055, 0.0
    %vm2058 = vcmp.gt.f32.partialorder %v2056, 0.0
    %v2060 = vperm.slane %v176, 0
    %v2062 = vmul.f32 %v2060, %v2055
    %v2063 = vmul.f32 %v2060, %v2056
    %v2064 = vsel %vm2057, %v2055, %v2062
    %v2065 = vsel %vm2058, %v2056, %v2063
    %v2066 = vld [vmem:[%s25] sm:$0xff]
    %v2067 = vld [vmem:[%s25 + $0x8] sm:$0xff]
    %v2068 = vld [vmem:[%s25 + $0x10] sm:$0xff]
    %v2069 = vld [vmem:[%s25 + $0x18] sm:$0xff]
    %v2070 = vld [vmem:[%s27] sm:$0x1]
    %v2071 = vld [vmem:[%s29] sm:$0xf]
    %v2072 = vld [vmem:[%s31] sm:$0xff]
    %v2073 = vld [vmem:[%s31 + $0x8] sm:$0xff]
    %v2074 = vld [vmem:[%s31 + $0x10] sm:$0xff]
    %v2075 = vld [vmem:[%s31 + $0x18] sm:$0xff]
    %v2076 = vld [vmem:[%s31 + $0x20] sm:$0xff]
    %v2077 = vld [vmem:[%s31 + $0x28] sm:$0xff]
    %v2078 = vld [vmem:[%s31 + $0x30] sm:$0xff]
    %v2079 = vld [vmem:[%s31 + $0x38] sm:$0xff]
    %v2080 = vld [vmem:[%s33] sm:$0x1]
    %v2081 = vld [vmem:[%s35] sm:$0x1]
    %v2082 = vld [vmem:[%s37] sm:$0x1]
    %v2084 = vsel %vm275, %v2064, 0
    %v2087 = vsel %vm275, %v2065, 0
    %2089 = vmatpush.msra.mxu0 0.0
    %2090 = vmatpush.msra.mxu0 0.0
    %2091 = vmatpush.msra.mxu0 0.0
    %2092 = vmatpush.msra.mxu0 0.0
    %2093 = vmatpush.msra.mxu0 0.0
    %2094 = vmatpush.msra.mxu0 0.0
    %2095 = vmatpush.msra.mxu0 0.0
    %2096 = vmatpush.msra.mxu0 0.0
    %2097 = vmatpush.msra.mxu0 0.0
    %2098 = vmatpush.msra.mxu0 0.0
    %2099 = vmatpush.msra.mxu0 0.0
    %2100 = vmatpush.msra.mxu0 0.0
    %2101 = vmatpush.msra.mxu0 0.0
    %2102 = vmatpush.msra.mxu0 0.0
    %2103 = vmatpush.msra.mxu0 %v2068
    %2104 = vmatpush.msra.mxu0 %v2066
    %2105 = vmatmul.f32.gmra.mxu0 %v2084
    %v2106 = vpop.f32.mrf.mxu0
    %v2107 = vadd.f32 0.0, %v2106
    %2108 = vmatmul.f32.gmra.mxu0 %v2087
    %v2109 = vpop.f32.mrf.mxu0
    %v2110 = vadd.f32 0.0, %v2109
    %2111 = vdwg.mxu0
    %2112 = vmatpush.msra.mxu0 0.0
    %2113 = vmatpush.msra.mxu0 0.0
    %2114 = vmatpush.msra.mxu0 0.0
    %2115 = vmatpush.msra.mxu0 0.0
    %2116 = vmatpush.msra.mxu0 0.0
    %2117 = vmatpush.msra.mxu0 0.0
    %2118 = vmatpush.msra.mxu0 0.0
    %2119 = vmatpush.msra.mxu0 0.0
    %2120 = vmatpush.msra.mxu0 0.0
    %2121 = vmatpush.msra.mxu0 0.0
    %2122 = vmatpush.msra.mxu0 0.0
    %2123 = vmatpush.msra.mxu0 0.0
    %2124 = vmatpush.msra.mxu0 0.0
    %2125 = vmatpush.msra.mxu0 0.0
    %2126 = vmatpush.msra.mxu0 %v2069
    %2127 = vmatpush.msra.mxu0 %v2067
    %2128 = vmatmul.f32.gmra.mxu0 %v2084
    %v2129 = vpop.f32.mrf.mxu0
    %v2130 = vadd.f32 0.0, %v2129
    %2131 = vmatmul.f32.gmra.mxu0 %v2087
    %v2132 = vpop.f32.mrf.mxu0
    %v2133 = vadd.f32 0.0, %v2132
    %2134 = vdwg.mxu0
    %v2136 = vperm.slane %v2070, 0
    %v2138 = vadd.f32 %v2107, %v2136
    %v2139 = vadd.f32 %v2110, %v2136
    %2140 = vxpose.xlu0.b32.start [1/16] %v2138, 128
    %2141 = vxpose.xlu0.b32.cont [2/16] %v2139, 128
    %2142 = vxpose.xlu0.b32.cont [3/16] 0.0, 128
    %2143 = vxpose.xlu0.b32.cont [4/16] 0.0, 128
    %2144 = vxpose.xlu0.b32.cont [5/16] 0.0, 128
    %2145 = vxpose.xlu0.b32.cont [6/16] 0.0, 128
    %2146 = vxpose.xlu0.b32.cont [7/16] 0.0, 128
    %2147 = vxpose.xlu0.b32.cont [8/16] 0.0, 128
    %2148 = vxpose.xlu0.b32.cont [9/16] 0.0, 128
    %2149 = vxpose.xlu0.b32.cont [10/16] 0.0, 128
    %2150 = vxpose.xlu0.b32.cont [11/16] 0.0, 128
    %2151 = vxpose.xlu0.b32.cont [12/16] 0.0, 128
    %2152 = vxpose.xlu0.b32.cont [13/16] 0.0, 128
    %2153 = vxpose.xlu0.b32.cont [14/16] 0.0, 128
    %2154 = vxpose.xlu0.b32.cont [15/16] 0.0, 128
    %2155 = vxpose.xlu0.b32.end [16/16] 0.0, 128
    %v2156 = vpop.trf.xlu0
    %v2157 = vpop.trf.xlu0
    %v2158 = vpop.trf.xlu0
    %v2159 = vpop.trf.xlu0
    %v2160 = vpop.trf.xlu0
    %v2161 = vpop.trf.xlu0
    %v2162 = vpop.trf.xlu0
    %v2163 = vpop.trf.xlu0
    %v2164 = vpop.trf.xlu0
    %v2165 = vpop.trf.xlu0
    %v2166 = vpop.trf.xlu0
    %v2167 = vpop.trf.xlu0
    %v2168 = vpop.trf.xlu0
    %v2169 = vpop.trf.xlu0
    %v2170 = vpop.trf.xlu0
    %v2171 = vpop.trf.xlu0
    %v2172 = vperm.slane %v2071, 0
    %2174 = vrot.lane.b32.xlu0 %v2172, 64
    %v2175 = vpop.permute.xlu0 %2174
    %v2177 = vmul.f32 %v2138, %v2175
    %v2178 = vmul.f32 %v2139, %v2175
    %2181 = vrot.lane.b32.xlu0 %v2177, 64
    %v2182 = vpop.permute.xlu0 %2181
    %2183 = vrot.lane.b32.xlu0 %v2178, 64
    %v2184 = vpop.permute.xlu0 %2183
    %v2187 = vsel %vm275, %v2182, 0.0
    %2188 = vadd.xlane.f32.xlu0 %v2187
    %v2189 = vpop.xlane.xlu0 %2188
    %v2190 = vsel %vm275, %v2184, 0.0
    %2191 = vadd.xlane.f32.xlu0 %v2190
    %v2192 = vpop.xlane.xlu0 %2191
    %2194 = vset.pattern.permute.xlu0 0
    %2195 = vperm.xlu0 %2194, %v2072
    %v2196 = vpop.permute.xlu0 %2195
    %2199 = vset.pattern.permute.xlu0 0
    %2200 = vperm.xlu0 %2199, %v2073
    %v2201 = vpop.permute.xlu0 %2200
    %v2203 = vmul.f32 %v2156, %v2196
    %v2204 = vmul.f32 %v2157, %v2201
    %v2205 = vsel %vm275, %v2203, 0.0
    %v2206 = vsel %vm275, %v2204, 0.0
    %v2207 = vadd.f32 %v2205, %v2206
    %v2208 = vrot.slane %v2207, 4
    %v2209 = vadd.f32 %v2207, %v2208
    %v2210 = vrot.slane %v2209, 2
    %v2211 = vadd.f32 %v2209, %v2210
    %v2212 = vrot.slane %v2211, 1
    %v2213 = vadd.f32 %v2211, %v2212
    %v2214 = vmul.f32 %v2072, 0.4
    %v2215 = vmul.f32 %v2073, 0.4
    %2217 = vset.pattern.permute.xlu0 64
    %2218 = vperm.xlu0 %2217, %v2138
    %v2219 = vpop.permute.xlu0 %2218
    %2222 = vset.pattern.permute.xlu0 64
    %2223 = vperm.xlu0 %2222, %v2139
    %v2224 = vpop.permute.xlu0 %2223
    %v2226 = vperm.slane %v2156, 0
    %v2227 = vadd.f32 %v2219, %v2226
    %v2228 = vadd.f32 %v2224, %v2226
    %v2229 = vand.u32 2147483647, %v2227
    %v2230 = vand.u32 2147483647, %v2228
    %s2232 = vtos %v2214
    %v2233 = vstv %s2232
    %v2235 = vmul.f32 %v2233, %v2229
    %v2236 = vmul.f32 %v2233, %v2230
    %v2237 = vadd.f32 %v2235, 0.0
    %v2238 = vadd.f32 %v2236, 0.0
    %2239 = vset.pattern.permute.xlu0 65
    %2240 = vperm.xlu0 %2239, %v2138
    %v2241 = vpop.permute.xlu0 %2240
    %2243 = vset.pattern.permute.xlu0 65
    %2244 = vperm.xlu0 %2243, %v2139
    %v2245 = vpop.permute.xlu0 %2244
    %v2247 = vperm.slane %v2156, 1
    %v2248 = vadd.f32 %v2241, %v2247
    %v2249 = vadd.f32 %v2245, %v2247
    %v2250 = vand.u32 2147483647, %v2248
    %v2251 = vand.u32 2147483647, %v2249
    %v2252 = vrot.slane %v2214, 1
    %s2253 = vtos %v2252
    %v2254 = vstv %s2253
    %v2256 = vmul.f32 %v2254, %v2250
    %v2257 = vmul.f32 %v2254, %v2251
    %v2258 = vadd.f32 %v2237, %v2256
    %v2259 = vadd.f32 %v2238, %v2257
    %2260 = vset.pattern.permute.xlu0 66
    %2261 = vperm.xlu0 %2260, %v2138
    %v2262 = vpop.permute.xlu0 %2261
    %2264 = vset.pattern.permute.xlu0 66
    %2265 = vperm.xlu0 %2264, %v2139
    %v2266 = vpop.permute.xlu0 %2265
    %v2268 = vperm.slane %v2156, 2
    %v2269 = vadd.f32 %v2262, %v2268
    %v2270 = vadd.f32 %v2266, %v2268
    %v2271 = vand.u32 2147483647, %v2269
    %v2272 = vand.u32 2147483647, %v2270
    %v2273 = vrot.slane %v2214, 2
    %s2274 = vtos %v2273
    %v2275 = vstv %s2274
    %v2277 = vmul.f32 %v2275, %v2271
    %v2278 = vmul.f32 %v2275, %v2272
    %v2279 = vadd.f32 %v2258, %v2277
    %v2280 = vadd.f32 %v2259, %v2278
    %2281 = vset.pattern.permute.xlu0 67
    %2282 = vperm.xlu0 %2281, %v2138
    %v2283 = vpop.permute.xlu0 %2282
    %2285 = vset.pattern.permute.xlu0 67
    %2286 = vperm.xlu0 %2285, %v2139
    %v2287 = vpop.permute.xlu0 %2286
    %v2289 = vperm.slane %v2156, 3
    %v2290 = vadd.f32 %v2283, %v2289
    %v2291 = vadd.f32 %v2287, %v2289
    %v2292 = vand.u32 2147483647, %v2290
    %v2293 = vand.u32 2147483647, %v2291
    %v2294 = vrot.slane %v2214, 3
    %s2295 = vtos %v2294
    %v2296 = vstv %s2295
    %v2298 = vmul.f32 %v2296, %v2292
    %v2299 = vmul.f32 %v2296, %v2293
    %v2300 = vadd.f32 %v2279, %v2298
    %v2301 = vadd.f32 %v2280, %v2299
    %2302 = vset.pattern.permute.xlu0 68
    %2303 = vperm.xlu0 %2302, %v2138
    %v2304 = vpop.permute.xlu0 %2303
    %2306 = vset.pattern.permute.xlu0 68
    %2307 = vperm.xlu0 %2306, %v2139
    %v2308 = vpop.permute.xlu0 %2307
    %v2310 = vperm.slane %v2156, 4
    %v2311 = vadd.f32 %v2304, %v2310
    %v2312 = vadd.f32 %v2308, %v2310
    %v2313 = vand.u32 2147483647, %v2311
    %v2314 = vand.u32 2147483647, %v2312
    %v2315 = vrot.slane %v2214, 4
    %s2316 = vtos %v2315
    %v2317 = vstv %s2316
    %v2319 = vmul.f32 %v2317, %v2313
    %v2320 = vmul.f32 %v2317, %v2314
    %v2321 = vadd.f32 %v2300, %v2319
    %v2322 = vadd.f32 %v2301, %v2320
    %2323 = vset.pattern.permute.xlu0 69
    %2324 = vperm.xlu0 %2323, %v2138
    %v2325 = vpop.permute.xlu0 %2324
    %2327 = vset.pattern.permute.xlu0 69
    %2328 = vperm.xlu0 %2327, %v2139
    %v2329 = vpop.permute.xlu0 %2328
    %v2331 = vperm.slane %v2156, 5
    %v2332 = vadd.f32 %v2325, %v2331
    %v2333 = vadd.f32 %v2329, %v2331
    %v2334 = vand.u32 2147483647, %v2332
    %v2335 = vand.u32 2147483647, %v2333
    %v2336 = vrot.slane %v2214, 5
    %s2337 = vtos %v2336
    %v2338 = vstv %s2337
    %v2340 = vmul.f32 %v2338, %v2334
    %v2341 = vmul.f32 %v2338, %v2335
    %v2342 = vadd.f32 %v2321, %v2340
    %v2343 = vadd.f32 %v2322, %v2341
    %2344 = vset.pattern.permute.xlu0 70
    %2345 = vperm.xlu0 %2344, %v2138
    %v2346 = vpop.permute.xlu0 %2345
    %2348 = vset.pattern.permute.xlu0 70
    %2349 = vperm.xlu0 %2348, %v2139
    %v2350 = vpop.permute.xlu0 %2349
    %v2352 = vperm.slane %v2156, 6
    %v2353 = vadd.f32 %v2346, %v2352
    %v2354 = vadd.f32 %v2350, %v2352
    %v2355 = vand.u32 2147483647, %v2353
    %v2356 = vand.u32 2147483647, %v2354
    %v2357 = vrot.slane %v2214, 6
    %s2358 = vtos %v2357
    %v2359 = vstv %s2358
    %v2361 = vmul.f32 %v2359, %v2355
    %v2362 = vmul.f32 %v2359, %v2356
    %v2363 = vadd.f32 %v2342, %v2361
    %v2364 = vadd.f32 %v2343, %v2362
    %2365 = vset.pattern.permute.xlu0 71
    %2366 = vperm.xlu0 %2365, %v2138
    %v2367 = vpop.permute.xlu0 %2366
    %2369 = vset.pattern.permute.xlu0 71
    %2370 = vperm.xlu0 %2369, %v2139
    %v2371 = vpop.permute.xlu0 %2370
    %v2373 = vperm.slane %v2156, 7
    %v2374 = vadd.f32 %v2367, %v2373
    %v2375 = vadd.f32 %v2371, %v2373
    %v2376 = vand.u32 2147483647, %v2374
    %v2377 = vand.u32 2147483647, %v2375
    %v2378 = vrot.slane %v2214, 7
    %s2379 = vtos %v2378
    %v2380 = vstv %s2379
    %v2382 = vmul.f32 %v2380, %v2376
    %v2383 = vmul.f32 %v2380, %v2377
    %v2384 = vadd.f32 %v2363, %v2382
    %v2385 = vadd.f32 %v2364, %v2383
    %2386 = vset.pattern.permute.xlu0 72
    %2387 = vperm.xlu0 %2386, %v2138
    %v2388 = vpop.permute.xlu0 %2387
    %2390 = vset.pattern.permute.xlu0 72
    %2391 = vperm.xlu0 %2390, %v2139
    %v2392 = vpop.permute.xlu0 %2391
    %v2394 = vperm.slane %v2157, 0
    %v2395 = vadd.f32 %v2388, %v2394
    %v2396 = vadd.f32 %v2392, %v2394
    %v2397 = vand.u32 2147483647, %v2395
    %v2398 = vand.u32 2147483647, %v2396
    %s2400 = vtos %v2215
    %v2401 = vstv %s2400
    %v2403 = vmul.f32 %v2401, %v2397
    %v2404 = vmul.f32 %v2401, %v2398
    %v2405 = vadd.f32 %v2384, %v2403
    %v2406 = vadd.f32 %v2385, %v2404
    %2407 = vset.pattern.permute.xlu0 73
    %2408 = vperm.xlu0 %2407, %v2138
    %v2409 = vpop.permute.xlu0 %2408
    %2411 = vset.pattern.permute.xlu0 73
    %2412 = vperm.xlu0 %2411, %v2139
    %v2413 = vpop.permute.xlu0 %2412
    %v2415 = vperm.slane %v2157, 1
    %v2416 = vadd.f32 %v2409, %v2415
    %v2417 = vadd.f32 %v2413, %v2415
    %v2418 = vand.u32 2147483647, %v2416
    %v2419 = vand.u32 2147483647, %v2417
    %v2420 = vrot.slane %v2215, 1
    %s2421 = vtos %v2420
    %v2422 = vstv %s2421
    %v2424 = vmul.f32 %v2422, %v2418
    %v2425 = vmul.f32 %v2422, %v2419
    %v2426 = vadd.f32 %v2405, %v2424
    %v2427 = vadd.f32 %v2406, %v2425
    %2428 = vset.pattern.permute.xlu0 74
    %2429 = vperm.xlu0 %2428, %v2138
    %v2430 = vpop.permute.xlu0 %2429
    %2432 = vset.pattern.permute.xlu0 74
    %2433 = vperm.xlu0 %2432, %v2139
    %v2434 = vpop.permute.xlu0 %2433
    %v2436 = vperm.slane %v2157, 2
    %v2437 = vadd.f32 %v2430, %v2436
    %v2438 = vadd.f32 %v2434, %v2436
    %v2439 = vand.u32 2147483647, %v2437
    %v2440 = vand.u32 2147483647, %v2438
    %v2441 = vrot.slane %v2215, 2
    %s2442 = vtos %v2441
    %v2443 = vstv %s2442
    %v2445 = vmul.f32 %v2443, %v2439
    %v2446 = vmul.f32 %v2443, %v2440
    %v2447 = vadd.f32 %v2426, %v2445
    %v2448 = vadd.f32 %v2427, %v2446
    %2449 = vset.pattern.permute.xlu0 75
    %2450 = vperm.xlu0 %2449, %v2138
    %v2451 = vpop.permute.xlu0 %2450
    %2453 = vset.pattern.permute.xlu0 75
    %2454 = vperm.xlu0 %2453, %v2139
    %v2455 = vpop.permute.xlu0 %2454
    %v2457 = vperm.slane %v2157, 3
    %v2458 = vadd.f32 %v2451, %v2457
    %v2459 = vadd.f32 %v2455, %v2457
    %v2460 = vand.u32 2147483647, %v2458
    %v2461 = vand.u32 2147483647, %v2459
    %v2462 = vrot.slane %v2215, 3
    %s2463 = vtos %v2462
    %v2464 = vstv %s2463
    %v2466 = vmul.f32 %v2464, %v2460
    %v2467 = vmul.f32 %v2464, %v2461
    %v2468 = vadd.f32 %v2447, %v2466
    %v2469 = vadd.f32 %v2448, %v2467
    %2470 = vset.pattern.permute.xlu0 76
    %2471 = vperm.xlu0 %2470, %v2138
    %v2472 = vpop.permute.xlu0 %2471
    %2474 = vset.pattern.permute.xlu0 76
    %2475 = vperm.xlu0 %2474, %v2139
    %v2476 = vpop.permute.xlu0 %2475
    %v2478 = vperm.slane %v2157, 4
    %v2479 = vadd.f32 %v2472, %v2478
    %v2480 = vadd.f32 %v2476, %v2478
    %v2481 = vand.u32 2147483647, %v2479
    %v2482 = vand.u32 2147483647, %v2480
    %v2483 = vrot.slane %v2215, 4
    %s2484 = vtos %v2483
    %v2485 = vstv %s2484
    %v2487 = vmul.f32 %v2485, %v2481
    %v2488 = vmul.f32 %v2485, %v2482
    %v2489 = vadd.f32 %v2468, %v2487
    %v2490 = vadd.f32 %v2469, %v2488
    %2491 = vset.pattern.permute.xlu0 77
    %2492 = vperm.xlu0 %2491, %v2138
    %v2493 = vpop.permute.xlu0 %2492
    %2495 = vset.pattern.permute.xlu0 77
    %2496 = vperm.xlu0 %2495, %v2139
    %v2497 = vpop.permute.xlu0 %2496
    %v2499 = vperm.slane %v2157, 5
    %v2500 = vadd.f32 %v2493, %v2499
    %v2501 = vadd.f32 %v2497, %v2499
    %v2502 = vand.u32 2147483647, %v2500
    %v2503 = vand.u32 2147483647, %v2501
    %v2504 = vrot.slane %v2215, 5
    %s2505 = vtos %v2504
    %v2506 = vstv %s2505
    %v2508 = vmul.f32 %v2506, %v2502
    %v2509 = vmul.f32 %v2506, %v2503
    %v2510 = vadd.f32 %v2489, %v2508
    %v2511 = vadd.f32 %v2490, %v2509
    %2512 = vset.pattern.permute.xlu0 78
    %2513 = vperm.xlu0 %2512, %v2138
    %v2514 = vpop.permute.xlu0 %2513
    %2516 = vset.pattern.permute.xlu0 78
    %2517 = vperm.xlu0 %2516, %v2139
    %v2518 = vpop.permute.xlu0 %2517
    %v2520 = vperm.slane %v2157, 6
    %v2521 = vadd.f32 %v2514, %v2520
    %v2522 = vadd.f32 %v2518, %v2520
    %v2523 = vand.u32 2147483647, %v2521
    %v2524 = vand.u32 2147483647, %v2522
    %v2525 = vrot.slane %v2215, 6
    %s2526 = vtos %v2525
    %v2527 = vstv %s2526
    %v2529 = vmul.f32 %v2527, %v2523
    %v2530 = vmul.f32 %v2527, %v2524
    %v2531 = vadd.f32 %v2510, %v2529
    %v2532 = vadd.f32 %v2511, %v2530
    %2533 = vset.pattern.permute.xlu0 79
    %2534 = vperm.xlu0 %2533, %v2138
    %v2535 = vpop.permute.xlu0 %2534
    %2537 = vset.pattern.permute.xlu0 79
    %2538 = vperm.xlu0 %2537, %v2139
    %v2539 = vpop.permute.xlu0 %2538
    %v2541 = vperm.slane %v2157, 7
    %v2542 = vadd.f32 %v2535, %v2541
    %v2543 = vadd.f32 %v2539, %v2541
    %v2544 = vand.u32 2147483647, %v2542
    %v2545 = vand.u32 2147483647, %v2543
    %v2546 = vrot.slane %v2215, 7
    %s2547 = vtos %v2546
    %v2548 = vstv %s2547
    %v2550 = vmul.f32 %v2548, %v2544
    %v2551 = vmul.f32 %v2548, %v2545
    %v2552 = vadd.f32 %v2531, %v2550
    %v2553 = vadd.f32 %v2532, %v2551
    %v2554 = vadd.f32 %v2189, %v2213
    %v2555 = vadd.f32 %v2192, %v2213
    %v2556 = vmul.f32 %v2554, 0.6
    %v2557 = vmul.f32 %v2555, 0.6
    %v2558 = vadd.f32 %v2556, %v2552
    %v2559 = vadd.f32 %v2557, %v2553
    %v2560 = vadd.f32 %v2558, %v130
    %v2561 = vadd.f32 %v2559, %v131
    %v2562 = vsel %vm275, %v2560, -inf
    %2563 = vmax.xlane.f32.xlu0 %v2562
    %v2564 = vpop.xlane.xlu0 %2563
    %v2565 = vsel %vm275, %v2561, -inf
    %2566 = vmax.xlane.f32.xlu0 %v2565
    %v2567 = vpop.xlane.xlu0 %2566
    %v2568 = vsub.f32 %v2560, %v2564
    %v2569 = vsub.f32 %v2561, %v2567
    %v2570 = vmul.f32 %v2568, 1.442695
    %v2571 = vpow.pop %v2570
    %v2572 = vmul.f32 %v2569, 1.442695
    %v2573 = vpow.pop %v2572
    %v2575 = vsel %vm275, %v2571, 0
    %v2578 = vsel %vm275, %v2573, 0
    %2580 = vmatpush.msra.mxu0 0.0
    %2581 = vmatpush.msra.mxu0 0.0
    %2582 = vmatpush.msra.mxu0 0.0
    %2583 = vmatpush.msra.mxu0 0.0
    %2584 = vmatpush.msra.mxu0 0.0
    %2585 = vmatpush.msra.mxu0 0.0
    %2586 = vmatpush.msra.mxu0 0.0
    %2587 = vmatpush.msra.mxu0 0.0
    %2588 = vmatpush.msra.mxu0 0.0
    %2589 = vmatpush.msra.mxu0 0.0
    %2590 = vmatpush.msra.mxu0 0.0
    %2591 = vmatpush.msra.mxu0 0.0
    %2592 = vmatpush.msra.mxu0 0.0
    %2593 = vmatpush.msra.mxu0 0.0
    %2594 = vmatpush.msra.mxu0 %v2139
    %2595 = vmatpush.msra.mxu0 %v2138
    %2596 = vmatmul.f32.gmra.mxu0 %v2575
    %v2597 = vpop.f32.mrf.mxu0
    %v2598 = vadd.f32 0.0, %v2597
    %2599 = vmatmul.f32.gmra.mxu0 %v2578
    %v2600 = vpop.f32.mrf.mxu0
    %v2601 = vadd.f32 0.0, %v2600
    %2602 = vdwg.mxu0
    %v2603 = vsel %vm275, %v2571, 0.0
    %2604 = vadd.xlane.f32.xlu0 %v2603
    %v2605 = vpop.xlane.xlu0 %2604
    %v2606 = vsel %vm275, %v2573, 0.0
    %2607 = vadd.xlane.f32.xlu0 %v2606
    %v2608 = vpop.xlane.xlu0 %2607
    %v2609 = vrcp.pop %v2605
    %v2610 = vrcp.pop %v2608
    %v2611 = vmul.f32 %v2598, %v2609
    %v2612 = vmul.f32 %v2601, %v2610
    %v2613 = vadd.f32 %v2611, 0.0
    %v2614 = vadd.f32 %v2612, 0.0
    %v2615 = vperm.slane %v2071, 1
    %2617 = vrot.lane.b32.xlu0 %v2615, 80
    %v2618 = vpop.permute.xlu0 %2617
    %v2620 = vmul.f32 %v2138, %v2618
    %v2621 = vmul.f32 %v2139, %v2618
    %2624 = vrot.lane.b32.xlu0 %v2620, 48
    %v2625 = vpop.permute.xlu0 %2624
    %2626 = vrot.lane.b32.xlu0 %v2621, 48
    %v2627 = vpop.permute.xlu0 %2626
    %v2630 = vsel %vm275, %v2625, 0.0
    %2631 = vadd.xlane.f32.xlu0 %v2630
    %v2632 = vpop.xlane.xlu0 %2631
    %v2633 = vsel %vm275, %v2627, 0.0
    %2634 = vadd.xlane.f32.xlu0 %v2633
    %v2635 = vpop.xlane.xlu0 %2634
    %2637 = vset.pattern.permute.xlu0 0
    %2638 = vperm.xlu0 %2637, %v2074
    %v2639 = vpop.permute.xlu0 %2638
    %2642 = vset.pattern.permute.xlu0 0
    %2643 = vperm.xlu0 %2642, %v2075
    %v2644 = vpop.permute.xlu0 %2643
    %v2646 = vmul.f32 %v2158, %v2639
    %v2647 = vmul.f32 %v2159, %v2644
    %v2648 = vsel %vm275, %v2646, 0.0
    %v2649 = vsel %vm275, %v2647, 0.0
    %v2650 = vadd.f32 %v2648, %v2649
    %v2651 = vrot.slane %v2650, 4
    %v2652 = vadd.f32 %v2650, %v2651
    %v2653 = vrot.slane %v2652, 2
    %v2654 = vadd.f32 %v2652, %v2653
    %v2655 = vrot.slane %v2654, 1
    %v2656 = vadd.f32 %v2654, %v2655
    %v2657 = vmul.f32 %v2074, 0.4
    %v2658 = vmul.f32 %v2075, 0.4
    %2659 = vset.pattern.permute.xlu0 80
    %2660 = vperm.xlu0 %2659, %v2138
    %v2661 = vpop.permute.xlu0 %2660
    %2663 = vset.pattern.permute.xlu0 80
    %2664 = vperm.xlu0 %2663, %v2139
    %v2665 = vpop.permute.xlu0 %2664
    %v2667 = vperm.slane %v2158, 0
    %v2668 = vadd.f32 %v2661, %v2667
    %v2669 = vadd.f32 %v2665, %v2667
    %v2670 = vand.u32 2147483647, %v2668
    %v2671 = vand.u32 2147483647, %v2669
    %s2673 = vtos %v2657
    %v2674 = vstv %s2673
    %v2676 = vmul.f32 %v2674, %v2670
    %v2677 = vmul.f32 %v2674, %v2671
    %v2678 = vadd.f32 %v2676, 0.0
    %v2679 = vadd.f32 %v2677, 0.0
    %2680 = vset.pattern.permute.xlu0 81
    %2681 = vperm.xlu0 %2680, %v2138
    %v2682 = vpop.permute.xlu0 %2681
    %2684 = vset.pattern.permute.xlu0 81
    %2685 = vperm.xlu0 %2684, %v2139
    %v2686 = vpop.permute.xlu0 %2685
    %v2688 = vperm.slane %v2158, 1
    %v2689 = vadd.f32 %v2682, %v2688
    %v2690 = vadd.f32 %v2686, %v2688
    %v2691 = vand.u32 2147483647, %v2689
    %v2692 = vand.u32 2147483647, %v2690
    %v2693 = vrot.slane %v2657, 1
    %s2694 = vtos %v2693
    %v2695 = vstv %s2694
    %v2697 = vmul.f32 %v2695, %v2691
    %v2698 = vmul.f32 %v2695, %v2692
    %v2699 = vadd.f32 %v2678, %v2697
    %v2700 = vadd.f32 %v2679, %v2698
    %2701 = vset.pattern.permute.xlu0 82
    %2702 = vperm.xlu0 %2701, %v2138
    %v2703 = vpop.permute.xlu0 %2702
    %2705 = vset.pattern.permute.xlu0 82
    %2706 = vperm.xlu0 %2705, %v2139
    %v2707 = vpop.permute.xlu0 %2706
    %v2709 = vperm.slane %v2158, 2
    %v2710 = vadd.f32 %v2703, %v2709
    %v2711 = vadd.f32 %v2707, %v2709
    %v2712 = vand.u32 2147483647, %v2710
    %v2713 = vand.u32 2147483647, %v2711
    %v2714 = vrot.slane %v2657, 2
    %s2715 = vtos %v2714
    %v2716 = vstv %s2715
    %v2718 = vmul.f32 %v2716, %v2712
    %v2719 = vmul.f32 %v2716, %v2713
    %v2720 = vadd.f32 %v2699, %v2718
    %v2721 = vadd.f32 %v2700, %v2719
    %2722 = vset.pattern.permute.xlu0 83
    %2723 = vperm.xlu0 %2722, %v2138
    %v2724 = vpop.permute.xlu0 %2723
    %2726 = vset.pattern.permute.xlu0 83
    %2727 = vperm.xlu0 %2726, %v2139
    %v2728 = vpop.permute.xlu0 %2727
    %v2730 = vperm.slane %v2158, 3
    %v2731 = vadd.f32 %v2724, %v2730
    %v2732 = vadd.f32 %v2728, %v2730
    %v2733 = vand.u32 2147483647, %v2731
    %v2734 = vand.u32 2147483647, %v2732
    %v2735 = vrot.slane %v2657, 3
    %s2736 = vtos %v2735
    %v2737 = vstv %s2736
    %v2739 = vmul.f32 %v2737, %v2733
    %v2740 = vmul.f32 %v2737, %v2734
    %v2741 = vadd.f32 %v2720, %v2739
    %v2742 = vadd.f32 %v2721, %v2740
    %2743 = vset.pattern.permute.xlu0 84
    %2744 = vperm.xlu0 %2743, %v2138
    %v2745 = vpop.permute.xlu0 %2744
    %2747 = vset.pattern.permute.xlu0 84
    %2748 = vperm.xlu0 %2747, %v2139
    %v2749 = vpop.permute.xlu0 %2748
    %v2751 = vperm.slane %v2158, 4
    %v2752 = vadd.f32 %v2745, %v2751
    %v2753 = vadd.f32 %v2749, %v2751
    %v2754 = vand.u32 2147483647, %v2752
    %v2755 = vand.u32 2147483647, %v2753
    %v2756 = vrot.slane %v2657, 4
    %s2757 = vtos %v2756
    %v2758 = vstv %s2757
    %v2760 = vmul.f32 %v2758, %v2754
    %v2761 = vmul.f32 %v2758, %v2755
    %v2762 = vadd.f32 %v2741, %v2760
    %v2763 = vadd.f32 %v2742, %v2761
    %2764 = vset.pattern.permute.xlu0 85
    %2765 = vperm.xlu0 %2764, %v2138
    %v2766 = vpop.permute.xlu0 %2765
    %2768 = vset.pattern.permute.xlu0 85
    %2769 = vperm.xlu0 %2768, %v2139
    %v2770 = vpop.permute.xlu0 %2769
    %v2772 = vperm.slane %v2158, 5
    %v2773 = vadd.f32 %v2766, %v2772
    %v2774 = vadd.f32 %v2770, %v2772
    %v2775 = vand.u32 2147483647, %v2773
    %v2776 = vand.u32 2147483647, %v2774
    %v2777 = vrot.slane %v2657, 5
    %s2778 = vtos %v2777
    %v2779 = vstv %s2778
    %v2781 = vmul.f32 %v2779, %v2775
    %v2782 = vmul.f32 %v2779, %v2776
    %v2783 = vadd.f32 %v2762, %v2781
    %v2784 = vadd.f32 %v2763, %v2782
    %2785 = vset.pattern.permute.xlu0 86
    %2786 = vperm.xlu0 %2785, %v2138
    %v2787 = vpop.permute.xlu0 %2786
    %2789 = vset.pattern.permute.xlu0 86
    %2790 = vperm.xlu0 %2789, %v2139
    %v2791 = vpop.permute.xlu0 %2790
    %v2793 = vperm.slane %v2158, 6
    %v2794 = vadd.f32 %v2787, %v2793
    %v2795 = vadd.f32 %v2791, %v2793
    %v2796 = vand.u32 2147483647, %v2794
    %v2797 = vand.u32 2147483647, %v2795
    %v2798 = vrot.slane %v2657, 6
    %s2799 = vtos %v2798
    %v2800 = vstv %s2799
    %v2802 = vmul.f32 %v2800, %v2796
    %v2803 = vmul.f32 %v2800, %v2797
    %v2804 = vadd.f32 %v2783, %v2802
    %v2805 = vadd.f32 %v2784, %v2803
    %2806 = vset.pattern.permute.xlu0 87
    %2807 = vperm.xlu0 %2806, %v2138
    %v2808 = vpop.permute.xlu0 %2807
    %2810 = vset.pattern.permute.xlu0 87
    %2811 = vperm.xlu0 %2810, %v2139
    %v2812 = vpop.permute.xlu0 %2811
    %v2814 = vperm.slane %v2158, 7
    %v2815 = vadd.f32 %v2808, %v2814
    %v2816 = vadd.f32 %v2812, %v2814
    %v2817 = vand.u32 2147483647, %v2815
    %v2818 = vand.u32 2147483647, %v2816
    %v2819 = vrot.slane %v2657, 7
    %s2820 = vtos %v2819
    %v2821 = vstv %s2820
    %v2823 = vmul.f32 %v2821, %v2817
    %v2824 = vmul.f32 %v2821, %v2818
    %v2825 = vadd.f32 %v2804, %v2823
    %v2826 = vadd.f32 %v2805, %v2824
    %2827 = vset.pattern.permute.xlu0 88
    %2828 = vperm.xlu0 %2827, %v2138
    %v2829 = vpop.permute.xlu0 %2828
    %2831 = vset.pattern.permute.xlu0 88
    %2832 = vperm.xlu0 %2831, %v2139
    %v2833 = vpop.permute.xlu0 %2832
    %v2835 = vperm.slane %v2159, 0
    %v2836 = vadd.f32 %v2829, %v2835
    %v2837 = vadd.f32 %v2833, %v2835
    %v2838 = vand.u32 2147483647, %v2836
    %v2839 = vand.u32 2147483647, %v2837
    %s2841 = vtos %v2658
    %v2842 = vstv %s2841
    %v2844 = vmul.f32 %v2842, %v2838
    %v2845 = vmul.f32 %v2842, %v2839
    %v2846 = vadd.f32 %v2825, %v2844
    %v2847 = vadd.f32 %v2826, %v2845
    %2848 = vset.pattern.permute.xlu0 89
    %2849 = vperm.xlu0 %2848, %v2138
    %v2850 = vpop.permute.xlu0 %2849
    %2852 = vset.pattern.permute.xlu0 89
    %2853 = vperm.xlu0 %2852, %v2139
    %v2854 = vpop.permute.xlu0 %2853
    %v2856 = vperm.slane %v2159, 1
    %v2857 = vadd.f32 %v2850, %v2856
    %v2858 = vadd.f32 %v2854, %v2856
    %v2859 = vand.u32 2147483647, %v2857
    %v2860 = vand.u32 2147483647, %v2858
    %v2861 = vrot.slane %v2658, 1
    %s2862 = vtos %v2861
    %v2863 = vstv %s2862
    %v2865 = vmul.f32 %v2863, %v2859
    %v2866 = vmul.f32 %v2863, %v2860
    %v2867 = vadd.f32 %v2846, %v2865
    %v2868 = vadd.f32 %v2847, %v2866
    %2869 = vset.pattern.permute.xlu0 90
    %2870 = vperm.xlu0 %2869, %v2138
    %v2871 = vpop.permute.xlu0 %2870
    %2873 = vset.pattern.permute.xlu0 90
    %2874 = vperm.xlu0 %2873, %v2139
    %v2875 = vpop.permute.xlu0 %2874
    %v2877 = vperm.slane %v2159, 2
    %v2878 = vadd.f32 %v2871, %v2877
    %v2879 = vadd.f32 %v2875, %v2877
    %v2880 = vand.u32 2147483647, %v2878
    %v2881 = vand.u32 2147483647, %v2879
    %v2882 = vrot.slane %v2658, 2
    %s2883 = vtos %v2882
    %v2884 = vstv %s2883
    %v2886 = vmul.f32 %v2884, %v2880
    %v2887 = vmul.f32 %v2884, %v2881
    %v2888 = vadd.f32 %v2867, %v2886
    %v2889 = vadd.f32 %v2868, %v2887
    %2890 = vset.pattern.permute.xlu0 91
    %2891 = vperm.xlu0 %2890, %v2138
    %v2892 = vpop.permute.xlu0 %2891
    %2894 = vset.pattern.permute.xlu0 91
    %2895 = vperm.xlu0 %2894, %v2139
    %v2896 = vpop.permute.xlu0 %2895
    %v2898 = vperm.slane %v2159, 3
    %v2899 = vadd.f32 %v2892, %v2898
    %v2900 = vadd.f32 %v2896, %v2898
    %v2901 = vand.u32 2147483647, %v2899
    %v2902 = vand.u32 2147483647, %v2900
    %v2903 = vrot.slane %v2658, 3
    %s2904 = vtos %v2903
    %v2905 = vstv %s2904
    %v2907 = vmul.f32 %v2905, %v2901
    %v2908 = vmul.f32 %v2905, %v2902
    %v2909 = vadd.f32 %v2888, %v2907
    %v2910 = vadd.f32 %v2889, %v2908
    %2911 = vset.pattern.permute.xlu0 92
    %2912 = vperm.xlu0 %2911, %v2138
    %v2913 = vpop.permute.xlu0 %2912
    %2915 = vset.pattern.permute.xlu0 92
    %2916 = vperm.xlu0 %2915, %v2139
    %v2917 = vpop.permute.xlu0 %2916
    %v2919 = vperm.slane %v2159, 4
    %v2920 = vadd.f32 %v2913, %v2919
    %v2921 = vadd.f32 %v2917, %v2919
    %v2922 = vand.u32 2147483647, %v2920
    %v2923 = vand.u32 2147483647, %v2921
    %v2924 = vrot.slane %v2658, 4
    %s2925 = vtos %v2924
    %v2926 = vstv %s2925
    %v2928 = vmul.f32 %v2926, %v2922
    %v2929 = vmul.f32 %v2926, %v2923
    %v2930 = vadd.f32 %v2909, %v2928
    %v2931 = vadd.f32 %v2910, %v2929
    %2932 = vset.pattern.permute.xlu0 93
    %2933 = vperm.xlu0 %2932, %v2138
    %v2934 = vpop.permute.xlu0 %2933
    %2936 = vset.pattern.permute.xlu0 93
    %2937 = vperm.xlu0 %2936, %v2139
    %v2938 = vpop.permute.xlu0 %2937
    %v2940 = vperm.slane %v2159, 5
    %v2941 = vadd.f32 %v2934, %v2940
    %v2942 = vadd.f32 %v2938, %v2940
    %v2943 = vand.u32 2147483647, %v2941
    %v2944 = vand.u32 2147483647, %v2942
    %v2945 = vrot.slane %v2658, 5
    %s2946 = vtos %v2945
    %v2947 = vstv %s2946
    %v2949 = vmul.f32 %v2947, %v2943
    %v2950 = vmul.f32 %v2947, %v2944
    %v2951 = vadd.f32 %v2930, %v2949
    %v2952 = vadd.f32 %v2931, %v2950
    %2953 = vset.pattern.permute.xlu0 94
    %2954 = vperm.xlu0 %2953, %v2138
    %v2955 = vpop.permute.xlu0 %2954
    %2957 = vset.pattern.permute.xlu0 94
    %2958 = vperm.xlu0 %2957, %v2139
    %v2959 = vpop.permute.xlu0 %2958
    %v2961 = vperm.slane %v2159, 6
    %v2962 = vadd.f32 %v2955, %v2961
    %v2963 = vadd.f32 %v2959, %v2961
    %v2964 = vand.u32 2147483647, %v2962
    %v2965 = vand.u32 2147483647, %v2963
    %v2966 = vrot.slane %v2658, 6
    %s2967 = vtos %v2966
    %v2968 = vstv %s2967
    %v2970 = vmul.f32 %v2968, %v2964
    %v2971 = vmul.f32 %v2968, %v2965
    %v2972 = vadd.f32 %v2951, %v2970
    %v2973 = vadd.f32 %v2952, %v2971
    %2974 = vset.pattern.permute.xlu0 95
    %2975 = vperm.xlu0 %2974, %v2138
    %v2976 = vpop.permute.xlu0 %2975
    %2978 = vset.pattern.permute.xlu0 95
    %2979 = vperm.xlu0 %2978, %v2139
    %v2980 = vpop.permute.xlu0 %2979
    %v2982 = vperm.slane %v2159, 7
    %v2983 = vadd.f32 %v2976, %v2982
    %v2984 = vadd.f32 %v2980, %v2982
    %v2985 = vand.u32 2147483647, %v2983
    %v2986 = vand.u32 2147483647, %v2984
    %v2987 = vrot.slane %v2658, 7
    %s2988 = vtos %v2987
    %v2989 = vstv %s2988
    %v2991 = vmul.f32 %v2989, %v2985
    %v2992 = vmul.f32 %v2989, %v2986
    %v2993 = vadd.f32 %v2972, %v2991
    %v2994 = vadd.f32 %v2973, %v2992
    %v2995 = vadd.f32 %v2632, %v2656
    %v2996 = vadd.f32 %v2635, %v2656
    %v2997 = vmul.f32 %v2995, 0.6
    %v2998 = vmul.f32 %v2996, 0.6
    %v2999 = vadd.f32 %v2997, %v2993
    %v3000 = vadd.f32 %v2998, %v2994
    %v3001 = vadd.f32 %v2999, %v130
    %v3002 = vadd.f32 %v3000, %v131
    %v3003 = vsel %vm275, %v3001, -inf
    %3004 = vmax.xlane.f32.xlu0 %v3003
    %v3005 = vpop.xlane.xlu0 %3004
    %v3006 = vsel %vm275, %v3002, -inf
    %3007 = vmax.xlane.f32.xlu0 %v3006
    %v3008 = vpop.xlane.xlu0 %3007
    %v3009 = vsub.f32 %v3001, %v3005
    %v3010 = vsub.f32 %v3002, %v3008
    %v3011 = vmul.f32 %v3009, 1.442695
    %v3012 = vpow.pop %v3011
    %v3013 = vmul.f32 %v3010, 1.442695
    %v3014 = vpow.pop %v3013
    %3015 = vrot.lane.b32.xlu0 %v2138, 112
    %v3016 = vpop.permute.xlu0 %3015
    %3017 = vrot.lane.b32.xlu0 %v2139, 112
    %v3018 = vpop.permute.xlu0 %3017
    %v3022 = vsel %vm275, %v3012, 0
    %v3025 = vsel %vm275, %v3014, 0
    %3027 = vmatpush.msra.mxu0 0.0
    %3028 = vmatpush.msra.mxu0 0.0
    %3029 = vmatpush.msra.mxu0 0.0
    %3030 = vmatpush.msra.mxu0 0.0
    %3031 = vmatpush.msra.mxu0 0.0
    %3032 = vmatpush.msra.mxu0 0.0
    %3033 = vmatpush.msra.mxu0 0.0
    %3034 = vmatpush.msra.mxu0 0.0
    %3035 = vmatpush.msra.mxu0 0.0
    %3036 = vmatpush.msra.mxu0 0.0
    %3037 = vmatpush.msra.mxu0 0.0
    %3038 = vmatpush.msra.mxu0 0.0
    %3039 = vmatpush.msra.mxu0 0.0
    %3040 = vmatpush.msra.mxu0 0.0
    %3041 = vmatpush.msra.mxu0 %v3018
    %3042 = vmatpush.msra.mxu0 %v3016
    %3043 = vmatmul.f32.gmra.mxu0 %v3022
    %v3044 = vpop.f32.mrf.mxu0
    %v3045 = vadd.f32 0.0, %v3044
    %3046 = vmatmul.f32.gmra.mxu0 %v3025
    %v3047 = vpop.f32.mrf.mxu0
    %v3048 = vadd.f32 0.0, %v3047
    %3049 = vdwg.mxu0
    %v3050 = vsel %vm275, %v3012, 0.0
    %3051 = vadd.xlane.f32.xlu0 %v3050
    %v3052 = vpop.xlane.xlu0 %3051
    %v3053 = vsel %vm275, %v3014, 0.0
    %3054 = vadd.xlane.f32.xlu0 %v3053
    %v3055 = vpop.xlane.xlu0 %3054
    %v3056 = vrcp.pop %v3052
    %v3057 = vrcp.pop %v3055
    %v3058 = vmul.f32 %v3045, %v3056
    %v3059 = vmul.f32 %v3048, %v3057
    %v3060 = vadd.f32 %v2613, %v3058
    %v3061 = vadd.f32 %v2614, %v3059
    %v3062 = vperm.slane %v2071, 2
    %3064 = vrot.lane.b32.xlu0 %v3062, 96
    %v3065 = vpop.permute.xlu0 %3064
    %v3067 = vmul.f32 %v2138, %v3065
    %v3068 = vmul.f32 %v2139, %v3065
    %3071 = vrot.lane.b32.xlu0 %v3067, 32
    %v3072 = vpop.permute.xlu0 %3071
    %3073 = vrot.lane.b32.xlu0 %v3068, 32
    %v3074 = vpop.permute.xlu0 %3073
    %v3077 = vsel %vm275, %v3072, 0.0
    %3078 = vadd.xlane.f32.xlu0 %v3077
    %v3079 = vpop.xlane.xlu0 %3078
    %v3080 = vsel %vm275, %v3074, 0.0
    %3081 = vadd.xlane.f32.xlu0 %v3080
    %v3082 = vpop.xlane.xlu0 %3081
    %3084 = vset.pattern.permute.xlu0 0
    %3085 = vperm.xlu0 %3084, %v2076
    %v3086 = vpop.permute.xlu0 %3085
    %3089 = vset.pattern.permute.xlu0 0
    %3090 = vperm.xlu0 %3089, %v2077
    %v3091 = vpop.permute.xlu0 %3090
    %v3093 = vmul.f32 %v2160, %v3086
    %v3094 = vmul.f32 %v2161, %v3091
    %v3095 = vsel %vm275, %v3093, 0.0
    %v3096 = vsel %vm275, %v3094, 0.0
    %v3097 = vadd.f32 %v3095, %v3096
    %v3098 = vrot.slane %v3097, 4
    %v3099 = vadd.f32 %v3097, %v3098
    %v3100 = vrot.slane %v3099, 2
    %v3101 = vadd.f32 %v3099, %v3100
    %v3102 = vrot.slane %v3101, 1
    %v3103 = vadd.f32 %v3101, %v3102
    %v3104 = vmul.f32 %v2076, 0.4
    %v3105 = vmul.f32 %v2077, 0.4
    %3106 = vset.pattern.permute.xlu0 96
    %3107 = vperm.xlu0 %3106, %v2138
    %v3108 = vpop.permute.xlu0 %3107
    %3110 = vset.pattern.permute.xlu0 96
    %3111 = vperm.xlu0 %3110, %v2139
    %v3112 = vpop.permute.xlu0 %3111
    %v3114 = vperm.slane %v2160, 0
    %v3115 = vadd.f32 %v3108, %v3114
    %v3116 = vadd.f32 %v3112, %v3114
    %v3117 = vand.u32 2147483647, %v3115
    %v3118 = vand.u32 2147483647, %v3116
    %s3120 = vtos %v3104
    %v3121 = vstv %s3120
    %v3123 = vmul.f32 %v3121, %v3117
    %v3124 = vmul.f32 %v3121, %v3118
    %v3125 = vadd.f32 %v3123, 0.0
    %v3126 = vadd.f32 %v3124, 0.0
    %3127 = vset.pattern.permute.xlu0 97
    %3128 = vperm.xlu0 %3127, %v2138
    %v3129 = vpop.permute.xlu0 %3128
    %3131 = vset.pattern.permute.xlu0 97
    %3132 = vperm.xlu0 %3131, %v2139
    %v3133 = vpop.permute.xlu0 %3132
    %v3135 = vperm.slane %v2160, 1
    %v3136 = vadd.f32 %v3129, %v3135
    %v3137 = vadd.f32 %v3133, %v3135
    %v3138 = vand.u32 2147483647, %v3136
    %v3139 = vand.u32 2147483647, %v3137
    %v3140 = vrot.slane %v3104, 1
    %s3141 = vtos %v3140
    %v3142 = vstv %s3141
    %v3144 = vmul.f32 %v3142, %v3138
    %v3145 = vmul.f32 %v3142, %v3139
    %v3146 = vadd.f32 %v3125, %v3144
    %v3147 = vadd.f32 %v3126, %v3145
    %3148 = vset.pattern.permute.xlu0 98
    %3149 = vperm.xlu0 %3148, %v2138
    %v3150 = vpop.permute.xlu0 %3149
    %3152 = vset.pattern.permute.xlu0 98
    %3153 = vperm.xlu0 %3152, %v2139
    %v3154 = vpop.permute.xlu0 %3153
    %v3156 = vperm.slane %v2160, 2
    %v3157 = vadd.f32 %v3150, %v3156
    %v3158 = vadd.f32 %v3154, %v3156
    %v3159 = vand.u32 2147483647, %v3157
    %v3160 = vand.u32 2147483647, %v3158
    %v3161 = vrot.slane %v3104, 2
    %s3162 = vtos %v3161
    %v3163 = vstv %s3162
    %v3165 = vmul.f32 %v3163, %v3159
    %v3166 = vmul.f32 %v3163, %v3160
    %v3167 = vadd.f32 %v3146, %v3165
    %v3168 = vadd.f32 %v3147, %v3166
    %3169 = vset.pattern.permute.xlu0 99
    %3170 = vperm.xlu0 %3169, %v2138
    %v3171 = vpop.permute.xlu0 %3170
    %3173 = vset.pattern.permute.xlu0 99
    %3174 = vperm.xlu0 %3173, %v2139
    %v3175 = vpop.permute.xlu0 %3174
    %v3177 = vperm.slane %v2160, 3
    %v3178 = vadd.f32 %v3171, %v3177
    %v3179 = vadd.f32 %v3175, %v3177
    %v3180 = vand.u32 2147483647, %v3178
    %v3181 = vand.u32 2147483647, %v3179
    %v3182 = vrot.slane %v3104, 3
    %s3183 = vtos %v3182
    %v3184 = vstv %s3183
    %v3186 = vmul.f32 %v3184, %v3180
    %v3187 = vmul.f32 %v3184, %v3181
    %v3188 = vadd.f32 %v3167, %v3186
    %v3189 = vadd.f32 %v3168, %v3187
    %3190 = vset.pattern.permute.xlu0 100
    %3191 = vperm.xlu0 %3190, %v2138
    %v3192 = vpop.permute.xlu0 %3191
    %3194 = vset.pattern.permute.xlu0 100
    %3195 = vperm.xlu0 %3194, %v2139
    %v3196 = vpop.permute.xlu0 %3195
    %v3198 = vperm.slane %v2160, 4
    %v3199 = vadd.f32 %v3192, %v3198
    %v3200 = vadd.f32 %v3196, %v3198
    %v3201 = vand.u32 2147483647, %v3199
    %v3202 = vand.u32 2147483647, %v3200
    %v3203 = vrot.slane %v3104, 4
    %s3204 = vtos %v3203
    %v3205 = vstv %s3204
    %v3207 = vmul.f32 %v3205, %v3201
    %v3208 = vmul.f32 %v3205, %v3202
    %v3209 = vadd.f32 %v3188, %v3207
    %v3210 = vadd.f32 %v3189, %v3208
    %3211 = vset.pattern.permute.xlu0 101
    %3212 = vperm.xlu0 %3211, %v2138
    %v3213 = vpop.permute.xlu0 %3212
    %3215 = vset.pattern.permute.xlu0 101
    %3216 = vperm.xlu0 %3215, %v2139
    %v3217 = vpop.permute.xlu0 %3216
    %v3219 = vperm.slane %v2160, 5
    %v3220 = vadd.f32 %v3213, %v3219
    %v3221 = vadd.f32 %v3217, %v3219
    %v3222 = vand.u32 2147483647, %v3220
    %v3223 = vand.u32 2147483647, %v3221
    %v3224 = vrot.slane %v3104, 5
    %s3225 = vtos %v3224
    %v3226 = vstv %s3225
    %v3228 = vmul.f32 %v3226, %v3222
    %v3229 = vmul.f32 %v3226, %v3223
    %v3230 = vadd.f32 %v3209, %v3228
    %v3231 = vadd.f32 %v3210, %v3229
    %3232 = vset.pattern.permute.xlu0 102
    %3233 = vperm.xlu0 %3232, %v2138
    %v3234 = vpop.permute.xlu0 %3233
    %3236 = vset.pattern.permute.xlu0 102
    %3237 = vperm.xlu0 %3236, %v2139
    %v3238 = vpop.permute.xlu0 %3237
    %v3240 = vperm.slane %v2160, 6
    %v3241 = vadd.f32 %v3234, %v3240
    %v3242 = vadd.f32 %v3238, %v3240
    %v3243 = vand.u32 2147483647, %v3241
    %v3244 = vand.u32 2147483647, %v3242
    %v3245 = vrot.slane %v3104, 6
    %s3246 = vtos %v3245
    %v3247 = vstv %s3246
    %v3249 = vmul.f32 %v3247, %v3243
    %v3250 = vmul.f32 %v3247, %v3244
    %v3251 = vadd.f32 %v3230, %v3249
    %v3252 = vadd.f32 %v3231, %v3250
    %3253 = vset.pattern.permute.xlu0 103
    %3254 = vperm.xlu0 %3253, %v2138
    %v3255 = vpop.permute.xlu0 %3254
    %3257 = vset.pattern.permute.xlu0 103
    %3258 = vperm.xlu0 %3257, %v2139
    %v3259 = vpop.permute.xlu0 %3258
    %v3261 = vperm.slane %v2160, 7
    %v3262 = vadd.f32 %v3255, %v3261
    %v3263 = vadd.f32 %v3259, %v3261
    %v3264 = vand.u32 2147483647, %v3262
    %v3265 = vand.u32 2147483647, %v3263
    %v3266 = vrot.slane %v3104, 7
    %s3267 = vtos %v3266
    %v3268 = vstv %s3267
    %v3270 = vmul.f32 %v3268, %v3264
    %v3271 = vmul.f32 %v3268, %v3265
    %v3272 = vadd.f32 %v3251, %v3270
    %v3273 = vadd.f32 %v3252, %v3271
    %3274 = vset.pattern.permute.xlu0 104
    %3275 = vperm.xlu0 %3274, %v2138
    %v3276 = vpop.permute.xlu0 %3275
    %3278 = vset.pattern.permute.xlu0 104
    %3279 = vperm.xlu0 %3278, %v2139
    %v3280 = vpop.permute.xlu0 %3279
    %v3282 = vperm.slane %v2161, 0
    %v3283 = vadd.f32 %v3276, %v3282
    %v3284 = vadd.f32 %v3280, %v3282
    %v3285 = vand.u32 2147483647, %v3283
    %v3286 = vand.u32 2147483647, %v3284
    %s3288 = vtos %v3105
    %v3289 = vstv %s3288
    %v3291 = vmul.f32 %v3289, %v3285
    %v3292 = vmul.f32 %v3289, %v3286
    %v3293 = vadd.f32 %v3272, %v3291
    %v3294 = vadd.f32 %v3273, %v3292
    %3295 = vset.pattern.permute.xlu0 105
    %3296 = vperm.xlu0 %3295, %v2138
    %v3297 = vpop.permute.xlu0 %3296
    %3299 = vset.pattern.permute.xlu0 105
    %3300 = vperm.xlu0 %3299, %v2139
    %v3301 = vpop.permute.xlu0 %3300
    %v3303 = vperm.slane %v2161, 1
    %v3304 = vadd.f32 %v3297, %v3303
    %v3305 = vadd.f32 %v3301, %v3303
    %v3306 = vand.u32 2147483647, %v3304
    %v3307 = vand.u32 2147483647, %v3305
    %v3308 = vrot.slane %v3105, 1
    %s3309 = vtos %v3308
    %v3310 = vstv %s3309
    %v3312 = vmul.f32 %v3310, %v3306
    %v3313 = vmul.f32 %v3310, %v3307
    %v3314 = vadd.f32 %v3293, %v3312
    %v3315 = vadd.f32 %v3294, %v3313
    %3316 = vset.pattern.permute.xlu0 106
    %3317 = vperm.xlu0 %3316, %v2138
    %v3318 = vpop.permute.xlu0 %3317
    %3320 = vset.pattern.permute.xlu0 106
    %3321 = vperm.xlu0 %3320, %v2139
    %v3322 = vpop.permute.xlu0 %3321
    %v3324 = vperm.slane %v2161, 2
    %v3325 = vadd.f32 %v3318, %v3324
    %v3326 = vadd.f32 %v3322, %v3324
    %v3327 = vand.u32 2147483647, %v3325
    %v3328 = vand.u32 2147483647, %v3326
    %v3329 = vrot.slane %v3105, 2
    %s3330 = vtos %v3329
    %v3331 = vstv %s3330
    %v3333 = vmul.f32 %v3331, %v3327
    %v3334 = vmul.f32 %v3331, %v3328
    %v3335 = vadd.f32 %v3314, %v3333
    %v3336 = vadd.f32 %v3315, %v3334
    %3337 = vset.pattern.permute.xlu0 107
    %3338 = vperm.xlu0 %3337, %v2138
    %v3339 = vpop.permute.xlu0 %3338
    %3341 = vset.pattern.permute.xlu0 107
    %3342 = vperm.xlu0 %3341, %v2139
    %v3343 = vpop.permute.xlu0 %3342
    %v3345 = vperm.slane %v2161, 3
    %v3346 = vadd.f32 %v3339, %v3345
    %v3347 = vadd.f32 %v3343, %v3345
    %v3348 = vand.u32 2147483647, %v3346
    %v3349 = vand.u32 2147483647, %v3347
    %v3350 = vrot.slane %v3105, 3
    %s3351 = vtos %v3350
    %v3352 = vstv %s3351
    %v3354 = vmul.f32 %v3352, %v3348
    %v3355 = vmul.f32 %v3352, %v3349
    %v3356 = vadd.f32 %v3335, %v3354
    %v3357 = vadd.f32 %v3336, %v3355
    %3358 = vset.pattern.permute.xlu0 108
    %3359 = vperm.xlu0 %3358, %v2138
    %v3360 = vpop.permute.xlu0 %3359
    %3362 = vset.pattern.permute.xlu0 108
    %3363 = vperm.xlu0 %3362, %v2139
    %v3364 = vpop.permute.xlu0 %3363
    %v3366 = vperm.slane %v2161, 4
    %v3367 = vadd.f32 %v3360, %v3366
    %v3368 = vadd.f32 %v3364, %v3366
    %v3369 = vand.u32 2147483647, %v3367
    %v3370 = vand.u32 2147483647, %v3368
    %v3371 = vrot.slane %v3105, 4
    %s3372 = vtos %v3371
    %v3373 = vstv %s3372
    %v3375 = vmul.f32 %v3373, %v3369
    %v3376 = vmul.f32 %v3373, %v3370
    %v3377 = vadd.f32 %v3356, %v3375
    %v3378 = vadd.f32 %v3357, %v3376
    %3379 = vset.pattern.permute.xlu0 109
    %3380 = vperm.xlu0 %3379, %v2138
    %v3381 = vpop.permute.xlu0 %3380
    %3383 = vset.pattern.permute.xlu0 109
    %3384 = vperm.xlu0 %3383, %v2139
    %v3385 = vpop.permute.xlu0 %3384
    %v3387 = vperm.slane %v2161, 5
    %v3388 = vadd.f32 %v3381, %v3387
    %v3389 = vadd.f32 %v3385, %v3387
    %v3390 = vand.u32 2147483647, %v3388
    %v3391 = vand.u32 2147483647, %v3389
    %v3392 = vrot.slane %v3105, 5
    %s3393 = vtos %v3392
    %v3394 = vstv %s3393
    %v3396 = vmul.f32 %v3394, %v3390
    %v3397 = vmul.f32 %v3394, %v3391
    %v3398 = vadd.f32 %v3377, %v3396
    %v3399 = vadd.f32 %v3378, %v3397
    %3400 = vset.pattern.permute.xlu0 110
    %3401 = vperm.xlu0 %3400, %v2138
    %v3402 = vpop.permute.xlu0 %3401
    %3404 = vset.pattern.permute.xlu0 110
    %3405 = vperm.xlu0 %3404, %v2139
    %v3406 = vpop.permute.xlu0 %3405
    %v3408 = vperm.slane %v2161, 6
    %v3409 = vadd.f32 %v3402, %v3408
    %v3410 = vadd.f32 %v3406, %v3408
    %v3411 = vand.u32 2147483647, %v3409
    %v3412 = vand.u32 2147483647, %v3410
    %v3413 = vrot.slane %v3105, 6
    %s3414 = vtos %v3413
    %v3415 = vstv %s3414
    %v3417 = vmul.f32 %v3415, %v3411
    %v3418 = vmul.f32 %v3415, %v3412
    %v3419 = vadd.f32 %v3398, %v3417
    %v3420 = vadd.f32 %v3399, %v3418
    %3421 = vset.pattern.permute.xlu0 111
    %3422 = vperm.xlu0 %3421, %v2138
    %v3423 = vpop.permute.xlu0 %3422
    %3425 = vset.pattern.permute.xlu0 111
    %3426 = vperm.xlu0 %3425, %v2139
    %v3427 = vpop.permute.xlu0 %3426
    %v3429 = vperm.slane %v2161, 7
    %v3430 = vadd.f32 %v3423, %v3429
    %v3431 = vadd.f32 %v3427, %v3429
    %v3432 = vand.u32 2147483647, %v3430
    %v3433 = vand.u32 2147483647, %v3431
    %v3434 = vrot.slane %v3105, 7
    %s3435 = vtos %v3434
    %v3436 = vstv %s3435
    %v3438 = vmul.f32 %v3436, %v3432
    %v3439 = vmul.f32 %v3436, %v3433
    %v3440 = vadd.f32 %v3419, %v3438
    %v3441 = vadd.f32 %v3420, %v3439
    %v3442 = vadd.f32 %v3079, %v3103
    %v3443 = vadd.f32 %v3082, %v3103
    %v3444 = vmul.f32 %v3442, 0.6
    %v3445 = vmul.f32 %v3443, 0.6
    %v3446 = vadd.f32 %v3444, %v3440
    %v3447 = vadd.f32 %v3445, %v3441
    %v3448 = vadd.f32 %v3446, %v130
    %v3449 = vadd.f32 %v3447, %v131
    %v3450 = vsel %vm275, %v3448, -inf
    %3451 = vmax.xlane.f32.xlu0 %v3450
    %v3452 = vpop.xlane.xlu0 %3451
    %v3453 = vsel %vm275, %v3449, -inf
    %3454 = vmax.xlane.f32.xlu0 %v3453
    %v3455 = vpop.xlane.xlu0 %3454
    %v3456 = vsub.f32 %v3448, %v3452
    %v3457 = vsub.f32 %v3449, %v3455
    %v3458 = vmul.f32 %v3456, 1.442695
    %v3459 = vpow.pop %v3458
    %v3460 = vmul.f32 %v3457, 1.442695
    %v3461 = vpow.pop %v3460
    %3462 = vrot.lane.b32.xlu0 %v2138, 96
    %v3463 = vpop.permute.xlu0 %3462
    %3464 = vrot.lane.b32.xlu0 %v2139, 96
    %v3465 = vpop.permute.xlu0 %3464
    %v3469 = vsel %vm275, %v3459, 0
    %v3472 = vsel %vm275, %v3461, 0
    %3474 = vmatpush.msra.mxu0 0.0
    %3475 = vmatpush.msra.mxu0 0.0
    %3476 = vmatpush.msra.mxu0 0.0
    %3477 = vmatpush.msra.mxu0 0.0
    %3478 = vmatpush.msra.mxu0 0.0
    %3479 = vmatpush.msra.mxu0 0.0
    %3480 = vmatpush.msra.mxu0 0.0
    %3481 = vmatpush.msra.mxu0 0.0
    %3482 = vmatpush.msra.mxu0 0.0
    %3483 = vmatpush.msra.mxu0 0.0
    %3484 = vmatpush.msra.mxu0 0.0
    %3485 = vmatpush.msra.mxu0 0.0
    %3486 = vmatpush.msra.mxu0 0.0
    %3487 = vmatpush.msra.mxu0 0.0
    %3488 = vmatpush.msra.mxu0 %v3465
    %3489 = vmatpush.msra.mxu0 %v3463
    %3490 = vmatmul.f32.gmra.mxu0 %v3469
    %v3491 = vpop.f32.mrf.mxu0
    %v3492 = vadd.f32 0.0, %v3491
    %3493 = vmatmul.f32.gmra.mxu0 %v3472
    %v3494 = vpop.f32.mrf.mxu0
    %v3495 = vadd.f32 0.0, %v3494
    %3496 = vdwg.mxu0
    %v3497 = vsel %vm275, %v3459, 0.0
    %3498 = vadd.xlane.f32.xlu0 %v3497
    %v3499 = vpop.xlane.xlu0 %3498
    %v3500 = vsel %vm275, %v3461, 0.0
    %3501 = vadd.xlane.f32.xlu0 %v3500
    %v3502 = vpop.xlane.xlu0 %3501
    %v3503 = vrcp.pop %v3499
    %v3504 = vrcp.pop %v3502
    %v3505 = vmul.f32 %v3492, %v3503
    %v3506 = vmul.f32 %v3495, %v3504
    %v3507 = vadd.f32 %v3060, %v3505
    %v3508 = vadd.f32 %v3061, %v3506
    %v3509 = vperm.slane %v2071, 3
    %3511 = vrot.lane.b32.xlu0 %v3509, 112
    %v3512 = vpop.permute.xlu0 %3511
    %v3514 = vmul.f32 %v2138, %v3512
    %v3515 = vmul.f32 %v2139, %v3512
    %3518 = vrot.lane.b32.xlu0 %v3514, 16
    %v3519 = vpop.permute.xlu0 %3518
    %3520 = vrot.lane.b32.xlu0 %v3515, 16
    %v3521 = vpop.permute.xlu0 %3520
    %v3524 = vsel %vm275, %v3519, 0.0
    %3525 = vadd.xlane.f32.xlu0 %v3524
    %v3526 = vpop.xlane.xlu0 %3525
    %v3527 = vsel %vm275, %v3521, 0.0
    %3528 = vadd.xlane.f32.xlu0 %v3527
    %v3529 = vpop.xlane.xlu0 %3528
    %3531 = vset.pattern.permute.xlu0 0
    %3532 = vperm.xlu0 %3531, %v2078
    %v3533 = vpop.permute.xlu0 %3532
    %3536 = vset.pattern.permute.xlu0 0
    %3537 = vperm.xlu0 %3536, %v2079
    %v3538 = vpop.permute.xlu0 %3537
    %v3540 = vmul.f32 %v2162, %v3533
    %v3541 = vmul.f32 %v2163, %v3538
    %v3542 = vsel %vm275, %v3540, 0.0
    %v3543 = vsel %vm275, %v3541, 0.0
    %v3544 = vadd.f32 %v3542, %v3543
    %v3545 = vrot.slane %v3544, 4
    %v3546 = vadd.f32 %v3544, %v3545
    %v3547 = vrot.slane %v3546, 2
    %v3548 = vadd.f32 %v3546, %v3547
    %v3549 = vrot.slane %v3548, 1
    %v3550 = vadd.f32 %v3548, %v3549
    %v3551 = vmul.f32 %v2078, 0.4
    %v3552 = vmul.f32 %v2079, 0.4
    %3553 = vset.pattern.permute.xlu0 112
    %3554 = vperm.xlu0 %3553, %v2138
    %v3555 = vpop.permute.xlu0 %3554
    %3557 = vset.pattern.permute.xlu0 112
    %3558 = vperm.xlu0 %3557, %v2139
    %v3559 = vpop.permute.xlu0 %3558
    %v3561 = vperm.slane %v2162, 0
    %v3562 = vadd.f32 %v3555, %v3561
    %v3563 = vadd.f32 %v3559, %v3561
    %v3564 = vand.u32 2147483647, %v3562
    %v3565 = vand.u32 2147483647, %v3563
    %s3567 = vtos %v3551
    %v3568 = vstv %s3567
    %v3570 = vmul.f32 %v3568, %v3564
    %v3571 = vmul.f32 %v3568, %v3565
    %v3572 = vadd.f32 %v3570, 0.0
    %v3573 = vadd.f32 %v3571, 0.0
    %3574 = vset.pattern.permute.xlu0 113
    %3575 = vperm.xlu0 %3574, %v2138
    %v3576 = vpop.permute.xlu0 %3575
    %3578 = vset.pattern.permute.xlu0 113
    %3579 = vperm.xlu0 %3578, %v2139
    %v3580 = vpop.permute.xlu0 %3579
    %v3582 = vperm.slane %v2162, 1
    %v3583 = vadd.f32 %v3576, %v3582
    %v3584 = vadd.f32 %v3580, %v3582
    %v3585 = vand.u32 2147483647, %v3583
    %v3586 = vand.u32 2147483647, %v3584
    %v3587 = vrot.slane %v3551, 1
    %s3588 = vtos %v3587
    %v3589 = vstv %s3588
    %v3591 = vmul.f32 %v3589, %v3585
    %v3592 = vmul.f32 %v3589, %v3586
    %v3593 = vadd.f32 %v3572, %v3591
    %v3594 = vadd.f32 %v3573, %v3592
    %3595 = vset.pattern.permute.xlu0 114
    %3596 = vperm.xlu0 %3595, %v2138
    %v3597 = vpop.permute.xlu0 %3596
    %3599 = vset.pattern.permute.xlu0 114
    %3600 = vperm.xlu0 %3599, %v2139
    %v3601 = vpop.permute.xlu0 %3600
    %v3603 = vperm.slane %v2162, 2
    %v3604 = vadd.f32 %v3597, %v3603
    %v3605 = vadd.f32 %v3601, %v3603
    %v3606 = vand.u32 2147483647, %v3604
    %v3607 = vand.u32 2147483647, %v3605
    %v3608 = vrot.slane %v3551, 2
    %s3609 = vtos %v3608
    %v3610 = vstv %s3609
    %v3612 = vmul.f32 %v3610, %v3606
    %v3613 = vmul.f32 %v3610, %v3607
    %v3614 = vadd.f32 %v3593, %v3612
    %v3615 = vadd.f32 %v3594, %v3613
    %3616 = vset.pattern.permute.xlu0 115
    %3617 = vperm.xlu0 %3616, %v2138
    %v3618 = vpop.permute.xlu0 %3617
    %3620 = vset.pattern.permute.xlu0 115
    %3621 = vperm.xlu0 %3620, %v2139
    %v3622 = vpop.permute.xlu0 %3621
    %v3624 = vperm.slane %v2162, 3
    %v3625 = vadd.f32 %v3618, %v3624
    %v3626 = vadd.f32 %v3622, %v3624
    %v3627 = vand.u32 2147483647, %v3625
    %v3628 = vand.u32 2147483647, %v3626
    %v3629 = vrot.slane %v3551, 3
    %s3630 = vtos %v3629
    %v3631 = vstv %s3630
    %v3633 = vmul.f32 %v3631, %v3627
    %v3634 = vmul.f32 %v3631, %v3628
    %v3635 = vadd.f32 %v3614, %v3633
    %v3636 = vadd.f32 %v3615, %v3634
    %3637 = vset.pattern.permute.xlu0 116
    %3638 = vperm.xlu0 %3637, %v2138
    %v3639 = vpop.permute.xlu0 %3638
    %3641 = vset.pattern.permute.xlu0 116
    %3642 = vperm.xlu0 %3641, %v2139
    %v3643 = vpop.permute.xlu0 %3642
    %v3645 = vperm.slane %v2162, 4
    %v3646 = vadd.f32 %v3639, %v3645
    %v3647 = vadd.f32 %v3643, %v3645
    %v3648 = vand.u32 2147483647, %v3646
    %v3649 = vand.u32 2147483647, %v3647
    %v3650 = vrot.slane %v3551, 4
    %s3651 = vtos %v3650
    %v3652 = vstv %s3651
    %v3654 = vmul.f32 %v3652, %v3648
    %v3655 = vmul.f32 %v3652, %v3649
    %v3656 = vadd.f32 %v3635, %v3654
    %v3657 = vadd.f32 %v3636, %v3655
    %3658 = vset.pattern.permute.xlu0 117
    %3659 = vperm.xlu0 %3658, %v2138
    %v3660 = vpop.permute.xlu0 %3659
    %3662 = vset.pattern.permute.xlu0 117
    %3663 = vperm.xlu0 %3662, %v2139
    %v3664 = vpop.permute.xlu0 %3663
    %v3666 = vperm.slane %v2162, 5
    %v3667 = vadd.f32 %v3660, %v3666
    %v3668 = vadd.f32 %v3664, %v3666
    %v3669 = vand.u32 2147483647, %v3667
    %v3670 = vand.u32 2147483647, %v3668
    %v3671 = vrot.slane %v3551, 5
    %s3672 = vtos %v3671
    %v3673 = vstv %s3672
    %v3675 = vmul.f32 %v3673, %v3669
    %v3676 = vmul.f32 %v3673, %v3670
    %v3677 = vadd.f32 %v3656, %v3675
    %v3678 = vadd.f32 %v3657, %v3676
    %3679 = vset.pattern.permute.xlu0 118
    %3680 = vperm.xlu0 %3679, %v2138
    %v3681 = vpop.permute.xlu0 %3680
    %3683 = vset.pattern.permute.xlu0 118
    %3684 = vperm.xlu0 %3683, %v2139
    %v3685 = vpop.permute.xlu0 %3684
    %v3687 = vperm.slane %v2162, 6
    %v3688 = vadd.f32 %v3681, %v3687
    %v3689 = vadd.f32 %v3685, %v3687
    %v3690 = vand.u32 2147483647, %v3688
    %v3691 = vand.u32 2147483647, %v3689
    %v3692 = vrot.slane %v3551, 6
    %s3693 = vtos %v3692
    %v3694 = vstv %s3693
    %v3696 = vmul.f32 %v3694, %v3690
    %v3697 = vmul.f32 %v3694, %v3691
    %v3698 = vadd.f32 %v3677, %v3696
    %v3699 = vadd.f32 %v3678, %v3697
    %3700 = vset.pattern.permute.xlu0 119
    %3701 = vperm.xlu0 %3700, %v2138
    %v3702 = vpop.permute.xlu0 %3701
    %3704 = vset.pattern.permute.xlu0 119
    %3705 = vperm.xlu0 %3704, %v2139
    %v3706 = vpop.permute.xlu0 %3705
    %v3708 = vperm.slane %v2162, 7
    %v3709 = vadd.f32 %v3702, %v3708
    %v3710 = vadd.f32 %v3706, %v3708
    %v3711 = vand.u32 2147483647, %v3709
    %v3712 = vand.u32 2147483647, %v3710
    %v3713 = vrot.slane %v3551, 7
    %s3714 = vtos %v3713
    %v3715 = vstv %s3714
    %v3717 = vmul.f32 %v3715, %v3711
    %v3718 = vmul.f32 %v3715, %v3712
    %v3719 = vadd.f32 %v3698, %v3717
    %v3720 = vadd.f32 %v3699, %v3718
    %3721 = vset.pattern.permute.xlu0 120
    %3722 = vperm.xlu0 %3721, %v2138
    %v3723 = vpop.permute.xlu0 %3722
    %3725 = vset.pattern.permute.xlu0 120
    %3726 = vperm.xlu0 %3725, %v2139
    %v3727 = vpop.permute.xlu0 %3726
    %v3729 = vperm.slane %v2163, 0
    %v3730 = vadd.f32 %v3723, %v3729
    %v3731 = vadd.f32 %v3727, %v3729
    %v3732 = vand.u32 2147483647, %v3730
    %v3733 = vand.u32 2147483647, %v3731
    %s3735 = vtos %v3552
    %v3736 = vstv %s3735
    %v3738 = vmul.f32 %v3736, %v3732
    %v3739 = vmul.f32 %v3736, %v3733
    %v3740 = vadd.f32 %v3719, %v3738
    %v3741 = vadd.f32 %v3720, %v3739
    %3742 = vset.pattern.permute.xlu0 121
    %3743 = vperm.xlu0 %3742, %v2138
    %v3744 = vpop.permute.xlu0 %3743
    %3746 = vset.pattern.permute.xlu0 121
    %3747 = vperm.xlu0 %3746, %v2139
    %v3748 = vpop.permute.xlu0 %3747
    %v3750 = vperm.slane %v2163, 1
    %v3751 = vadd.f32 %v3744, %v3750
    %v3752 = vadd.f32 %v3748, %v3750
    %v3753 = vand.u32 2147483647, %v3751
    %v3754 = vand.u32 2147483647, %v3752
    %v3755 = vrot.slane %v3552, 1
    %s3756 = vtos %v3755
    %v3757 = vstv %s3756
    %v3759 = vmul.f32 %v3757, %v3753
    %v3760 = vmul.f32 %v3757, %v3754
    %v3761 = vadd.f32 %v3740, %v3759
    %v3762 = vadd.f32 %v3741, %v3760
    %3763 = vset.pattern.permute.xlu0 122
    %3764 = vperm.xlu0 %3763, %v2138
    %v3765 = vpop.permute.xlu0 %3764
    %3767 = vset.pattern.permute.xlu0 122
    %3768 = vperm.xlu0 %3767, %v2139
    %v3769 = vpop.permute.xlu0 %3768
    %v3771 = vperm.slane %v2163, 2
    %v3772 = vadd.f32 %v3765, %v3771
    %v3773 = vadd.f32 %v3769, %v3771
    %v3774 = vand.u32 2147483647, %v3772
    %v3775 = vand.u32 2147483647, %v3773
    %v3776 = vrot.slane %v3552, 2
    %s3777 = vtos %v3776
    %v3778 = vstv %s3777
    %v3780 = vmul.f32 %v3778, %v3774
    %v3781 = vmul.f32 %v3778, %v3775
    %v3782 = vadd.f32 %v3761, %v3780
    %v3783 = vadd.f32 %v3762, %v3781
    %3784 = vset.pattern.permute.xlu0 123
    %3785 = vperm.xlu0 %3784, %v2138
    %v3786 = vpop.permute.xlu0 %3785
    %3788 = vset.pattern.permute.xlu0 123
    %3789 = vperm.xlu0 %3788, %v2139
    %v3790 = vpop.permute.xlu0 %3789
    %v3792 = vperm.slane %v2163, 3
    %v3793 = vadd.f32 %v3786, %v3792
    %v3794 = vadd.f32 %v3790, %v3792
    %v3795 = vand.u32 2147483647, %v3793
    %v3796 = vand.u32 2147483647, %v3794
    %v3797 = vrot.slane %v3552, 3
    %s3798 = vtos %v3797
    %v3799 = vstv %s3798
    %v3801 = vmul.f32 %v3799, %v3795
    %v3802 = vmul.f32 %v3799, %v3796
    %v3803 = vadd.f32 %v3782, %v3801
    %v3804 = vadd.f32 %v3783, %v3802
    %3805 = vset.pattern.permute.xlu0 124
    %3806 = vperm.xlu0 %3805, %v2138
    %v3807 = vpop.permute.xlu0 %3806
    %3809 = vset.pattern.permute.xlu0 124
    %3810 = vperm.xlu0 %3809, %v2139
    %v3811 = vpop.permute.xlu0 %3810
    %v3813 = vperm.slane %v2163, 4
    %v3814 = vadd.f32 %v3807, %v3813
    %v3815 = vadd.f32 %v3811, %v3813
    %v3816 = vand.u32 2147483647, %v3814
    %v3817 = vand.u32 2147483647, %v3815
    %v3818 = vrot.slane %v3552, 4
    %s3819 = vtos %v3818
    %v3820 = vstv %s3819
    %v3822 = vmul.f32 %v3820, %v3816
    %v3823 = vmul.f32 %v3820, %v3817
    %v3824 = vadd.f32 %v3803, %v3822
    %v3825 = vadd.f32 %v3804, %v3823
    %3826 = vset.pattern.permute.xlu0 125
    %3827 = vperm.xlu0 %3826, %v2138
    %v3828 = vpop.permute.xlu0 %3827
    %3830 = vset.pattern.permute.xlu0 125
    %3831 = vperm.xlu0 %3830, %v2139
    %v3832 = vpop.permute.xlu0 %3831
    %v3834 = vperm.slane %v2163, 5
    %v3835 = vadd.f32 %v3828, %v3834
    %v3836 = vadd.f32 %v3832, %v3834
    %v3837 = vand.u32 2147483647, %v3835
    %v3838 = vand.u32 2147483647, %v3836
    %v3839 = vrot.slane %v3552, 5
    %s3840 = vtos %v3839
    %v3841 = vstv %s3840
    %v3843 = vmul.f32 %v3841, %v3837
    %v3844 = vmul.f32 %v3841, %v3838
    %v3845 = vadd.f32 %v3824, %v3843
    %v3846 = vadd.f32 %v3825, %v3844
    %3847 = vset.pattern.permute.xlu0 126
    %3848 = vperm.xlu0 %3847, %v2138
    %v3849 = vpop.permute.xlu0 %3848
    %3851 = vset.pattern.permute.xlu0 126
    %3852 = vperm.xlu0 %3851, %v2139
    %v3853 = vpop.permute.xlu0 %3852
    %v3855 = vperm.slane %v2163, 6
    %v3856 = vadd.f32 %v3849, %v3855
    %v3857 = vadd.f32 %v3853, %v3855
    %v3858 = vand.u32 2147483647, %v3856
    %v3859 = vand.u32 2147483647, %v3857
    %v3860 = vrot.slane %v3552, 6
    %s3861 = vtos %v3860
    %v3862 = vstv %s3861
    %v3864 = vmul.f32 %v3862, %v3858
    %v3865 = vmul.f32 %v3862, %v3859
    %v3866 = vadd.f32 %v3845, %v3864
    %v3867 = vadd.f32 %v3846, %v3865
    %3868 = vset.pattern.permute.xlu0 127
    %3869 = vperm.xlu0 %3868, %v2138
    %v3870 = vpop.permute.xlu0 %3869
    %3872 = vset.pattern.permute.xlu0 127
    %3873 = vperm.xlu0 %3872, %v2139
    %v3874 = vpop.permute.xlu0 %3873
    %v3876 = vperm.slane %v2163, 7
    %v3877 = vadd.f32 %v3870, %v3876
    %v3878 = vadd.f32 %v3874, %v3876
    %v3879 = vand.u32 2147483647, %v3877
    %v3880 = vand.u32 2147483647, %v3878
    %v3881 = vrot.slane %v3552, 7
    %s3882 = vtos %v3881
    %v3883 = vstv %s3882
    %v3885 = vmul.f32 %v3883, %v3879
    %v3886 = vmul.f32 %v3883, %v3880
    %v3887 = vadd.f32 %v3866, %v3885
    %v3888 = vadd.f32 %v3867, %v3886
    %v3889 = vadd.f32 %v3526, %v3550
    %v3890 = vadd.f32 %v3529, %v3550
    %v3891 = vmul.f32 %v3889, 0.6
    %v3892 = vmul.f32 %v3890, 0.6
    %v3893 = vadd.f32 %v3891, %v3887
    %v3894 = vadd.f32 %v3892, %v3888
    %v3895 = vadd.f32 %v3893, %v130
    %v3896 = vadd.f32 %v3894, %v131
    %v3897 = vsel %vm275, %v3895, -inf
    %3898 = vmax.xlane.f32.xlu0 %v3897
    %v3899 = vpop.xlane.xlu0 %3898
    %v3900 = vsel %vm275, %v3896, -inf
    %3901 = vmax.xlane.f32.xlu0 %v3900
    %v3902 = vpop.xlane.xlu0 %3901
    %v3903 = vsub.f32 %v3895, %v3899
    %v3904 = vsub.f32 %v3896, %v3902
    %v3905 = vmul.f32 %v3903, 1.442695
    %v3906 = vpow.pop %v3905
    %v3907 = vmul.f32 %v3904, 1.442695
    %v3908 = vpow.pop %v3907
    %3909 = vrot.lane.b32.xlu0 %v2138, 80
    %v3910 = vpop.permute.xlu0 %3909
    %3911 = vrot.lane.b32.xlu0 %v2139, 80
    %v3912 = vpop.permute.xlu0 %3911
    %v3916 = vsel %vm275, %v3906, 0
    %v3919 = vsel %vm275, %v3908, 0
    %3921 = vmatpush.msra.mxu0 0.0
    %3922 = vmatpush.msra.mxu0 0.0
    %3923 = vmatpush.msra.mxu0 0.0
    %3924 = vmatpush.msra.mxu0 0.0
    %3925 = vmatpush.msra.mxu0 0.0
    %3926 = vmatpush.msra.mxu0 0.0
    %3927 = vmatpush.msra.mxu0 0.0
    %3928 = vmatpush.msra.mxu0 0.0
    %3929 = vmatpush.msra.mxu0 0.0
    %3930 = vmatpush.msra.mxu0 0.0
    %3931 = vmatpush.msra.mxu0 0.0
    %3932 = vmatpush.msra.mxu0 0.0
    %3933 = vmatpush.msra.mxu0 0.0
    %3934 = vmatpush.msra.mxu0 0.0
    %3935 = vmatpush.msra.mxu0 %v3912
    %3936 = vmatpush.msra.mxu0 %v3910
    %3937 = vmatmul.f32.gmra.mxu0 %v3916
    %v3938 = vpop.f32.mrf.mxu0
    %v3939 = vadd.f32 0.0, %v3938
    %3940 = vmatmul.f32.gmra.mxu0 %v3919
    %v3941 = vpop.f32.mrf.mxu0
    %v3942 = vadd.f32 0.0, %v3941
    %3943 = vdwg.mxu0
    %v3944 = vsel %vm275, %v3906, 0.0
    %3945 = vadd.xlane.f32.xlu0 %v3944
    %v3946 = vpop.xlane.xlu0 %3945
    %v3947 = vsel %vm275, %v3908, 0.0
    %3948 = vadd.xlane.f32.xlu0 %v3947
    %v3949 = vpop.xlane.xlu0 %3948
    %v3950 = vrcp.pop %v3946
    %v3951 = vrcp.pop %v3949
    %v3952 = vmul.f32 %v3939, %v3950
    %v3953 = vmul.f32 %v3942, %v3951
    %v3954 = vadd.f32 %v3507, %v3952
    %v3955 = vadd.f32 %v3508, %v3953
    %v3957 = vperm.slane %v2080, 0
    %v3959 = vmul.f32 %v3954, %v3957
    %v3960 = vmul.f32 %v3955, %v3957
    %v3961 = vadd.f32 %v3959, %v2130
    %v3962 = vadd.f32 %v3960, %v2133
    %v3964 = vperm.slane %v2081, 0
    %v3966 = vadd.f32 %v3961, %v3964
    %v3967 = vadd.f32 %v3962, %v3964
    %vm3968 = vcmp.gt.f32.partialorder %v3966, 0.0
    %vm3969 = vcmp.gt.f32.partialorder %v3967, 0.0
    %v3971 = vperm.slane %v2082, 0
    %v3973 = vmul.f32 %v3971, %v3966
    %v3974 = vmul.f32 %v3971, %v3967
    %v3975 = vsel %vm3968, %v3966, %v3973
    %v3976 = vsel %vm3969, %v3967, %v3974
    %v3977 = vlaneseq
    %v3978 = vand.u32 %v3977, 127
    %v3979 = vld [vmem:[%s5] sm:$0xff]
    %3980 = vset.pattern.permute.xlu0 0
    %3981 = vperm.xlu0 %3980, %v3979
    %v3982 = vpop.permute.xlu0 %3981
    %vm3983 = vcmp.eq.s32.totalorder %v3978, %v3982
    %v3984 = vsel %vm3983, 1, 0
    %v3985 = vcvt.s32.f32 %v3984
    %v3986 = vld [vmem:[%s7] sm:$0xff]
    %3987 = vset.pattern.permute.xlu0 0
    %3988 = vperm.xlu0 %3987, %v3986
    %v3989 = vpop.permute.xlu0 %3988
    %vm3990 = vcmp.eq.s32.totalorder %v3978, %v3989
    %v3991 = vsel %vm3990, 1, 0
    %v3992 = vcvt.s32.f32 %v3991
    %v3993 = vld [vmem:[%s39] sm:$0xff]
    %v3994 = vld [vmem:[%s39 + $0x8] sm:$0xff]
    %v3995 = vld [vmem:[%s41] sm:$0xff]
    %v3996 = vld [vmem:[%s41 + $0x8] sm:$0xff]
    %v3998 = vsel %vm275, %v3975, 0
    %v4001 = vsel %vm275, %v3976, 0
    %4003 = vmatpush.msra.mxu0 0.0
    %4004 = vmatpush.msra.mxu0 0.0
    %4005 = vmatpush.msra.mxu0 0.0
    %4006 = vmatpush.msra.mxu0 0.0
    %4007 = vmatpush.msra.mxu0 0.0
    %4008 = vmatpush.msra.mxu0 0.0
    %4009 = vmatpush.msra.mxu0 0.0
    %4010 = vmatpush.msra.mxu0 0.0
    %4011 = vmatpush.msra.mxu0 0.0
    %4012 = vmatpush.msra.mxu0 0.0
    %4013 = vmatpush.msra.mxu0 0.0
    %4014 = vmatpush.msra.mxu0 0.0
    %4015 = vmatpush.msra.mxu0 0.0
    %4016 = vmatpush.msra.mxu0 0.0
    %4017 = vmatpush.msra.mxu0 %v3996
    %4018 = vmatpush.msra.mxu0 %v3995
    %4019 = vmatmul.f32.gmra.mxu0 %v3998
    %v4020 = vpop.f32.mrf.mxu0
    %v4021 = vadd.f32 0.0, %v4020
    %4022 = vmatmul.f32.gmra.mxu0 %v4001
    %v4023 = vpop.f32.mrf.mxu0
    %v4024 = vadd.f32 0.0, %v4023
    %4025 = vdwg.mxu0
    %4026 = vmatpush.msra.mxu0 0.0
    %4027 = vmatpush.msra.mxu0 0.0
    %4028 = vmatpush.msra.mxu0 0.0
    %4029 = vmatpush.msra.mxu0 0.0
    %4030 = vmatpush.msra.mxu0 0.0
    %4031 = vmatpush.msra.mxu0 0.0
    %4032 = vmatpush.msra.mxu0 0.0
    %4033 = vmatpush.msra.mxu0 0.0
    %4034 = vmatpush.msra.mxu0 0.0
    %4035 = vmatpush.msra.mxu0 0.0
    %4036 = vmatpush.msra.mxu0 0.0
    %4037 = vmatpush.msra.mxu0 0.0
    %4038 = vmatpush.msra.mxu0 0.0
    %4039 = vmatpush.msra.mxu0 0.0
    %4040 = vmatpush.msra.mxu0 %v3994
    %4041 = vmatpush.msra.mxu0 %v3993
    %4042 = vmatmul.f32.gmra.mxu0 %v2084
    %v4043 = vpop.f32.mrf.mxu0
    %v4044 = vadd.f32 %v4021, %v4043
    %4045 = vmatmul.f32.gmra.mxu0 %v2087
    %v4046 = vpop.f32.mrf.mxu0
    %v4047 = vadd.f32 %v4024, %v4046
    %4048 = vdwg.mxu0
    %v4049 = vld [vmem:[%s43] sm:$0xff]
    %v4050 = vld [vmem:[%s43 + $0x8] sm:$0xff]
    %v4051 = vld [vmem:[%s45] sm:$0xff]
    %v4052 = vld [vmem:[%s45 + $0x8] sm:$0xff]
    %4053 = vmatpush.msra.mxu0 0.0
    %4054 = vmatpush.msra.mxu0 0.0
    %4055 = vmatpush.msra.mxu0 0.0
    %4056 = vmatpush.msra.mxu0 0.0
    %4057 = vmatpush.msra.mxu0 0.0
    %4058 = vmatpush.msra.mxu0 0.0
    %4059 = vmatpush.msra.mxu0 0.0
    %4060 = vmatpush.msra.mxu0 0.0
    %4061 = vmatpush.msra.mxu0 0.0
    %4062 = vmatpush.msra.mxu0 0.0
    %4063 = vmatpush.msra.mxu0 0.0
    %4064 = vmatpush.msra.mxu0 0.0
    %4065 = vmatpush.msra.mxu0 0.0
    %4066 = vmatpush.msra.mxu0 0.0
    %4067 = vmatpush.msra.mxu0 %v4052
    %4068 = vmatpush.msra.mxu0 %v4051
    %4069 = vmatmul.f32.gmra.mxu0 %v3998
    %v4070 = vpop.f32.mrf.mxu0
    %v4071 = vadd.f32 0.0, %v4070
    %4072 = vmatmul.f32.gmra.mxu0 %v4001
    %v4073 = vpop.f32.mrf.mxu0
    %v4074 = vadd.f32 0.0, %v4073
    %4075 = vdwg.mxu0
    %4076 = vmatpush.msra.mxu0 0.0
    %4077 = vmatpush.msra.mxu0 0.0
    %4078 = vmatpush.msra.mxu0 0.0
    %4079 = vmatpush.msra.mxu0 0.0
    %4080 = vmatpush.msra.mxu0 0.0
    %4081 = vmatpush.msra.mxu0 0.0
    %4082 = vmatpush.msra.mxu0 0.0
    %4083 = vmatpush.msra.mxu0 0.0
    %4084 = vmatpush.msra.mxu0 0.0
    %4085 = vmatpush.msra.mxu0 0.0
    %4086 = vmatpush.msra.mxu0 0.0
    %4087 = vmatpush.msra.mxu0 0.0
    %4088 = vmatpush.msra.mxu0 0.0
    %4089 = vmatpush.msra.mxu0 0.0
    %4090 = vmatpush.msra.mxu0 %v4050
    %4091 = vmatpush.msra.mxu0 %v4049
    %4092 = vmatmul.f32.gmra.mxu0 %v2084
    %v4093 = vpop.f32.mrf.mxu0
    %v4094 = vadd.f32 %v4071, %v4093
    %4095 = vmatmul.f32.gmra.mxu0 %v2087
    %v4096 = vpop.f32.mrf.mxu0
    %v4097 = vadd.f32 %v4074, %v4096
    %4098 = vdwg.mxu0
    %v4100 = vsel %vm275, %v3992, 0
    %4102 = vmatpush.msra.mxu0 0.0
    %4103 = vmatpush.msra.mxu0 0.0
    %4104 = vmatpush.msra.mxu0 0.0
    %4105 = vmatpush.msra.mxu0 0.0
    %4106 = vmatpush.msra.mxu0 0.0
    %4107 = vmatpush.msra.mxu0 0.0
    %4108 = vmatpush.msra.mxu0 0.0
    %4109 = vmatpush.msra.mxu0 0.0
    %4110 = vmatpush.msra.mxu0 0.0
    %4111 = vmatpush.msra.mxu0 0.0
    %4112 = vmatpush.msra.mxu0 0.0
    %4113 = vmatpush.msra.mxu0 0.0
    %4114 = vmatpush.msra.mxu0 0.0
    %4115 = vmatpush.msra.mxu0 0.0
    %4116 = vmatpush.msra.mxu0 %v4097
    %4117 = vmatpush.msra.mxu0 %v4094
    %4118 = vmatmul.f32.gmra.mxu0 %v4100
    %v4119 = vpop.f32.mrf.mxu0
    %v4120 = vadd.f32 0.0, %v4119
    %4121 = vdwg.mxu0
    %v4123 = vsel %vm275, %v3985, 0
    %4125 = vmatpush.msra.mxu0 0.0
    %4126 = vmatpush.msra.mxu0 0.0
    %4127 = vmatpush.msra.mxu0 0.0
    %4128 = vmatpush.msra.mxu0 0.0
    %4129 = vmatpush.msra.mxu0 0.0
    %4130 = vmatpush.msra.mxu0 0.0
    %4131 = vmatpush.msra.mxu0 0.0
    %4132 = vmatpush.msra.mxu0 0.0
    %4133 = vmatpush.msra.mxu0 0.0
    %4134 = vmatpush.msra.mxu0 0.0
    %4135 = vmatpush.msra.mxu0 0.0
    %4136 = vmatpush.msra.mxu0 0.0
    %4137 = vmatpush.msra.mxu0 0.0
    %4138 = vmatpush.msra.mxu0 0.0
    %4139 = vmatpush.msra.mxu0 %v4047
    %4140 = vmatpush.msra.mxu0 %v4044
    %4141 = vmatmul.f32.gmra.mxu0 %v4123
    %v4142 = vpop.f32.mrf.mxu0
    %v4143 = vadd.f32 %v4120, %v4142
    %4144 = vdwg.mxu0
    %v4145 = vld [vmem:[%s9] sm:$0xff]
    %v4146 = vadd.f32 %v4143, %v4145
    %4147 = vst [vmem:[#allocation2] sm:$0xff] %v4146
    %v4148 = vld [vmem:[%s47] sm:$0xff]
    %v4149 = vld [vmem:[%s47 + $0x8] sm:$0xff]
    %v4150 = vld [vmem:[%s47 + $0x10] sm:$0xff]
    %v4151 = vld [vmem:[%s47 + $0x18] sm:$0xff]
    %v4152 = vld [vmem:[%s47 + $0x20] sm:$0xff]
    %v4153 = vld [vmem:[%s47 + $0x28] sm:$0xff]
    %v4154 = vld [vmem:[%s47 + $0x30] sm:$0xff]
    %v4155 = vld [vmem:[%s47 + $0x38] sm:$0xff]
    %v4156 = vld [vmem:[%s47 + $0x40] sm:$0xff]
    %v4157 = vld [vmem:[%s47 + $0x48] sm:$0xff]
    %v4158 = vld [vmem:[%s47 + $0x50] sm:$0xff]
    %v4159 = vld [vmem:[%s47 + $0x58] sm:$0xff]
    %v4160 = vld [vmem:[%s47 + $0x60] sm:$0xff]
    %v4161 = vld [vmem:[%s47 + $0x68] sm:$0xff]
    %v4162 = vld [vmem:[%s47 + $0x70] sm:$0xff]
    %v4163 = vld [vmem:[%s47 + $0x78] sm:$0xff]
    %v4164 = vld [vmem:[%s49] sm:$0x1]
    %v4166 = vperm.slane %v4164, 0
    %4168 = vmatpush.msra.mxu0 %v4163
    %4169 = vmatpush.msra.mxu0 %v4162
    %4170 = vmatpush.msra.mxu0 %v4161
    %4171 = vmatpush.msra.mxu0 %v4160
    %4172 = vmatpush.msra.mxu0 %v4159
    %4173 = vmatpush.msra.mxu0 %v4158
    %4174 = vmatpush.msra.mxu0 %v4157
    %4175 = vmatpush.msra.mxu0 %v4156
    %4176 = vmatpush.msra.mxu0 %v4155
    %4177 = vmatpush.msra.mxu0 %v4154
    %4178 = vmatpush.msra.mxu0 %v4153
    %4179 = vmatpush.msra.mxu0 %v4152
    %4180 = vmatpush.msra.mxu0 %v4151
    %4181 = vmatpush.msra.mxu0 %v4150
    %4182 = vmatpush.msra.mxu0 %v4149
    %4183 = vmatpush.msra.mxu0 %v4148
    %4184 = vmatmul.f32.gmra.mxu0 %v4146
    %v4185 = vpop.f32.mrf.mxu0
    %v4186 = vadd.f32 %v4166, %v4185
    %4187 = vdwg.mxu0
    %vm4188 = vcmp.gt.f32.partialorder %v4186, 0.0
    %v4189 = vmul.f32 %v4186, 0.01
    %v4190 = vsel %vm4188, %v4186, %v4189
    %v4191 = vld [vmem:[%s51] sm:$0xff]
    %v4192 = vld [vmem:[%s51 + $0x8] sm:$0xff]
    %v4193 = vld [vmem:[%s51 + $0x10] sm:$0xff]
    %v4194 = vld [vmem:[%s51 + $0x18] sm:$0xff]
    %v4195 = vld [vmem:[%s53] sm:$0x1]
    %v4197 = vperm.slane %v4195, 0
    %vm4199 = vcmask 261120
    %v4201 = vsel %vm4199, %v4190, 0
    %4203 = vmatpush.msra.mxu0 0.0
    %4204 = vmatpush.msra.mxu0 0.0
    %4205 = vmatpush.msra.mxu0 0.0
    %4206 = vmatpush.msra.mxu0 0.0
    %4207 = vmatpush.msra.mxu0 0.0
    %4208 = vmatpush.msra.mxu0 0.0
    %4209 = vmatpush.msra.mxu0 0.0
    %4210 = vmatpush.msra.mxu0 0.0
    %4211 = vmatpush.msra.mxu0 0.0
    %4212 = vmatpush.msra.mxu0 0.0
    %4213 = vmatpush.msra.mxu0 0.0
    %4214 = vmatpush.msra.mxu0 0.0
    %4215 = vmatpush.msra.mxu0 %v4194
    %4216 = vmatpush.msra.mxu0 %v4193
    %4217 = vmatpush.msra.mxu0 %v4192
    %4218 = vmatpush.msra.mxu0 %v4191
    %4219 = vmatmul.f32.gmra.mxu0 %v4201
    %v4220 = vpop.f32.mrf.mxu0
    %v4221 = vadd.f32 %v4197, %v4220
    %4222 = vdwg.mxu0
    %vm4223 = vcmp.gt.f32.partialorder %v4221, 0.0
    %v4224 = vmul.f32 %v4221, 0.01
    %v4225 = vsel %vm4223, %v4221, %v4224
    %v4226 = vld [vmem:[%s55] sm:$0xff]
    %v4227 = vld [vmem:[%s57] sm:$0x1]
    %v4229 = vperm.slane %v4227, 0
    %vm4231 = vcmask 64512
    %v4233 = vsel %vm4231, %v4225, 0
    %4235 = vmatpush.msra.mxu0 0.0
    %4236 = vmatpush.msra.mxu0 0.0
    %4237 = vmatpush.msra.mxu0 0.0
    %4238 = vmatpush.msra.mxu0 0.0
    %4239 = vmatpush.msra.mxu0 0.0
    %4240 = vmatpush.msra.mxu0 0.0
    %4241 = vmatpush.msra.mxu0 0.0
    %4242 = vmatpush.msra.mxu0 0.0
    %4243 = vmatpush.msra.mxu0 0.0
    %4244 = vmatpush.msra.mxu0 0.0
    %4245 = vmatpush.msra.mxu0 0.0
    %4246 = vmatpush.msra.mxu0 0.0
    %4247 = vmatpush.msra.mxu0 0.0
    %4248 = vmatpush.msra.mxu0 0.0
    %4249 = vmatpush.msra.mxu0 0.0
    %4250 = vmatpush.msra.mxu0 %v4226
    %4251 = vmatmul.f32.gmra.mxu0 %v4233
    %v4252 = vpop.f32.mrf.mxu0
    %v4253 = vadd.f32 %v4229, %v4252
    %4254 = vdwg.mxu0
    %4255 = vst [vmem:[%s61] sm:$0xff] %v4253
    // Predicated region
    $region118: #{model_cn_forward.1} parent=1 // pred_check
      _
    $region119: #{model_cn_forward.1} parent=1 // pred_check_branch
      %4257 = sbr.rel (0) target = $region121
    $region120: #{model_cn_forward.1} parent=1 // pred_region
      %4259 = vsyncadd [#allocation3], 0
      %s4261 = sshll.u32 [#allocation2], 4
      %s4262 = int_to_ptr.vmem [resolvable:$true] %s4261
      %s4263 = sshll.u32 %s59, 4
      %s4264 = int_to_ptr.hbm [resolvable:$true] %s4263
      %4266 = dma.vmem_to_hbm [thread:$0]  %s4262, 128, %s4264, [#allocation3]
    $region121: #{model_cn_forward.1} parent=1 // pred_fallthru
      _
    // Predicated region
    $region122: #{model_cn_forward.1} parent=1 // pred_check
      _
    $region123: #{model_cn_forward.1} parent=1 // pred_check_branch
      %4268 = sbr.rel (0) target = $region125
    $region124: #{model_cn_forward.1} parent=1 // pred_region
      _
    $region125: #{model_cn_forward.1} parent=1 // pred_fallthru
      _
    // Predicated region
    $region126: #{model_cn_forward.1} parent=1 // pred_check
      _
    $region127: #{model_cn_forward.1} parent=1 // pred_check_branch
      %4270 = sbr.rel (0) target = $region129
    $region128: #{model_cn_forward.1} parent=1 // pred_region
      %4272 = dma.done [#allocation3], 128
    $region129: #{model_cn_forward.1} parent=1 // pred_fallthru
      _
    // Predicated region
    $region130: #{model_cn_forward.1} parent=1 // pred_check
      _
    $region131: #{model_cn_forward.1} parent=1 // pred_check_branch
      %4274 = sbr.rel (0) target = $region133
    $region132: #{model_cn_forward.1} parent=1 // pred_region
      _
    $region133: #{model_cn_forward.1} parent=1 // pred_fallthru
      _
    %4275 = vsyncpa [#allocation3], 1

</llo_original>
